<compile_context>
chip_gen: v6e
topology: v6e:2x2x1
jax: 0.10.0
libtpu: 0.0.40
codegen_flags: <defaults>
</compile_context>

<pallas_src>
import jax
import jax.numpy as jnp
import numpy as np
from jax.experimental import pallas as pl
from jax.experimental.pallas import tpu as pltpu


def _vmem():
    return pl.BlockSpec(memory_space=pltpu.MemorySpace.VMEM)


def _smem():
    return pl.BlockSpec(memory_space=pltpu.MemorySpace.SMEM)


# ------------------------------ fused kernel --------------------------------

def _fused_forward_kernel(x_ref, w1_ref, b1_ref, w2_ref, b2_ref,
                          p1r_ref, p1c_ref, p2r_ref, p2c_ref,
                          w1c_ref, fc1b_ref, fc2w_ref, fc2b_ref, o_ref):
    f32 = jnp.float32

    # ---- conv1 (3->5, k=2, valid) + relu : unrolled VPU MACs ----
    taps1 = {}
    for ci in range(3):
        xc = x_ref[0, ci]                                    # (27, 27)
        for di in range(2):
            for dj in range(2):
                taps1[(ci, di, dj)] = xc[di:di + 26, dj:dj + 26]

    r1 = p1r_ref[...]                                        # (13, 25)
    c1 = p1c_ref[...]                                        # (25, 13)
    pool1 = []
    for co in range(5):
        acc = jnp.zeros((26, 26), f32)
        for ci in range(3):
            for di in range(2):
                for dj in range(2):
                    w = w1_ref[co * 12 + ci * 4 + di * 2 + dj]
                    acc = acc + w * taps1[(ci, di, dj)]
        a = jnp.maximum(acc + b1_ref[co], 0.0)               # (26, 26)
        # maxpool 2x2 stride 2: window max via shifted slices, then subsample
        # even rows/cols with tiny 0/1 selection GEMMs (no strided slicing).
        hmax = jnp.maximum(a[:, 0:25], a[:, 1:26])           # (26, 25)
        vmax = jnp.maximum(hmax[0:25, :], hmax[1:26, :])     # (25, 25)
        pool1.append(
            jnp.dot(jnp.dot(r1, vmax, preferred_element_type=f32), c1,
                    preferred_element_type=f32))             # (13, 13)

    # ---- conv2 (5->10, k=2) + relu + pool, accumulating stacked features ----
    taps2 = {}
    for ci in range(5):
        for di in range(2):
            for dj in range(2):
                taps2[(ci, di, dj)] = pool1[ci][di:di + 12, dj:dj + 12]

    c2sel = p2c_ref[...]                                     # (11, 6)
    feat = jnp.zeros((60, 6), f32)                           # stacked (10*6, 6)
    for co in range(10):
        acc = jnp.zeros((12, 12), f32)
        for ci in range(5):
            for di in range(2):
                for dj in range(2):
                    w = w2_ref[co * 20 + ci * 4 + di * 2 + dj]
                    acc = acc + w * taps2[(ci, di, dj)]
        a = jnp.maximum(acc + b2_ref[co], 0.0)               # (12, 12)
        hmax = jnp.maximum(a[:, 0:11], a[:, 1:12])           # (12, 11)
        vmax = jnp.maximum(hmax[0:11, :], hmax[1:12, :])     # (11, 11)
        # p2r_ref[co] both subsamples even rows and places the (6,6) result at
        # rows [6*co, 6*co+6) of the stacked feature block (NCHW order).
        feat = feat + jnp.dot(
            jnp.dot(p2r_ref[co], vmax, preferred_element_type=f32), c2sel,
            preferred_element_type=f32)                      # (60, 6)

    # ---- fc1 (360->32) + relu : 6 small GEMMs, one per feature column ----
    h = fc1b_ref[...]                                        # (32, 1)
    for c in range(6):
        h = h + jnp.dot(w1c_ref[c], feat[:, c:c + 1],
                        preferred_element_type=f32)          # (32, 1)
    h = jnp.maximum(h, 0.0)

    # ---- fc2 (32->1) ----
    out = jnp.dot(fc2w_ref[...], h, preferred_element_type=f32) + fc2b_ref[0]
    o_ref[0] = out                                           # (1, 1)


# ------------------------------ host wrapper --------------------------------

def init_params(key):
    ks = jax.random.split(key, 8)

    def u(k, shape, fan_in):
        bound = 1.0 / np.sqrt(float(fan_in))
        return jax.random.uniform(k, shape, jnp.float32, -bound, bound)

    return {
        "conv1_w": u(ks[0], (5, 3, 2, 2), 3 * 4),
        "conv1_b": u(ks[1], (5,), 3 * 4),
        "conv2_w": u(ks[2], (10, 5, 2, 2), 5 * 4),
        "conv2_b": u(ks[3], (10,), 5 * 4),
        "fc1_w": u(ks[4], (32, 360), 360),
        "fc1_b": u(ks[5], (32,), 360),
        "fc2_w": u(ks[6], (1, 32), 32),
        "fc2_b": u(ks[7], (1,), 32),
    }


def _even_selector(n_out, n_in):
    m = np.zeros((n_out, n_in), np.float32)
    m[np.arange(n_out), 2 * np.arange(n_out)] = 1.0
    return m


def prepare_kernel_params(p):
    """One-time host-side repacking (runs once, outside the jitted forward)."""
    r1 = _even_selector(13, 25)                      # pool1 even-row select
    r2 = _even_selector(6, 11)                       # pool2 even-row select
    p2r = np.zeros((10, 60, 11), np.float32)         # select + channel placement
    for co in range(10):
        p2r[co, 6 * co:6 * co + 6, :] = r2
    # fc1_w[k, co*36 + i*6 + j]  ->  fc1_wc[j, k, co*6 + i]
    fc1_wc = jnp.transpose(p["fc1_w"].reshape(32, 60, 6), (2, 0, 1))
    return {
        "conv1_w": p["conv1_w"].reshape(-1).astype(jnp.float32),   # (60,)
        "conv1_b": p["conv1_b"].astype(jnp.float32),               # (5,)
        "conv2_w": p["conv2_w"].reshape(-1).astype(jnp.float32),   # (200,)
        "conv2_b": p["conv2_b"].astype(jnp.float32),               # (10,)
        "pool1_r": jnp.asarray(r1),                                # (13, 25)
        "pool1_c": jnp.asarray(r1.T),                              # (25, 13)
        "pool2_r": jnp.asarray(p2r),                               # (10, 60, 11)
        "pool2_c": jnp.asarray(r2.T),                              # (11, 6)
        "fc1_wc": fc1_wc.astype(jnp.float32),                      # (6, 32, 60)
        "fc1_b": p["fc1_b"].reshape(32, 1).astype(jnp.float32),    # (32, 1)
        "fc2_w": p["fc2_w"].astype(jnp.float32),                   # (1, 32)
        "fc2_b": p["fc2_b"].astype(jnp.float32),                   # (1,)
    }


@jax.jit
def traffic_light_forward(x, kp):
    n = x.shape[0]
    x = x.astype(jnp.float32)
    out = pl.pallas_call(
        _fused_forward_kernel,
        out_shape=jax.ShapeDtypeStruct((n, 1, 1), jnp.float32),
        grid=(n,),
        in_specs=[
            pl.BlockSpec((1, 3, 27, 27), lambda b: (b, 0, 0, 0)),  # x (per image)
            _smem(), _smem(), _smem(), _smem(),   # conv1_w/b, conv2_w/b scalars
            _vmem(), _vmem(), _vmem(), _vmem(),   # pooling selection matrices
            _vmem(), _vmem(), _vmem(),            # fc1_wc, fc1_b, fc2_w
            _smem(),                              # fc2_b
        ],
        out_specs=pl.BlockSpec((1, 1, 1), lambda b: (b, 0, 0)),
        compiler_params=pltpu.CompilerParams(
            dimension_semantics=("parallel",)),
    )(x, kp["conv1_w"], kp["conv1_b"], kp["conv2_w"], kp["conv2_b"],
      kp["pool1_r"], kp["pool1_c"], kp["pool2_r"], kp["pool2_c"],
      kp["fc1_wc"], kp["fc1_b"], kp["fc2_w"], kp["fc2_b"])
    return out.reshape(n)                          # squeeze(1)


# ------------------------------- reference ----------------------------------

def reference_forward(x, p):
    def conv(x, w, b):
        out = jax.lax.conv_general_dilated(
            x, w, window_strides=(1, 1), padding="VALID",
            dimension_numbers=("NCHW", "OIHW", "NCHW"))
        return jax.nn.relu(out + b[None, :, None, None])

    def pool(x):
        return jax.lax.reduce_window(x, -jnp.inf, jax.lax.max,
                                     (1, 1, 2, 2), (1, 1, 2, 2), "VALID")

    x = pool(conv(x.astype(jnp.float32), p["conv1_w"], p["conv1_b"]))
    x = pool(conv(x, p["conv2_w"], p["conv2_b"]))
    x = x.reshape(x.shape[0], 360)
    x = jax.nn.relu(x @ p["fc1_w"].T + p["fc1_b"])
    x = x @ p["fc2_w"].T + p["fc2_b"]
    return x[:, 0]


if __name__ == "__main__":
    key = jax.random.PRNGKey(0)
    k_x, k_p = jax.random.split(key)
    x = jax.random.normal(k_x, (2, 3, 27, 27), jnp.float32)  # N=2, C=3, 27x27
    params = init_params(k_p)
    kparams = prepare_kernel_params(params)      # one-time weight repacking

    out = traffic_light_forward(x, kparams)
    out = jax.block_until_ready(out)

    ref = reference_forward(x, params)
    assert out.shape == (2,), f"bad output shape {out.shape}"
    max_diff = float(jnp.max(jnp.abs(out - ref)))
    assert max_diff < 1e-4, f"mismatch vs reference, max diff {max_diff}"

    print("KERNEL_OK")
</pallas_src>

<mosaic_0001>
module attributes {stable_mosaic.version = 11 : i64} {
  func.func @_fused_forward_kernel(%arg0: i32, %arg1: memref<1x3x27x27xf32, #tpu.memory_space<vmem>>, %arg2: memref<60xf32, #tpu.memory_space<smem>>, %arg3: memref<5xf32, #tpu.memory_space<smem>>, %arg4: memref<200xf32, #tpu.memory_space<smem>>, %arg5: memref<10xf32, #tpu.memory_space<smem>>, %arg6: memref<13x25xf32, #tpu.memory_space<vmem>>, %arg7: memref<25x13xf32, #tpu.memory_space<vmem>>, %arg8: memref<10x60x11xf32, #tpu.memory_space<vmem>>, %arg9: memref<11x6xf32, #tpu.memory_space<vmem>>, %arg10: memref<6x32x60xf32, #tpu.memory_space<vmem>>, %arg11: memref<32x1xf32, #tpu.memory_space<vmem>>, %arg12: memref<1x32xf32, #tpu.memory_space<vmem>>, %arg13: memref<1xf32, #tpu.memory_space<smem>>, %arg14: memref<1x1x1xf32, #tpu.memory_space<vmem>>) attributes {dimension_semantics = [#tpu.dimension_semantics<parallel>], iteration_bounds = array<i64: 2>, scalar_prefetch = 0 : i64, scratch_operands = 0 : i64, tpu.core_type = #tpu.core_type<tc>, window_params = [{transform_indices = @transform_0, window_bounds = array<i64: 1, 3, 27, 27>}, {transform_indices = @transform_1, window_bounds = array<i64: 60>}, {transform_indices = @transform_2, window_bounds = array<i64: 5>}, {transform_indices = @transform_3, window_bounds = array<i64: 200>}, {transform_indices = @transform_4, window_bounds = array<i64: 10>}, {pipeline_mode = #tpu.pipeline_mode<synchronous>, transform_indices = @transform_5, window_bounds = array<i64: 13, 25>}, {pipeline_mode = #tpu.pipeline_mode<synchronous>, transform_indices = @transform_6, window_bounds = array<i64: 25, 13>}, {pipeline_mode = #tpu.pipeline_mode<synchronous>, transform_indices = @transform_7, window_bounds = array<i64: 10, 60, 11>}, {pipeline_mode = #tpu.pipeline_mode<synchronous>, transform_indices = @transform_8, window_bounds = array<i64: 11, 6>}, {pipeline_mode = #tpu.pipeline_mode<synchronous>, transform_indices = @transform_9, window_bounds = array<i64: 6, 32, 60>}, {pipeline_mode = #tpu.pipeline_mode<synchronous>, transform_indices = @transform_10, window_bounds = array<i64: 32, 1>}, {pipeline_mode = #tpu.pipeline_mode<synchronous>, transform_indices = @transform_11, window_bounds = array<i64: 1, 32>}, {transform_indices = @transform_12, window_bounds = array<i64: 1>}, {transform_indices = @transform_13, window_bounds = array<i64: 1, 1, 1>}]} {
    %c0 = arith.constant 0 : index
    %c0_0 = arith.constant 0 : index
    %c0_1 = arith.constant 0 : index
    %c0_2 = arith.constant 0 : index
    %0 = vector.load %arg1[%c0, %c0_0, %c0_1, %c0_2] : memref<1x3x27x27xf32, #tpu.memory_space<vmem>>, vector<1x1x27x27xf32>
    %1 = vector.shape_cast %0 : vector<1x1x27x27xf32> to vector<27x27xf32>
    %2 = vector.extract_strided_slice %1 {offsets = [0, 0], sizes = [26, 26], strides = [1, 1]} : vector<27x27xf32> to vector<26x26xf32>
    %3 = vector.extract_strided_slice %1 {offsets = [0, 1], sizes = [26, 26], strides = [1, 1]} : vector<27x27xf32> to vector<26x26xf32>
    %4 = vector.extract_strided_slice %1 {offsets = [1, 0], sizes = [26, 26], strides = [1, 1]} : vector<27x27xf32> to vector<26x26xf32>
    %5 = vector.extract_strided_slice %1 {offsets = [1, 1], sizes = [26, 26], strides = [1, 1]} : vector<27x27xf32> to vector<26x26xf32>
    %c0_3 = arith.constant 0 : index
    %c1 = arith.constant 1 : index
    %c0_4 = arith.constant 0 : index
    %c0_5 = arith.constant 0 : index
    %6 = vector.load %arg1[%c0_3, %c1, %c0_4, %c0_5] : memref<1x3x27x27xf32, #tpu.memory_space<vmem>>, vector<1x1x27x27xf32>
    %7 = vector.shape_cast %6 : vector<1x1x27x27xf32> to vector<27x27xf32>
    %8 = vector.extract_strided_slice %7 {offsets = [0, 0], sizes = [26, 26], strides = [1, 1]} : vector<27x27xf32> to vector<26x26xf32>
    %9 = vector.extract_strided_slice %7 {offsets = [0, 1], sizes = [26, 26], strides = [1, 1]} : vector<27x27xf32> to vector<26x26xf32>
    %10 = vector.extract_strided_slice %7 {offsets = [1, 0], sizes = [26, 26], strides = [1, 1]} : vector<27x27xf32> to vector<26x26xf32>
    %11 = vector.extract_strided_slice %7 {offsets = [1, 1], sizes = [26, 26], strides = [1, 1]} : vector<27x27xf32> to vector<26x26xf32>
    %c0_6 = arith.constant 0 : index
    %c2 = arith.constant 2 : index
    %c0_7 = arith.constant 0 : index
    %c0_8 = arith.constant 0 : index
    %12 = vector.load %arg1[%c0_6, %c2, %c0_7, %c0_8] : memref<1x3x27x27xf32, #tpu.memory_space<vmem>>, vector<1x1x27x27xf32>
    %13 = vector.shape_cast %12 : vector<1x1x27x27xf32> to vector<27x27xf32>
    %14 = vector.extract_strided_slice %13 {offsets = [0, 0], sizes = [26, 26], strides = [1, 1]} : vector<27x27xf32> to vector<26x26xf32>
    %15 = vector.extract_strided_slice %13 {offsets = [0, 1], sizes = [26, 26], strides = [1, 1]} : vector<27x27xf32> to vector<26x26xf32>
    %16 = vector.extract_strided_slice %13 {offsets = [1, 0], sizes = [26, 26], strides = [1, 1]} : vector<27x27xf32> to vector<26x26xf32>
    %17 = vector.extract_strided_slice %13 {offsets = [1, 1], sizes = [26, 26], strides = [1, 1]} : vector<27x27xf32> to vector<26x26xf32>
    %c0_9 = arith.constant 0 : index
    %c0_10 = arith.constant 0 : index
    %18 = vector.load %arg6[%c0_9, %c0_10] : memref<13x25xf32, #tpu.memory_space<vmem>>, vector<13x25xf32>
    %c0_11 = arith.constant 0 : index
    %c0_12 = arith.constant 0 : index
    %19 = vector.load %arg7[%c0_11, %c0_12] : memref<25x13xf32, #tpu.memory_space<vmem>>, vector<25x13xf32>
    %cst = arith.constant 0.000000e+00 : f32
    %20 = vector.broadcast %cst : f32 to vector<26x26xf32>
    %c0_13 = arith.constant 0 : index
    %21 = memref.load %arg2[%c0_13] : memref<60xf32, #tpu.memory_space<smem>>
    %22 = vector.broadcast %21 : f32 to vector<26x26xf32>
    %23 = arith.mulf %22, %2 : vector<26x26xf32>
    %24 = arith.addf %20, %23 : vector<26x26xf32>
    %c1_14 = arith.constant 1 : index
    %25 = memref.load %arg2[%c1_14] : memref<60xf32, #tpu.memory_space<smem>>
    %26 = vector.broadcast %25 : f32 to vector<26x26xf32>
    %27 = arith.mulf %26, %3 : vector<26x26xf32>
    %28 = arith.addf %24, %27 : vector<26x26xf32>
    %c2_15 = arith.constant 2 : index
    %29 = memref.load %arg2[%c2_15] : memref<60xf32, #tpu.memory_space<smem>>
    %30 = vector.broadcast %29 : f32 to vector<26x26xf32>
    %31 = arith.mulf %30, %4 : vector<26x26xf32>
    %32 = arith.addf %28, %31 : vector<26x26xf32>
    %c3 = arith.constant 3 : index
    %33 = memref.load %arg2[%c3] : memref<60xf32, #tpu.memory_space<smem>>
    %34 = vector.broadcast %33 : f32 to vector<26x26xf32>
    %35 = arith.mulf %34, %5 : vector<26x26xf32>
    %36 = arith.addf %32, %35 : vector<26x26xf32>
    %c4 = arith.constant 4 : index
    %37 = memref.load %arg2[%c4] : memref<60xf32, #tpu.memory_space<smem>>
    %38 = vector.broadcast %37 : f32 to vector<26x26xf32>
    %39 = arith.mulf %38, %8 : vector<26x26xf32>
    %40 = arith.addf %36, %39 : vector<26x26xf32>
    %c5 = arith.constant 5 : index
    %41 = memref.load %arg2[%c5] : memref<60xf32, #tpu.memory_space<smem>>
    %42 = vector.broadcast %41 : f32 to vector<26x26xf32>
    %43 = arith.mulf %42, %9 : vector<26x26xf32>
    %44 = arith.addf %40, %43 : vector<26x26xf32>
    %c6 = arith.constant 6 : index
    %45 = memref.load %arg2[%c6] : memref<60xf32, #tpu.memory_space<smem>>
    %46 = vector.broadcast %45 : f32 to vector<26x26xf32>
    %47 = arith.mulf %46, %10 : vector<26x26xf32>
    %48 = arith.addf %44, %47 : vector<26x26xf32>
    %c7 = arith.constant 7 : index
    %49 = memref.load %arg2[%c7] : memref<60xf32, #tpu.memory_space<smem>>
    %50 = vector.broadcast %49 : f32 to vector<26x26xf32>
    %51 = arith.mulf %50, %11 : vector<26x26xf32>
    %52 = arith.addf %48, %51 : vector<26x26xf32>
    %c8 = arith.constant 8 : index
    %53 = memref.load %arg2[%c8] : memref<60xf32, #tpu.memory_space<smem>>
    %54 = vector.broadcast %53 : f32 to vector<26x26xf32>
    %55 = arith.mulf %54, %14 : vector<26x26xf32>
    %56 = arith.addf %52, %55 : vector<26x26xf32>
    %c9 = arith.constant 9 : index
    %57 = memref.load %arg2[%c9] : memref<60xf32, #tpu.memory_space<smem>>
    %58 = vector.broadcast %57 : f32 to vector<26x26xf32>
    %59 = arith.mulf %58, %15 : vector<26x26xf32>
    %60 = arith.addf %56, %59 : vector<26x26xf32>
    %c10 = arith.constant 10 : index
    %61 = memref.load %arg2[%c10] : memref<60xf32, #tpu.memory_space<smem>>
    %62 = vector.broadcast %61 : f32 to vector<26x26xf32>
    %63 = arith.mulf %62, %16 : vector<26x26xf32>
    %64 = arith.addf %60, %63 : vector<26x26xf32>
    %c11 = arith.constant 11 : index
    %65 = memref.load %arg2[%c11] : memref<60xf32, #tpu.memory_space<smem>>
    %66 = vector.broadcast %65 : f32 to vector<26x26xf32>
    %67 = arith.mulf %66, %17 : vector<26x26xf32>
    %68 = arith.addf %64, %67 : vector<26x26xf32>
    %c0_16 = arith.constant 0 : index
    %69 = memref.load %arg3[%c0_16] : memref<5xf32, #tpu.memory_space<smem>>
    %70 = vector.broadcast %69 : f32 to vector<26x26xf32>
    %71 = arith.addf %68, %70 : vector<26x26xf32>
    %cst_17 = arith.constant 0.000000e+00 : f32
    %72 = vector.broadcast %cst_17 : f32 to vector<26x26xf32>
    %73 = arith.maximumf %71, %72 : vector<26x26xf32>
    %74 = vector.extract_strided_slice %73 {offsets = [0, 0], sizes = [26, 25], strides = [1, 1]} : vector<26x26xf32> to vector<26x25xf32>
    %75 = vector.extract_strided_slice %73 {offsets = [0, 1], sizes = [26, 25], strides = [1, 1]} : vector<26x26xf32> to vector<26x25xf32>
    %76 = arith.maximumf %74, %75 : vector<26x25xf32>
    %77 = vector.extract_strided_slice %76 {offsets = [0, 0], sizes = [25, 25], strides = [1, 1]} : vector<26x25xf32> to vector<25x25xf32>
    %78 = vector.extract_strided_slice %76 {offsets = [1, 0], sizes = [25, 25], strides = [1, 1]} : vector<26x25xf32> to vector<25x25xf32>
    %79 = arith.maximumf %77, %78 : vector<25x25xf32>
    %cst_18 = arith.constant dense<0.000000e+00> : vector<13x25xf32>
    %80 = tpu.matmul %18, %79, %cst_18 {dimension_numbers = #tpu.dot_dimension_numbers<[1], [0], [0], [1], [0, 0, 1, 1], [], []>} : vector<13x25xf32>, vector<25x25xf32>, vector<13x25xf32> -> vector<13x25xf32>
    %cst_19 = arith.constant dense<0.000000e+00> : vector<13x13xf32>
    %81 = tpu.matmul %80, %19, %cst_19 {dimension_numbers = #tpu.dot_dimension_numbers<[1], [0], [0], [1], [0, 0, 1, 1], [], []>} : vector<13x25xf32>, vector<25x13xf32>, vector<13x13xf32> -> vector<13x13xf32>
    %cst_20 = arith.constant 0.000000e+00 : f32
    %82 = vector.broadcast %cst_20 : f32 to vector<26x26xf32>
    %c12 = arith.constant 12 : index
    %83 = memref.load %arg2[%c12] : memref<60xf32, #tpu.memory_space<smem>>
    %84 = vector.broadcast %83 : f32 to vector<26x26xf32>
    %85 = arith.mulf %84, %2 : vector<26x26xf32>
    %86 = arith.addf %82, %85 : vector<26x26xf32>
    %c13 = arith.constant 13 : index
    %87 = memref.load %arg2[%c13] : memref<60xf32, #tpu.memory_space<smem>>
    %88 = vector.broadcast %87 : f32 to vector<26x26xf32>
    %89 = arith.mulf %88, %3 : vector<26x26xf32>
    %90 = arith.addf %86, %89 : vector<26x26xf32>
    %c14 = arith.constant 14 : index
    %91 = memref.load %arg2[%c14] : memref<60xf32, #tpu.memory_space<smem>>
    %92 = vector.broadcast %91 : f32 to vector<26x26xf32>
    %93 = arith.mulf %92, %4 : vector<26x26xf32>
    %94 = arith.addf %90, %93 : vector<26x26xf32>
    %c15 = arith.constant 15 : index
    %95 = memref.load %arg2[%c15] : memref<60xf32, #tpu.memory_space<smem>>
    %96 = vector.broadcast %95 : f32 to vector<26x26xf32>
    %97 = arith.mulf %96, %5 : vector<26x26xf32>
    %98 = arith.addf %94, %97 : vector<26x26xf32>
    %c16 = arith.constant 16 : index
    %99 = memref.load %arg2[%c16] : memref<60xf32, #tpu.memory_space<smem>>
    %100 = vector.broadcast %99 : f32 to vector<26x26xf32>
    %101 = arith.mulf %100, %8 : vector<26x26xf32>
    %102 = arith.addf %98, %101 : vector<26x26xf32>
    %c17 = arith.constant 17 : index
    %103 = memref.load %arg2[%c17] : memref<60xf32, #tpu.memory_space<smem>>
    %104 = vector.broadcast %103 : f32 to vector<26x26xf32>
    %105 = arith.mulf %104, %9 : vector<26x26xf32>
    %106 = arith.addf %102, %105 : vector<26x26xf32>
    %c18 = arith.constant 18 : index
    %107 = memref.load %arg2[%c18] : memref<60xf32, #tpu.memory_space<smem>>
    %108 = vector.broadcast %107 : f32 to vector<26x26xf32>
    %109 = arith.mulf %108, %10 : vector<26x26xf32>
    %110 = arith.addf %106, %109 : vector<26x26xf32>
    %c19 = arith.constant 19 : index
    %111 = memref.load %arg2[%c19] : memref<60xf32, #tpu.memory_space<smem>>
    %112 = vector.broadcast %111 : f32 to vector<26x26xf32>
    %113 = arith.mulf %112, %11 : vector<26x26xf32>
    %114 = arith.addf %110, %113 : vector<26x26xf32>
    %c20 = arith.constant 20 : index
    %115 = memref.load %arg2[%c20] : memref<60xf32, #tpu.memory_space<smem>>
    %116 = vector.broadcast %115 : f32 to vector<26x26xf32>
    %117 = arith.mulf %116, %14 : vector<26x26xf32>
    %118 = arith.addf %114, %117 : vector<26x26xf32>
    %c21 = arith.constant 21 : index
    %119 = memref.load %arg2[%c21] : memref<60xf32, #tpu.memory_space<smem>>
    %120 = vector.broadcast %119 : f32 to vector<26x26xf32>
    %121 = arith.mulf %120, %15 : vector<26x26xf32>
    %122 = arith.addf %118, %121 : vector<26x26xf32>
    %c22 = arith.constant 22 : index
    %123 = memref.load %arg2[%c22] : memref<60xf32, #tpu.memory_space<smem>>
    %124 = vector.broadcast %123 : f32 to vector<26x26xf32>
    %125 = arith.mulf %124, %16 : vector<26x26xf32>
    %126 = arith.addf %122, %125 : vector<26x26xf32>
    %c23 = arith.constant 23 : index
    %127 = memref.load %arg2[%c23] : memref<60xf32, #tpu.memory_space<smem>>
    %128 = vector.broadcast %127 : f32 to vector<26x26xf32>
    %129 = arith.mulf %128, %17 : vector<26x26xf32>
    %130 = arith.addf %126, %129 : vector<26x26xf32>
    %c1_21 = arith.constant 1 : index
    %131 = memref.load %arg3[%c1_21] : memref<5xf32, #tpu.memory_space<smem>>
    %132 = vector.broadcast %131 : f32 to vector<26x26xf32>
    %133 = arith.addf %130, %132 : vector<26x26xf32>
    %cst_22 = arith.constant 0.000000e+00 : f32
    %134 = vector.broadcast %cst_22 : f32 to vector<26x26xf32>
    %135 = arith.maximumf %133, %134 : vector<26x26xf32>
    %136 = vector.extract_strided_slice %135 {offsets = [0, 0], sizes = [26, 25], strides = [1, 1]} : vector<26x26xf32> to vector<26x25xf32>
    %137 = vector.extract_strided_slice %135 {offsets = [0, 1], sizes = [26, 25], strides = [1, 1]} : vector<26x26xf32> to vector<26x25xf32>
    %138 = arith.maximumf %136, %137 : vector<26x25xf32>
    %139 = vector.extract_strided_slice %138 {offsets = [0, 0], sizes = [25, 25], strides = [1, 1]} : vector<26x25xf32> to vector<25x25xf32>
    %140 = vector.extract_strided_slice %138 {offsets = [1, 0], sizes = [25, 25], strides = [1, 1]} : vector<26x25xf32> to vector<25x25xf32>
    %141 = arith.maximumf %139, %140 : vector<25x25xf32>
    %cst_23 = arith.constant dense<0.000000e+00> : vector<13x25xf32>
    %142 = tpu.matmul %18, %141, %cst_23 {dimension_numbers = #tpu.dot_dimension_numbers<[1], [0], [0], [1], [0, 0, 1, 1], [], []>} : vector<13x25xf32>, vector<25x25xf32>, vector<13x25xf32> -> vector<13x25xf32>
    %cst_24 = arith.constant dense<0.000000e+00> : vector<13x13xf32>
    %143 = tpu.matmul %142, %19, %cst_24 {dimension_numbers = #tpu.dot_dimension_numbers<[1], [0], [0], [1], [0, 0, 1, 1], [], []>} : vector<13x25xf32>, vector<25x13xf32>, vector<13x13xf32> -> vector<13x13xf32>
    %cst_25 = arith.constant 0.000000e+00 : f32
    %144 = vector.broadcast %cst_25 : f32 to vector<26x26xf32>
    %c24 = arith.constant 24 : index
    %145 = memref.load %arg2[%c24] : memref<60xf32, #tpu.memory_space<smem>>
    %146 = vector.broadcast %145 : f32 to vector<26x26xf32>
    %147 = arith.mulf %146, %2 : vector<26x26xf32>
    %148 = arith.addf %144, %147 : vector<26x26xf32>
    %c25 = arith.constant 25 : index
    %149 = memref.load %arg2[%c25] : memref<60xf32, #tpu.memory_space<smem>>
    %150 = vector.broadcast %149 : f32 to vector<26x26xf32>
    %151 = arith.mulf %150, %3 : vector<26x26xf32>
    %152 = arith.addf %148, %151 : vector<26x26xf32>
    %c26 = arith.constant 26 : index
    %153 = memref.load %arg2[%c26] : memref<60xf32, #tpu.memory_space<smem>>
    %154 = vector.broadcast %153 : f32 to vector<26x26xf32>
    %155 = arith.mulf %154, %4 : vector<26x26xf32>
    %156 = arith.addf %152, %155 : vector<26x26xf32>
    %c27 = arith.constant 27 : index
    %157 = memref.load %arg2[%c27] : memref<60xf32, #tpu.memory_space<smem>>
    %158 = vector.broadcast %157 : f32 to vector<26x26xf32>
    %159 = arith.mulf %158, %5 : vector<26x26xf32>
    %160 = arith.addf %156, %159 : vector<26x26xf32>
    %c28 = arith.constant 28 : index
    %161 = memref.load %arg2[%c28] : memref<60xf32, #tpu.memory_space<smem>>
    %162 = vector.broadcast %161 : f32 to vector<26x26xf32>
    %163 = arith.mulf %162, %8 : vector<26x26xf32>
    %164 = arith.addf %160, %163 : vector<26x26xf32>
    %c29 = arith.constant 29 : index
    %165 = memref.load %arg2[%c29] : memref<60xf32, #tpu.memory_space<smem>>
    %166 = vector.broadcast %165 : f32 to vector<26x26xf32>
    %167 = arith.mulf %166, %9 : vector<26x26xf32>
    %168 = arith.addf %164, %167 : vector<26x26xf32>
    %c30 = arith.constant 30 : index
    %169 = memref.load %arg2[%c30] : memref<60xf32, #tpu.memory_space<smem>>
    %170 = vector.broadcast %169 : f32 to vector<26x26xf32>
    %171 = arith.mulf %170, %10 : vector<26x26xf32>
    %172 = arith.addf %168, %171 : vector<26x26xf32>
    %c31 = arith.constant 31 : index
    %173 = memref.load %arg2[%c31] : memref<60xf32, #tpu.memory_space<smem>>
    %174 = vector.broadcast %173 : f32 to vector<26x26xf32>
    %175 = arith.mulf %174, %11 : vector<26x26xf32>
    %176 = arith.addf %172, %175 : vector<26x26xf32>
    %c32 = arith.constant 32 : index
    %177 = memref.load %arg2[%c32] : memref<60xf32, #tpu.memory_space<smem>>
    %178 = vector.broadcast %177 : f32 to vector<26x26xf32>
    %179 = arith.mulf %178, %14 : vector<26x26xf32>
    %180 = arith.addf %176, %179 : vector<26x26xf32>
    %c33 = arith.constant 33 : index
    %181 = memref.load %arg2[%c33] : memref<60xf32, #tpu.memory_space<smem>>
    %182 = vector.broadcast %181 : f32 to vector<26x26xf32>
    %183 = arith.mulf %182, %15 : vector<26x26xf32>
    %184 = arith.addf %180, %183 : vector<26x26xf32>
    %c34 = arith.constant 34 : index
    %185 = memref.load %arg2[%c34] : memref<60xf32, #tpu.memory_space<smem>>
    %186 = vector.broadcast %185 : f32 to vector<26x26xf32>
    %187 = arith.mulf %186, %16 : vector<26x26xf32>
    %188 = arith.addf %184, %187 : vector<26x26xf32>
    %c35 = arith.constant 35 : index
    %189 = memref.load %arg2[%c35] : memref<60xf32, #tpu.memory_space<smem>>
    %190 = vector.broadcast %189 : f32 to vector<26x26xf32>
    %191 = arith.mulf %190, %17 : vector<26x26xf32>
    %192 = arith.addf %188, %191 : vector<26x26xf32>
    %c2_26 = arith.constant 2 : index
    %193 = memref.load %arg3[%c2_26] : memref<5xf32, #tpu.memory_space<smem>>
    %194 = vector.broadcast %193 : f32 to vector<26x26xf32>
    %195 = arith.addf %192, %194 : vector<26x26xf32>
    %cst_27 = arith.constant 0.000000e+00 : f32
    %196 = vector.broadcast %cst_27 : f32 to vector<26x26xf32>
    %197 = arith.maximumf %195, %196 : vector<26x26xf32>
    %198 = vector.extract_strided_slice %197 {offsets = [0, 0], sizes = [26, 25], strides = [1, 1]} : vector<26x26xf32> to vector<26x25xf32>
    %199 = vector.extract_strided_slice %197 {offsets = [0, 1], sizes = [26, 25], strides = [1, 1]} : vector<26x26xf32> to vector<26x25xf32>
    %200 = arith.maximumf %198, %199 : vector<26x25xf32>
    %201 = vector.extract_strided_slice %200 {offsets = [0, 0], sizes = [25, 25], strides = [1, 1]} : vector<26x25xf32> to vector<25x25xf32>
    %202 = vector.extract_strided_slice %200 {offsets = [1, 0], sizes = [25, 25], strides = [1, 1]} : vector<26x25xf32> to vector<25x25xf32>
    %203 = arith.maximumf %201, %202 : vector<25x25xf32>
    %cst_28 = arith.constant dense<0.000000e+00> : vector<13x25xf32>
    %204 = tpu.matmul %18, %203, %cst_28 {dimension_numbers = #tpu.dot_dimension_numbers<[1], [0], [0], [1], [0, 0, 1, 1], [], []>} : vector<13x25xf32>, vector<25x25xf32>, vector<13x25xf32> -> vector<13x25xf32>
    %cst_29 = arith.constant dense<0.000000e+00> : vector<13x13xf32>
    %205 = tpu.matmul %204, %19, %cst_29 {dimension_numbers = #tpu.dot_dimension_numbers<[1], [0], [0], [1], [0, 0, 1, 1], [], []>} : vector<13x25xf32>, vector<25x13xf32>, vector<13x13xf32> -> vector<13x13xf32>
    %cst_30 = arith.constant 0.000000e+00 : f32
    %206 = vector.broadcast %cst_30 : f32 to vector<26x26xf32>
    %c36 = arith.constant 36 : index
    %207 = memref.load %arg2[%c36] : memref<60xf32, #tpu.memory_space<smem>>
    %208 = vector.broadcast %207 : f32 to vector<26x26xf32>
    %209 = arith.mulf %208, %2 : vector<26x26xf32>
    %210 = arith.addf %206, %209 : vector<26x26xf32>
    %c37 = arith.constant 37 : index
    %211 = memref.load %arg2[%c37] : memref<60xf32, #tpu.memory_space<smem>>
    %212 = vector.broadcast %211 : f32 to vector<26x26xf32>
    %213 = arith.mulf %212, %3 : vector<26x26xf32>
    %214 = arith.addf %210, %213 : vector<26x26xf32>
    %c38 = arith.constant 38 : index
    %215 = memref.load %arg2[%c38] : memref<60xf32, #tpu.memory_space<smem>>
    %216 = vector.broadcast %215 : f32 to vector<26x26xf32>
    %217 = arith.mulf %216, %4 : vector<26x26xf32>
    %218 = arith.addf %214, %217 : vector<26x26xf32>
    %c39 = arith.constant 39 : index
    %219 = memref.load %arg2[%c39] : memref<60xf32, #tpu.memory_space<smem>>
    %220 = vector.broadcast %219 : f32 to vector<26x26xf32>
    %221 = arith.mulf %220, %5 : vector<26x26xf32>
    %222 = arith.addf %218, %221 : vector<26x26xf32>
    %c40 = arith.constant 40 : index
    %223 = memref.load %arg2[%c40] : memref<60xf32, #tpu.memory_space<smem>>
    %224 = vector.broadcast %223 : f32 to vector<26x26xf32>
    %225 = arith.mulf %224, %8 : vector<26x26xf32>
    %226 = arith.addf %222, %225 : vector<26x26xf32>
    %c41 = arith.constant 41 : index
    %227 = memref.load %arg2[%c41] : memref<60xf32, #tpu.memory_space<smem>>
    %228 = vector.broadcast %227 : f32 to vector<26x26xf32>
    %229 = arith.mulf %228, %9 : vector<26x26xf32>
    %230 = arith.addf %226, %229 : vector<26x26xf32>
    %c42 = arith.constant 42 : index
    %231 = memref.load %arg2[%c42] : memref<60xf32, #tpu.memory_space<smem>>
    %232 = vector.broadcast %231 : f32 to vector<26x26xf32>
    %233 = arith.mulf %232, %10 : vector<26x26xf32>
    %234 = arith.addf %230, %233 : vector<26x26xf32>
    %c43 = arith.constant 43 : index
    %235 = memref.load %arg2[%c43] : memref<60xf32, #tpu.memory_space<smem>>
    %236 = vector.broadcast %235 : f32 to vector<26x26xf32>
    %237 = arith.mulf %236, %11 : vector<26x26xf32>
    %238 = arith.addf %234, %237 : vector<26x26xf32>
    %c44 = arith.constant 44 : index
    %239 = memref.load %arg2[%c44] : memref<60xf32, #tpu.memory_space<smem>>
    %240 = vector.broadcast %239 : f32 to vector<26x26xf32>
    %241 = arith.mulf %240, %14 : vector<26x26xf32>
    %242 = arith.addf %238, %241 : vector<26x26xf32>
    %c45 = arith.constant 45 : index
    %243 = memref.load %arg2[%c45] : memref<60xf32, #tpu.memory_space<smem>>
    %244 = vector.broadcast %243 : f32 to vector<26x26xf32>
    %245 = arith.mulf %244, %15 : vector<26x26xf32>
    %246 = arith.addf %242, %245 : vector<26x26xf32>
    %c46 = arith.constant 46 : index
    %247 = memref.load %arg2[%c46] : memref<60xf32, #tpu.memory_space<smem>>
    %248 = vector.broadcast %247 : f32 to vector<26x26xf32>
    %249 = arith.mulf %248, %16 : vector<26x26xf32>
    %250 = arith.addf %246, %249 : vector<26x26xf32>
    %c47 = arith.constant 47 : index
    %251 = memref.load %arg2[%c47] : memref<60xf32, #tpu.memory_space<smem>>
    %252 = vector.broadcast %251 : f32 to vector<26x26xf32>
    %253 = arith.mulf %252, %17 : vector<26x26xf32>
    %254 = arith.addf %250, %253 : vector<26x26xf32>
    %c3_31 = arith.constant 3 : index
    %255 = memref.load %arg3[%c3_31] : memref<5xf32, #tpu.memory_space<smem>>
    %256 = vector.broadcast %255 : f32 to vector<26x26xf32>
    %257 = arith.addf %254, %256 : vector<26x26xf32>
    %cst_32 = arith.constant 0.000000e+00 : f32
    %258 = vector.broadcast %cst_32 : f32 to vector<26x26xf32>
    %259 = arith.maximumf %257, %258 : vector<26x26xf32>
    %260 = vector.extract_strided_slice %259 {offsets = [0, 0], sizes = [26, 25], strides = [1, 1]} : vector<26x26xf32> to vector<26x25xf32>
    %261 = vector.extract_strided_slice %259 {offsets = [0, 1], sizes = [26, 25], strides = [1, 1]} : vector<26x26xf32> to vector<26x25xf32>
    %262 = arith.maximumf %260, %261 : vector<26x25xf32>
    %263 = vector.extract_strided_slice %262 {offsets = [0, 0], sizes = [25, 25], strides = [1, 1]} : vector<26x25xf32> to vector<25x25xf32>
    %264 = vector.extract_strided_slice %262 {offsets = [1, 0], sizes = [25, 25], strides = [1, 1]} : vector<26x25xf32> to vector<25x25xf32>
    %265 = arith.maximumf %263, %264 : vector<25x25xf32>
    %cst_33 = arith.constant dense<0.000000e+00> : vector<13x25xf32>
    %266 = tpu.matmul %18, %265, %cst_33 {dimension_numbers = #tpu.dot_dimension_numbers<[1], [0], [0], [1], [0, 0, 1, 1], [], []>} : vector<13x25xf32>, vector<25x25xf32>, vector<13x25xf32> -> vector<13x25xf32>
    %cst_34 = arith.constant dense<0.000000e+00> : vector<13x13xf32>
    %267 = tpu.matmul %266, %19, %cst_34 {dimension_numbers = #tpu.dot_dimension_numbers<[1], [0], [0], [1], [0, 0, 1, 1], [], []>} : vector<13x25xf32>, vector<25x13xf32>, vector<13x13xf32> -> vector<13x13xf32>
    %cst_35 = arith.constant 0.000000e+00 : f32
    %268 = vector.broadcast %cst_35 : f32 to vector<26x26xf32>
    %c48 = arith.constant 48 : index
    %269 = memref.load %arg2[%c48] : memref<60xf32, #tpu.memory_space<smem>>
    %270 = vector.broadcast %269 : f32 to vector<26x26xf32>
    %271 = arith.mulf %270, %2 : vector<26x26xf32>
    %272 = arith.addf %268, %271 : vector<26x26xf32>
    %c49 = arith.constant 49 : index
    %273 = memref.load %arg2[%c49] : memref<60xf32, #tpu.memory_space<smem>>
    %274 = vector.broadcast %273 : f32 to vector<26x26xf32>
    %275 = arith.mulf %274, %3 : vector<26x26xf32>
    %276 = arith.addf %272, %275 : vector<26x26xf32>
    %c50 = arith.constant 50 : index
    %277 = memref.load %arg2[%c50] : memref<60xf32, #tpu.memory_space<smem>>
    %278 = vector.broadcast %277 : f32 to vector<26x26xf32>
    %279 = arith.mulf %278, %4 : vector<26x26xf32>
    %280 = arith.addf %276, %279 : vector<26x26xf32>
    %c51 = arith.constant 51 : index
    %281 = memref.load %arg2[%c51] : memref<60xf32, #tpu.memory_space<smem>>
    %282 = vector.broadcast %281 : f32 to vector<26x26xf32>
    %283 = arith.mulf %282, %5 : vector<26x26xf32>
    %284 = arith.addf %280, %283 : vector<26x26xf32>
    %c52 = arith.constant 52 : index
    %285 = memref.load %arg2[%c52] : memref<60xf32, #tpu.memory_space<smem>>
    %286 = vector.broadcast %285 : f32 to vector<26x26xf32>
    %287 = arith.mulf %286, %8 : vector<26x26xf32>
    %288 = arith.addf %284, %287 : vector<26x26xf32>
    %c53 = arith.constant 53 : index
    %289 = memref.load %arg2[%c53] : memref<60xf32, #tpu.memory_space<smem>>
    %290 = vector.broadcast %289 : f32 to vector<26x26xf32>
    %291 = arith.mulf %290, %9 : vector<26x26xf32>
    %292 = arith.addf %288, %291 : vector<26x26xf32>
    %c54 = arith.constant 54 : index
    %293 = memref.load %arg2[%c54] : memref<60xf32, #tpu.memory_space<smem>>
    %294 = vector.broadcast %293 : f32 to vector<26x26xf32>
    %295 = arith.mulf %294, %10 : vector<26x26xf32>
    %296 = arith.addf %292, %295 : vector<26x26xf32>
    %c55 = arith.constant 55 : index
    %297 = memref.load %arg2[%c55] : memref<60xf32, #tpu.memory_space<smem>>
    %298 = vector.broadcast %297 : f32 to vector<26x26xf32>
    %299 = arith.mulf %298, %11 : vector<26x26xf32>
    %300 = arith.addf %296, %299 : vector<26x26xf32>
    %c56 = arith.constant 56 : index
    %301 = memref.load %arg2[%c56] : memref<60xf32, #tpu.memory_space<smem>>
    %302 = vector.broadcast %301 : f32 to vector<26x26xf32>
    %303 = arith.mulf %302, %14 : vector<26x26xf32>
    %304 = arith.addf %300, %303 : vector<26x26xf32>
    %c57 = arith.constant 57 : index
    %305 = memref.load %arg2[%c57] : memref<60xf32, #tpu.memory_space<smem>>
    %306 = vector.broadcast %305 : f32 to vector<26x26xf32>
    %307 = arith.mulf %306, %15 : vector<26x26xf32>
    %308 = arith.addf %304, %307 : vector<26x26xf32>
    %c58 = arith.constant 58 : index
    %309 = memref.load %arg2[%c58] : memref<60xf32, #tpu.memory_space<smem>>
    %310 = vector.broadcast %309 : f32 to vector<26x26xf32>
    %311 = arith.mulf %310, %16 : vector<26x26xf32>
    %312 = arith.addf %308, %311 : vector<26x26xf32>
    %c59 = arith.constant 59 : index
    %313 = memref.load %arg2[%c59] : memref<60xf32, #tpu.memory_space<smem>>
    %314 = vector.broadcast %313 : f32 to vector<26x26xf32>
    %315 = arith.mulf %314, %17 : vector<26x26xf32>
    %316 = arith.addf %312, %315 : vector<26x26xf32>
    %c4_36 = arith.constant 4 : index
    %317 = memref.load %arg3[%c4_36] : memref<5xf32, #tpu.memory_space<smem>>
    %318 = vector.broadcast %317 : f32 to vector<26x26xf32>
    %319 = arith.addf %316, %318 : vector<26x26xf32>
    %cst_37 = arith.constant 0.000000e+00 : f32
    %320 = vector.broadcast %cst_37 : f32 to vector<26x26xf32>
    %321 = arith.maximumf %319, %320 : vector<26x26xf32>
    %322 = vector.extract_strided_slice %321 {offsets = [0, 0], sizes = [26, 25], strides = [1, 1]} : vector<26x26xf32> to vector<26x25xf32>
    %323 = vector.extract_strided_slice %321 {offsets = [0, 1], sizes = [26, 25], strides = [1, 1]} : vector<26x26xf32> to vector<26x25xf32>
    %324 = arith.maximumf %322, %323 : vector<26x25xf32>
    %325 = vector.extract_strided_slice %324 {offsets = [0, 0], sizes = [25, 25], strides = [1, 1]} : vector<26x25xf32> to vector<25x25xf32>
    %326 = vector.extract_strided_slice %324 {offsets = [1, 0], sizes = [25, 25], strides = [1, 1]} : vector<26x25xf32> to vector<25x25xf32>
    %327 = arith.maximumf %325, %326 : vector<25x25xf32>
    %cst_38 = arith.constant dense<0.000000e+00> : vector<13x25xf32>
    %328 = tpu.matmul %18, %327, %cst_38 {dimension_numbers = #tpu.dot_dimension_numbers<[1], [0], [0], [1], [0, 0, 1, 1], [], []>} : vector<13x25xf32>, vector<25x25xf32>, vector<13x25xf32> -> vector<13x25xf32>
    %cst_39 = arith.constant dense<0.000000e+00> : vector<13x13xf32>
    %329 = tpu.matmul %328, %19, %cst_39 {dimension_numbers = #tpu.dot_dimension_numbers<[1], [0], [0], [1], [0, 0, 1, 1], [], []>} : vector<13x25xf32>, vector<25x13xf32>, vector<13x13xf32> -> vector<13x13xf32>
    %330 = vector.extract_strided_slice %81 {offsets = [0, 0], sizes = [12, 12], strides = [1, 1]} : vector<13x13xf32> to vector<12x12xf32>
    %331 = vector.extract_strided_slice %81 {offsets = [0, 1], sizes = [12, 12], strides = [1, 1]} : vector<13x13xf32> to vector<12x12xf32>
    %332 = vector.extract_strided_slice %81 {offsets = [1, 0], sizes = [12, 12], strides = [1, 1]} : vector<13x13xf32> to vector<12x12xf32>
    %333 = vector.extract_strided_slice %81 {offsets = [1, 1], sizes = [12, 12], strides = [1, 1]} : vector<13x13xf32> to vector<12x12xf32>
    %334 = vector.extract_strided_slice %143 {offsets = [0, 0], sizes = [12, 12], strides = [1, 1]} : vector<13x13xf32> to vector<12x12xf32>
    %335 = vector.extract_strided_slice %143 {offsets = [0, 1], sizes = [12, 12], strides = [1, 1]} : vector<13x13xf32> to vector<12x12xf32>
    %336 = vector.extract_strided_slice %143 {offsets = [1, 0], sizes = [12, 12], strides = [1, 1]} : vector<13x13xf32> to vector<12x12xf32>
    %337 = vector.extract_strided_slice %143 {offsets = [1, 1], sizes = [12, 12], strides = [1, 1]} : vector<13x13xf32> to vector<12x12xf32>
    %338 = vector.extract_strided_slice %205 {offsets = [0, 0], sizes = [12, 12], strides = [1, 1]} : vector<13x13xf32> to vector<12x12xf32>
    %339 = vector.extract_strided_slice %205 {offsets = [0, 1], sizes = [12, 12], strides = [1, 1]} : vector<13x13xf32> to vector<12x12xf32>
    %340 = vector.extract_strided_slice %205 {offsets = [1, 0], sizes = [12, 12], strides = [1, 1]} : vector<13x13xf32> to vector<12x12xf32>
    %341 = vector.extract_strided_slice %205 {offsets = [1, 1], sizes = [12, 12], strides = [1, 1]} : vector<13x13xf32> to vector<12x12xf32>
    %342 = vector.extract_strided_slice %267 {offsets = [0, 0], sizes = [12, 12], strides = [1, 1]} : vector<13x13xf32> to vector<12x12xf32>
    %343 = vector.extract_strided_slice %267 {offsets = [0, 1], sizes = [12, 12], strides = [1, 1]} : vector<13x13xf32> to vector<12x12xf32>
    %344 = vector.extract_strided_slice %267 {offsets = [1, 0], sizes = [12, 12], strides = [1, 1]} : vector<13x13xf32> to vector<12x12xf32>
    %345 = vector.extract_strided_slice %267 {offsets = [1, 1], sizes = [12, 12], strides = [1, 1]} : vector<13x13xf32> to vector<12x12xf32>
    %346 = vector.extract_strided_slice %329 {offsets = [0, 0], sizes = [12, 12], strides = [1, 1]} : vector<13x13xf32> to vector<12x12xf32>
    %347 = vector.extract_strided_slice %329 {offsets = [0, 1], sizes = [12, 12], strides = [1, 1]} : vector<13x13xf32> to vector<12x12xf32>
    %348 = vector.extract_strided_slice %329 {offsets = [1, 0], sizes = [12, 12], strides = [1, 1]} : vector<13x13xf32> to vector<12x12xf32>
    %349 = vector.extract_strided_slice %329 {offsets = [1, 1], sizes = [12, 12], strides = [1, 1]} : vector<13x13xf32> to vector<12x12xf32>
    %c0_40 = arith.constant 0 : index
    %c0_41 = arith.constant 0 : index
    %350 = vector.load %arg9[%c0_40, %c0_41] : memref<11x6xf32, #tpu.memory_space<vmem>>, vector<11x6xf32>
    %cst_42 = arith.constant 0.000000e+00 : f32
    %351 = vector.broadcast %cst_42 : f32 to vector<60x6xf32>
    %cst_43 = arith.constant 0.000000e+00 : f32
    %352 = vector.broadcast %cst_43 : f32 to vector<12x12xf32>
    %c0_44 = arith.constant 0 : index
    %353 = memref.load %arg4[%c0_44] : memref<200xf32, #tpu.memory_space<smem>>
    %354 = vector.broadcast %353 : f32 to vector<12x12xf32>
    %355 = arith.mulf %354, %330 : vector<12x12xf32>
    %356 = arith.addf %352, %355 : vector<12x12xf32>
    %c1_45 = arith.constant 1 : index
    %357 = memref.load %arg4[%c1_45] : memref<200xf32, #tpu.memory_space<smem>>
    %358 = vector.broadcast %357 : f32 to vector<12x12xf32>
    %359 = arith.mulf %358, %331 : vector<12x12xf32>
    %360 = arith.addf %356, %359 : vector<12x12xf32>
    %c2_46 = arith.constant 2 : index
    %361 = memref.load %arg4[%c2_46] : memref<200xf32, #tpu.memory_space<smem>>
    %362 = vector.broadcast %361 : f32 to vector<12x12xf32>
    %363 = arith.mulf %362, %332 : vector<12x12xf32>
    %364 = arith.addf %360, %363 : vector<12x12xf32>
    %c3_47 = arith.constant 3 : index
    %365 = memref.load %arg4[%c3_47] : memref<200xf32, #tpu.memory_space<smem>>
    %366 = vector.broadcast %365 : f32 to vector<12x12xf32>
    %367 = arith.mulf %366, %333 : vector<12x12xf32>
    %368 = arith.addf %364, %367 : vector<12x12xf32>
    %c4_48 = arith.constant 4 : index
    %369 = memref.load %arg4[%c4_48] : memref<200xf32, #tpu.memory_space<smem>>
    %370 = vector.broadcast %369 : f32 to vector<12x12xf32>
    %371 = arith.mulf %370, %334 : vector<12x12xf32>
    %372 = arith.addf %368, %371 : vector<12x12xf32>
    %c5_49 = arith.constant 5 : index
    %373 = memref.load %arg4[%c5_49] : memref<200xf32, #tpu.memory_space<smem>>
    %374 = vector.broadcast %373 : f32 to vector<12x12xf32>
    %375 = arith.mulf %374, %335 : vector<12x12xf32>
    %376 = arith.addf %372, %375 : vector<12x12xf32>
    %c6_50 = arith.constant 6 : index
    %377 = memref.load %arg4[%c6_50] : memref<200xf32, #tpu.memory_space<smem>>
    %378 = vector.broadcast %377 : f32 to vector<12x12xf32>
    %379 = arith.mulf %378, %336 : vector<12x12xf32>
    %380 = arith.addf %376, %379 : vector<12x12xf32>
    %c7_51 = arith.constant 7 : index
    %381 = memref.load %arg4[%c7_51] : memref<200xf32, #tpu.memory_space<smem>>
    %382 = vector.broadcast %381 : f32 to vector<12x12xf32>
    %383 = arith.mulf %382, %337 : vector<12x12xf32>
    %384 = arith.addf %380, %383 : vector<12x12xf32>
    %c8_52 = arith.constant 8 : index
    %385 = memref.load %arg4[%c8_52] : memref<200xf32, #tpu.memory_space<smem>>
    %386 = vector.broadcast %385 : f32 to vector<12x12xf32>
    %387 = arith.mulf %386, %338 : vector<12x12xf32>
    %388 = arith.addf %384, %387 : vector<12x12xf32>
    %c9_53 = arith.constant 9 : index
    %389 = memref.load %arg4[%c9_53] : memref<200xf32, #tpu.memory_space<smem>>
    %390 = vector.broadcast %389 : f32 to vector<12x12xf32>
    %391 = arith.mulf %390, %339 : vector<12x12xf32>
    %392 = arith.addf %388, %391 : vector<12x12xf32>
    %c10_54 = arith.constant 10 : index
    %393 = memref.load %arg4[%c10_54] : memref<200xf32, #tpu.memory_space<smem>>
    %394 = vector.broadcast %393 : f32 to vector<12x12xf32>
    %395 = arith.mulf %394, %340 : vector<12x12xf32>
    %396 = arith.addf %392, %395 : vector<12x12xf32>
    %c11_55 = arith.constant 11 : index
    %397 = memref.load %arg4[%c11_55] : memref<200xf32, #tpu.memory_space<smem>>
    %398 = vector.broadcast %397 : f32 to vector<12x12xf32>
    %399 = arith.mulf %398, %341 : vector<12x12xf32>
    %400 = arith.addf %396, %399 : vector<12x12xf32>
    %c12_56 = arith.constant 12 : index
    %401 = memref.load %arg4[%c12_56] : memref<200xf32, #tpu.memory_space<smem>>
    %402 = vector.broadcast %401 : f32 to vector<12x12xf32>
    %403 = arith.mulf %402, %342 : vector<12x12xf32>
    %404 = arith.addf %400, %403 : vector<12x12xf32>
    %c13_57 = arith.constant 13 : index
    %405 = memref.load %arg4[%c13_57] : memref<200xf32, #tpu.memory_space<smem>>
    %406 = vector.broadcast %405 : f32 to vector<12x12xf32>
    %407 = arith.mulf %406, %343 : vector<12x12xf32>
    %408 = arith.addf %404, %407 : vector<12x12xf32>
    %c14_58 = arith.constant 14 : index
    %409 = memref.load %arg4[%c14_58] : memref<200xf32, #tpu.memory_space<smem>>
    %410 = vector.broadcast %409 : f32 to vector<12x12xf32>
    %411 = arith.mulf %410, %344 : vector<12x12xf32>
    %412 = arith.addf %408, %411 : vector<12x12xf32>
    %c15_59 = arith.constant 15 : index
    %413 = memref.load %arg4[%c15_59] : memref<200xf32, #tpu.memory_space<smem>>
    %414 = vector.broadcast %413 : f32 to vector<12x12xf32>
    %415 = arith.mulf %414, %345 : vector<12x12xf32>
    %416 = arith.addf %412, %415 : vector<12x12xf32>
    %c16_60 = arith.constant 16 : index
    %417 = memref.load %arg4[%c16_60] : memref<200xf32, #tpu.memory_space<smem>>
    %418 = vector.broadcast %417 : f32 to vector<12x12xf32>
    %419 = arith.mulf %418, %346 : vector<12x12xf32>
    %420 = arith.addf %416, %419 : vector<12x12xf32>
    %c17_61 = arith.constant 17 : index
    %421 = memref.load %arg4[%c17_61] : memref<200xf32, #tpu.memory_space<smem>>
    %422 = vector.broadcast %421 : f32 to vector<12x12xf32>
    %423 = arith.mulf %422, %347 : vector<12x12xf32>
    %424 = arith.addf %420, %423 : vector<12x12xf32>
    %c18_62 = arith.constant 18 : index
    %425 = memref.load %arg4[%c18_62] : memref<200xf32, #tpu.memory_space<smem>>
    %426 = vector.broadcast %425 : f32 to vector<12x12xf32>
    %427 = arith.mulf %426, %348 : vector<12x12xf32>
    %428 = arith.addf %424, %427 : vector<12x12xf32>
    %c19_63 = arith.constant 19 : index
    %429 = memref.load %arg4[%c19_63] : memref<200xf32, #tpu.memory_space<smem>>
    %430 = vector.broadcast %429 : f32 to vector<12x12xf32>
    %431 = arith.mulf %430, %349 : vector<12x12xf32>
    %432 = arith.addf %428, %431 : vector<12x12xf32>
    %c0_64 = arith.constant 0 : index
    %433 = memref.load %arg5[%c0_64] : memref<10xf32, #tpu.memory_space<smem>>
    %434 = vector.broadcast %433 : f32 to vector<12x12xf32>
    %435 = arith.addf %432, %434 : vector<12x12xf32>
    %cst_65 = arith.constant 0.000000e+00 : f32
    %436 = vector.broadcast %cst_65 : f32 to vector<12x12xf32>
    %437 = arith.maximumf %435, %436 : vector<12x12xf32>
    %438 = vector.extract_strided_slice %437 {offsets = [0, 0], sizes = [12, 11], strides = [1, 1]} : vector<12x12xf32> to vector<12x11xf32>
    %439 = vector.extract_strided_slice %437 {offsets = [0, 1], sizes = [12, 11], strides = [1, 1]} : vector<12x12xf32> to vector<12x11xf32>
    %440 = arith.maximumf %438, %439 : vector<12x11xf32>
    %441 = vector.extract_strided_slice %440 {offsets = [0, 0], sizes = [11, 11], strides = [1, 1]} : vector<12x11xf32> to vector<11x11xf32>
    %442 = vector.extract_strided_slice %440 {offsets = [1, 0], sizes = [11, 11], strides = [1, 1]} : vector<12x11xf32> to vector<11x11xf32>
    %443 = arith.maximumf %441, %442 : vector<11x11xf32>
    %c0_66 = arith.constant 0 : index
    %c0_67 = arith.constant 0 : index
    %c0_68 = arith.constant 0 : index
    %444 = vector.load %arg8[%c0_66, %c0_67, %c0_68] : memref<10x60x11xf32, #tpu.memory_space<vmem>>, vector<1x60x11xf32>
    %445 = vector.shape_cast %444 : vector<1x60x11xf32> to vector<60x11xf32>
    %cst_69 = arith.constant dense<0.000000e+00> : vector<60x11xf32>
    %446 = tpu.matmul %445, %443, %cst_69 {dimension_numbers = #tpu.dot_dimension_numbers<[1], [0], [0], [1], [0, 0, 1, 1], [], []>} : vector<60x11xf32>, vector<11x11xf32>, vector<60x11xf32> -> vector<60x11xf32>
    %cst_70 = arith.constant dense<0.000000e+00> : vector<60x6xf32>
    %447 = tpu.matmul %446, %350, %cst_70 {dimension_numbers = #tpu.dot_dimension_numbers<[1], [0], [0], [1], [0, 0, 1, 1], [], []>} : vector<60x11xf32>, vector<11x6xf32>, vector<60x6xf32> -> vector<60x6xf32>
    %448 = arith.addf %351, %447 : vector<60x6xf32>
    %cst_71 = arith.constant 0.000000e+00 : f32
    %449 = vector.broadcast %cst_71 : f32 to vector<12x12xf32>
    %c20_72 = arith.constant 20 : index
    %450 = memref.load %arg4[%c20_72] : memref<200xf32, #tpu.memory_space<smem>>
    %451 = vector.broadcast %450 : f32 to vector<12x12xf32>
    %452 = arith.mulf %451, %330 : vector<12x12xf32>
    %453 = arith.addf %449, %452 : vector<12x12xf32>
    %c21_73 = arith.constant 21 : index
    %454 = memref.load %arg4[%c21_73] : memref<200xf32, #tpu.memory_space<smem>>
    %455 = vector.broadcast %454 : f32 to vector<12x12xf32>
    %456 = arith.mulf %455, %331 : vector<12x12xf32>
    %457 = arith.addf %453, %456 : vector<12x12xf32>
    %c22_74 = arith.constant 22 : index
    %458 = memref.load %arg4[%c22_74] : memref<200xf32, #tpu.memory_space<smem>>
    %459 = vector.broadcast %458 : f32 to vector<12x12xf32>
    %460 = arith.mulf %459, %332 : vector<12x12xf32>
    %461 = arith.addf %457, %460 : vector<12x12xf32>
    %c23_75 = arith.constant 23 : index
    %462 = memref.load %arg4[%c23_75] : memref<200xf32, #tpu.memory_space<smem>>
    %463 = vector.broadcast %462 : f32 to vector<12x12xf32>
    %464 = arith.mulf %463, %333 : vector<12x12xf32>
    %465 = arith.addf %461, %464 : vector<12x12xf32>
    %c24_76 = arith.constant 24 : index
    %466 = memref.load %arg4[%c24_76] : memref<200xf32, #tpu.memory_space<smem>>
    %467 = vector.broadcast %466 : f32 to vector<12x12xf32>
    %468 = arith.mulf %467, %334 : vector<12x12xf32>
    %469 = arith.addf %465, %468 : vector<12x12xf32>
    %c25_77 = arith.constant 25 : index
    %470 = memref.load %arg4[%c25_77] : memref<200xf32, #tpu.memory_space<smem>>
    %471 = vector.broadcast %470 : f32 to vector<12x12xf32>
    %472 = arith.mulf %471, %335 : vector<12x12xf32>
    %473 = arith.addf %469, %472 : vector<12x12xf32>
    %c26_78 = arith.constant 26 : index
    %474 = memref.load %arg4[%c26_78] : memref<200xf32, #tpu.memory_space<smem>>
    %475 = vector.broadcast %474 : f32 to vector<12x12xf32>
    %476 = arith.mulf %475, %336 : vector<12x12xf32>
    %477 = arith.addf %473, %476 : vector<12x12xf32>
    %c27_79 = arith.constant 27 : index
    %478 = memref.load %arg4[%c27_79] : memref<200xf32, #tpu.memory_space<smem>>
    %479 = vector.broadcast %478 : f32 to vector<12x12xf32>
    %480 = arith.mulf %479, %337 : vector<12x12xf32>
    %481 = arith.addf %477, %480 : vector<12x12xf32>
    %c28_80 = arith.constant 28 : index
    %482 = memref.load %arg4[%c28_80] : memref<200xf32, #tpu.memory_space<smem>>
    %483 = vector.broadcast %482 : f32 to vector<12x12xf32>
    %484 = arith.mulf %483, %338 : vector<12x12xf32>
    %485 = arith.addf %481, %484 : vector<12x12xf32>
    %c29_81 = arith.constant 29 : index
    %486 = memref.load %arg4[%c29_81] : memref<200xf32, #tpu.memory_space<smem>>
    %487 = vector.broadcast %486 : f32 to vector<12x12xf32>
    %488 = arith.mulf %487, %339 : vector<12x12xf32>
    %489 = arith.addf %485, %488 : vector<12x12xf32>
    %c30_82 = arith.constant 30 : index
    %490 = memref.load %arg4[%c30_82] : memref<200xf32, #tpu.memory_space<smem>>
    %491 = vector.broadcast %490 : f32 to vector<12x12xf32>
    %492 = arith.mulf %491, %340 : vector<12x12xf32>
    %493 = arith.addf %489, %492 : vector<12x12xf32>
    %c31_83 = arith.constant 31 : index
    %494 = memref.load %arg4[%c31_83] : memref<200xf32, #tpu.memory_space<smem>>
    %495 = vector.broadcast %494 : f32 to vector<12x12xf32>
    %496 = arith.mulf %495, %341 : vector<12x12xf32>
    %497 = arith.addf %493, %496 : vector<12x12xf32>
    %c32_84 = arith.constant 32 : index
    %498 = memref.load %arg4[%c32_84] : memref<200xf32, #tpu.memory_space<smem>>
    %499 = vector.broadcast %498 : f32 to vector<12x12xf32>
    %500 = arith.mulf %499, %342 : vector<12x12xf32>
    %501 = arith.addf %497, %500 : vector<12x12xf32>
    %c33_85 = arith.constant 33 : index
    %502 = memref.load %arg4[%c33_85] : memref<200xf32, #tpu.memory_space<smem>>
    %503 = vector.broadcast %502 : f32 to vector<12x12xf32>
    %504 = arith.mulf %503, %343 : vector<12x12xf32>
    %505 = arith.addf %501, %504 : vector<12x12xf32>
    %c34_86 = arith.constant 34 : index
    %506 = memref.load %arg4[%c34_86] : memref<200xf32, #tpu.memory_space<smem>>
    %507 = vector.broadcast %506 : f32 to vector<12x12xf32>
    %508 = arith.mulf %507, %344 : vector<12x12xf32>
    %509 = arith.addf %505, %508 : vector<12x12xf32>
    %c35_87 = arith.constant 35 : index
    %510 = memref.load %arg4[%c35_87] : memref<200xf32, #tpu.memory_space<smem>>
    %511 = vector.broadcast %510 : f32 to vector<12x12xf32>
    %512 = arith.mulf %511, %345 : vector<12x12xf32>
    %513 = arith.addf %509, %512 : vector<12x12xf32>
    %c36_88 = arith.constant 36 : index
    %514 = memref.load %arg4[%c36_88] : memref<200xf32, #tpu.memory_space<smem>>
    %515 = vector.broadcast %514 : f32 to vector<12x12xf32>
    %516 = arith.mulf %515, %346 : vector<12x12xf32>
    %517 = arith.addf %513, %516 : vector<12x12xf32>
    %c37_89 = arith.constant 37 : index
    %518 = memref.load %arg4[%c37_89] : memref<200xf32, #tpu.memory_space<smem>>
    %519 = vector.broadcast %518 : f32 to vector<12x12xf32>
    %520 = arith.mulf %519, %347 : vector<12x12xf32>
    %521 = arith.addf %517, %520 : vector<12x12xf32>
    %c38_90 = arith.constant 38 : index
    %522 = memref.load %arg4[%c38_90] : memref<200xf32, #tpu.memory_space<smem>>
    %523 = vector.broadcast %522 : f32 to vector<12x12xf32>
    %524 = arith.mulf %523, %348 : vector<12x12xf32>
    %525 = arith.addf %521, %524 : vector<12x12xf32>
    %c39_91 = arith.constant 39 : index
    %526 = memref.load %arg4[%c39_91] : memref<200xf32, #tpu.memory_space<smem>>
    %527 = vector.broadcast %526 : f32 to vector<12x12xf32>
    %528 = arith.mulf %527, %349 : vector<12x12xf32>
    %529 = arith.addf %525, %528 : vector<12x12xf32>
    %c1_92 = arith.constant 1 : index
    %530 = memref.load %arg5[%c1_92] : memref<10xf32, #tpu.memory_space<smem>>
    %531 = vector.broadcast %530 : f32 to vector<12x12xf32>
    %532 = arith.addf %529, %531 : vector<12x12xf32>
    %cst_93 = arith.constant 0.000000e+00 : f32
    %533 = vector.broadcast %cst_93 : f32 to vector<12x12xf32>
    %534 = arith.maximumf %532, %533 : vector<12x12xf32>
    %535 = vector.extract_strided_slice %534 {offsets = [0, 0], sizes = [12, 11], strides = [1, 1]} : vector<12x12xf32> to vector<12x11xf32>
    %536 = vector.extract_strided_slice %534 {offsets = [0, 1], sizes = [12, 11], strides = [1, 1]} : vector<12x12xf32> to vector<12x11xf32>
    %537 = arith.maximumf %535, %536 : vector<12x11xf32>
    %538 = vector.extract_strided_slice %537 {offsets = [0, 0], sizes = [11, 11], strides = [1, 1]} : vector<12x11xf32> to vector<11x11xf32>
    %539 = vector.extract_strided_slice %537 {offsets = [1, 0], sizes = [11, 11], strides = [1, 1]} : vector<12x11xf32> to vector<11x11xf32>
    %540 = arith.maximumf %538, %539 : vector<11x11xf32>
    %c1_94 = arith.constant 1 : index
    %c0_95 = arith.constant 0 : index
    %c0_96 = arith.constant 0 : index
    %541 = vector.load %arg8[%c1_94, %c0_95, %c0_96] : memref<10x60x11xf32, #tpu.memory_space<vmem>>, vector<1x60x11xf32>
    %542 = vector.shape_cast %541 : vector<1x60x11xf32> to vector<60x11xf32>
    %cst_97 = arith.constant dense<0.000000e+00> : vector<60x11xf32>
    %543 = tpu.matmul %542, %540, %cst_97 {dimension_numbers = #tpu.dot_dimension_numbers<[1], [0], [0], [1], [0, 0, 1, 1], [], []>} : vector<60x11xf32>, vector<11x11xf32>, vector<60x11xf32> -> vector<60x11xf32>
    %cst_98 = arith.constant dense<0.000000e+00> : vector<60x6xf32>
    %544 = tpu.matmul %543, %350, %cst_98 {dimension_numbers = #tpu.dot_dimension_numbers<[1], [0], [0], [1], [0, 0, 1, 1], [], []>} : vector<60x11xf32>, vector<11x6xf32>, vector<60x6xf32> -> vector<60x6xf32>
    %545 = arith.addf %448, %544 : vector<60x6xf32>
    %cst_99 = arith.constant 0.000000e+00 : f32
    %546 = vector.broadcast %cst_99 : f32 to vector<12x12xf32>
    %c40_100 = arith.constant 40 : index
    %547 = memref.load %arg4[%c40_100] : memref<200xf32, #tpu.memory_space<smem>>
    %548 = vector.broadcast %547 : f32 to vector<12x12xf32>
    %549 = arith.mulf %548, %330 : vector<12x12xf32>
    %550 = arith.addf %546, %549 : vector<12x12xf32>
    %c41_101 = arith.constant 41 : index
    %551 = memref.load %arg4[%c41_101] : memref<200xf32, #tpu.memory_space<smem>>
    %552 = vector.broadcast %551 : f32 to vector<12x12xf32>
    %553 = arith.mulf %552, %331 : vector<12x12xf32>
    %554 = arith.addf %550, %553 : vector<12x12xf32>
    %c42_102 = arith.constant 42 : index
    %555 = memref.load %arg4[%c42_102] : memref<200xf32, #tpu.memory_space<smem>>
    %556 = vector.broadcast %555 : f32 to vector<12x12xf32>
    %557 = arith.mulf %556, %332 : vector<12x12xf32>
    %558 = arith.addf %554, %557 : vector<12x12xf32>
    %c43_103 = arith.constant 43 : index
    %559 = memref.load %arg4[%c43_103] : memref<200xf32, #tpu.memory_space<smem>>
    %560 = vector.broadcast %559 : f32 to vector<12x12xf32>
    %561 = arith.mulf %560, %333 : vector<12x12xf32>
    %562 = arith.addf %558, %561 : vector<12x12xf32>
    %c44_104 = arith.constant 44 : index
    %563 = memref.load %arg4[%c44_104] : memref<200xf32, #tpu.memory_space<smem>>
    %564 = vector.broadcast %563 : f32 to vector<12x12xf32>
    %565 = arith.mulf %564, %334 : vector<12x12xf32>
    %566 = arith.addf %562, %565 : vector<12x12xf32>
    %c45_105 = arith.constant 45 : index
    %567 = memref.load %arg4[%c45_105] : memref<200xf32, #tpu.memory_space<smem>>
    %568 = vector.broadcast %567 : f32 to vector<12x12xf32>
    %569 = arith.mulf %568, %335 : vector<12x12xf32>
    %570 = arith.addf %566, %569 : vector<12x12xf32>
    %c46_106 = arith.constant 46 : index
    %571 = memref.load %arg4[%c46_106] : memref<200xf32, #tpu.memory_space<smem>>
    %572 = vector.broadcast %571 : f32 to vector<12x12xf32>
    %573 = arith.mulf %572, %336 : vector<12x12xf32>
    %574 = arith.addf %570, %573 : vector<12x12xf32>
    %c47_107 = arith.constant 47 : index
    %575 = memref.load %arg4[%c47_107] : memref<200xf32, #tpu.memory_space<smem>>
    %576 = vector.broadcast %575 : f32 to vector<12x12xf32>
    %577 = arith.mulf %576, %337 : vector<12x12xf32>
    %578 = arith.addf %574, %577 : vector<12x12xf32>
    %c48_108 = arith.constant 48 : index
    %579 = memref.load %arg4[%c48_108] : memref<200xf32, #tpu.memory_space<smem>>
    %580 = vector.broadcast %579 : f32 to vector<12x12xf32>
    %581 = arith.mulf %580, %338 : vector<12x12xf32>
    %582 = arith.addf %578, %581 : vector<12x12xf32>
    %c49_109 = arith.constant 49 : index
    %583 = memref.load %arg4[%c49_109] : memref<200xf32, #tpu.memory_space<smem>>
    %584 = vector.broadcast %583 : f32 to vector<12x12xf32>
    %585 = arith.mulf %584, %339 : vector<12x12xf32>
    %586 = arith.addf %582, %585 : vector<12x12xf32>
    %c50_110 = arith.constant 50 : index
    %587 = memref.load %arg4[%c50_110] : memref<200xf32, #tpu.memory_space<smem>>
    %588 = vector.broadcast %587 : f32 to vector<12x12xf32>
    %589 = arith.mulf %588, %340 : vector<12x12xf32>
    %590 = arith.addf %586, %589 : vector<12x12xf32>
    %c51_111 = arith.constant 51 : index
    %591 = memref.load %arg4[%c51_111] : memref<200xf32, #tpu.memory_space<smem>>
    %592 = vector.broadcast %591 : f32 to vector<12x12xf32>
    %593 = arith.mulf %592, %341 : vector<12x12xf32>
    %594 = arith.addf %590, %593 : vector<12x12xf32>
    %c52_112 = arith.constant 52 : index
    %595 = memref.load %arg4[%c52_112] : memref<200xf32, #tpu.memory_space<smem>>
    %596 = vector.broadcast %595 : f32 to vector<12x12xf32>
    %597 = arith.mulf %596, %342 : vector<12x12xf32>
    %598 = arith.addf %594, %597 : vector<12x12xf32>
    %c53_113 = arith.constant 53 : index
    %599 = memref.load %arg4[%c53_113] : memref<200xf32, #tpu.memory_space<smem>>
    %600 = vector.broadcast %599 : f32 to vector<12x12xf32>
    %601 = arith.mulf %600, %343 : vector<12x12xf32>
    %602 = arith.addf %598, %601 : vector<12x12xf32>
    %c54_114 = arith.constant 54 : index
    %603 = memref.load %arg4[%c54_114] : memref<200xf32, #tpu.memory_space<smem>>
    %604 = vector.broadcast %603 : f32 to vector<12x12xf32>
    %605 = arith.mulf %604, %344 : vector<12x12xf32>
    %606 = arith.addf %602, %605 : vector<12x12xf32>
    %c55_115 = arith.constant 55 : index
    %607 = memref.load %arg4[%c55_115] : memref<200xf32, #tpu.memory_space<smem>>
    %608 = vector.broadcast %607 : f32 to vector<12x12xf32>
    %609 = arith.mulf %608, %345 : vector<12x12xf32>
    %610 = arith.addf %606, %609 : vector<12x12xf32>
    %c56_116 = arith.constant 56 : index
    %611 = memref.load %arg4[%c56_116] : memref<200xf32, #tpu.memory_space<smem>>
    %612 = vector.broadcast %611 : f32 to vector<12x12xf32>
    %613 = arith.mulf %612, %346 : vector<12x12xf32>
    %614 = arith.addf %610, %613 : vector<12x12xf32>
    %c57_117 = arith.constant 57 : index
    %615 = memref.load %arg4[%c57_117] : memref<200xf32, #tpu.memory_space<smem>>
    %616 = vector.broadcast %615 : f32 to vector<12x12xf32>
    %617 = arith.mulf %616, %347 : vector<12x12xf32>
    %618 = arith.addf %614, %617 : vector<12x12xf32>
    %c58_118 = arith.constant 58 : index
    %619 = memref.load %arg4[%c58_118] : memref<200xf32, #tpu.memory_space<smem>>
    %620 = vector.broadcast %619 : f32 to vector<12x12xf32>
    %621 = arith.mulf %620, %348 : vector<12x12xf32>
    %622 = arith.addf %618, %621 : vector<12x12xf32>
    %c59_119 = arith.constant 59 : index
    %623 = memref.load %arg4[%c59_119] : memref<200xf32, #tpu.memory_space<smem>>
    %624 = vector.broadcast %623 : f32 to vector<12x12xf32>
    %625 = arith.mulf %624, %349 : vector<12x12xf32>
    %626 = arith.addf %622, %625 : vector<12x12xf32>
    %c2_120 = arith.constant 2 : index
    %627 = memref.load %arg5[%c2_120] : memref<10xf32, #tpu.memory_space<smem>>
    %628 = vector.broadcast %627 : f32 to vector<12x12xf32>
    %629 = arith.addf %626, %628 : vector<12x12xf32>
    %cst_121 = arith.constant 0.000000e+00 : f32
    %630 = vector.broadcast %cst_121 : f32 to vector<12x12xf32>
    %631 = arith.maximumf %629, %630 : vector<12x12xf32>
    %632 = vector.extract_strided_slice %631 {offsets = [0, 0], sizes = [12, 11], strides = [1, 1]} : vector<12x12xf32> to vector<12x11xf32>
    %633 = vector.extract_strided_slice %631 {offsets = [0, 1], sizes = [12, 11], strides = [1, 1]} : vector<12x12xf32> to vector<12x11xf32>
    %634 = arith.maximumf %632, %633 : vector<12x11xf32>
    %635 = vector.extract_strided_slice %634 {offsets = [0, 0], sizes = [11, 11], strides = [1, 1]} : vector<12x11xf32> to vector<11x11xf32>
    %636 = vector.extract_strided_slice %634 {offsets = [1, 0], sizes = [11, 11], strides = [1, 1]} : vector<12x11xf32> to vector<11x11xf32>
    %637 = arith.maximumf %635, %636 : vector<11x11xf32>
    %c2_122 = arith.constant 2 : index
    %c0_123 = arith.constant 0 : index
    %c0_124 = arith.constant 0 : index
    %638 = vector.load %arg8[%c2_122, %c0_123, %c0_124] : memref<10x60x11xf32, #tpu.memory_space<vmem>>, vector<1x60x11xf32>
    %639 = vector.shape_cast %638 : vector<1x60x11xf32> to vector<60x11xf32>
    %cst_125 = arith.constant dense<0.000000e+00> : vector<60x11xf32>
    %640 = tpu.matmul %639, %637, %cst_125 {dimension_numbers = #tpu.dot_dimension_numbers<[1], [0], [0], [1], [0, 0, 1, 1], [], []>} : vector<60x11xf32>, vector<11x11xf32>, vector<60x11xf32> -> vector<60x11xf32>
    %cst_126 = arith.constant dense<0.000000e+00> : vector<60x6xf32>
    %641 = tpu.matmul %640, %350, %cst_126 {dimension_numbers = #tpu.dot_dimension_numbers<[1], [0], [0], [1], [0, 0, 1, 1], [], []>} : vector<60x11xf32>, vector<11x6xf32>, vector<60x6xf32> -> vector<60x6xf32>
    %642 = arith.addf %545, %641 : vector<60x6xf32>
    %cst_127 = arith.constant 0.000000e+00 : f32
    %643 = vector.broadcast %cst_127 : f32 to vector<12x12xf32>
    %c60 = arith.constant 60 : index
    %644 = memref.load %arg4[%c60] : memref<200xf32, #tpu.memory_space<smem>>
    %645 = vector.broadcast %644 : f32 to vector<12x12xf32>
    %646 = arith.mulf %645, %330 : vector<12x12xf32>
    %647 = arith.addf %643, %646 : vector<12x12xf32>
    %c61 = arith.constant 61 : index
    %648 = memref.load %arg4[%c61] : memref<200xf32, #tpu.memory_space<smem>>
    %649 = vector.broadcast %648 : f32 to vector<12x12xf32>
    %650 = arith.mulf %649, %331 : vector<12x12xf32>
    %651 = arith.addf %647, %650 : vector<12x12xf32>
    %c62 = arith.constant 62 : index
    %652 = memref.load %arg4[%c62] : memref<200xf32, #tpu.memory_space<smem>>
    %653 = vector.broadcast %652 : f32 to vector<12x12xf32>
    %654 = arith.mulf %653, %332 : vector<12x12xf32>
    %655 = arith.addf %651, %654 : vector<12x12xf32>
    %c63 = arith.constant 63 : index
    %656 = memref.load %arg4[%c63] : memref<200xf32, #tpu.memory_space<smem>>
    %657 = vector.broadcast %656 : f32 to vector<12x12xf32>
    %658 = arith.mulf %657, %333 : vector<12x12xf32>
    %659 = arith.addf %655, %658 : vector<12x12xf32>
    %c64 = arith.constant 64 : index
    %660 = memref.load %arg4[%c64] : memref<200xf32, #tpu.memory_space<smem>>
    %661 = vector.broadcast %660 : f32 to vector<12x12xf32>
    %662 = arith.mulf %661, %334 : vector<12x12xf32>
    %663 = arith.addf %659, %662 : vector<12x12xf32>
    %c65 = arith.constant 65 : index
    %664 = memref.load %arg4[%c65] : memref<200xf32, #tpu.memory_space<smem>>
    %665 = vector.broadcast %664 : f32 to vector<12x12xf32>
    %666 = arith.mulf %665, %335 : vector<12x12xf32>
    %667 = arith.addf %663, %666 : vector<12x12xf32>
    %c66 = arith.constant 66 : index
    %668 = memref.load %arg4[%c66] : memref<200xf32, #tpu.memory_space<smem>>
    %669 = vector.broadcast %668 : f32 to vector<12x12xf32>
    %670 = arith.mulf %669, %336 : vector<12x12xf32>
    %671 = arith.addf %667, %670 : vector<12x12xf32>
    %c67 = arith.constant 67 : index
    %672 = memref.load %arg4[%c67] : memref<200xf32, #tpu.memory_space<smem>>
    %673 = vector.broadcast %672 : f32 to vector<12x12xf32>
    %674 = arith.mulf %673, %337 : vector<12x12xf32>
    %675 = arith.addf %671, %674 : vector<12x12xf32>
    %c68 = arith.constant 68 : index
    %676 = memref.load %arg4[%c68] : memref<200xf32, #tpu.memory_space<smem>>
    %677 = vector.broadcast %676 : f32 to vector<12x12xf32>
    %678 = arith.mulf %677, %338 : vector<12x12xf32>
    %679 = arith.addf %675, %678 : vector<12x12xf32>
    %c69 = arith.constant 69 : index
    %680 = memref.load %arg4[%c69] : memref<200xf32, #tpu.memory_space<smem>>
    %681 = vector.broadcast %680 : f32 to vector<12x12xf32>
    %682 = arith.mulf %681, %339 : vector<12x12xf32>
    %683 = arith.addf %679, %682 : vector<12x12xf32>
    %c70 = arith.constant 70 : index
    %684 = memref.load %arg4[%c70] : memref<200xf32, #tpu.memory_space<smem>>
    %685 = vector.broadcast %684 : f32 to vector<12x12xf32>
    %686 = arith.mulf %685, %340 : vector<12x12xf32>
    %687 = arith.addf %683, %686 : vector<12x12xf32>
    %c71 = arith.constant 71 : index
    %688 = memref.load %arg4[%c71] : memref<200xf32, #tpu.memory_space<smem>>
    %689 = vector.broadcast %688 : f32 to vector<12x12xf32>
    %690 = arith.mulf %689, %341 : vector<12x12xf32>
    %691 = arith.addf %687, %690 : vector<12x12xf32>
    %c72 = arith.constant 72 : index
    %692 = memref.load %arg4[%c72] : memref<200xf32, #tpu.memory_space<smem>>
    %693 = vector.broadcast %692 : f32 to vector<12x12xf32>
    %694 = arith.mulf %693, %342 : vector<12x12xf32>
    %695 = arith.addf %691, %694 : vector<12x12xf32>
    %c73 = arith.constant 73 : index
    %696 = memref.load %arg4[%c73] : memref<200xf32, #tpu.memory_space<smem>>
    %697 = vector.broadcast %696 : f32 to vector<12x12xf32>
    %698 = arith.mulf %697, %343 : vector<12x12xf32>
    %699 = arith.addf %695, %698 : vector<12x12xf32>
    %c74 = arith.constant 74 : index
    %700 = memref.load %arg4[%c74] : memref<200xf32, #tpu.memory_space<smem>>
    %701 = vector.broadcast %700 : f32 to vector<12x12xf32>
    %702 = arith.mulf %701, %344 : vector<12x12xf32>
    %703 = arith.addf %699, %702 : vector<12x12xf32>
    %c75 = arith.constant 75 : index
    %704 = memref.load %arg4[%c75] : memref<200xf32, #tpu.memory_space<smem>>
    %705 = vector.broadcast %704 : f32 to vector<12x12xf32>
    %706 = arith.mulf %705, %345 : vector<12x12xf32>
    %707 = arith.addf %703, %706 : vector<12x12xf32>
    %c76 = arith.constant 76 : index
    %708 = memref.load %arg4[%c76] : memref<200xf32, #tpu.memory_space<smem>>
    %709 = vector.broadcast %708 : f32 to vector<12x12xf32>
    %710 = arith.mulf %709, %346 : vector<12x12xf32>
    %711 = arith.addf %707, %710 : vector<12x12xf32>
    %c77 = arith.constant 77 : index
    %712 = memref.load %arg4[%c77] : memref<200xf32, #tpu.memory_space<smem>>
    %713 = vector.broadcast %712 : f32 to vector<12x12xf32>
    %714 = arith.mulf %713, %347 : vector<12x12xf32>
    %715 = arith.addf %711, %714 : vector<12x12xf32>
    %c78 = arith.constant 78 : index
    %716 = memref.load %arg4[%c78] : memref<200xf32, #tpu.memory_space<smem>>
    %717 = vector.broadcast %716 : f32 to vector<12x12xf32>
    %718 = arith.mulf %717, %348 : vector<12x12xf32>
    %719 = arith.addf %715, %718 : vector<12x12xf32>
    %c79 = arith.constant 79 : index
    %720 = memref.load %arg4[%c79] : memref<200xf32, #tpu.memory_space<smem>>
    %721 = vector.broadcast %720 : f32 to vector<12x12xf32>
    %722 = arith.mulf %721, %349 : vector<12x12xf32>
    %723 = arith.addf %719, %722 : vector<12x12xf32>
    %c3_128 = arith.constant 3 : index
    %724 = memref.load %arg5[%c3_128] : memref<10xf32, #tpu.memory_space<smem>>
    %725 = vector.broadcast %724 : f32 to vector<12x12xf32>
    %726 = arith.addf %723, %725 : vector<12x12xf32>
    %cst_129 = arith.constant 0.000000e+00 : f32
    %727 = vector.broadcast %cst_129 : f32 to vector<12x12xf32>
    %728 = arith.maximumf %726, %727 : vector<12x12xf32>
    %729 = vector.extract_strided_slice %728 {offsets = [0, 0], sizes = [12, 11], strides = [1, 1]} : vector<12x12xf32> to vector<12x11xf32>
    %730 = vector.extract_strided_slice %728 {offsets = [0, 1], sizes = [12, 11], strides = [1, 1]} : vector<12x12xf32> to vector<12x11xf32>
    %731 = arith.maximumf %729, %730 : vector<12x11xf32>
    %732 = vector.extract_strided_slice %731 {offsets = [0, 0], sizes = [11, 11], strides = [1, 1]} : vector<12x11xf32> to vector<11x11xf32>
    %733 = vector.extract_strided_slice %731 {offsets = [1, 0], sizes = [11, 11], strides = [1, 1]} : vector<12x11xf32> to vector<11x11xf32>
    %734 = arith.maximumf %732, %733 : vector<11x11xf32>
    %c3_130 = arith.constant 3 : index
    %c0_131 = arith.constant 0 : index
    %c0_132 = arith.constant 0 : index
    %735 = vector.load %arg8[%c3_130, %c0_131, %c0_132] : memref<10x60x11xf32, #tpu.memory_space<vmem>>, vector<1x60x11xf32>
    %736 = vector.shape_cast %735 : vector<1x60x11xf32> to vector<60x11xf32>
    %cst_133 = arith.constant dense<0.000000e+00> : vector<60x11xf32>
    %737 = tpu.matmul %736, %734, %cst_133 {dimension_numbers = #tpu.dot_dimension_numbers<[1], [0], [0], [1], [0, 0, 1, 1], [], []>} : vector<60x11xf32>, vector<11x11xf32>, vector<60x11xf32> -> vector<60x11xf32>
    %cst_134 = arith.constant dense<0.000000e+00> : vector<60x6xf32>
    %738 = tpu.matmul %737, %350, %cst_134 {dimension_numbers = #tpu.dot_dimension_numbers<[1], [0], [0], [1], [0, 0, 1, 1], [], []>} : vector<60x11xf32>, vector<11x6xf32>, vector<60x6xf32> -> vector<60x6xf32>
    %739 = arith.addf %642, %738 : vector<60x6xf32>
    %cst_135 = arith.constant 0.000000e+00 : f32
    %740 = vector.broadcast %cst_135 : f32 to vector<12x12xf32>
    %c80 = arith.constant 80 : index
    %741 = memref.load %arg4[%c80] : memref<200xf32, #tpu.memory_space<smem>>
    %742 = vector.broadcast %741 : f32 to vector<12x12xf32>
    %743 = arith.mulf %742, %330 : vector<12x12xf32>
    %744 = arith.addf %740, %743 : vector<12x12xf32>
    %c81 = arith.constant 81 : index
    %745 = memref.load %arg4[%c81] : memref<200xf32, #tpu.memory_space<smem>>
    %746 = vector.broadcast %745 : f32 to vector<12x12xf32>
    %747 = arith.mulf %746, %331 : vector<12x12xf32>
    %748 = arith.addf %744, %747 : vector<12x12xf32>
    %c82 = arith.constant 82 : index
    %749 = memref.load %arg4[%c82] : memref<200xf32, #tpu.memory_space<smem>>
    %750 = vector.broadcast %749 : f32 to vector<12x12xf32>
    %751 = arith.mulf %750, %332 : vector<12x12xf32>
    %752 = arith.addf %748, %751 : vector<12x12xf32>
    %c83 = arith.constant 83 : index
    %753 = memref.load %arg4[%c83] : memref<200xf32, #tpu.memory_space<smem>>
    %754 = vector.broadcast %753 : f32 to vector<12x12xf32>
    %755 = arith.mulf %754, %333 : vector<12x12xf32>
    %756 = arith.addf %752, %755 : vector<12x12xf32>
    %c84 = arith.constant 84 : index
    %757 = memref.load %arg4[%c84] : memref<200xf32, #tpu.memory_space<smem>>
    %758 = vector.broadcast %757 : f32 to vector<12x12xf32>
    %759 = arith.mulf %758, %334 : vector<12x12xf32>
    %760 = arith.addf %756, %759 : vector<12x12xf32>
    %c85 = arith.constant 85 : index
    %761 = memref.load %arg4[%c85] : memref<200xf32, #tpu.memory_space<smem>>
    %762 = vector.broadcast %761 : f32 to vector<12x12xf32>
    %763 = arith.mulf %762, %335 : vector<12x12xf32>
    %764 = arith.addf %760, %763 : vector<12x12xf32>
    %c86 = arith.constant 86 : index
    %765 = memref.load %arg4[%c86] : memref<200xf32, #tpu.memory_space<smem>>
    %766 = vector.broadcast %765 : f32 to vector<12x12xf32>
    %767 = arith.mulf %766, %336 : vector<12x12xf32>
    %768 = arith.addf %764, %767 : vector<12x12xf32>
    %c87 = arith.constant 87 : index
    %769 = memref.load %arg4[%c87] : memref<200xf32, #tpu.memory_space<smem>>
    %770 = vector.broadcast %769 : f32 to vector<12x12xf32>
    %771 = arith.mulf %770, %337 : vector<12x12xf32>
    %772 = arith.addf %768, %771 : vector<12x12xf32>
    %c88 = arith.constant 88 : index
    %773 = memref.load %arg4[%c88] : memref<200xf32, #tpu.memory_space<smem>>
    %774 = vector.broadcast %773 : f32 to vector<12x12xf32>
    %775 = arith.mulf %774, %338 : vector<12x12xf32>
    %776 = arith.addf %772, %775 : vector<12x12xf32>
    %c89 = arith.constant 89 : index
    %777 = memref.load %arg4[%c89] : memref<200xf32, #tpu.memory_space<smem>>
    %778 = vector.broadcast %777 : f32 to vector<12x12xf32>
    %779 = arith.mulf %778, %339 : vector<12x12xf32>
    %780 = arith.addf %776, %779 : vector<12x12xf32>
    %c90 = arith.constant 90 : index
    %781 = memref.load %arg4[%c90] : memref<200xf32, #tpu.memory_space<smem>>
    %782 = vector.broadcast %781 : f32 to vector<12x12xf32>
    %783 = arith.mulf %782, %340 : vector<12x12xf32>
    %784 = arith.addf %780, %783 : vector<12x12xf32>
    %c91 = arith.constant 91 : index
    %785 = memref.load %arg4[%c91] : memref<200xf32, #tpu.memory_space<smem>>
    %786 = vector.broadcast %785 : f32 to vector<12x12xf32>
    %787 = arith.mulf %786, %341 : vector<12x12xf32>
    %788 = arith.addf %784, %787 : vector<12x12xf32>
    %c92 = arith.constant 92 : index
    %789 = memref.load %arg4[%c92] : memref<200xf32, #tpu.memory_space<smem>>
    %790 = vector.broadcast %789 : f32 to vector<12x12xf32>
    %791 = arith.mulf %790, %342 : vector<12x12xf32>
    %792 = arith.addf %788, %791 : vector<12x12xf32>
    %c93 = arith.constant 93 : index
    %793 = memref.load %arg4[%c93] : memref<200xf32, #tpu.memory_space<smem>>
    %794 = vector.broadcast %793 : f32 to vector<12x12xf32>
    %795 = arith.mulf %794, %343 : vector<12x12xf32>
    %796 = arith.addf %792, %795 : vector<12x12xf32>
    %c94 = arith.constant 94 : index
    %797 = memref.load %arg4[%c94] : memref<200xf32, #tpu.memory_space<smem>>
    %798 = vector.broadcast %797 : f32 to vector<12x12xf32>
    %799 = arith.mulf %798, %344 : vector<12x12xf32>
    %800 = arith.addf %796, %799 : vector<12x12xf32>
    %c95 = arith.constant 95 : index
    %801 = memref.load %arg4[%c95] : memref<200xf32, #tpu.memory_space<smem>>
    %802 = vector.broadcast %801 : f32 to vector<12x12xf32>
    %803 = arith.mulf %802, %345 : vector<12x12xf32>
    %804 = arith.addf %800, %803 : vector<12x12xf32>
    %c96 = arith.constant 96 : index
    %805 = memref.load %arg4[%c96] : memref<200xf32, #tpu.memory_space<smem>>
    %806 = vector.broadcast %805 : f32 to vector<12x12xf32>
    %807 = arith.mulf %806, %346 : vector<12x12xf32>
    %808 = arith.addf %804, %807 : vector<12x12xf32>
    %c97 = arith.constant 97 : index
    %809 = memref.load %arg4[%c97] : memref<200xf32, #tpu.memory_space<smem>>
    %810 = vector.broadcast %809 : f32 to vector<12x12xf32>
    %811 = arith.mulf %810, %347 : vector<12x12xf32>
    %812 = arith.addf %808, %811 : vector<12x12xf32>
    %c98 = arith.constant 98 : index
    %813 = memref.load %arg4[%c98] : memref<200xf32, #tpu.memory_space<smem>>
    %814 = vector.broadcast %813 : f32 to vector<12x12xf32>
    %815 = arith.mulf %814, %348 : vector<12x12xf32>
    %816 = arith.addf %812, %815 : vector<12x12xf32>
    %c99 = arith.constant 99 : index
    %817 = memref.load %arg4[%c99] : memref<200xf32, #tpu.memory_space<smem>>
    %818 = vector.broadcast %817 : f32 to vector<12x12xf32>
    %819 = arith.mulf %818, %349 : vector<12x12xf32>
    %820 = arith.addf %816, %819 : vector<12x12xf32>
    %c4_136 = arith.constant 4 : index
    %821 = memref.load %arg5[%c4_136] : memref<10xf32, #tpu.memory_space<smem>>
    %822 = vector.broadcast %821 : f32 to vector<12x12xf32>
    %823 = arith.addf %820, %822 : vector<12x12xf32>
    %cst_137 = arith.constant 0.000000e+00 : f32
    %824 = vector.broadcast %cst_137 : f32 to vector<12x12xf32>
    %825 = arith.maximumf %823, %824 : vector<12x12xf32>
    %826 = vector.extract_strided_slice %825 {offsets = [0, 0], sizes = [12, 11], strides = [1, 1]} : vector<12x12xf32> to vector<12x11xf32>
    %827 = vector.extract_strided_slice %825 {offsets = [0, 1], sizes = [12, 11], strides = [1, 1]} : vector<12x12xf32> to vector<12x11xf32>
    %828 = arith.maximumf %826, %827 : vector<12x11xf32>
    %829 = vector.extract_strided_slice %828 {offsets = [0, 0], sizes = [11, 11], strides = [1, 1]} : vector<12x11xf32> to vector<11x11xf32>
    %830 = vector.extract_strided_slice %828 {offsets = [1, 0], sizes = [11, 11], strides = [1, 1]} : vector<12x11xf32> to vector<11x11xf32>
    %831 = arith.maximumf %829, %830 : vector<11x11xf32>
    %c4_138 = arith.constant 4 : index
    %c0_139 = arith.constant 0 : index
    %c0_140 = arith.constant 0 : index
    %832 = vector.load %arg8[%c4_138, %c0_139, %c0_140] : memref<10x60x11xf32, #tpu.memory_space<vmem>>, vector<1x60x11xf32>
    %833 = vector.shape_cast %832 : vector<1x60x11xf32> to vector<60x11xf32>
    %cst_141 = arith.constant dense<0.000000e+00> : vector<60x11xf32>
    %834 = tpu.matmul %833, %831, %cst_141 {dimension_numbers = #tpu.dot_dimension_numbers<[1], [0], [0], [1], [0, 0, 1, 1], [], []>} : vector<60x11xf32>, vector<11x11xf32>, vector<60x11xf32> -> vector<60x11xf32>
    %cst_142 = arith.constant dense<0.000000e+00> : vector<60x6xf32>
    %835 = tpu.matmul %834, %350, %cst_142 {dimension_numbers = #tpu.dot_dimension_numbers<[1], [0], [0], [1], [0, 0, 1, 1], [], []>} : vector<60x11xf32>, vector<11x6xf32>, vector<60x6xf32> -> vector<60x6xf32>
    %836 = arith.addf %739, %835 : vector<60x6xf32>
    %cst_143 = arith.constant 0.000000e+00 : f32
    %837 = vector.broadcast %cst_143 : f32 to vector<12x12xf32>
    %c100 = arith.constant 100 : index
    %838 = memref.load %arg4[%c100] : memref<200xf32, #tpu.memory_space<smem>>
    %839 = vector.broadcast %838 : f32 to vector<12x12xf32>
    %840 = arith.mulf %839, %330 : vector<12x12xf32>
    %841 = arith.addf %837, %840 : vector<12x12xf32>
    %c101 = arith.constant 101 : index
    %842 = memref.load %arg4[%c101] : memref<200xf32, #tpu.memory_space<smem>>
    %843 = vector.broadcast %842 : f32 to vector<12x12xf32>
    %844 = arith.mulf %843, %331 : vector<12x12xf32>
    %845 = arith.addf %841, %844 : vector<12x12xf32>
    %c102 = arith.constant 102 : index
    %846 = memref.load %arg4[%c102] : memref<200xf32, #tpu.memory_space<smem>>
    %847 = vector.broadcast %846 : f32 to vector<12x12xf32>
    %848 = arith.mulf %847, %332 : vector<12x12xf32>
    %849 = arith.addf %845, %848 : vector<12x12xf32>
    %c103 = arith.constant 103 : index
    %850 = memref.load %arg4[%c103] : memref<200xf32, #tpu.memory_space<smem>>
    %851 = vector.broadcast %850 : f32 to vector<12x12xf32>
    %852 = arith.mulf %851, %333 : vector<12x12xf32>
    %853 = arith.addf %849, %852 : vector<12x12xf32>
    %c104 = arith.constant 104 : index
    %854 = memref.load %arg4[%c104] : memref<200xf32, #tpu.memory_space<smem>>
    %855 = vector.broadcast %854 : f32 to vector<12x12xf32>
    %856 = arith.mulf %855, %334 : vector<12x12xf32>
    %857 = arith.addf %853, %856 : vector<12x12xf32>
    %c105 = arith.constant 105 : index
    %858 = memref.load %arg4[%c105] : memref<200xf32, #tpu.memory_space<smem>>
    %859 = vector.broadcast %858 : f32 to vector<12x12xf32>
    %860 = arith.mulf %859, %335 : vector<12x12xf32>
    %861 = arith.addf %857, %860 : vector<12x12xf32>
    %c106 = arith.constant 106 : index
    %862 = memref.load %arg4[%c106] : memref<200xf32, #tpu.memory_space<smem>>
    %863 = vector.broadcast %862 : f32 to vector<12x12xf32>
    %864 = arith.mulf %863, %336 : vector<12x12xf32>
    %865 = arith.addf %861, %864 : vector<12x12xf32>
    %c107 = arith.constant 107 : index
    %866 = memref.load %arg4[%c107] : memref<200xf32, #tpu.memory_space<smem>>
    %867 = vector.broadcast %866 : f32 to vector<12x12xf32>
    %868 = arith.mulf %867, %337 : vector<12x12xf32>
    %869 = arith.addf %865, %868 : vector<12x12xf32>
    %c108 = arith.constant 108 : index
    %870 = memref.load %arg4[%c108] : memref<200xf32, #tpu.memory_space<smem>>
    %871 = vector.broadcast %870 : f32 to vector<12x12xf32>
    %872 = arith.mulf %871, %338 : vector<12x12xf32>
    %873 = arith.addf %869, %872 : vector<12x12xf32>
    %c109 = arith.constant 109 : index
    %874 = memref.load %arg4[%c109] : memref<200xf32, #tpu.memory_space<smem>>
    %875 = vector.broadcast %874 : f32 to vector<12x12xf32>
    %876 = arith.mulf %875, %339 : vector<12x12xf32>
    %877 = arith.addf %873, %876 : vector<12x12xf32>
    %c110 = arith.constant 110 : index
    %878 = memref.load %arg4[%c110] : memref<200xf32, #tpu.memory_space<smem>>
    %879 = vector.broadcast %878 : f32 to vector<12x12xf32>
    %880 = arith.mulf %879, %340 : vector<12x12xf32>
    %881 = arith.addf %877, %880 : vector<12x12xf32>
    %c111 = arith.constant 111 : index
    %882 = memref.load %arg4[%c111] : memref<200xf32, #tpu.memory_space<smem>>
    %883 = vector.broadcast %882 : f32 to vector<12x12xf32>
    %884 = arith.mulf %883, %341 : vector<12x12xf32>
    %885 = arith.addf %881, %884 : vector<12x12xf32>
    %c112 = arith.constant 112 : index
    %886 = memref.load %arg4[%c112] : memref<200xf32, #tpu.memory_space<smem>>
    %887 = vector.broadcast %886 : f32 to vector<12x12xf32>
    %888 = arith.mulf %887, %342 : vector<12x12xf32>
    %889 = arith.addf %885, %888 : vector<12x12xf32>
    %c113 = arith.constant 113 : index
    %890 = memref.load %arg4[%c113] : memref<200xf32, #tpu.memory_space<smem>>
    %891 = vector.broadcast %890 : f32 to vector<12x12xf32>
    %892 = arith.mulf %891, %343 : vector<12x12xf32>
    %893 = arith.addf %889, %892 : vector<12x12xf32>
    %c114 = arith.constant 114 : index
    %894 = memref.load %arg4[%c114] : memref<200xf32, #tpu.memory_space<smem>>
    %895 = vector.broadcast %894 : f32 to vector<12x12xf32>
    %896 = arith.mulf %895, %344 : vector<12x12xf32>
    %897 = arith.addf %893, %896 : vector<12x12xf32>
    %c115 = arith.constant 115 : index
    %898 = memref.load %arg4[%c115] : memref<200xf32, #tpu.memory_space<smem>>
    %899 = vector.broadcast %898 : f32 to vector<12x12xf32>
    %900 = arith.mulf %899, %345 : vector<12x12xf32>
    %901 = arith.addf %897, %900 : vector<12x12xf32>
    %c116 = arith.constant 116 : index
    %902 = memref.load %arg4[%c116] : memref<200xf32, #tpu.memory_space<smem>>
    %903 = vector.broadcast %902 : f32 to vector<12x12xf32>
    %904 = arith.mulf %903, %346 : vector<12x12xf32>
    %905 = arith.addf %901, %904 : vector<12x12xf32>
    %c117 = arith.constant 117 : index
    %906 = memref.load %arg4[%c117] : memref<200xf32, #tpu.memory_space<smem>>
    %907 = vector.broadcast %906 : f32 to vector<12x12xf32>
    %908 = arith.mulf %907, %347 : vector<12x12xf32>
    %909 = arith.addf %905, %908 : vector<12x12xf32>
    %c118 = arith.constant 118 : index
    %910 = memref.load %arg4[%c118] : memref<200xf32, #tpu.memory_space<smem>>
    %911 = vector.broadcast %910 : f32 to vector<12x12xf32>
    %912 = arith.mulf %911, %348 : vector<12x12xf32>
    %913 = arith.addf %909, %912 : vector<12x12xf32>
    %c119 = arith.constant 119 : index
    %914 = memref.load %arg4[%c119] : memref<200xf32, #tpu.memory_space<smem>>
    %915 = vector.broadcast %914 : f32 to vector<12x12xf32>
    %916 = arith.mulf %915, %349 : vector<12x12xf32>
    %917 = arith.addf %913, %916 : vector<12x12xf32>
    %c5_144 = arith.constant 5 : index
    %918 = memref.load %arg5[%c5_144] : memref<10xf32, #tpu.memory_space<smem>>
    %919 = vector.broadcast %918 : f32 to vector<12x12xf32>
    %920 = arith.addf %917, %919 : vector<12x12xf32>
    %cst_145 = arith.constant 0.000000e+00 : f32
    %921 = vector.broadcast %cst_145 : f32 to vector<12x12xf32>
    %922 = arith.maximumf %920, %921 : vector<12x12xf32>
    %923 = vector.extract_strided_slice %922 {offsets = [0, 0], sizes = [12, 11], strides = [1, 1]} : vector<12x12xf32> to vector<12x11xf32>
    %924 = vector.extract_strided_slice %922 {offsets = [0, 1], sizes = [12, 11], strides = [1, 1]} : vector<12x12xf32> to vector<12x11xf32>
    %925 = arith.maximumf %923, %924 : vector<12x11xf32>
    %926 = vector.extract_strided_slice %925 {offsets = [0, 0], sizes = [11, 11], strides = [1, 1]} : vector<12x11xf32> to vector<11x11xf32>
    %927 = vector.extract_strided_slice %925 {offsets = [1, 0], sizes = [11, 11], strides = [1, 1]} : vector<12x11xf32> to vector<11x11xf32>
    %928 = arith.maximumf %926, %927 : vector<11x11xf32>
    %c5_146 = arith.constant 5 : index
    %c0_147 = arith.constant 0 : index
    %c0_148 = arith.constant 0 : index
    %929 = vector.load %arg8[%c5_146, %c0_147, %c0_148] : memref<10x60x11xf32, #tpu.memory_space<vmem>>, vector<1x60x11xf32>
    %930 = vector.shape_cast %929 : vector<1x60x11xf32> to vector<60x11xf32>
    %cst_149 = arith.constant dense<0.000000e+00> : vector<60x11xf32>
    %931 = tpu.matmul %930, %928, %cst_149 {dimension_numbers = #tpu.dot_dimension_numbers<[1], [0], [0], [1], [0, 0, 1, 1], [], []>} : vector<60x11xf32>, vector<11x11xf32>, vector<60x11xf32> -> vector<60x11xf32>
    %cst_150 = arith.constant dense<0.000000e+00> : vector<60x6xf32>
    %932 = tpu.matmul %931, %350, %cst_150 {dimension_numbers = #tpu.dot_dimension_numbers<[1], [0], [0], [1], [0, 0, 1, 1], [], []>} : vector<60x11xf32>, vector<11x6xf32>, vector<60x6xf32> -> vector<60x6xf32>
    %933 = arith.addf %836, %932 : vector<60x6xf32>
    %cst_151 = arith.constant 0.000000e+00 : f32
    %934 = vector.broadcast %cst_151 : f32 to vector<12x12xf32>
    %c120 = arith.constant 120 : index
    %935 = memref.load %arg4[%c120] : memref<200xf32, #tpu.memory_space<smem>>
    %936 = vector.broadcast %935 : f32 to vector<12x12xf32>
    %937 = arith.mulf %936, %330 : vector<12x12xf32>
    %938 = arith.addf %934, %937 : vector<12x12xf32>
    %c121 = arith.constant 121 : index
    %939 = memref.load %arg4[%c121] : memref<200xf32, #tpu.memory_space<smem>>
    %940 = vector.broadcast %939 : f32 to vector<12x12xf32>
    %941 = arith.mulf %940, %331 : vector<12x12xf32>
    %942 = arith.addf %938, %941 : vector<12x12xf32>
    %c122 = arith.constant 122 : index
    %943 = memref.load %arg4[%c122] : memref<200xf32, #tpu.memory_space<smem>>
    %944 = vector.broadcast %943 : f32 to vector<12x12xf32>
    %945 = arith.mulf %944, %332 : vector<12x12xf32>
    %946 = arith.addf %942, %945 : vector<12x12xf32>
    %c123 = arith.constant 123 : index
    %947 = memref.load %arg4[%c123] : memref<200xf32, #tpu.memory_space<smem>>
    %948 = vector.broadcast %947 : f32 to vector<12x12xf32>
    %949 = arith.mulf %948, %333 : vector<12x12xf32>
    %950 = arith.addf %946, %949 : vector<12x12xf32>
    %c124 = arith.constant 124 : index
    %951 = memref.load %arg4[%c124] : memref<200xf32, #tpu.memory_space<smem>>
    %952 = vector.broadcast %951 : f32 to vector<12x12xf32>
    %953 = arith.mulf %952, %334 : vector<12x12xf32>
    %954 = arith.addf %950, %953 : vector<12x12xf32>
    %c125 = arith.constant 125 : index
    %955 = memref.load %arg4[%c125] : memref<200xf32, #tpu.memory_space<smem>>
    %956 = vector.broadcast %955 : f32 to vector<12x12xf32>
    %957 = arith.mulf %956, %335 : vector<12x12xf32>
    %958 = arith.addf %954, %957 : vector<12x12xf32>
    %c126 = arith.constant 126 : index
    %959 = memref.load %arg4[%c126] : memref<200xf32, #tpu.memory_space<smem>>
    %960 = vector.broadcast %959 : f32 to vector<12x12xf32>
    %961 = arith.mulf %960, %336 : vector<12x12xf32>
    %962 = arith.addf %958, %961 : vector<12x12xf32>
    %c127 = arith.constant 127 : index
    %963 = memref.load %arg4[%c127] : memref<200xf32, #tpu.memory_space<smem>>
    %964 = vector.broadcast %963 : f32 to vector<12x12xf32>
    %965 = arith.mulf %964, %337 : vector<12x12xf32>
    %966 = arith.addf %962, %965 : vector<12x12xf32>
    %c128 = arith.constant 128 : index
    %967 = memref.load %arg4[%c128] : memref<200xf32, #tpu.memory_space<smem>>
    %968 = vector.broadcast %967 : f32 to vector<12x12xf32>
    %969 = arith.mulf %968, %338 : vector<12x12xf32>
    %970 = arith.addf %966, %969 : vector<12x12xf32>
    %c129 = arith.constant 129 : index
    %971 = memref.load %arg4[%c129] : memref<200xf32, #tpu.memory_space<smem>>
    %972 = vector.broadcast %971 : f32 to vector<12x12xf32>
    %973 = arith.mulf %972, %339 : vector<12x12xf32>
    %974 = arith.addf %970, %973 : vector<12x12xf32>
    %c130 = arith.constant 130 : index
    %975 = memref.load %arg4[%c130] : memref<200xf32, #tpu.memory_space<smem>>
    %976 = vector.broadcast %975 : f32 to vector<12x12xf32>
    %977 = arith.mulf %976, %340 : vector<12x12xf32>
    %978 = arith.addf %974, %977 : vector<12x12xf32>
    %c131 = arith.constant 131 : index
    %979 = memref.load %arg4[%c131] : memref<200xf32, #tpu.memory_space<smem>>
    %980 = vector.broadcast %979 : f32 to vector<12x12xf32>
    %981 = arith.mulf %980, %341 : vector<12x12xf32>
    %982 = arith.addf %978, %981 : vector<12x12xf32>
    %c132 = arith.constant 132 : index
    %983 = memref.load %arg4[%c132] : memref<200xf32, #tpu.memory_space<smem>>
    %984 = vector.broadcast %983 : f32 to vector<12x12xf32>
    %985 = arith.mulf %984, %342 : vector<12x12xf32>
    %986 = arith.addf %982, %985 : vector<12x12xf32>
    %c133 = arith.constant 133 : index
    %987 = memref.load %arg4[%c133] : memref<200xf32, #tpu.memory_space<smem>>
    %988 = vector.broadcast %987 : f32 to vector<12x12xf32>
    %989 = arith.mulf %988, %343 : vector<12x12xf32>
    %990 = arith.addf %986, %989 : vector<12x12xf32>
    %c134 = arith.constant 134 : index
    %991 = memref.load %arg4[%c134] : memref<200xf32, #tpu.memory_space<smem>>
    %992 = vector.broadcast %991 : f32 to vector<12x12xf32>
    %993 = arith.mulf %992, %344 : vector<12x12xf32>
    %994 = arith.addf %990, %993 : vector<12x12xf32>
    %c135 = arith.constant 135 : index
    %995 = memref.load %arg4[%c135] : memref<200xf32, #tpu.memory_space<smem>>
    %996 = vector.broadcast %995 : f32 to vector<12x12xf32>
    %997 = arith.mulf %996, %345 : vector<12x12xf32>
    %998 = arith.addf %994, %997 : vector<12x12xf32>
    %c136 = arith.constant 136 : index
    %999 = memref.load %arg4[%c136] : memref<200xf32, #tpu.memory_space<smem>>
    %1000 = vector.broadcast %999 : f32 to vector<12x12xf32>
    %1001 = arith.mulf %1000, %346 : vector<12x12xf32>
    %1002 = arith.addf %998, %1001 : vector<12x12xf32>
    %c137 = arith.constant 137 : index
    %1003 = memref.load %arg4[%c137] : memref<200xf32, #tpu.memory_space<smem>>
    %1004 = vector.broadcast %1003 : f32 to vector<12x12xf32>
    %1005 = arith.mulf %1004, %347 : vector<12x12xf32>
    %1006 = arith.addf %1002, %1005 : vector<12x12xf32>
    %c138 = arith.constant 138 : index
    %1007 = memref.load %arg4[%c138] : memref<200xf32, #tpu.memory_space<smem>>
    %1008 = vector.broadcast %1007 : f32 to vector<12x12xf32>
    %1009 = arith.mulf %1008, %348 : vector<12x12xf32>
    %1010 = arith.addf %1006, %1009 : vector<12x12xf32>
    %c139 = arith.constant 139 : index
    %1011 = memref.load %arg4[%c139] : memref<200xf32, #tpu.memory_space<smem>>
    %1012 = vector.broadcast %1011 : f32 to vector<12x12xf32>
    %1013 = arith.mulf %1012, %349 : vector<12x12xf32>
    %1014 = arith.addf %1010, %1013 : vector<12x12xf32>
    %c6_152 = arith.constant 6 : index
    %1015 = memref.load %arg5[%c6_152] : memref<10xf32, #tpu.memory_space<smem>>
    %1016 = vector.broadcast %1015 : f32 to vector<12x12xf32>
    %1017 = arith.addf %1014, %1016 : vector<12x12xf32>
    %cst_153 = arith.constant 0.000000e+00 : f32
    %1018 = vector.broadcast %cst_153 : f32 to vector<12x12xf32>
    %1019 = arith.maximumf %1017, %1018 : vector<12x12xf32>
    %1020 = vector.extract_strided_slice %1019 {offsets = [0, 0], sizes = [12, 11], strides = [1, 1]} : vector<12x12xf32> to vector<12x11xf32>
    %1021 = vector.extract_strided_slice %1019 {offsets = [0, 1], sizes = [12, 11], strides = [1, 1]} : vector<12x12xf32> to vector<12x11xf32>
    %1022 = arith.maximumf %1020, %1021 : vector<12x11xf32>
    %1023 = vector.extract_strided_slice %1022 {offsets = [0, 0], sizes = [11, 11], strides = [1, 1]} : vector<12x11xf32> to vector<11x11xf32>
    %1024 = vector.extract_strided_slice %1022 {offsets = [1, 0], sizes = [11, 11], strides = [1, 1]} : vector<12x11xf32> to vector<11x11xf32>
    %1025 = arith.maximumf %1023, %1024 : vector<11x11xf32>
    %c6_154 = arith.constant 6 : index
    %c0_155 = arith.constant 0 : index
    %c0_156 = arith.constant 0 : index
    %1026 = vector.load %arg8[%c6_154, %c0_155, %c0_156] : memref<10x60x11xf32, #tpu.memory_space<vmem>>, vector<1x60x11xf32>
    %1027 = vector.shape_cast %1026 : vector<1x60x11xf32> to vector<60x11xf32>
    %cst_157 = arith.constant dense<0.000000e+00> : vector<60x11xf32>
    %1028 = tpu.matmul %1027, %1025, %cst_157 {dimension_numbers = #tpu.dot_dimension_numbers<[1], [0], [0], [1], [0, 0, 1, 1], [], []>} : vector<60x11xf32>, vector<11x11xf32>, vector<60x11xf32> -> vector<60x11xf32>
    %cst_158 = arith.constant dense<0.000000e+00> : vector<60x6xf32>
    %1029 = tpu.matmul %1028, %350, %cst_158 {dimension_numbers = #tpu.dot_dimension_numbers<[1], [0], [0], [1], [0, 0, 1, 1], [], []>} : vector<60x11xf32>, vector<11x6xf32>, vector<60x6xf32> -> vector<60x6xf32>
    %1030 = arith.addf %933, %1029 : vector<60x6xf32>
    %cst_159 = arith.constant 0.000000e+00 : f32
    %1031 = vector.broadcast %cst_159 : f32 to vector<12x12xf32>
    %c140 = arith.constant 140 : index
    %1032 = memref.load %arg4[%c140] : memref<200xf32, #tpu.memory_space<smem>>
    %1033 = vector.broadcast %1032 : f32 to vector<12x12xf32>
    %1034 = arith.mulf %1033, %330 : vector<12x12xf32>
    %1035 = arith.addf %1031, %1034 : vector<12x12xf32>
    %c141 = arith.constant 141 : index
    %1036 = memref.load %arg4[%c141] : memref<200xf32, #tpu.memory_space<smem>>
    %1037 = vector.broadcast %1036 : f32 to vector<12x12xf32>
    %1038 = arith.mulf %1037, %331 : vector<12x12xf32>
    %1039 = arith.addf %1035, %1038 : vector<12x12xf32>
    %c142 = arith.constant 142 : index
    %1040 = memref.load %arg4[%c142] : memref<200xf32, #tpu.memory_space<smem>>
    %1041 = vector.broadcast %1040 : f32 to vector<12x12xf32>
    %1042 = arith.mulf %1041, %332 : vector<12x12xf32>
    %1043 = arith.addf %1039, %1042 : vector<12x12xf32>
    %c143 = arith.constant 143 : index
    %1044 = memref.load %arg4[%c143] : memref<200xf32, #tpu.memory_space<smem>>
    %1045 = vector.broadcast %1044 : f32 to vector<12x12xf32>
    %1046 = arith.mulf %1045, %333 : vector<12x12xf32>
    %1047 = arith.addf %1043, %1046 : vector<12x12xf32>
    %c144 = arith.constant 144 : index
    %1048 = memref.load %arg4[%c144] : memref<200xf32, #tpu.memory_space<smem>>
    %1049 = vector.broadcast %1048 : f32 to vector<12x12xf32>
    %1050 = arith.mulf %1049, %334 : vector<12x12xf32>
    %1051 = arith.addf %1047, %1050 : vector<12x12xf32>
    %c145 = arith.constant 145 : index
    %1052 = memref.load %arg4[%c145] : memref<200xf32, #tpu.memory_space<smem>>
    %1053 = vector.broadcast %1052 : f32 to vector<12x12xf32>
    %1054 = arith.mulf %1053, %335 : vector<12x12xf32>
    %1055 = arith.addf %1051, %1054 : vector<12x12xf32>
    %c146 = arith.constant 146 : index
    %1056 = memref.load %arg4[%c146] : memref<200xf32, #tpu.memory_space<smem>>
    %1057 = vector.broadcast %1056 : f32 to vector<12x12xf32>
    %1058 = arith.mulf %1057, %336 : vector<12x12xf32>
    %1059 = arith.addf %1055, %1058 : vector<12x12xf32>
    %c147 = arith.constant 147 : index
    %1060 = memref.load %arg4[%c147] : memref<200xf32, #tpu.memory_space<smem>>
    %1061 = vector.broadcast %1060 : f32 to vector<12x12xf32>
    %1062 = arith.mulf %1061, %337 : vector<12x12xf32>
    %1063 = arith.addf %1059, %1062 : vector<12x12xf32>
    %c148 = arith.constant 148 : index
    %1064 = memref.load %arg4[%c148] : memref<200xf32, #tpu.memory_space<smem>>
    %1065 = vector.broadcast %1064 : f32 to vector<12x12xf32>
    %1066 = arith.mulf %1065, %338 : vector<12x12xf32>
    %1067 = arith.addf %1063, %1066 : vector<12x12xf32>
    %c149 = arith.constant 149 : index
    %1068 = memref.load %arg4[%c149] : memref<200xf32, #tpu.memory_space<smem>>
    %1069 = vector.broadcast %1068 : f32 to vector<12x12xf32>
    %1070 = arith.mulf %1069, %339 : vector<12x12xf32>
    %1071 = arith.addf %1067, %1070 : vector<12x12xf32>
    %c150 = arith.constant 150 : index
    %1072 = memref.load %arg4[%c150] : memref<200xf32, #tpu.memory_space<smem>>
    %1073 = vector.broadcast %1072 : f32 to vector<12x12xf32>
    %1074 = arith.mulf %1073, %340 : vector<12x12xf32>
    %1075 = arith.addf %1071, %1074 : vector<12x12xf32>
    %c151 = arith.constant 151 : index
    %1076 = memref.load %arg4[%c151] : memref<200xf32, #tpu.memory_space<smem>>
    %1077 = vector.broadcast %1076 : f32 to vector<12x12xf32>
    %1078 = arith.mulf %1077, %341 : vector<12x12xf32>
    %1079 = arith.addf %1075, %1078 : vector<12x12xf32>
    %c152 = arith.constant 152 : index
    %1080 = memref.load %arg4[%c152] : memref<200xf32, #tpu.memory_space<smem>>
    %1081 = vector.broadcast %1080 : f32 to vector<12x12xf32>
    %1082 = arith.mulf %1081, %342 : vector<12x12xf32>
    %1083 = arith.addf %1079, %1082 : vector<12x12xf32>
    %c153 = arith.constant 153 : index
    %1084 = memref.load %arg4[%c153] : memref<200xf32, #tpu.memory_space<smem>>
    %1085 = vector.broadcast %1084 : f32 to vector<12x12xf32>
    %1086 = arith.mulf %1085, %343 : vector<12x12xf32>
    %1087 = arith.addf %1083, %1086 : vector<12x12xf32>
    %c154 = arith.constant 154 : index
    %1088 = memref.load %arg4[%c154] : memref<200xf32, #tpu.memory_space<smem>>
    %1089 = vector.broadcast %1088 : f32 to vector<12x12xf32>
    %1090 = arith.mulf %1089, %344 : vector<12x12xf32>
    %1091 = arith.addf %1087, %1090 : vector<12x12xf32>
    %c155 = arith.constant 155 : index
    %1092 = memref.load %arg4[%c155] : memref<200xf32, #tpu.memory_space<smem>>
    %1093 = vector.broadcast %1092 : f32 to vector<12x12xf32>
    %1094 = arith.mulf %1093, %345 : vector<12x12xf32>
    %1095 = arith.addf %1091, %1094 : vector<12x12xf32>
    %c156 = arith.constant 156 : index
    %1096 = memref.load %arg4[%c156] : memref<200xf32, #tpu.memory_space<smem>>
    %1097 = vector.broadcast %1096 : f32 to vector<12x12xf32>
    %1098 = arith.mulf %1097, %346 : vector<12x12xf32>
    %1099 = arith.addf %1095, %1098 : vector<12x12xf32>
    %c157 = arith.constant 157 : index
    %1100 = memref.load %arg4[%c157] : memref<200xf32, #tpu.memory_space<smem>>
    %1101 = vector.broadcast %1100 : f32 to vector<12x12xf32>
    %1102 = arith.mulf %1101, %347 : vector<12x12xf32>
    %1103 = arith.addf %1099, %1102 : vector<12x12xf32>
    %c158 = arith.constant 158 : index
    %1104 = memref.load %arg4[%c158] : memref<200xf32, #tpu.memory_space<smem>>
    %1105 = vector.broadcast %1104 : f32 to vector<12x12xf32>
    %1106 = arith.mulf %1105, %348 : vector<12x12xf32>
    %1107 = arith.addf %1103, %1106 : vector<12x12xf32>
    %c159 = arith.constant 159 : index
    %1108 = memref.load %arg4[%c159] : memref<200xf32, #tpu.memory_space<smem>>
    %1109 = vector.broadcast %1108 : f32 to vector<12x12xf32>
    %1110 = arith.mulf %1109, %349 : vector<12x12xf32>
    %1111 = arith.addf %1107, %1110 : vector<12x12xf32>
    %c7_160 = arith.constant 7 : index
    %1112 = memref.load %arg5[%c7_160] : memref<10xf32, #tpu.memory_space<smem>>
    %1113 = vector.broadcast %1112 : f32 to vector<12x12xf32>
    %1114 = arith.addf %1111, %1113 : vector<12x12xf32>
    %cst_161 = arith.constant 0.000000e+00 : f32
    %1115 = vector.broadcast %cst_161 : f32 to vector<12x12xf32>
    %1116 = arith.maximumf %1114, %1115 : vector<12x12xf32>
    %1117 = vector.extract_strided_slice %1116 {offsets = [0, 0], sizes = [12, 11], strides = [1, 1]} : vector<12x12xf32> to vector<12x11xf32>
    %1118 = vector.extract_strided_slice %1116 {offsets = [0, 1], sizes = [12, 11], strides = [1, 1]} : vector<12x12xf32> to vector<12x11xf32>
    %1119 = arith.maximumf %1117, %1118 : vector<12x11xf32>
    %1120 = vector.extract_strided_slice %1119 {offsets = [0, 0], sizes = [11, 11], strides = [1, 1]} : vector<12x11xf32> to vector<11x11xf32>
    %1121 = vector.extract_strided_slice %1119 {offsets = [1, 0], sizes = [11, 11], strides = [1, 1]} : vector<12x11xf32> to vector<11x11xf32>
    %1122 = arith.maximumf %1120, %1121 : vector<11x11xf32>
    %c7_162 = arith.constant 7 : index
    %c0_163 = arith.constant 0 : index
    %c0_164 = arith.constant 0 : index
    %1123 = vector.load %arg8[%c7_162, %c0_163, %c0_164] : memref<10x60x11xf32, #tpu.memory_space<vmem>>, vector<1x60x11xf32>
    %1124 = vector.shape_cast %1123 : vector<1x60x11xf32> to vector<60x11xf32>
    %cst_165 = arith.constant dense<0.000000e+00> : vector<60x11xf32>
    %1125 = tpu.matmul %1124, %1122, %cst_165 {dimension_numbers = #tpu.dot_dimension_numbers<[1], [0], [0], [1], [0, 0, 1, 1], [], []>} : vector<60x11xf32>, vector<11x11xf32>, vector<60x11xf32> -> vector<60x11xf32>
    %cst_166 = arith.constant dense<0.000000e+00> : vector<60x6xf32>
    %1126 = tpu.matmul %1125, %350, %cst_166 {dimension_numbers = #tpu.dot_dimension_numbers<[1], [0], [0], [1], [0, 0, 1, 1], [], []>} : vector<60x11xf32>, vector<11x6xf32>, vector<60x6xf32> -> vector<60x6xf32>
    %1127 = arith.addf %1030, %1126 : vector<60x6xf32>
    %cst_167 = arith.constant 0.000000e+00 : f32
    %1128 = vector.broadcast %cst_167 : f32 to vector<12x12xf32>
    %c160 = arith.constant 160 : index
    %1129 = memref.load %arg4[%c160] : memref<200xf32, #tpu.memory_space<smem>>
    %1130 = vector.broadcast %1129 : f32 to vector<12x12xf32>
    %1131 = arith.mulf %1130, %330 : vector<12x12xf32>
    %1132 = arith.addf %1128, %1131 : vector<12x12xf32>
    %c161 = arith.constant 161 : index
    %1133 = memref.load %arg4[%c161] : memref<200xf32, #tpu.memory_space<smem>>
    %1134 = vector.broadcast %1133 : f32 to vector<12x12xf32>
    %1135 = arith.mulf %1134, %331 : vector<12x12xf32>
    %1136 = arith.addf %1132, %1135 : vector<12x12xf32>
    %c162 = arith.constant 162 : index
    %1137 = memref.load %arg4[%c162] : memref<200xf32, #tpu.memory_space<smem>>
    %1138 = vector.broadcast %1137 : f32 to vector<12x12xf32>
    %1139 = arith.mulf %1138, %332 : vector<12x12xf32>
    %1140 = arith.addf %1136, %1139 : vector<12x12xf32>
    %c163 = arith.constant 163 : index
    %1141 = memref.load %arg4[%c163] : memref<200xf32, #tpu.memory_space<smem>>
    %1142 = vector.broadcast %1141 : f32 to vector<12x12xf32>
    %1143 = arith.mulf %1142, %333 : vector<12x12xf32>
    %1144 = arith.addf %1140, %1143 : vector<12x12xf32>
    %c164 = arith.constant 164 : index
    %1145 = memref.load %arg4[%c164] : memref<200xf32, #tpu.memory_space<smem>>
    %1146 = vector.broadcast %1145 : f32 to vector<12x12xf32>
    %1147 = arith.mulf %1146, %334 : vector<12x12xf32>
    %1148 = arith.addf %1144, %1147 : vector<12x12xf32>
    %c165 = arith.constant 165 : index
    %1149 = memref.load %arg4[%c165] : memref<200xf32, #tpu.memory_space<smem>>
    %1150 = vector.broadcast %1149 : f32 to vector<12x12xf32>
    %1151 = arith.mulf %1150, %335 : vector<12x12xf32>
    %1152 = arith.addf %1148, %1151 : vector<12x12xf32>
    %c166 = arith.constant 166 : index
    %1153 = memref.load %arg4[%c166] : memref<200xf32, #tpu.memory_space<smem>>
    %1154 = vector.broadcast %1153 : f32 to vector<12x12xf32>
    %1155 = arith.mulf %1154, %336 : vector<12x12xf32>
    %1156 = arith.addf %1152, %1155 : vector<12x12xf32>
    %c167 = arith.constant 167 : index
    %1157 = memref.load %arg4[%c167] : memref<200xf32, #tpu.memory_space<smem>>
    %1158 = vector.broadcast %1157 : f32 to vector<12x12xf32>
    %1159 = arith.mulf %1158, %337 : vector<12x12xf32>
    %1160 = arith.addf %1156, %1159 : vector<12x12xf32>
    %c168 = arith.constant 168 : index
    %1161 = memref.load %arg4[%c168] : memref<200xf32, #tpu.memory_space<smem>>
    %1162 = vector.broadcast %1161 : f32 to vector<12x12xf32>
    %1163 = arith.mulf %1162, %338 : vector<12x12xf32>
    %1164 = arith.addf %1160, %1163 : vector<12x12xf32>
    %c169 = arith.constant 169 : index
    %1165 = memref.load %arg4[%c169] : memref<200xf32, #tpu.memory_space<smem>>
    %1166 = vector.broadcast %1165 : f32 to vector<12x12xf32>
    %1167 = arith.mulf %1166, %339 : vector<12x12xf32>
    %1168 = arith.addf %1164, %1167 : vector<12x12xf32>
    %c170 = arith.constant 170 : index
    %1169 = memref.load %arg4[%c170] : memref<200xf32, #tpu.memory_space<smem>>
    %1170 = vector.broadcast %1169 : f32 to vector<12x12xf32>
    %1171 = arith.mulf %1170, %340 : vector<12x12xf32>
    %1172 = arith.addf %1168, %1171 : vector<12x12xf32>
    %c171 = arith.constant 171 : index
    %1173 = memref.load %arg4[%c171] : memref<200xf32, #tpu.memory_space<smem>>
    %1174 = vector.broadcast %1173 : f32 to vector<12x12xf32>
    %1175 = arith.mulf %1174, %341 : vector<12x12xf32>
    %1176 = arith.addf %1172, %1175 : vector<12x12xf32>
    %c172 = arith.constant 172 : index
    %1177 = memref.load %arg4[%c172] : memref<200xf32, #tpu.memory_space<smem>>
    %1178 = vector.broadcast %1177 : f32 to vector<12x12xf32>
    %1179 = arith.mulf %1178, %342 : vector<12x12xf32>
    %1180 = arith.addf %1176, %1179 : vector<12x12xf32>
    %c173 = arith.constant 173 : index
    %1181 = memref.load %arg4[%c173] : memref<200xf32, #tpu.memory_space<smem>>
    %1182 = vector.broadcast %1181 : f32 to vector<12x12xf32>
    %1183 = arith.mulf %1182, %343 : vector<12x12xf32>
    %1184 = arith.addf %1180, %1183 : vector<12x12xf32>
    %c174 = arith.constant 174 : index
    %1185 = memref.load %arg4[%c174] : memref<200xf32, #tpu.memory_space<smem>>
    %1186 = vector.broadcast %1185 : f32 to vector<12x12xf32>
    %1187 = arith.mulf %1186, %344 : vector<12x12xf32>
    %1188 = arith.addf %1184, %1187 : vector<12x12xf32>
    %c175 = arith.constant 175 : index
    %1189 = memref.load %arg4[%c175] : memref<200xf32, #tpu.memory_space<smem>>
    %1190 = vector.broadcast %1189 : f32 to vector<12x12xf32>
    %1191 = arith.mulf %1190, %345 : vector<12x12xf32>
    %1192 = arith.addf %1188, %1191 : vector<12x12xf32>
    %c176 = arith.constant 176 : index
    %1193 = memref.load %arg4[%c176] : memref<200xf32, #tpu.memory_space<smem>>
    %1194 = vector.broadcast %1193 : f32 to vector<12x12xf32>
    %1195 = arith.mulf %1194, %346 : vector<12x12xf32>
    %1196 = arith.addf %1192, %1195 : vector<12x12xf32>
    %c177 = arith.constant 177 : index
    %1197 = memref.load %arg4[%c177] : memref<200xf32, #tpu.memory_space<smem>>
    %1198 = vector.broadcast %1197 : f32 to vector<12x12xf32>
    %1199 = arith.mulf %1198, %347 : vector<12x12xf32>
    %1200 = arith.addf %1196, %1199 : vector<12x12xf32>
    %c178 = arith.constant 178 : index
    %1201 = memref.load %arg4[%c178] : memref<200xf32, #tpu.memory_space<smem>>
    %1202 = vector.broadcast %1201 : f32 to vector<12x12xf32>
    %1203 = arith.mulf %1202, %348 : vector<12x12xf32>
    %1204 = arith.addf %1200, %1203 : vector<12x12xf32>
    %c179 = arith.constant 179 : index
    %1205 = memref.load %arg4[%c179] : memref<200xf32, #tpu.memory_space<smem>>
    %1206 = vector.broadcast %1205 : f32 to vector<12x12xf32>
    %1207 = arith.mulf %1206, %349 : vector<12x12xf32>
    %1208 = arith.addf %1204, %1207 : vector<12x12xf32>
    %c8_168 = arith.constant 8 : index
    %1209 = memref.load %arg5[%c8_168] : memref<10xf32, #tpu.memory_space<smem>>
    %1210 = vector.broadcast %1209 : f32 to vector<12x12xf32>
    %1211 = arith.addf %1208, %1210 : vector<12x12xf32>
    %cst_169 = arith.constant 0.000000e+00 : f32
    %1212 = vector.broadcast %cst_169 : f32 to vector<12x12xf32>
    %1213 = arith.maximumf %1211, %1212 : vector<12x12xf32>
    %1214 = vector.extract_strided_slice %1213 {offsets = [0, 0], sizes = [12, 11], strides = [1, 1]} : vector<12x12xf32> to vector<12x11xf32>
    %1215 = vector.extract_strided_slice %1213 {offsets = [0, 1], sizes = [12, 11], strides = [1, 1]} : vector<12x12xf32> to vector<12x11xf32>
    %1216 = arith.maximumf %1214, %1215 : vector<12x11xf32>
    %1217 = vector.extract_strided_slice %1216 {offsets = [0, 0], sizes = [11, 11], strides = [1, 1]} : vector<12x11xf32> to vector<11x11xf32>
    %1218 = vector.extract_strided_slice %1216 {offsets = [1, 0], sizes = [11, 11], strides = [1, 1]} : vector<12x11xf32> to vector<11x11xf32>
    %1219 = arith.maximumf %1217, %1218 : vector<11x11xf32>
    %c8_170 = arith.constant 8 : index
    %c0_171 = arith.constant 0 : index
    %c0_172 = arith.constant 0 : index
    %1220 = vector.load %arg8[%c8_170, %c0_171, %c0_172] : memref<10x60x11xf32, #tpu.memory_space<vmem>>, vector<1x60x11xf32>
    %1221 = vector.shape_cast %1220 : vector<1x60x11xf32> to vector<60x11xf32>
    %cst_173 = arith.constant dense<0.000000e+00> : vector<60x11xf32>
    %1222 = tpu.matmul %1221, %1219, %cst_173 {dimension_numbers = #tpu.dot_dimension_numbers<[1], [0], [0], [1], [0, 0, 1, 1], [], []>} : vector<60x11xf32>, vector<11x11xf32>, vector<60x11xf32> -> vector<60x11xf32>
    %cst_174 = arith.constant dense<0.000000e+00> : vector<60x6xf32>
    %1223 = tpu.matmul %1222, %350, %cst_174 {dimension_numbers = #tpu.dot_dimension_numbers<[1], [0], [0], [1], [0, 0, 1, 1], [], []>} : vector<60x11xf32>, vector<11x6xf32>, vector<60x6xf32> -> vector<60x6xf32>
    %1224 = arith.addf %1127, %1223 : vector<60x6xf32>
    %cst_175 = arith.constant 0.000000e+00 : f32
    %1225 = vector.broadcast %cst_175 : f32 to vector<12x12xf32>
    %c180 = arith.constant 180 : index
    %1226 = memref.load %arg4[%c180] : memref<200xf32, #tpu.memory_space<smem>>
    %1227 = vector.broadcast %1226 : f32 to vector<12x12xf32>
    %1228 = arith.mulf %1227, %330 : vector<12x12xf32>
    %1229 = arith.addf %1225, %1228 : vector<12x12xf32>
    %c181 = arith.constant 181 : index
    %1230 = memref.load %arg4[%c181] : memref<200xf32, #tpu.memory_space<smem>>
    %1231 = vector.broadcast %1230 : f32 to vector<12x12xf32>
    %1232 = arith.mulf %1231, %331 : vector<12x12xf32>
    %1233 = arith.addf %1229, %1232 : vector<12x12xf32>
    %c182 = arith.constant 182 : index
    %1234 = memref.load %arg4[%c182] : memref<200xf32, #tpu.memory_space<smem>>
    %1235 = vector.broadcast %1234 : f32 to vector<12x12xf32>
    %1236 = arith.mulf %1235, %332 : vector<12x12xf32>
    %1237 = arith.addf %1233, %1236 : vector<12x12xf32>
    %c183 = arith.constant 183 : index
    %1238 = memref.load %arg4[%c183] : memref<200xf32, #tpu.memory_space<smem>>
    %1239 = vector.broadcast %1238 : f32 to vector<12x12xf32>
    %1240 = arith.mulf %1239, %333 : vector<12x12xf32>
    %1241 = arith.addf %1237, %1240 : vector<12x12xf32>
    %c184 = arith.constant 184 : index
    %1242 = memref.load %arg4[%c184] : memref<200xf32, #tpu.memory_space<smem>>
    %1243 = vector.broadcast %1242 : f32 to vector<12x12xf32>
    %1244 = arith.mulf %1243, %334 : vector<12x12xf32>
    %1245 = arith.addf %1241, %1244 : vector<12x12xf32>
    %c185 = arith.constant 185 : index
    %1246 = memref.load %arg4[%c185] : memref<200xf32, #tpu.memory_space<smem>>
    %1247 = vector.broadcast %1246 : f32 to vector<12x12xf32>
    %1248 = arith.mulf %1247, %335 : vector<12x12xf32>
    %1249 = arith.addf %1245, %1248 : vector<12x12xf32>
    %c186 = arith.constant 186 : index
    %1250 = memref.load %arg4[%c186] : memref<200xf32, #tpu.memory_space<smem>>
    %1251 = vector.broadcast %1250 : f32 to vector<12x12xf32>
    %1252 = arith.mulf %1251, %336 : vector<12x12xf32>
    %1253 = arith.addf %1249, %1252 : vector<12x12xf32>
    %c187 = arith.constant 187 : index
    %1254 = memref.load %arg4[%c187] : memref<200xf32, #tpu.memory_space<smem>>
    %1255 = vector.broadcast %1254 : f32 to vector<12x12xf32>
    %1256 = arith.mulf %1255, %337 : vector<12x12xf32>
    %1257 = arith.addf %1253, %1256 : vector<12x12xf32>
    %c188 = arith.constant 188 : index
    %1258 = memref.load %arg4[%c188] : memref<200xf32, #tpu.memory_space<smem>>
    %1259 = vector.broadcast %1258 : f32 to vector<12x12xf32>
    %1260 = arith.mulf %1259, %338 : vector<12x12xf32>
    %1261 = arith.addf %1257, %1260 : vector<12x12xf32>
    %c189 = arith.constant 189 : index
    %1262 = memref.load %arg4[%c189] : memref<200xf32, #tpu.memory_space<smem>>
    %1263 = vector.broadcast %1262 : f32 to vector<12x12xf32>
    %1264 = arith.mulf %1263, %339 : vector<12x12xf32>
    %1265 = arith.addf %1261, %1264 : vector<12x12xf32>
    %c190 = arith.constant 190 : index
    %1266 = memref.load %arg4[%c190] : memref<200xf32, #tpu.memory_space<smem>>
    %1267 = vector.broadcast %1266 : f32 to vector<12x12xf32>
    %1268 = arith.mulf %1267, %340 : vector<12x12xf32>
    %1269 = arith.addf %1265, %1268 : vector<12x12xf32>
    %c191 = arith.constant 191 : index
    %1270 = memref.load %arg4[%c191] : memref<200xf32, #tpu.memory_space<smem>>
    %1271 = vector.broadcast %1270 : f32 to vector<12x12xf32>
    %1272 = arith.mulf %1271, %341 : vector<12x12xf32>
    %1273 = arith.addf %1269, %1272 : vector<12x12xf32>
    %c192 = arith.constant 192 : index
    %1274 = memref.load %arg4[%c192] : memref<200xf32, #tpu.memory_space<smem>>
    %1275 = vector.broadcast %1274 : f32 to vector<12x12xf32>
    %1276 = arith.mulf %1275, %342 : vector<12x12xf32>
    %1277 = arith.addf %1273, %1276 : vector<12x12xf32>
    %c193 = arith.constant 193 : index
    %1278 = memref.load %arg4[%c193] : memref<200xf32, #tpu.memory_space<smem>>
    %1279 = vector.broadcast %1278 : f32 to vector<12x12xf32>
    %1280 = arith.mulf %1279, %343 : vector<12x12xf32>
    %1281 = arith.addf %1277, %1280 : vector<12x12xf32>
    %c194 = arith.constant 194 : index
    %1282 = memref.load %arg4[%c194] : memref<200xf32, #tpu.memory_space<smem>>
    %1283 = vector.broadcast %1282 : f32 to vector<12x12xf32>
    %1284 = arith.mulf %1283, %344 : vector<12x12xf32>
    %1285 = arith.addf %1281, %1284 : vector<12x12xf32>
    %c195 = arith.constant 195 : index
    %1286 = memref.load %arg4[%c195] : memref<200xf32, #tpu.memory_space<smem>>
    %1287 = vector.broadcast %1286 : f32 to vector<12x12xf32>
    %1288 = arith.mulf %1287, %345 : vector<12x12xf32>
    %1289 = arith.addf %1285, %1288 : vector<12x12xf32>
    %c196 = arith.constant 196 : index
    %1290 = memref.load %arg4[%c196] : memref<200xf32, #tpu.memory_space<smem>>
    %1291 = vector.broadcast %1290 : f32 to vector<12x12xf32>
    %1292 = arith.mulf %1291, %346 : vector<12x12xf32>
    %1293 = arith.addf %1289, %1292 : vector<12x12xf32>
    %c197 = arith.constant 197 : index
    %1294 = memref.load %arg4[%c197] : memref<200xf32, #tpu.memory_space<smem>>
    %1295 = vector.broadcast %1294 : f32 to vector<12x12xf32>
    %1296 = arith.mulf %1295, %347 : vector<12x12xf32>
    %1297 = arith.addf %1293, %1296 : vector<12x12xf32>
    %c198 = arith.constant 198 : index
    %1298 = memref.load %arg4[%c198] : memref<200xf32, #tpu.memory_space<smem>>
    %1299 = vector.broadcast %1298 : f32 to vector<12x12xf32>
    %1300 = arith.mulf %1299, %348 : vector<12x12xf32>
    %1301 = arith.addf %1297, %1300 : vector<12x12xf32>
    %c199 = arith.constant 199 : index
    %1302 = memref.load %arg4[%c199] : memref<200xf32, #tpu.memory_space<smem>>
    %1303 = vector.broadcast %1302 : f32 to vector<12x12xf32>
    %1304 = arith.mulf %1303, %349 : vector<12x12xf32>
    %1305 = arith.addf %1301, %1304 : vector<12x12xf32>
    %c9_176 = arith.constant 9 : index
    %1306 = memref.load %arg5[%c9_176] : memref<10xf32, #tpu.memory_space<smem>>
    %1307 = vector.broadcast %1306 : f32 to vector<12x12xf32>
    %1308 = arith.addf %1305, %1307 : vector<12x12xf32>
    %cst_177 = arith.constant 0.000000e+00 : f32
    %1309 = vector.broadcast %cst_177 : f32 to vector<12x12xf32>
    %1310 = arith.maximumf %1308, %1309 : vector<12x12xf32>
    %1311 = vector.extract_strided_slice %1310 {offsets = [0, 0], sizes = [12, 11], strides = [1, 1]} : vector<12x12xf32> to vector<12x11xf32>
    %1312 = vector.extract_strided_slice %1310 {offsets = [0, 1], sizes = [12, 11], strides = [1, 1]} : vector<12x12xf32> to vector<12x11xf32>
    %1313 = arith.maximumf %1311, %1312 : vector<12x11xf32>
    %1314 = vector.extract_strided_slice %1313 {offsets = [0, 0], sizes = [11, 11], strides = [1, 1]} : vector<12x11xf32> to vector<11x11xf32>
    %1315 = vector.extract_strided_slice %1313 {offsets = [1, 0], sizes = [11, 11], strides = [1, 1]} : vector<12x11xf32> to vector<11x11xf32>
    %1316 = arith.maximumf %1314, %1315 : vector<11x11xf32>
    %c9_178 = arith.constant 9 : index
    %c0_179 = arith.constant 0 : index
    %c0_180 = arith.constant 0 : index
    %1317 = vector.load %arg8[%c9_178, %c0_179, %c0_180] : memref<10x60x11xf32, #tpu.memory_space<vmem>>, vector<1x60x11xf32>
    %1318 = vector.shape_cast %1317 : vector<1x60x11xf32> to vector<60x11xf32>
    %cst_181 = arith.constant dense<0.000000e+00> : vector<60x11xf32>
    %1319 = tpu.matmul %1318, %1316, %cst_181 {dimension_numbers = #tpu.dot_dimension_numbers<[1], [0], [0], [1], [0, 0, 1, 1], [], []>} : vector<60x11xf32>, vector<11x11xf32>, vector<60x11xf32> -> vector<60x11xf32>
    %cst_182 = arith.constant dense<0.000000e+00> : vector<60x6xf32>
    %1320 = tpu.matmul %1319, %350, %cst_182 {dimension_numbers = #tpu.dot_dimension_numbers<[1], [0], [0], [1], [0, 0, 1, 1], [], []>} : vector<60x11xf32>, vector<11x6xf32>, vector<60x6xf32> -> vector<60x6xf32>
    %1321 = arith.addf %1224, %1320 : vector<60x6xf32>
    %c0_183 = arith.constant 0 : index
    %c0_184 = arith.constant 0 : index
    %1322 = vector.load %arg11[%c0_183, %c0_184] : memref<32x1xf32, #tpu.memory_space<vmem>>, vector<32x1xf32>
    %c0_185 = arith.constant 0 : index
    %c0_186 = arith.constant 0 : index
    %c0_187 = arith.constant 0 : index
    %1323 = vector.load %arg10[%c0_185, %c0_186, %c0_187] : memref<6x32x60xf32, #tpu.memory_space<vmem>>, vector<1x32x60xf32>
    %1324 = vector.shape_cast %1323 : vector<1x32x60xf32> to vector<32x60xf32>
    %1325 = vector.extract_strided_slice %1321 {offsets = [0, 0], sizes = [60, 1], strides = [1, 1]} : vector<60x6xf32> to vector<60x1xf32>
    %cst_188 = arith.constant dense<0.000000e+00> : vector<32x1xf32>
    %1326 = tpu.matmul %1324, %1325, %cst_188 {dimension_numbers = #tpu.dot_dimension_numbers<[1], [0], [0], [1], [0, 0, 1, 1], [], []>} : vector<32x60xf32>, vector<60x1xf32>, vector<32x1xf32> -> vector<32x1xf32>
    %1327 = arith.addf %1322, %1326 : vector<32x1xf32>
    %c1_189 = arith.constant 1 : index
    %c0_190 = arith.constant 0 : index
    %c0_191 = arith.constant 0 : index
    %1328 = vector.load %arg10[%c1_189, %c0_190, %c0_191] : memref<6x32x60xf32, #tpu.memory_space<vmem>>, vector<1x32x60xf32>
    %1329 = vector.shape_cast %1328 : vector<1x32x60xf32> to vector<32x60xf32>
    %1330 = vector.extract_strided_slice %1321 {offsets = [0, 1], sizes = [60, 1], strides = [1, 1]} : vector<60x6xf32> to vector<60x1xf32>
    %cst_192 = arith.constant dense<0.000000e+00> : vector<32x1xf32>
    %1331 = tpu.matmul %1329, %1330, %cst_192 {dimension_numbers = #tpu.dot_dimension_numbers<[1], [0], [0], [1], [0, 0, 1, 1], [], []>} : vector<32x60xf32>, vector<60x1xf32>, vector<32x1xf32> -> vector<32x1xf32>
    %1332 = arith.addf %1327, %1331 : vector<32x1xf32>
    %c2_193 = arith.constant 2 : index
    %c0_194 = arith.constant 0 : index
    %c0_195 = arith.constant 0 : index
    %1333 = vector.load %arg10[%c2_193, %c0_194, %c0_195] : memref<6x32x60xf32, #tpu.memory_space<vmem>>, vector<1x32x60xf32>
    %1334 = vector.shape_cast %1333 : vector<1x32x60xf32> to vector<32x60xf32>
    %1335 = vector.extract_strided_slice %1321 {offsets = [0, 2], sizes = [60, 1], strides = [1, 1]} : vector<60x6xf32> to vector<60x1xf32>
    %cst_196 = arith.constant dense<0.000000e+00> : vector<32x1xf32>
    %1336 = tpu.matmul %1334, %1335, %cst_196 {dimension_numbers = #tpu.dot_dimension_numbers<[1], [0], [0], [1], [0, 0, 1, 1], [], []>} : vector<32x60xf32>, vector<60x1xf32>, vector<32x1xf32> -> vector<32x1xf32>
    %1337 = arith.addf %1332, %1336 : vector<32x1xf32>
    %c3_197 = arith.constant 3 : index
    %c0_198 = arith.constant 0 : index
    %c0_199 = arith.constant 0 : index
    %1338 = vector.load %arg10[%c3_197, %c0_198, %c0_199] : memref<6x32x60xf32, #tpu.memory_space<vmem>>, vector<1x32x60xf32>
    %1339 = vector.shape_cast %1338 : vector<1x32x60xf32> to vector<32x60xf32>
    %1340 = vector.extract_strided_slice %1321 {offsets = [0, 3], sizes = [60, 1], strides = [1, 1]} : vector<60x6xf32> to vector<60x1xf32>
    %cst_200 = arith.constant dense<0.000000e+00> : vector<32x1xf32>
    %1341 = tpu.matmul %1339, %1340, %cst_200 {dimension_numbers = #tpu.dot_dimension_numbers<[1], [0], [0], [1], [0, 0, 1, 1], [], []>} : vector<32x60xf32>, vector<60x1xf32>, vector<32x1xf32> -> vector<32x1xf32>
    %1342 = arith.addf %1337, %1341 : vector<32x1xf32>
    %c4_201 = arith.constant 4 : index
    %c0_202 = arith.constant 0 : index
    %c0_203 = arith.constant 0 : index
    %1343 = vector.load %arg10[%c4_201, %c0_202, %c0_203] : memref<6x32x60xf32, #tpu.memory_space<vmem>>, vector<1x32x60xf32>
    %1344 = vector.shape_cast %1343 : vector<1x32x60xf32> to vector<32x60xf32>
    %1345 = vector.extract_strided_slice %1321 {offsets = [0, 4], sizes = [60, 1], strides = [1, 1]} : vector<60x6xf32> to vector<60x1xf32>
    %cst_204 = arith.constant dense<0.000000e+00> : vector<32x1xf32>
    %1346 = tpu.matmul %1344, %1345, %cst_204 {dimension_numbers = #tpu.dot_dimension_numbers<[1], [0], [0], [1], [0, 0, 1, 1], [], []>} : vector<32x60xf32>, vector<60x1xf32>, vector<32x1xf32> -> vector<32x1xf32>
    %1347 = arith.addf %1342, %1346 : vector<32x1xf32>
    %c5_205 = arith.constant 5 : index
    %c0_206 = arith.constant 0 : index
    %c0_207 = arith.constant 0 : index
    %1348 = vector.load %arg10[%c5_205, %c0_206, %c0_207] : memref<6x32x60xf32, #tpu.memory_space<vmem>>, vector<1x32x60xf32>
    %1349 = vector.shape_cast %1348 : vector<1x32x60xf32> to vector<32x60xf32>
    %1350 = vector.extract_strided_slice %1321 {offsets = [0, 5], sizes = [60, 1], strides = [1, 1]} : vector<60x6xf32> to vector<60x1xf32>
    %cst_208 = arith.constant dense<0.000000e+00> : vector<32x1xf32>
    %1351 = tpu.matmul %1349, %1350, %cst_208 {dimension_numbers = #tpu.dot_dimension_numbers<[1], [0], [0], [1], [0, 0, 1, 1], [], []>} : vector<32x60xf32>, vector<60x1xf32>, vector<32x1xf32> -> vector<32x1xf32>
    %1352 = arith.addf %1347, %1351 : vector<32x1xf32>
    %cst_209 = arith.constant 0.000000e+00 : f32
    %1353 = vector.broadcast %cst_209 : f32 to vector<32x1xf32>
    %1354 = arith.maximumf %1352, %1353 : vector<32x1xf32>
    %c0_210 = arith.constant 0 : index
    %c0_211 = arith.constant 0 : index
    %1355 = vector.load %arg12[%c0_210, %c0_211] : memref<1x32xf32, #tpu.memory_space<vmem>>, vector<1x32xf32>
    %cst_212 = arith.constant dense<0.000000e+00> : vector<1x1xf32>
    %1356 = tpu.matmul %1355, %1354, %cst_212 {dimension_numbers = #tpu.dot_dimension_numbers<[1], [0], [0], [1], [0, 0, 1, 1], [], []>} : vector<1x32xf32>, vector<32x1xf32>, vector<1x1xf32> -> vector<1x1xf32>
    %c0_213 = arith.constant 0 : index
    %1357 = memref.load %arg13[%c0_213] : memref<1xf32, #tpu.memory_space<smem>>
    %1358 = vector.broadcast %1357 : f32 to vector<1x1xf32>
    %1359 = arith.addf %1356, %1358 : vector<1x1xf32>
    %c0_214 = arith.constant 0 : index
    %c0_215 = arith.constant 0 : index
    %c0_216 = arith.constant 0 : index
    %1360 = vector.load %arg14[%c0_214, %c0_215, %c0_216] : memref<1x1x1xf32, #tpu.memory_space<vmem>>, vector<1x1x1xf32>
    %1361 = vector.shape_cast %1360 : vector<1x1x1xf32> to vector<1x1xf32>
    %1362 = vector.shape_cast %1359 : vector<1x1xf32> to vector<1x1x1xf32>
    tpu.vector_store %arg14[%c0_214, %c0_215, %c0_216], %1362 {strides = array<i32>} : memref<1x1x1xf32, #tpu.memory_space<vmem>>, vector<1x1x1xf32>,
    return
  }
  func.func @transform_0(%arg0: i32) -> (i32, i32, i32, i32) {
    %c0_i32 = arith.constant 0 : i32
    %c0_i32_0 = arith.constant 0 : i32
    %c0_i32_1 = arith.constant 0 : i32
    %c0_i32_2 = arith.constant 0 : i32
    return %arg0, %c0_i32, %c0_i32_0, %c0_i32_1 : i32, i32, i32, i32
  }
  func.func @transform_1(%arg0: i32) -> i32 {
    %c0_i32 = arith.constant 0 : i32
    %c0_i32_0 = arith.constant 0 : i32
    return %c0_i32 : i32
  }
  func.func @transform_2(%arg0: i32) -> i32 {
    %c0_i32 = arith.constant 0 : i32
    %c0_i32_0 = arith.constant 0 : i32
    return %c0_i32 : i32
  }
  func.func @transform_3(%arg0: i32) -> i32 {
    %c0_i32 = arith.constant 0 : i32
    %c0_i32_0 = arith.constant 0 : i32
    return %c0_i32 : i32
  }
  func.func @transform_4(%arg0: i32) -> i32 {
    %c0_i32 = arith.constant 0 : i32
    %c0_i32_0 = arith.constant 0 : i32
    return %c0_i32 : i32
  }
  func.func @transform_5(%arg0: i32) -> (i32, i32) {
    %c0_i32 = arith.constant 0 : i32
    %c0_i32_0 = arith.constant 0 : i32
    %c0_i32_1 = arith.constant 0 : i32
    return %c0_i32, %c0_i32_0 : i32, i32
  }
  func.func @transform_6(%arg0: i32) -> (i32, i32) {
    %c0_i32 = arith.constant 0 : i32
    %c0_i32_0 = arith.constant 0 : i32
    %c0_i32_1 = arith.constant 0 : i32
    return %c0_i32, %c0_i32_0 : i32, i32
  }
  func.func @transform_7(%arg0: i32) -> (i32, i32, i32) {
    %c0_i32 = arith.constant 0 : i32
    %c0_i32_0 = arith.constant 0 : i32
    %c0_i32_1 = arith.constant 0 : i32
    %c0_i32_2 = arith.constant 0 : i32
    return %c0_i32, %c0_i32_0, %c0_i32_1 : i32, i32, i32
  }
  func.func @transform_8(%arg0: i32) -> (i32, i32) {
    %c0_i32 = arith.constant 0 : i32
    %c0_i32_0 = arith.constant 0 : i32
    %c0_i32_1 = arith.constant 0 : i32
    return %c0_i32, %c0_i32_0 : i32, i32
  }
  func.func @transform_9(%arg0: i32) -> (i32, i32, i32) {
    %c0_i32 = arith.constant 0 : i32
    %c0_i32_0 = arith.constant 0 : i32
    %c0_i32_1 = arith.constant 0 : i32
    %c0_i32_2 = arith.constant 0 : i32
    return %c0_i32, %c0_i32_0, %c0_i32_1 : i32, i32, i32
  }
  func.func @transform_10(%arg0: i32) -> (i32, i32) {
    %c0_i32 = arith.constant 0 : i32
    %c0_i32_0 = arith.constant 0 : i32
    %c0_i32_1 = arith.constant 0 : i32
    return %c0_i32, %c0_i32_0 : i32, i32
  }
  func.func @transform_11(%arg0: i32) -> (i32, i32) {
    %c0_i32 = arith.constant 0 : i32
    %c0_i32_0 = arith.constant 0 : i32
    %c0_i32_1 = arith.constant 0 : i32
    return %c0_i32, %c0_i32_0 : i32, i32
  }
  func.func @transform_12(%arg0: i32) -> i32 {
    %c0_i32 = arith.constant 0 : i32
    %c0_i32_0 = arith.constant 0 : i32
    return %c0_i32 : i32
  }
  func.func @transform_13(%arg0: i32) -> (i32, i32, i32) {
    %c0_i32 = arith.constant 0 : i32
    %c0_i32_0 = arith.constant 0 : i32
    %c0_i32_1 = arith.constant 0 : i32
    return %arg0, %c0_i32, %c0_i32_0 : i32, i32, i32
  }
}

</mosaic_0001>

<llo_original>
// kernel: traffic_light_forward.1
$region0: #{traffic_light_forward.1}
  #allocation0 [shape = 'u32[]', space=smem, size = 0x4, offset = 0x4, fixed_abs, tag = 'smem constant byte address 0x4 - core index']
  #allocation1 [shape = 'u32[144,128]{1,0:T(1,128)}', space=vmem, size = 0x12000, scoped, tag = 'internal scratch']
  #allocation2 [shape = 'f32[1]{0:T(128)S(6)}', space=smem, size = 0x200, scoped, tag = 'scoped memory for traffic_light_forward.1']
  %s0 = inlined_call_operand.vmem [shape: f32[2,3,27,27], index: 0, kind: input, shape index: {}]
  %s1 = inlined_call_operand.vmem [shape: f32[60], index: 1, kind: input, shape index: {}]
  %s2 = inlined_call_operand.vmem [shape: f32[5], index: 2, kind: input, shape index: {}]
  %s3 = inlined_call_operand.vmem [shape: f32[200], index: 3, kind: input, shape index: {}]
  %s4 = inlined_call_operand.vmem [shape: f32[10], index: 4, kind: input, shape index: {}]
  %s5 = inlined_call_operand.vmem [shape: f32[13,25], index: 5, kind: input, shape index: {}]
  %s6 = inlined_call_operand.vmem [shape: f32[25,13], index: 6, kind: input, shape index: {}]
  %s7 = inlined_call_operand.vmem [shape: f32[10,60,11], index: 7, kind: input, shape index: {}]
  %s8 = inlined_call_operand.vmem [shape: f32[11,6], index: 8, kind: input, shape index: {}]
  %s9 = inlined_call_operand.vmem [shape: f32[6,32,60], index: 9, kind: input, shape index: {}]
  %s10 = inlined_call_operand.vmem [shape: f32[32,1], index: 10, kind: input, shape index: {}]
  %s11 = inlined_call_operand.vmem [shape: f32[1,32], index: 11, kind: input, shape index: {}]
  %s12 = inlined_call_operand.<no memory space> [shape: f32[1], index: 12, kind: input, shape index: {}]
  %s13 = inlined_call_operand.vmem [shape: f32[2,1,1], index: 13, kind: output, shape index: {}]
  %s14 = sld [smem:[#allocation0]]
  $region101: #{traffic_light_forward.1} parent=0
    _
  %s16 = ssub.s32 1, %s14
  %s17 = scalar_select 0, %s16, %s14
  %18 = sst [smem:[#allocation2]] %s12
  $region1: #{traffic_light_forward.1} parent=0
    #allocation3 [shape = 'u8[512]{0}', space=smem, size = 0x200, scoped, tag = 'input window, operand 1, single buffered']
    #allocation4 [shape = 's32[2]{0}', space=sflag, size = 0x8, scoped, tag = 'scoped memory for traffic_light_forward.1']
    #allocation5 [shape = 'u8[512]{0}', space=smem, size = 0x200, scoped, tag = 'input window, operand 2, single buffered']
    #allocation6 [shape = 's32[1]{0}', space=sflag, size = 0x4, scoped, tag = 'scoped memory for traffic_light_forward.1']
    #allocation7 [shape = 'u8[1024]{0}', space=smem, size = 0x400, scoped, tag = 'input window, operand 3, single buffered']
    #allocation8 [shape = 'u8[512]{0}', space=smem, size = 0x200, scoped, tag = 'input window, operand 4, single buffered']
    #allocation9 [shape = 's32[1]{0}', space=sflag, size = 0x4, scoped, tag = 'scoped memory for traffic_light_forward.1']
    %19 = vsyncpa [#allocation4], 0
    %20 = vsyncpa [#allocation6], 0
    %21 = vsyncpa [#allocation9], 0
    loop: start=0, step=1, limit=4
    $region2: #{traffic_light_forward.1} parent=1 // loop_pre_header
      _
    $region3: #{traffic_light_forward.1} parent=1 // loop_header
      %s23 = sphi 0, %s27
      %p24 = scmp.ge.s32.totalorder %s23, 4
      %s33 = sphi 0, %s35
      %s36 = sphi 0, %s33
      %s37 = sphi 0, %s36
      %s53 = sphi 0, %s37
      %s57 = sphi 0, %s57
      %s59 = sphi 0, %s57
      %s60 = sphi 0, %s59
      %s74 = sphi 0, %s60
      %s78 = sphi 0, %s78
      %s80 = sphi 0, %s78
      %s81 = sphi 0, %s80
      %s95 = sphi 0, %s81
      %s99 = sphi 0, %s99
      %s101 = sphi 0, %s99
      %s102 = sphi 0, %s101
      %s116 = sphi 0, %s102
      %s120 = sphi 0, %s120
      %s122 = sphi 0, %s120
      %s123 = sphi 0, %s122
      %s137 = sphi 0, %s123
      %s141 = sphi 0, %s141
      %s143 = sphi 0, %s141
      %s144 = sphi 0, %s143
      %s158 = sphi 0, %s144
      %s162 = sphi 0, %s162
      %s164 = sphi 0, %s162
      %s165 = sphi 0, %s164
      %s179 = sphi 0, %s165
      %s183 = sphi 0, %s183
      %s185 = sphi 0, %s183
      %s186 = sphi 0, %s185
      %s200 = sphi 0, %s186
      %s204 = sphi 0, %s204
      %s206 = sphi 0, %s204
      %s207 = sphi 0, %s206
      %s221 = sphi 0, %s207
      %s225 = sphi 0, %s225
      %s227 = sphi 0, %s225
      %s228 = sphi 0, %s227
      %s242 = sphi 0, %s228
      %s246 = sphi 0, %s246
      %s248 = sphi 0, %s246
      %s249 = sphi 0, %s248
      %s263 = sphi 0, %s249
      %s267 = sphi 0, %s267
      %s269 = sphi 0, %s267
      %s270 = sphi 0, %s269
      %s284 = sphi 0, %s270
      %s288 = sphi 0, %s288
      %s290 = sphi 0, %s288
      %s291 = sphi 0, %s290
      %s305 = sphi 0, %s291
      %s311 = sphi 0, %s313
      %s314 = sphi 0, %s311
      %s315 = sphi 0, %s314
      %s331 = sphi 0, %s315
    $region4: #{traffic_light_forward.1} parent=1 // loop_header_branch
      %26 = sbr.rel (%p24) target = $region8
    $region5: #{traffic_light_forward.1} parent=1 // loop_body
      %s28 = ssub.s32 %s23, 1
      %s29 = ssub.s32 %s23, 2
      %s30 = sadd.s32 %s23, 1
      %s31 = ssub.s32 %s23, %s30
      %p32 = scmp.eq.s32.totalorder %s31, 0
      %s34 = sadd.s32 %s33, 1
      %s35 = scalar_select %p32, %s33, %s34
      %p38 = pneg %p32
      %p39 = scmp.eq.s32.totalorder %s23, 1
      %p40 = por %p38, %p39
      %p41 = scmp.ne.s32.totalorder %s33, %s36
      %p42 = scmp.eq.s32.totalorder %s23, 0
      %p43 = por %p41, %p42
      %p44 = scmp.ne.s32.totalorder %s33, %s36
      %p45 = scmp.eq.s32.totalorder %s28, 1
      %p46 = por %p44, %p45
      %p47 = scmp.ne.s32.totalorder %s36, %s37
      %p48 = scmp.eq.s32.totalorder %s28, 0
      %p49 = por %p47, %p48
      %p50 = scmp.ne.s32.totalorder %s36, %s37
      %p51 = scmp.eq.s32.totalorder %s29, 1
      %p52 = por %p50, %p51
      %p54 = scmp.ne.s32.totalorder %s37, %s53
      %p55 = scmp.eq.s32.totalorder %s29, 0
      %p56 = por %p54, %p55
      %s58 = sadd.s32 %s57, 1
      %p61 = scmp.eq.s32.totalorder %s23, 1
      %p62 = scmp.ne.s32.totalorder %s57, %s59
      %p63 = scmp.eq.s32.totalorder %s23, 0
      %p64 = por %p62, %p63
      %p65 = scmp.ne.s32.totalorder %s57, %s59
      %p66 = scmp.eq.s32.totalorder %s28, 1
      %p67 = por %p65, %p66
      %p68 = scmp.ne.s32.totalorder %s59, %s60
      %p69 = scmp.eq.s32.totalorder %s28, 0
      %p70 = por %p68, %p69
      %p71 = scmp.ne.s32.totalorder %s59, %s60
      %p72 = scmp.eq.s32.totalorder %s29, 1
      %p73 = por %p71, %p72
      %p75 = scmp.ne.s32.totalorder %s60, %s74
      %p76 = scmp.eq.s32.totalorder %s29, 0
      %p77 = por %p75, %p76
      %s79 = sadd.s32 %s78, 1
      %p82 = scmp.eq.s32.totalorder %s23, 1
      %p83 = scmp.ne.s32.totalorder %s78, %s80
      %p84 = scmp.eq.s32.totalorder %s23, 0
      %p85 = por %p83, %p84
      %p86 = scmp.ne.s32.totalorder %s78, %s80
      %p87 = scmp.eq.s32.totalorder %s28, 1
      %p88 = por %p86, %p87
      %p89 = scmp.ne.s32.totalorder %s80, %s81
      %p90 = scmp.eq.s32.totalorder %s28, 0
      %p91 = por %p89, %p90
      %p92 = scmp.ne.s32.totalorder %s80, %s81
      %p93 = scmp.eq.s32.totalorder %s29, 1
      %p94 = por %p92, %p93
      %p96 = scmp.ne.s32.totalorder %s81, %s95
      %p97 = scmp.eq.s32.totalorder %s29, 0
      %p98 = por %p96, %p97
      %s100 = sadd.s32 %s99, 1
      %p103 = scmp.eq.s32.totalorder %s23, 1
      %p104 = scmp.ne.s32.totalorder %s99, %s101
      %p105 = scmp.eq.s32.totalorder %s23, 0
      %p106 = por %p104, %p105
      %p107 = scmp.ne.s32.totalorder %s99, %s101
      %p108 = scmp.eq.s32.totalorder %s28, 1
      %p109 = por %p107, %p108
      %p110 = scmp.ne.s32.totalorder %s101, %s102
      %p111 = scmp.eq.s32.totalorder %s28, 0
      %p112 = por %p110, %p111
      %p113 = scmp.ne.s32.totalorder %s101, %s102
      %p114 = scmp.eq.s32.totalorder %s29, 1
      %p115 = por %p113, %p114
      %p117 = scmp.ne.s32.totalorder %s102, %s116
      %p118 = scmp.eq.s32.totalorder %s29, 0
      %p119 = por %p117, %p118
      %s121 = sadd.s32 %s120, 1
      %p124 = scmp.eq.s32.totalorder %s23, 1
      %p125 = scmp.ne.s32.totalorder %s120, %s122
      %p126 = scmp.eq.s32.totalorder %s23, 0
      %p127 = por %p125, %p126
      %p128 = scmp.ne.s32.totalorder %s120, %s122
      %p129 = scmp.eq.s32.totalorder %s28, 1
      %p130 = por %p128, %p129
      %p131 = scmp.ne.s32.totalorder %s122, %s123
      %p132 = scmp.eq.s32.totalorder %s28, 0
      %p133 = por %p131, %p132
      %p134 = scmp.ne.s32.totalorder %s122, %s123
      %p135 = scmp.eq.s32.totalorder %s29, 1
      %p136 = por %p134, %p135
      %p138 = scmp.ne.s32.totalorder %s123, %s137
      %p139 = scmp.eq.s32.totalorder %s29, 0
      %p140 = por %p138, %p139
      %s142 = sadd.s32 %s141, 1
      %p145 = scmp.eq.s32.totalorder %s23, 1
      %p146 = scmp.ne.s32.totalorder %s141, %s143
      %p147 = scmp.eq.s32.totalorder %s23, 0
      %p148 = por %p146, %p147
      %p149 = scmp.ne.s32.totalorder %s141, %s143
      %p150 = scmp.eq.s32.totalorder %s28, 1
      %p151 = por %p149, %p150
      %p152 = scmp.ne.s32.totalorder %s143, %s144
      %p153 = scmp.eq.s32.totalorder %s28, 0
      %p154 = por %p152, %p153
      %p155 = scmp.ne.s32.totalorder %s143, %s144
      %p156 = scmp.eq.s32.totalorder %s29, 1
      %p157 = por %p155, %p156
      %p159 = scmp.ne.s32.totalorder %s144, %s158
      %p160 = scmp.eq.s32.totalorder %s29, 0
      %p161 = por %p159, %p160
      %s163 = sadd.s32 %s162, 1
      %p166 = scmp.eq.s32.totalorder %s23, 1
      %p167 = scmp.ne.s32.totalorder %s162, %s164
      %p168 = scmp.eq.s32.totalorder %s23, 0
      %p169 = por %p167, %p168
      %p170 = scmp.ne.s32.totalorder %s162, %s164
      %p171 = scmp.eq.s32.totalorder %s28, 1
      %p172 = por %p170, %p171
      %p173 = scmp.ne.s32.totalorder %s164, %s165
      %p174 = scmp.eq.s32.totalorder %s28, 0
      %p175 = por %p173, %p174
      %p176 = scmp.ne.s32.totalorder %s164, %s165
      %p177 = scmp.eq.s32.totalorder %s29, 1
      %p178 = por %p176, %p177
      %p180 = scmp.ne.s32.totalorder %s165, %s179
      %p181 = scmp.eq.s32.totalorder %s29, 0
      %p182 = por %p180, %p181
      %s184 = sadd.s32 %s183, 1
      %p187 = scmp.eq.s32.totalorder %s23, 1
      %p188 = scmp.ne.s32.totalorder %s183, %s185
      %p189 = scmp.eq.s32.totalorder %s23, 0
      %p190 = por %p188, %p189
      %p191 = scmp.ne.s32.totalorder %s183, %s185
      %p192 = scmp.eq.s32.totalorder %s28, 1
      %p193 = por %p191, %p192
      %p194 = scmp.ne.s32.totalorder %s185, %s186
      %p195 = scmp.eq.s32.totalorder %s28, 0
      %p196 = por %p194, %p195
      %p197 = scmp.ne.s32.totalorder %s185, %s186
      %p198 = scmp.eq.s32.totalorder %s29, 1
      %p199 = por %p197, %p198
      %p201 = scmp.ne.s32.totalorder %s186, %s200
      %p202 = scmp.eq.s32.totalorder %s29, 0
      %p203 = por %p201, %p202
      %s205 = sadd.s32 %s204, 1
      %p208 = scmp.eq.s32.totalorder %s23, 1
      %p209 = scmp.ne.s32.totalorder %s204, %s206
      %p210 = scmp.eq.s32.totalorder %s23, 0
      %p211 = por %p209, %p210
      %p212 = scmp.ne.s32.totalorder %s204, %s206
      %p213 = scmp.eq.s32.totalorder %s28, 1
      %p214 = por %p212, %p213
      %p215 = scmp.ne.s32.totalorder %s206, %s207
      %p216 = scmp.eq.s32.totalorder %s28, 0
      %p217 = por %p215, %p216
      %p218 = scmp.ne.s32.totalorder %s206, %s207
      %p219 = scmp.eq.s32.totalorder %s29, 1
      %p220 = por %p218, %p219
      %p222 = scmp.ne.s32.totalorder %s207, %s221
      %p223 = scmp.eq.s32.totalorder %s29, 0
      %p224 = por %p222, %p223
      %s226 = sadd.s32 %s225, 1
      %p229 = scmp.eq.s32.totalorder %s23, 1
      %p230 = scmp.ne.s32.totalorder %s225, %s227
      %p231 = scmp.eq.s32.totalorder %s23, 0
      %p232 = por %p230, %p231
      %p233 = scmp.ne.s32.totalorder %s225, %s227
      %p234 = scmp.eq.s32.totalorder %s28, 1
      %p235 = por %p233, %p234
      %p236 = scmp.ne.s32.totalorder %s227, %s228
      %p237 = scmp.eq.s32.totalorder %s28, 0
      %p238 = por %p236, %p237
      %p239 = scmp.ne.s32.totalorder %s227, %s228
      %p240 = scmp.eq.s32.totalorder %s29, 1
      %p241 = por %p239, %p240
      %p243 = scmp.ne.s32.totalorder %s228, %s242
      %p244 = scmp.eq.s32.totalorder %s29, 0
      %p245 = por %p243, %p244
      %s247 = sadd.s32 %s246, 1
      %p250 = scmp.eq.s32.totalorder %s23, 1
      %p251 = scmp.ne.s32.totalorder %s246, %s248
      %p252 = scmp.eq.s32.totalorder %s23, 0
      %p253 = por %p251, %p252
      %p254 = scmp.ne.s32.totalorder %s246, %s248
      %p255 = scmp.eq.s32.totalorder %s28, 1
      %p256 = por %p254, %p255
      %p257 = scmp.ne.s32.totalorder %s248, %s249
      %p258 = scmp.eq.s32.totalorder %s28, 0
      %p259 = por %p257, %p258
      %p260 = scmp.ne.s32.totalorder %s248, %s249
      %p261 = scmp.eq.s32.totalorder %s29, 1
      %p262 = por %p260, %p261
      %p264 = scmp.ne.s32.totalorder %s249, %s263
      %p265 = scmp.eq.s32.totalorder %s29, 0
      %p266 = por %p264, %p265
      %s268 = sadd.s32 %s267, 1
      %p271 = scmp.eq.s32.totalorder %s23, 1
      %p272 = scmp.ne.s32.totalorder %s267, %s269
      %p273 = scmp.eq.s32.totalorder %s23, 0
      %p274 = por %p272, %p273
      %p275 = scmp.ne.s32.totalorder %s267, %s269
      %p276 = scmp.eq.s32.totalorder %s28, 1
      %p277 = por %p275, %p276
      %p278 = scmp.ne.s32.totalorder %s269, %s270
      %p279 = scmp.eq.s32.totalorder %s28, 0
      %p280 = por %p278, %p279
      %p281 = scmp.ne.s32.totalorder %s269, %s270
      %p282 = scmp.eq.s32.totalorder %s29, 1
      %p283 = por %p281, %p282
      %p285 = scmp.ne.s32.totalorder %s270, %s284
      %p286 = scmp.eq.s32.totalorder %s29, 0
      %p287 = por %p285, %p286
      %s289 = sadd.s32 %s288, 1
      %p292 = scmp.eq.s32.totalorder %s23, 1
      %p293 = scmp.ne.s32.totalorder %s288, %s290
      %p294 = scmp.eq.s32.totalorder %s23, 0
      %p295 = por %p293, %p294
      %p296 = scmp.ne.s32.totalorder %s288, %s290
      %p297 = scmp.eq.s32.totalorder %s28, 1
      %p298 = por %p296, %p297
      %p299 = scmp.ne.s32.totalorder %s290, %s291
      %p300 = scmp.eq.s32.totalorder %s28, 0
      %p301 = por %p299, %p300
      %p302 = scmp.ne.s32.totalorder %s290, %s291
      %p303 = scmp.eq.s32.totalorder %s29, 1
      %p304 = por %p302, %p303
      %p306 = scmp.ne.s32.totalorder %s291, %s305
      %p307 = scmp.eq.s32.totalorder %s29, 0
      %p308 = por %p306, %p307
      %s309 = ssub.s32 %s23, %s30
      %p310 = scmp.eq.s32.totalorder %s309, 0
      %s312 = sadd.s32 %s311, 1
      %s313 = scalar_select %p310, %s311, %s312
      %p316 = pneg %p310
      %p317 = scmp.eq.s32.totalorder %s23, 1
      %p318 = por %p316, %p317
      %p319 = scmp.ne.s32.totalorder %s311, %s314
      %p320 = scmp.eq.s32.totalorder %s23, 0
      %p321 = por %p319, %p320
      %p322 = scmp.ne.s32.totalorder %s311, %s314
      %p323 = scmp.eq.s32.totalorder %s28, 1
      %p324 = por %p322, %p323
      %p325 = scmp.ne.s32.totalorder %s314, %s315
      %p326 = scmp.eq.s32.totalorder %s28, 0
      %p327 = por %p325, %p326
      %p328 = scmp.ne.s32.totalorder %s314, %s315
      %p329 = scmp.eq.s32.totalorder %s29, 1
      %p330 = por %p328, %p329
      %p332 = scmp.ne.s32.totalorder %s315, %s331
      %p333 = scmp.eq.s32.totalorder %s29, 0
      %p334 = por %p332, %p333
      %p335 = scmp.le.s32.totalorder 1, %s23
      %p336 = scmp.lt.s32.totalorder %s23, 3
      %p337 = pnand %p335, %p336
      %p338 = pneg %p337
      // Predicated region
      $region9: #{traffic_light_forward.1} parent=5 // pred_check
        _
      $region10: #{traffic_light_forward.1} parent=5 // pred_check_branch
        %340 = sbr.rel (%p337) target = $region12
      $region11: #{traffic_light_forward.1} parent=5 // pred_region
        %s341 = ssub.s32 %s23, 1
        // Predicated region
        $region13: #{traffic_light_forward.1} parent=11 // pred_check
          %p342 = pneg %p70
        $region14: #{traffic_light_forward.1} parent=11 // pred_check_branch
          %344 = sbr.rel (%p342) target = $region16
        $region15: #{traffic_light_forward.1} parent=11 // pred_region
          %s346 = ssub.s32 16, 16
          %347 = vsyncadd [#allocation4], %s346
          %s349 = sshll.u32 %s1, 4
          %s350 = int_to_ptr.vmem [resolvable:$true] %s349
          %352 = dma.vmem_to_smem %s350, 16, [#allocation3], [#allocation4]
        $region16: #{traffic_light_forward.1} parent=11 // pred_fallthru
          _
        // Predicated region
        $region17: #{traffic_light_forward.1} parent=11 // pred_check
          %p353 = pneg %p91
        $region18: #{traffic_light_forward.1} parent=11 // pred_check_branch
          %355 = sbr.rel (%p353) target = $region20
        $region19: #{traffic_light_forward.1} parent=11 // pred_region
          %s357 = ssub.s32 16, 16
          %358 = vsyncadd [#allocation6], %s357
          %s360 = sshll.u32 %s2, 4
          %s361 = int_to_ptr.vmem [resolvable:$true] %s360
          %363 = dma.vmem_to_smem %s361, 16, [#allocation5], [#allocation6]
        $region20: #{traffic_light_forward.1} parent=11 // pred_fallthru
          _
        // Predicated region
        $region21: #{traffic_light_forward.1} parent=11 // pred_check
          %p364 = pneg %p112
        $region22: #{traffic_light_forward.1} parent=11 // pred_check_branch
          %366 = sbr.rel (%p364) target = $region24
        $region23: #{traffic_light_forward.1} parent=11 // pred_region
          %s368 = ssub.s32 32, 32
          %369 = vsyncadd [#allocation6], %s368
          %s371 = sshll.u32 %s3, 4
          %s372 = int_to_ptr.vmem [resolvable:$true] %s371
          %374 = dma.vmem_to_smem %s372, 32, [#allocation7], [#allocation6]
        $region24: #{traffic_light_forward.1} parent=11 // pred_fallthru
          _
        // Predicated region
        $region25: #{traffic_light_forward.1} parent=11 // pred_check
          %p375 = pneg %p133
        $region26: #{traffic_light_forward.1} parent=11 // pred_check_branch
          %377 = sbr.rel (%p375) target = $region28
        $region27: #{traffic_light_forward.1} parent=11 // pred_region
          %s379 = ssub.s32 16, 16
          %380 = vsyncadd [#allocation9], %s379
          %s382 = sshll.u32 %s4, 4
          %s383 = int_to_ptr.vmem [resolvable:$true] %s382
          %385 = dma.vmem_to_smem %s383, 16, [#allocation8], [#allocation9]
        $region28: #{traffic_light_forward.1} parent=11 // pred_fallthru
          _
        // Predicated region
        $region29: #{traffic_light_forward.1} parent=11 // pred_check
          %p386 = pneg %p154
        $region30: #{traffic_light_forward.1} parent=11 // pred_check_branch
          %388 = sbr.rel (%p386) target = $region32
        $region31: #{traffic_light_forward.1} parent=11 // pred_region
          _
        $region32: #{traffic_light_forward.1} parent=11 // pred_fallthru
          _
        // Predicated region
        $region33: #{traffic_light_forward.1} parent=11 // pred_check
          %p389 = pneg %p175
        $region34: #{traffic_light_forward.1} parent=11 // pred_check_branch
          %391 = sbr.rel (%p389) target = $region36
        $region35: #{traffic_light_forward.1} parent=11 // pred_region
          _
        $region36: #{traffic_light_forward.1} parent=11 // pred_fallthru
          _
        // Predicated region
        $region37: #{traffic_light_forward.1} parent=11 // pred_check
          %p392 = pneg %p196
        $region38: #{traffic_light_forward.1} parent=11 // pred_check_branch
          %394 = sbr.rel (%p392) target = $region40
        $region39: #{traffic_light_forward.1} parent=11 // pred_region
          _
        $region40: #{traffic_light_forward.1} parent=11 // pred_fallthru
          _
        // Predicated region
        $region41: #{traffic_light_forward.1} parent=11 // pred_check
          %p395 = pneg %p217
        $region42: #{traffic_light_forward.1} parent=11 // pred_check_branch
          %397 = sbr.rel (%p395) target = $region44
        $region43: #{traffic_light_forward.1} parent=11 // pred_region
          _
        $region44: #{traffic_light_forward.1} parent=11 // pred_fallthru
          _
        // Predicated region
        $region45: #{traffic_light_forward.1} parent=11 // pred_check
          %p398 = pneg %p238
        $region46: #{traffic_light_forward.1} parent=11 // pred_check_branch
          %400 = sbr.rel (%p398) target = $region48
        $region47: #{traffic_light_forward.1} parent=11 // pred_region
          _
        $region48: #{traffic_light_forward.1} parent=11 // pred_fallthru
          _
        // Predicated region
        $region49: #{traffic_light_forward.1} parent=11 // pred_check
          %p401 = pneg %p259
        $region50: #{traffic_light_forward.1} parent=11 // pred_check_branch
          %403 = sbr.rel (%p401) target = $region52
        $region51: #{traffic_light_forward.1} parent=11 // pred_region
          _
        $region52: #{traffic_light_forward.1} parent=11 // pred_fallthru
          _
        // Predicated region
        $region53: #{traffic_light_forward.1} parent=11 // pred_check
          %p404 = pneg %p280
        $region54: #{traffic_light_forward.1} parent=11 // pred_check_branch
          %406 = sbr.rel (%p404) target = $region56
        $region55: #{traffic_light_forward.1} parent=11 // pred_region
          _
        $region56: #{traffic_light_forward.1} parent=11 // pred_fallthru
          _
        // Predicated region
        $region57: #{traffic_light_forward.1} parent=11 // pred_check
          %p407 = pneg %p301
        $region58: #{traffic_light_forward.1} parent=11 // pred_check_branch
          %409 = sbr.rel (%p407) target = $region60
        $region59: #{traffic_light_forward.1} parent=11 // pred_region
          _
        $region60: #{traffic_light_forward.1} parent=11 // pred_fallthru
          _
      $region12: #{traffic_light_forward.1} parent=5 // pred_fallthru
        _
      %p410 = scmp.lt.s32.totalorder %s23, 2
      // Predicated region
      $region61: #{traffic_light_forward.1} parent=5 // pred_check
        %p411 = pneg %p410
      $region62: #{traffic_light_forward.1} parent=5 // pred_check_branch
        %413 = sbr.rel (%p411) target = $region64
      $region63: #{traffic_light_forward.1} parent=5 // pred_region
        // Predicated region
        $region65: #{traffic_light_forward.1} parent=63 // pred_check
          %p414 = pneg %p43
        $region66: #{traffic_light_forward.1} parent=63 // pred_check_branch
          %416 = sbr.rel (%p414) target = $region68
        $region67: #{traffic_light_forward.1} parent=63 // pred_region
          %p417 = scmp.lt.s32.totalorder %s23, 1
          %s418 = scalar_select %p417, %s23, 1
          %s419 = smul.addr %s418, 12
          %s420 = smul.addr %s419, 8
          %s421 = scalar_lea.vmem %s0, %s420
        $region68: #{traffic_light_forward.1} parent=63 // pred_fallthru
          _
      $region64: #{traffic_light_forward.1} parent=5 // pred_fallthru
        _
      %p422 = scmp.le.s32.totalorder 1, %s23
      %p423 = scmp.lt.s32.totalorder %s23, 3
      %p424 = pnand %p422, %p423
      %p425 = pneg %p424
      // Predicated region
      $region69: #{traffic_light_forward.1} parent=5 // pred_check
        _
      $region70: #{traffic_light_forward.1} parent=5 // pred_check_branch
        %427 = sbr.rel (%p424) target = $region72
      $region71: #{traffic_light_forward.1} parent=5 // pred_region
        %s428 = ssub.s32 %s23, 1
        // Predicated region
        $region73: #{traffic_light_forward.1} parent=71 // pred_check
          %p429 = pneg %p70
        $region74: #{traffic_light_forward.1} parent=71 // pred_check_branch
          %431 = sbr.rel (%p429) target = $region76
        $region75: #{traffic_light_forward.1} parent=71 // pred_region
          %432 = dma.done [#allocation4], 16
        $region76: #{traffic_light_forward.1} parent=71 // pred_fallthru
          _
        // Predicated region
        $region77: #{traffic_light_forward.1} parent=71 // pred_check
          %p433 = pneg %p91
        $region78: #{traffic_light_forward.1} parent=71 // pred_check_branch
          %435 = sbr.rel (%p433) target = $region80
        $region79: #{traffic_light_forward.1} parent=71 // pred_region
          %436 = dma.done [#allocation6], 16
        $region80: #{traffic_light_forward.1} parent=71 // pred_fallthru
          _
        // Predicated region
        $region81: #{traffic_light_forward.1} parent=71 // pred_check
          %p437 = pneg %p112
        $region82: #{traffic_light_forward.1} parent=71 // pred_check_branch
          %439 = sbr.rel (%p437) target = $region84
        $region83: #{traffic_light_forward.1} parent=71 // pred_region
          %440 = dma.done [#allocation6], 32
        $region84: #{traffic_light_forward.1} parent=71 // pred_fallthru
          _
        // Predicated region
        $region85: #{traffic_light_forward.1} parent=71 // pred_check
          %p441 = pneg %p133
        $region86: #{traffic_light_forward.1} parent=71 // pred_check_branch
          %443 = sbr.rel (%p441) target = $region88
        $region87: #{traffic_light_forward.1} parent=71 // pred_region
          %444 = dma.done [#allocation9], 16
        $region88: #{traffic_light_forward.1} parent=71 // pred_fallthru
          _
        %445 = sfence
        %p446 = scmp.lt.s32.totalorder %s28, 1
        %s447 = scalar_select %p446, %s28, 1
        %s448 = smul.addr %s447, 12
        %s449 = smul.addr %s448, 8
        %s450 = scalar_lea.vmem %s0, %s449
        %p451 = pneg %p49
        %p452 = pneg %p46
        %p453 = pneg %p70
        %p454 = pneg %p67
        %p455 = pneg %p91
        %p456 = pneg %p88
        %p457 = pneg %p112
        %p458 = pneg %p109
        %p459 = pneg %p133
        %p460 = pneg %p130
        %p461 = pneg %p154
        %p462 = pneg %p151
        %p463 = pneg %p175
        %p464 = pneg %p172
        %p465 = pneg %p196
        %p466 = pneg %p193
        %p467 = pneg %p217
        %p468 = pneg %p214
        %p469 = pneg %p238
        %p470 = pneg %p235
        %p471 = pneg %p259
        %p472 = pneg %p256
        %p473 = pneg %p280
        %p474 = pneg %p277
        %p475 = pneg %p301
        %p476 = pneg %p298
        %p477 = pneg %p327
        %p478 = pneg %p324
        %p479 = scmp.lt.s32.totalorder %s28, 1
        %s480 = scalar_select %p479, %s28, 1
        %s481 = scalar_lea.vmem %s13, %s480
        %p482 = scmp.lt.s32.totalorder %s28, 1
        %s483 = scalar_select %p482, %s28, 1
        %s484 = smul.addr %s483, 12
        %s485 = smul.addr %s484, 8
        %s486 = scalar_lea.vmem %s0, %s485
        %p487 = scmp.lt.s32.totalorder %s28, 1
        %s488 = scalar_select %p487, %s28, 1
        %s489 = scalar_lea.vmem %s13, %s488
        %v490 = vld [vmem:[%s486] sm:$0xff]
        %v491 = vld [vmem:[%s486 + $0x8] sm:$0xff]
        %v492 = vld [vmem:[%s486 + $0x10] sm:$0xff]
        %v493 = vld [vmem:[%s486 + $0x18] sm:$0x7]
        %s494 = scalar_lea.vmem %s486, 32
        %v495 = vld [vmem:[%s494] sm:$0xff]
        %v496 = vld [vmem:[%s494 + $0x8] sm:$0xff]
        %v497 = vld [vmem:[%s494 + $0x10] sm:$0xff]
        %v498 = vld [vmem:[%s494 + $0x18] sm:$0x7]
        %s499 = scalar_lea.vmem %s486, 64
        %v500 = vld [vmem:[%s499] sm:$0xff]
        %v501 = vld [vmem:[%s499 + $0x8] sm:$0xff]
        %v502 = vld [vmem:[%s499 + $0x10] sm:$0xff]
        %v503 = vld [vmem:[%s499 + $0x18] sm:$0x7]
        %v504 = vld [vmem:[%s5] sm:$0xff]
        %v505 = vld [vmem:[%s5 + $0x8] sm:$0x1f]
        %v506 = vld [vmem:[%s6] sm:$0xff]
        %v507 = vld [vmem:[%s6 + $0x8] sm:$0xff]
        %v508 = vld [vmem:[%s6 + $0x10] sm:$0xff]
        %v509 = vld [vmem:[%s6 + $0x18] sm:$0x1]
        %s510 = sld [smem:[#allocation3]]
        %v511 = vstv %s510
        %v512 = vmul.f32 %v511, %v490
        %v513 = vmul.f32 %v511, %v491
        %v514 = vmul.f32 %v511, %v492
        %v515 = vmul.f32 %v511, %v493
        %v516 = vadd.f32 %v512, 0.0
        %v517 = vadd.f32 %v513, 0.0
        %v518 = vadd.f32 %v514, 0.0
        %v519 = vadd.f32 %v515, 0.0
        %s520 = sld [smem:[#allocation3 + $0x1]]
        %v521 = vstv %s520
        %v522 = vmul.f32 %v521, %v490
        %v523 = vmul.f32 %v521, %v491
        %v524 = vmul.f32 %v521, %v492
        %v525 = vmul.f32 %v521, %v493
        %530 = vrot.lane.b32.xlu0 %v522, 127
        %v531 = vpop.permute.xlu0 %530
        %532 = vrot.lane.b32.xlu0 %v523, 127
        %v533 = vpop.permute.xlu0 %532
        %534 = vrot.lane.b32.xlu0 %v524, 127
        %v535 = vpop.permute.xlu0 %534
        %536 = vrot.lane.b32.xlu0 %v525, 127
        %v537 = vpop.permute.xlu0 %536
        %v542 = vadd.f32 %v516, %v531
        %v543 = vadd.f32 %v517, %v533
        %v544 = vadd.f32 %v518, %v535
        %v545 = vadd.f32 %v519, %v537
        %s546 = sld [smem:[#allocation3 + $0x2]]
        %v547 = vstv %s546
        %v548 = vmul.f32 %v547, %v490
        %v549 = vmul.f32 %v547, %v491
        %v550 = vmul.f32 %v547, %v492
        %v551 = vmul.f32 %v547, %v493
        %vm556 = vcmask 1046528
        %v557 = vrot.slane %v548, 1
        %v558 = vrot.slane %v549, 1
        %v559 = vsel %vm556, %v557, %v558
        %v560 = vrot.slane %v550, 1
        %v561 = vsel %vm556, %v558, %v560
        %v562 = vrot.slane %v551, 1
        %v563 = vsel %vm556, %v560, %v562
        %v568 = vadd.f32 %v542, %v559
        %v569 = vadd.f32 %v543, %v561
        %v570 = vadd.f32 %v544, %v563
        %v571 = vadd.f32 %v545, %v562
        %s572 = sld [smem:[#allocation3 + $0x3]]
        %v573 = vstv %s572
        %v574 = vmul.f32 %v573, %v490
        %v575 = vmul.f32 %v573, %v491
        %v576 = vmul.f32 %v573, %v492
        %v577 = vmul.f32 %v573, %v493
        %v582 = vrot.slane %v574, 1
        %v583 = vrot.slane %v575, 1
        %v584 = vsel %vm556, %v582, %v583
        %v585 = vrot.slane %v576, 1
        %v586 = vsel %vm556, %v583, %v585
        %v587 = vrot.slane %v577, 1
        %v588 = vsel %vm556, %v585, %v587
        %589 = vrot.lane.b32.xlu0 %v584, 127
        %v590 = vpop.permute.xlu0 %589
        %591 = vrot.lane.b32.xlu0 %v586, 127
        %v592 = vpop.permute.xlu0 %591
        %593 = vrot.lane.b32.xlu0 %v588, 127
        %v594 = vpop.permute.xlu0 %593
        %595 = vrot.lane.b32.xlu0 %v587, 127
        %v596 = vpop.permute.xlu0 %595
        %v601 = vadd.f32 %v568, %v590
        %v602 = vadd.f32 %v569, %v592
        %v603 = vadd.f32 %v570, %v594
        %v604 = vadd.f32 %v571, %v596
        %s605 = sld [smem:[#allocation3 + $0x4]]
        %v606 = vstv %s605
        %v607 = vmul.f32 %v606, %v495
        %v608 = vmul.f32 %v606, %v496
        %v609 = vmul.f32 %v606, %v497
        %v610 = vmul.f32 %v606, %v498
        %v611 = vadd.f32 %v601, %v607
        %v612 = vadd.f32 %v602, %v608
        %v613 = vadd.f32 %v603, %v609
        %v614 = vadd.f32 %v604, %v610
        %s615 = sld [smem:[#allocation3 + $0x5]]
        %v616 = vstv %s615
        %v617 = vmul.f32 %v616, %v495
        %v618 = vmul.f32 %v616, %v496
        %v619 = vmul.f32 %v616, %v497
        %v620 = vmul.f32 %v616, %v498
        %625 = vrot.lane.b32.xlu0 %v617, 127
        %v626 = vpop.permute.xlu0 %625
        %627 = vrot.lane.b32.xlu0 %v618, 127
        %v628 = vpop.permute.xlu0 %627
        %629 = vrot.lane.b32.xlu0 %v619, 127
        %v630 = vpop.permute.xlu0 %629
        %631 = vrot.lane.b32.xlu0 %v620, 127
        %v632 = vpop.permute.xlu0 %631
        %v637 = vadd.f32 %v611, %v626
        %v638 = vadd.f32 %v612, %v628
        %v639 = vadd.f32 %v613, %v630
        %v640 = vadd.f32 %v614, %v632
        %s641 = sld [smem:[#allocation3 + $0x6]]
        %v642 = vstv %s641
        %v643 = vmul.f32 %v642, %v495
        %v644 = vmul.f32 %v642, %v496
        %v645 = vmul.f32 %v642, %v497
        %v646 = vmul.f32 %v642, %v498
        %v651 = vrot.slane %v643, 1
        %v652 = vrot.slane %v644, 1
        %v653 = vsel %vm556, %v651, %v652
        %v654 = vrot.slane %v645, 1
        %v655 = vsel %vm556, %v652, %v654
        %v656 = vrot.slane %v646, 1
        %v657 = vsel %vm556, %v654, %v656
        %v662 = vadd.f32 %v637, %v653
        %v663 = vadd.f32 %v638, %v655
        %v664 = vadd.f32 %v639, %v657
        %v665 = vadd.f32 %v640, %v656
        %s666 = sld [smem:[#allocation3 + $0x7]]
        %v667 = vstv %s666
        %v668 = vmul.f32 %v667, %v495
        %v669 = vmul.f32 %v667, %v496
        %v670 = vmul.f32 %v667, %v497
        %v671 = vmul.f32 %v667, %v498
        %v676 = vrot.slane %v668, 1
        %v677 = vrot.slane %v669, 1
        %v678 = vsel %vm556, %v676, %v677
        %v679 = vrot.slane %v670, 1
        %v680 = vsel %vm556, %v677, %v679
        %v681 = vrot.slane %v671, 1
        %v682 = vsel %vm556, %v679, %v681
        %683 = vrot.lane.b32.xlu0 %v678, 127
        %v684 = vpop.permute.xlu0 %683
        %685 = vrot.lane.b32.xlu0 %v680, 127
        %v686 = vpop.permute.xlu0 %685
        %687 = vrot.lane.b32.xlu0 %v682, 127
        %v688 = vpop.permute.xlu0 %687
        %689 = vrot.lane.b32.xlu0 %v681, 127
        %v690 = vpop.permute.xlu0 %689
        %v695 = vadd.f32 %v662, %v684
        %v696 = vadd.f32 %v663, %v686
        %v697 = vadd.f32 %v664, %v688
        %v698 = vadd.f32 %v665, %v690
        %s699 = sld [smem:[#allocation3 + $0x8]]
        %v700 = vstv %s699
        %v701 = vmul.f32 %v700, %v500
        %v702 = vmul.f32 %v700, %v501
        %v703 = vmul.f32 %v700, %v502
        %v704 = vmul.f32 %v700, %v503
        %v705 = vadd.f32 %v695, %v701
        %v706 = vadd.f32 %v696, %v702
        %v707 = vadd.f32 %v697, %v703
        %v708 = vadd.f32 %v698, %v704
        %s709 = sld [smem:[#allocation3 + $0x9]]
        %v710 = vstv %s709
        %v711 = vmul.f32 %v710, %v500
        %v712 = vmul.f32 %v710, %v501
        %v713 = vmul.f32 %v710, %v502
        %v714 = vmul.f32 %v710, %v503
        %719 = vrot.lane.b32.xlu0 %v711, 127
        %v720 = vpop.permute.xlu0 %719
        %721 = vrot.lane.b32.xlu0 %v712, 127
        %v722 = vpop.permute.xlu0 %721
        %723 = vrot.lane.b32.xlu0 %v713, 127
        %v724 = vpop.permute.xlu0 %723
        %725 = vrot.lane.b32.xlu0 %v714, 127
        %v726 = vpop.permute.xlu0 %725
        %v731 = vadd.f32 %v705, %v720
        %v732 = vadd.f32 %v706, %v722
        %v733 = vadd.f32 %v707, %v724
        %v734 = vadd.f32 %v708, %v726
        %s735 = sld [smem:[#allocation3 + $0xa]]
        %v736 = vstv %s735
        %v737 = vmul.f32 %v736, %v500
        %v738 = vmul.f32 %v736, %v501
        %v739 = vmul.f32 %v736, %v502
        %v740 = vmul.f32 %v736, %v503
        %v745 = vrot.slane %v737, 1
        %v746 = vrot.slane %v738, 1
        %v747 = vsel %vm556, %v745, %v746
        %v748 = vrot.slane %v739, 1
        %v749 = vsel %vm556, %v746, %v748
        %v750 = vrot.slane %v740, 1
        %v751 = vsel %vm556, %v748, %v750
        %v756 = vadd.f32 %v731, %v747
        %v757 = vadd.f32 %v732, %v749
        %v758 = vadd.f32 %v733, %v751
        %v759 = vadd.f32 %v734, %v750
        %s760 = sld [smem:[#allocation3 + $0xb]]
        %v761 = vstv %s760
        %v762 = vmul.f32 %v761, %v500
        %v763 = vmul.f32 %v761, %v501
        %v764 = vmul.f32 %v761, %v502
        %v765 = vmul.f32 %v761, %v503
        %v770 = vrot.slane %v762, 1
        %v771 = vrot.slane %v763, 1
        %v772 = vsel %vm556, %v770, %v771
        %v773 = vrot.slane %v764, 1
        %v774 = vsel %vm556, %v771, %v773
        %v775 = vrot.slane %v765, 1
        %v776 = vsel %vm556, %v773, %v775
        %777 = vrot.lane.b32.xlu0 %v772, 127
        %v778 = vpop.permute.xlu0 %777
        %779 = vrot.lane.b32.xlu0 %v774, 127
        %v780 = vpop.permute.xlu0 %779
        %781 = vrot.lane.b32.xlu0 %v776, 127
        %v782 = vpop.permute.xlu0 %781
        %783 = vrot.lane.b32.xlu0 %v775, 127
        %v784 = vpop.permute.xlu0 %783
        %v789 = vadd.f32 %v756, %v778
        %v790 = vadd.f32 %v757, %v780
        %v791 = vadd.f32 %v758, %v782
        %v792 = vadd.f32 %v759, %v784
        %s793 = sld [smem:[#allocation5]]
        %v794 = vstv %s793
        %v795 = vadd.f32 %v789, %v794
        %v796 = vadd.f32 %v790, %v794
        %v797 = vadd.f32 %v791, %v794
        %v798 = vadd.f32 %v792, %v794
        %v799 = vmax.f32 %v795, 0.0
        %v800 = vmax.f32 %v796, 0.0
        %v801 = vmax.f32 %v797, 0.0
        %v802 = vmax.f32 %v798, 0.0
        %807 = vrot.lane.b32.xlu0 %v799, 127
        %v808 = vpop.permute.xlu0 %807
        %809 = vrot.lane.b32.xlu0 %v800, 127
        %v810 = vpop.permute.xlu0 %809
        %811 = vrot.lane.b32.xlu0 %v801, 127
        %v812 = vpop.permute.xlu0 %811
        %813 = vrot.lane.b32.xlu0 %v802, 127
        %v814 = vpop.permute.xlu0 %813
        %v819 = vmax.f32 %v799, %v808
        %v820 = vmax.f32 %v800, %v810
        %v821 = vmax.f32 %v801, %v812
        %v822 = vmax.f32 %v802, %v814
        %v827 = vrot.slane %v819, 1
        %v828 = vrot.slane %v820, 1
        %v829 = vsel %vm556, %v827, %v828
        %v830 = vrot.slane %v821, 1
        %v831 = vsel %vm556, %v828, %v830
        %v832 = vrot.slane %v822, 1
        %v833 = vsel %vm556, %v830, %v832
        %v838 = vmax.f32 %v819, %v829
        %v839 = vmax.f32 %v820, %v831
        %v840 = vmax.f32 %v821, %v833
        %v841 = vmax.f32 %v822, %v832
        %vm842 = vcmask 203776
        %v844 = vsel %vm842, %v504, 0
        %v847 = vsel %vm842, %v505, 0
        %vm849 = vcmask 1040384
        %v851 = vsel %vm849, %v841, 0
        %853 = vmatprep.subr.mxu0 0.0
        %854 = vmatpush1.msra.mxu0 0.0
        %855 = vmatprep.subr.mxu0 0.0
        %856 = vmatpush1.msra.mxu0 0.0
        %857 = vmatprep.subr.mxu0 0.0
        %858 = vmatpush1.msra.mxu0 0.0
        %859 = vmatprep.subr.mxu0 0.0
        %860 = vmatpush1.msra.mxu0 0.0
        %861 = vmatprep.subr.mxu0 0.0
        %862 = vmatpush1.msra.mxu0 0.0
        %863 = vmatprep.subr.mxu0 0.0
        %864 = vmatpush1.msra.mxu0 0.0
        %865 = vmatprep.subr.mxu0 0.0
        %866 = vmatpush1.msra.mxu0 0.0
        %867 = vmatprep.subr.mxu0 0.0
        %868 = vmatpush1.msra.mxu0 0.0
        %869 = vmatprep.subr.mxu0 0.0
        %870 = vmatpush1.msra.mxu0 0.0
        %871 = vmatprep.subr.mxu0 0.0
        %872 = vmatpush1.msra.mxu0 0.0
        %873 = vmatprep.subr.mxu0 0.0
        %874 = vmatpush1.msra.mxu0 0.0
        %875 = vmatprep.subr.mxu0 0.0
        %876 = vmatpush1.msra.mxu0 0.0
        %877 = vmatprep.subr.mxu0 0.0
        %878 = vmatpush1.msra.mxu0 %v851
        %879 = vmatprep.subr.mxu0 0.0
        %880 = vmatpush1.msra.mxu0 %v840
        %881 = vmatprep.subr.mxu0 0.0
        %882 = vmatpush1.msra.mxu0 %v839
        %883 = vmatprep.subr.mxu0 0.0
        %884 = vmatpush1.msra.mxu0 %v838
        %885 = vmatprep.subr.mxu0 0.0
        %886 = vmatpush2.msra.mxu0 0.0
        %887 = vmatprep.subr.mxu0 0.0
        %888 = vmatpush2.msra.mxu0 0.0
        %889 = vmatprep.subr.mxu0 0.0
        %890 = vmatpush2.msra.mxu0 0.0
        %891 = vmatprep.subr.mxu0 0.0
        %892 = vmatpush2.msra.mxu0 0.0
        %893 = vmatprep.subr.mxu0 0.0
        %894 = vmatpush2.msra.mxu0 0.0
        %895 = vmatprep.subr.mxu0 0.0
        %896 = vmatpush2.msra.mxu0 0.0
        %897 = vmatprep.subr.mxu0 0.0
        %898 = vmatpush2.msra.mxu0 0.0
        %899 = vmatprep.subr.mxu0 0.0
        %900 = vmatpush2.msra.mxu0 0.0
        %901 = vmatprep.subr.mxu0 0.0
        %902 = vmatpush2.msra.mxu0 0.0
        %903 = vmatprep.subr.mxu0 0.0
        %904 = vmatpush2.msra.mxu0 0.0
        %905 = vmatprep.subr.mxu0 0.0
        %906 = vmatpush2.msra.mxu0 0.0
        %907 = vmatprep.subr.mxu0 0.0
        %908 = vmatpush2.msra.mxu0 0.0
        %909 = vmatprep.subr.mxu0 0.0
        %910 = vmatpush2.msra.mxu0 0.0
        %911 = vmatprep.subr.mxu0 0.0
        %912 = vmatpush2.msra.mxu0 0.0
        %913 = vmatprep.subr.mxu0 0.0
        %914 = vmatpush2.msra.mxu0 0.0
        %915 = vmatprep.subr.mxu0 0.0
        %916 = vmatpush2.msra.mxu0 0.0
        %917 = vmatprep.mubr.f32.mxu0 0.0
        %918 = vmatmul.mubr.f32.gmra.mxu0 %v844
        %v919 = vpop.f32.mrf.mxu0
        %v920 = vadd.f32 0.0, %v919
        %v921 = vpop.f32.mrf.mxu0
        %922 = vmatprep.mubr.f32.mxu0 0.0
        %923 = vmatmul.mubr.f32.gmra.mxu0 %v847
        %v924 = vpop.f32.mrf.mxu0
        %v925 = vadd.f32 0.0, %v924
        %v926 = vpop.f32.mrf.mxu0
        %927 = vdwg.mxu0
        %v929 = vsel %vm842, %v920, 0
        %v932 = vsel %vm842, %v925, 0
        %v935 = vsel %vm849, %v509, 0
        %937 = vmatprep.subr.mxu0 0.0
        %938 = vmatpush1.msra.mxu0 0.0
        %939 = vmatprep.subr.mxu0 0.0
        %940 = vmatpush1.msra.mxu0 0.0
        %941 = vmatprep.subr.mxu0 0.0
        %942 = vmatpush1.msra.mxu0 0.0
        %943 = vmatprep.subr.mxu0 0.0
        %944 = vmatpush1.msra.mxu0 0.0
        %945 = vmatprep.subr.mxu0 0.0
        %946 = vmatpush1.msra.mxu0 0.0
        %947 = vmatprep.subr.mxu0 0.0
        %948 = vmatpush1.msra.mxu0 0.0
        %949 = vmatprep.subr.mxu0 0.0
        %950 = vmatpush1.msra.mxu0 0.0
        %951 = vmatprep.subr.mxu0 0.0
        %952 = vmatpush1.msra.mxu0 0.0
        %953 = vmatprep.subr.mxu0 0.0
        %954 = vmatpush1.msra.mxu0 0.0
        %955 = vmatprep.subr.mxu0 0.0
        %956 = vmatpush1.msra.mxu0 0.0
        %957 = vmatprep.subr.mxu0 0.0
        %958 = vmatpush1.msra.mxu0 0.0
        %959 = vmatprep.subr.mxu0 0.0
        %960 = vmatpush1.msra.mxu0 0.0
        %961 = vmatprep.subr.mxu0 0.0
        %962 = vmatpush1.msra.mxu0 %v935
        %963 = vmatprep.subr.mxu0 0.0
        %964 = vmatpush1.msra.mxu0 %v508
        %965 = vmatprep.subr.mxu0 0.0
        %966 = vmatpush1.msra.mxu0 %v507
        %967 = vmatprep.subr.mxu0 0.0
        %968 = vmatpush1.msra.mxu0 %v506
        %969 = vmatprep.subr.mxu0 0.0
        %970 = vmatpush2.msra.mxu0 0.0
        %971 = vmatprep.subr.mxu0 0.0
        %972 = vmatpush2.msra.mxu0 0.0
        %973 = vmatprep.subr.mxu0 0.0
        %974 = vmatpush2.msra.mxu0 0.0
        %975 = vmatprep.subr.mxu0 0.0
        %976 = vmatpush2.msra.mxu0 0.0
        %977 = vmatprep.subr.mxu0 0.0
        %978 = vmatpush2.msra.mxu0 0.0
        %979 = vmatprep.subr.mxu0 0.0
        %980 = vmatpush2.msra.mxu0 0.0
        %981 = vmatprep.subr.mxu0 0.0
        %982 = vmatpush2.msra.mxu0 0.0
        %983 = vmatprep.subr.mxu0 0.0
        %984 = vmatpush2.msra.mxu0 0.0
        %985 = vmatprep.subr.mxu0 0.0
        %986 = vmatpush2.msra.mxu0 0.0
        %987 = vmatprep.subr.mxu0 0.0
        %988 = vmatpush2.msra.mxu0 0.0
        %989 = vmatprep.subr.mxu0 0.0
        %990 = vmatpush2.msra.mxu0 0.0
        %991 = vmatprep.subr.mxu0 0.0
        %992 = vmatpush2.msra.mxu0 0.0
        %993 = vmatprep.subr.mxu0 0.0
        %994 = vmatpush2.msra.mxu0 0.0
        %995 = vmatprep.subr.mxu0 0.0
        %996 = vmatpush2.msra.mxu0 0.0
        %997 = vmatprep.subr.mxu0 0.0
        %998 = vmatpush2.msra.mxu0 0.0
        %999 = vmatprep.subr.mxu0 0.0
        %1000 = vmatpush2.msra.mxu0 0.0
        %1001 = vmatprep.mubr.f32.mxu0 0.0
        %1002 = vmatmul.mubr.f32.gmra.mxu0 %v929
        %v1003 = vpop.f32.mrf.mxu0
        %v1004 = vadd.f32 0.0, %v1003
        %v1005 = vpop.f32.mrf.mxu0
        %1006 = vmatprep.mubr.f32.mxu0 0.0
        %1007 = vmatmul.mubr.f32.gmra.mxu0 %v932
        %v1008 = vpop.f32.mrf.mxu0
        %v1009 = vadd.f32 0.0, %v1008
        %v1010 = vpop.f32.mrf.mxu0
        %1011 = vdwg.mxu0
        %s1012 = sld [smem:[#allocation3 + $0xc]]
        %v1013 = vstv %s1012
        %v1014 = vmul.f32 %v1013, %v490
        %v1015 = vmul.f32 %v1013, %v491
        %v1016 = vmul.f32 %v1013, %v492
        %v1017 = vmul.f32 %v1013, %v493
        %v1018 = vadd.f32 %v1014, 0.0
        %v1019 = vadd.f32 %v1015, 0.0
        %v1020 = vadd.f32 %v1016, 0.0
        %v1021 = vadd.f32 %v1017, 0.0
        %s1022 = sld [smem:[#allocation3 + $0xd]]
        %v1023 = vstv %s1022
        %v1024 = vmul.f32 %v1023, %v490
        %v1025 = vmul.f32 %v1023, %v491
        %v1026 = vmul.f32 %v1023, %v492
        %v1027 = vmul.f32 %v1023, %v493
        %1032 = vrot.lane.b32.xlu0 %v1024, 127
        %v1033 = vpop.permute.xlu0 %1032
        %1034 = vrot.lane.b32.xlu0 %v1025, 127
        %v1035 = vpop.permute.xlu0 %1034
        %1036 = vrot.lane.b32.xlu0 %v1026, 127
        %v1037 = vpop.permute.xlu0 %1036
        %1038 = vrot.lane.b32.xlu0 %v1027, 127
        %v1039 = vpop.permute.xlu0 %1038
        %v1044 = vadd.f32 %v1018, %v1033
        %v1045 = vadd.f32 %v1019, %v1035
        %v1046 = vadd.f32 %v1020, %v1037
        %v1047 = vadd.f32 %v1021, %v1039
        %s1048 = sld [smem:[#allocation3 + $0xe]]
        %v1049 = vstv %s1048
        %v1050 = vmul.f32 %v1049, %v490
        %v1051 = vmul.f32 %v1049, %v491
        %v1052 = vmul.f32 %v1049, %v492
        %v1053 = vmul.f32 %v1049, %v493
        %v1058 = vrot.slane %v1050, 1
        %v1059 = vrot.slane %v1051, 1
        %v1060 = vsel %vm556, %v1058, %v1059
        %v1061 = vrot.slane %v1052, 1
        %v1062 = vsel %vm556, %v1059, %v1061
        %v1063 = vrot.slane %v1053, 1
        %v1064 = vsel %vm556, %v1061, %v1063
        %v1069 = vadd.f32 %v1044, %v1060
        %v1070 = vadd.f32 %v1045, %v1062
        %v1071 = vadd.f32 %v1046, %v1064
        %v1072 = vadd.f32 %v1047, %v1063
        %s1073 = sld [smem:[#allocation3 + $0xf]]
        %v1074 = vstv %s1073
        %v1075 = vmul.f32 %v1074, %v490
        %v1076 = vmul.f32 %v1074, %v491
        %v1077 = vmul.f32 %v1074, %v492
        %v1078 = vmul.f32 %v1074, %v493
        %v1083 = vrot.slane %v1075, 1
        %v1084 = vrot.slane %v1076, 1
        %v1085 = vsel %vm556, %v1083, %v1084
        %v1086 = vrot.slane %v1077, 1
        %v1087 = vsel %vm556, %v1084, %v1086
        %v1088 = vrot.slane %v1078, 1
        %v1089 = vsel %vm556, %v1086, %v1088
        %1090 = vrot.lane.b32.xlu0 %v1085, 127
        %v1091 = vpop.permute.xlu0 %1090
        %1092 = vrot.lane.b32.xlu0 %v1087, 127
        %v1093 = vpop.permute.xlu0 %1092
        %1094 = vrot.lane.b32.xlu0 %v1089, 127
        %v1095 = vpop.permute.xlu0 %1094
        %1096 = vrot.lane.b32.xlu0 %v1088, 127
        %v1097 = vpop.permute.xlu0 %1096
        %v1102 = vadd.f32 %v1069, %v1091
        %v1103 = vadd.f32 %v1070, %v1093
        %v1104 = vadd.f32 %v1071, %v1095
        %v1105 = vadd.f32 %v1072, %v1097
        %s1106 = sld [smem:[#allocation3 + $0x10]]
        %v1107 = vstv %s1106
        %v1108 = vmul.f32 %v1107, %v495
        %v1109 = vmul.f32 %v1107, %v496
        %v1110 = vmul.f32 %v1107, %v497
        %v1111 = vmul.f32 %v1107, %v498
        %v1112 = vadd.f32 %v1102, %v1108
        %v1113 = vadd.f32 %v1103, %v1109
        %v1114 = vadd.f32 %v1104, %v1110
        %v1115 = vadd.f32 %v1105, %v1111
        %s1116 = sld [smem:[#allocation3 + $0x11]]
        %v1117 = vstv %s1116
        %v1118 = vmul.f32 %v1117, %v495
        %v1119 = vmul.f32 %v1117, %v496
        %v1120 = vmul.f32 %v1117, %v497
        %v1121 = vmul.f32 %v1117, %v498
        %1126 = vrot.lane.b32.xlu0 %v1118, 127
        %v1127 = vpop.permute.xlu0 %1126
        %1128 = vrot.lane.b32.xlu0 %v1119, 127
        %v1129 = vpop.permute.xlu0 %1128
        %1130 = vrot.lane.b32.xlu0 %v1120, 127
        %v1131 = vpop.permute.xlu0 %1130
        %1132 = vrot.lane.b32.xlu0 %v1121, 127
        %v1133 = vpop.permute.xlu0 %1132
        %v1138 = vadd.f32 %v1112, %v1127
        %v1139 = vadd.f32 %v1113, %v1129
        %v1140 = vadd.f32 %v1114, %v1131
        %v1141 = vadd.f32 %v1115, %v1133
        %s1142 = sld [smem:[#allocation3 + $0x12]]
        %v1143 = vstv %s1142
        %v1144 = vmul.f32 %v1143, %v495
        %v1145 = vmul.f32 %v1143, %v496
        %v1146 = vmul.f32 %v1143, %v497
        %v1147 = vmul.f32 %v1143, %v498
        %v1152 = vrot.slane %v1144, 1
        %v1153 = vrot.slane %v1145, 1
        %v1154 = vsel %vm556, %v1152, %v1153
        %v1155 = vrot.slane %v1146, 1
        %v1156 = vsel %vm556, %v1153, %v1155
        %v1157 = vrot.slane %v1147, 1
        %v1158 = vsel %vm556, %v1155, %v1157
        %v1163 = vadd.f32 %v1138, %v1154
        %v1164 = vadd.f32 %v1139, %v1156
        %v1165 = vadd.f32 %v1140, %v1158
        %v1166 = vadd.f32 %v1141, %v1157
        %s1167 = sld [smem:[#allocation3 + $0x13]]
        %v1168 = vstv %s1167
        %v1169 = vmul.f32 %v1168, %v495
        %v1170 = vmul.f32 %v1168, %v496
        %v1171 = vmul.f32 %v1168, %v497
        %v1172 = vmul.f32 %v1168, %v498
        %v1177 = vrot.slane %v1169, 1
        %v1178 = vrot.slane %v1170, 1
        %v1179 = vsel %vm556, %v1177, %v1178
        %v1180 = vrot.slane %v1171, 1
        %v1181 = vsel %vm556, %v1178, %v1180
        %v1182 = vrot.slane %v1172, 1
        %v1183 = vsel %vm556, %v1180, %v1182
        %1184 = vrot.lane.b32.xlu0 %v1179, 127
        %v1185 = vpop.permute.xlu0 %1184
        %1186 = vrot.lane.b32.xlu0 %v1181, 127
        %v1187 = vpop.permute.xlu0 %1186
        %1188 = vrot.lane.b32.xlu0 %v1183, 127
        %v1189 = vpop.permute.xlu0 %1188
        %1190 = vrot.lane.b32.xlu0 %v1182, 127
        %v1191 = vpop.permute.xlu0 %1190
        %v1196 = vadd.f32 %v1163, %v1185
        %v1197 = vadd.f32 %v1164, %v1187
        %v1198 = vadd.f32 %v1165, %v1189
        %v1199 = vadd.f32 %v1166, %v1191
        %s1200 = sld [smem:[#allocation3 + $0x14]]
        %v1201 = vstv %s1200
        %v1202 = vmul.f32 %v1201, %v500
        %v1203 = vmul.f32 %v1201, %v501
        %v1204 = vmul.f32 %v1201, %v502
        %v1205 = vmul.f32 %v1201, %v503
        %v1206 = vadd.f32 %v1196, %v1202
        %v1207 = vadd.f32 %v1197, %v1203
        %v1208 = vadd.f32 %v1198, %v1204
        %v1209 = vadd.f32 %v1199, %v1205
        %s1210 = sld [smem:[#allocation3 + $0x15]]
        %v1211 = vstv %s1210
        %v1212 = vmul.f32 %v1211, %v500
        %v1213 = vmul.f32 %v1211, %v501
        %v1214 = vmul.f32 %v1211, %v502
        %v1215 = vmul.f32 %v1211, %v503
        %1220 = vrot.lane.b32.xlu0 %v1212, 127
        %v1221 = vpop.permute.xlu0 %1220
        %1222 = vrot.lane.b32.xlu0 %v1213, 127
        %v1223 = vpop.permute.xlu0 %1222
        %1224 = vrot.lane.b32.xlu0 %v1214, 127
        %v1225 = vpop.permute.xlu0 %1224
        %1226 = vrot.lane.b32.xlu0 %v1215, 127
        %v1227 = vpop.permute.xlu0 %1226
        %v1232 = vadd.f32 %v1206, %v1221
        %v1233 = vadd.f32 %v1207, %v1223
        %v1234 = vadd.f32 %v1208, %v1225
        %v1235 = vadd.f32 %v1209, %v1227
        %s1236 = sld [smem:[#allocation3 + $0x16]]
        %v1237 = vstv %s1236
        %v1238 = vmul.f32 %v1237, %v500
        %v1239 = vmul.f32 %v1237, %v501
        %v1240 = vmul.f32 %v1237, %v502
        %v1241 = vmul.f32 %v1237, %v503
        %v1246 = vrot.slane %v1238, 1
        %v1247 = vrot.slane %v1239, 1
        %v1248 = vsel %vm556, %v1246, %v1247
        %v1249 = vrot.slane %v1240, 1
        %v1250 = vsel %vm556, %v1247, %v1249
        %v1251 = vrot.slane %v1241, 1
        %v1252 = vsel %vm556, %v1249, %v1251
        %v1257 = vadd.f32 %v1232, %v1248
        %v1258 = vadd.f32 %v1233, %v1250
        %v1259 = vadd.f32 %v1234, %v1252
        %v1260 = vadd.f32 %v1235, %v1251
        %s1261 = sld [smem:[#allocation3 + $0x17]]
        %v1262 = vstv %s1261
        %v1263 = vmul.f32 %v1262, %v500
        %v1264 = vmul.f32 %v1262, %v501
        %v1265 = vmul.f32 %v1262, %v502
        %v1266 = vmul.f32 %v1262, %v503
        %v1271 = vrot.slane %v1263, 1
        %v1272 = vrot.slane %v1264, 1
        %v1273 = vsel %vm556, %v1271, %v1272
        %v1274 = vrot.slane %v1265, 1
        %v1275 = vsel %vm556, %v1272, %v1274
        %v1276 = vrot.slane %v1266, 1
        %v1277 = vsel %vm556, %v1274, %v1276
        %1278 = vrot.lane.b32.xlu0 %v1273, 127
        %v1279 = vpop.permute.xlu0 %1278
        %1280 = vrot.lane.b32.xlu0 %v1275, 127
        %v1281 = vpop.permute.xlu0 %1280
        %1282 = vrot.lane.b32.xlu0 %v1277, 127
        %v1283 = vpop.permute.xlu0 %1282
        %1284 = vrot.lane.b32.xlu0 %v1276, 127
        %v1285 = vpop.permute.xlu0 %1284
        %v1290 = vadd.f32 %v1257, %v1279
        %v1291 = vadd.f32 %v1258, %v1281
        %v1292 = vadd.f32 %v1259, %v1283
        %v1293 = vadd.f32 %v1260, %v1285
        %s1294 = sld [smem:[#allocation5 + $0x1]]
        %v1295 = vstv %s1294
        %v1296 = vadd.f32 %v1290, %v1295
        %v1297 = vadd.f32 %v1291, %v1295
        %v1298 = vadd.f32 %v1292, %v1295
        %v1299 = vadd.f32 %v1293, %v1295
        %v1300 = vmax.f32 %v1296, 0.0
        %v1301 = vmax.f32 %v1297, 0.0
        %v1302 = vmax.f32 %v1298, 0.0
        %v1303 = vmax.f32 %v1299, 0.0
        %1308 = vrot.lane.b32.xlu0 %v1300, 127
        %v1309 = vpop.permute.xlu0 %1308
        %1310 = vrot.lane.b32.xlu0 %v1301, 127
        %v1311 = vpop.permute.xlu0 %1310
        %1312 = vrot.lane.b32.xlu0 %v1302, 127
        %v1313 = vpop.permute.xlu0 %1312
        %1314 = vrot.lane.b32.xlu0 %v1303, 127
        %v1315 = vpop.permute.xlu0 %1314
        %v1320 = vmax.f32 %v1300, %v1309
        %v1321 = vmax.f32 %v1301, %v1311
        %v1322 = vmax.f32 %v1302, %v1313
        %v1323 = vmax.f32 %v1303, %v1315
        %v1328 = vrot.slane %v1320, 1
        %v1329 = vrot.slane %v1321, 1
        %v1330 = vsel %vm556, %v1328, %v1329
        %v1331 = vrot.slane %v1322, 1
        %v1332 = vsel %vm556, %v1329, %v1331
        %v1333 = vrot.slane %v1323, 1
        %v1334 = vsel %vm556, %v1331, %v1333
        %v1339 = vmax.f32 %v1320, %v1330
        %v1340 = vmax.f32 %v1321, %v1332
        %v1341 = vmax.f32 %v1322, %v1334
        %v1342 = vmax.f32 %v1323, %v1333
        %v1344 = vsel %vm849, %v1342, 0
        %1346 = vmatprep.subr.mxu0 0.0
        %1347 = vmatpush1.msra.mxu0 0.0
        %1348 = vmatprep.subr.mxu0 0.0
        %1349 = vmatpush1.msra.mxu0 0.0
        %1350 = vmatprep.subr.mxu0 0.0
        %1351 = vmatpush1.msra.mxu0 0.0
        %1352 = vmatprep.subr.mxu0 0.0
        %1353 = vmatpush1.msra.mxu0 0.0
        %1354 = vmatprep.subr.mxu0 0.0
        %1355 = vmatpush1.msra.mxu0 0.0
        %1356 = vmatprep.subr.mxu0 0.0
        %1357 = vmatpush1.msra.mxu0 0.0
        %1358 = vmatprep.subr.mxu0 0.0
        %1359 = vmatpush1.msra.mxu0 0.0
        %1360 = vmatprep.subr.mxu0 0.0
        %1361 = vmatpush1.msra.mxu0 0.0
        %1362 = vmatprep.subr.mxu0 0.0
        %1363 = vmatpush1.msra.mxu0 0.0
        %1364 = vmatprep.subr.mxu0 0.0
        %1365 = vmatpush1.msra.mxu0 0.0
        %1366 = vmatprep.subr.mxu0 0.0
        %1367 = vmatpush1.msra.mxu0 0.0
        %1368 = vmatprep.subr.mxu0 0.0
        %1369 = vmatpush1.msra.mxu0 0.0
        %1370 = vmatprep.subr.mxu0 0.0
        %1371 = vmatpush1.msra.mxu0 %v1344
        %1372 = vmatprep.subr.mxu0 0.0
        %1373 = vmatpush1.msra.mxu0 %v1341
        %1374 = vmatprep.subr.mxu0 0.0
        %1375 = vmatpush1.msra.mxu0 %v1340
        %1376 = vmatprep.subr.mxu0 0.0
        %1377 = vmatpush1.msra.mxu0 %v1339
        %1378 = vmatprep.subr.mxu0 0.0
        %1379 = vmatpush2.msra.mxu0 0.0
        %1380 = vmatprep.subr.mxu0 0.0
        %1381 = vmatpush2.msra.mxu0 0.0
        %1382 = vmatprep.subr.mxu0 0.0
        %1383 = vmatpush2.msra.mxu0 0.0
        %1384 = vmatprep.subr.mxu0 0.0
        %1385 = vmatpush2.msra.mxu0 0.0
        %1386 = vmatprep.subr.mxu0 0.0
        %1387 = vmatpush2.msra.mxu0 0.0
        %1388 = vmatprep.subr.mxu0 0.0
        %1389 = vmatpush2.msra.mxu0 0.0
        %1390 = vmatprep.subr.mxu0 0.0
        %1391 = vmatpush2.msra.mxu0 0.0
        %1392 = vmatprep.subr.mxu0 0.0
        %1393 = vmatpush2.msra.mxu0 0.0
        %1394 = vmatprep.subr.mxu0 0.0
        %1395 = vmatpush2.msra.mxu0 0.0
        %1396 = vmatprep.subr.mxu0 0.0
        %1397 = vmatpush2.msra.mxu0 0.0
        %1398 = vmatprep.subr.mxu0 0.0
        %1399 = vmatpush2.msra.mxu0 0.0
        %1400 = vmatprep.subr.mxu0 0.0
        %1401 = vmatpush2.msra.mxu0 0.0
        %1402 = vmatprep.subr.mxu0 0.0
        %1403 = vmatpush2.msra.mxu0 0.0
        %1404 = vmatprep.subr.mxu0 0.0
        %1405 = vmatpush2.msra.mxu0 0.0
        %1406 = vmatprep.subr.mxu0 0.0
        %1407 = vmatpush2.msra.mxu0 0.0
        %1408 = vmatprep.subr.mxu0 0.0
        %1409 = vmatpush2.msra.mxu0 0.0
        %1410 = vmatprep.mubr.f32.mxu0 0.0
        %1411 = vmatmul.mubr.f32.gmra.mxu0 %v844
        %v1412 = vpop.f32.mrf.mxu0
        %v1413 = vadd.f32 0.0, %v1412
        %v1414 = vpop.f32.mrf.mxu0
        %1415 = vmatprep.mubr.f32.mxu0 0.0
        %1416 = vmatmul.mubr.f32.gmra.mxu0 %v847
        %v1417 = vpop.f32.mrf.mxu0
        %v1418 = vadd.f32 0.0, %v1417
        %v1419 = vpop.f32.mrf.mxu0
        %1420 = vdwg.mxu0
        %v1422 = vsel %vm842, %v1413, 0
        %v1425 = vsel %vm842, %v1418, 0
        %1427 = vmatprep.subr.mxu0 0.0
        %1428 = vmatpush1.msra.mxu0 0.0
        %1429 = vmatprep.subr.mxu0 0.0
        %1430 = vmatpush1.msra.mxu0 0.0
        %1431 = vmatprep.subr.mxu0 0.0
        %1432 = vmatpush1.msra.mxu0 0.0
        %1433 = vmatprep.subr.mxu0 0.0
        %1434 = vmatpush1.msra.mxu0 0.0
        %1435 = vmatprep.subr.mxu0 0.0
        %1436 = vmatpush1.msra.mxu0 0.0
        %1437 = vmatprep.subr.mxu0 0.0
        %1438 = vmatpush1.msra.mxu0 0.0
        %1439 = vmatprep.subr.mxu0 0.0
        %1440 = vmatpush1.msra.mxu0 0.0
        %1441 = vmatprep.subr.mxu0 0.0
        %1442 = vmatpush1.msra.mxu0 0.0
        %1443 = vmatprep.subr.mxu0 0.0
        %1444 = vmatpush1.msra.mxu0 0.0
        %1445 = vmatprep.subr.mxu0 0.0
        %1446 = vmatpush1.msra.mxu0 0.0
        %1447 = vmatprep.subr.mxu0 0.0
        %1448 = vmatpush1.msra.mxu0 0.0
        %1449 = vmatprep.subr.mxu0 0.0
        %1450 = vmatpush1.msra.mxu0 0.0
        %1451 = vmatprep.subr.mxu0 0.0
        %1452 = vmatpush1.msra.mxu0 %v935
        %1453 = vmatprep.subr.mxu0 0.0
        %1454 = vmatpush1.msra.mxu0 %v508
        %1455 = vmatprep.subr.mxu0 0.0
        %1456 = vmatpush1.msra.mxu0 %v507
        %1457 = vmatprep.subr.mxu0 0.0
        %1458 = vmatpush1.msra.mxu0 %v506
        %1459 = vmatprep.subr.mxu0 0.0
        %1460 = vmatpush2.msra.mxu0 0.0
        %1461 = vmatprep.subr.mxu0 0.0
        %1462 = vmatpush2.msra.mxu0 0.0
        %1463 = vmatprep.subr.mxu0 0.0
        %1464 = vmatpush2.msra.mxu0 0.0
        %1465 = vmatprep.subr.mxu0 0.0
        %1466 = vmatpush2.msra.mxu0 0.0
        %1467 = vmatprep.subr.mxu0 0.0
        %1468 = vmatpush2.msra.mxu0 0.0
        %1469 = vmatprep.subr.mxu0 0.0
        %1470 = vmatpush2.msra.mxu0 0.0
        %1471 = vmatprep.subr.mxu0 0.0
        %1472 = vmatpush2.msra.mxu0 0.0
        %1473 = vmatprep.subr.mxu0 0.0
        %1474 = vmatpush2.msra.mxu0 0.0
        %1475 = vmatprep.subr.mxu0 0.0
        %1476 = vmatpush2.msra.mxu0 0.0
        %1477 = vmatprep.subr.mxu0 0.0
        %1478 = vmatpush2.msra.mxu0 0.0
        %1479 = vmatprep.subr.mxu0 0.0
        %1480 = vmatpush2.msra.mxu0 0.0
        %1481 = vmatprep.subr.mxu0 0.0
        %1482 = vmatpush2.msra.mxu0 0.0
        %1483 = vmatprep.subr.mxu0 0.0
        %1484 = vmatpush2.msra.mxu0 0.0
        %1485 = vmatprep.subr.mxu0 0.0
        %1486 = vmatpush2.msra.mxu0 0.0
        %1487 = vmatprep.subr.mxu0 0.0
        %1488 = vmatpush2.msra.mxu0 0.0
        %1489 = vmatprep.subr.mxu0 0.0
        %1490 = vmatpush2.msra.mxu0 0.0
        %1491 = vmatprep.mubr.f32.mxu0 0.0
        %1492 = vmatmul.mubr.f32.gmra.mxu0 %v1422
        %v1493 = vpop.f32.mrf.mxu0
        %v1494 = vadd.f32 0.0, %v1493
        %v1495 = vpop.f32.mrf.mxu0
        %1496 = vmatprep.mubr.f32.mxu0 0.0
        %1497 = vmatmul.mubr.f32.gmra.mxu0 %v1425
        %v1498 = vpop.f32.mrf.mxu0
        %v1499 = vadd.f32 0.0, %v1498
        %v1500 = vpop.f32.mrf.mxu0
        %1501 = vdwg.mxu0
        %s1502 = sld [smem:[#allocation3 + $0x18]]
        %v1503 = vstv %s1502
        %v1504 = vmul.f32 %v1503, %v490
        %v1505 = vmul.f32 %v1503, %v491
        %v1506 = vmul.f32 %v1503, %v492
        %v1507 = vmul.f32 %v1503, %v493
        %v1508 = vadd.f32 %v1504, 0.0
        %v1509 = vadd.f32 %v1505, 0.0
        %v1510 = vadd.f32 %v1506, 0.0
        %v1511 = vadd.f32 %v1507, 0.0
        %s1512 = sld [smem:[#allocation3 + $0x19]]
        %v1513 = vstv %s1512
        %v1514 = vmul.f32 %v1513, %v490
        %v1515 = vmul.f32 %v1513, %v491
        %v1516 = vmul.f32 %v1513, %v492
        %v1517 = vmul.f32 %v1513, %v493
        %1522 = vrot.lane.b32.xlu0 %v1514, 127
        %v1523 = vpop.permute.xlu0 %1522
        %1524 = vrot.lane.b32.xlu0 %v1515, 127
        %v1525 = vpop.permute.xlu0 %1524
        %1526 = vrot.lane.b32.xlu0 %v1516, 127
        %v1527 = vpop.permute.xlu0 %1526
        %1528 = vrot.lane.b32.xlu0 %v1517, 127
        %v1529 = vpop.permute.xlu0 %1528
        %v1534 = vadd.f32 %v1508, %v1523
        %v1535 = vadd.f32 %v1509, %v1525
        %v1536 = vadd.f32 %v1510, %v1527
        %v1537 = vadd.f32 %v1511, %v1529
        %s1538 = sld [smem:[#allocation3 + $0x1a]]
        %v1539 = vstv %s1538
        %v1540 = vmul.f32 %v1539, %v490
        %v1541 = vmul.f32 %v1539, %v491
        %v1542 = vmul.f32 %v1539, %v492
        %v1543 = vmul.f32 %v1539, %v493
        %v1548 = vrot.slane %v1540, 1
        %v1549 = vrot.slane %v1541, 1
        %v1550 = vsel %vm556, %v1548, %v1549
        %v1551 = vrot.slane %v1542, 1
        %v1552 = vsel %vm556, %v1549, %v1551
        %v1553 = vrot.slane %v1543, 1
        %v1554 = vsel %vm556, %v1551, %v1553
        %v1559 = vadd.f32 %v1534, %v1550
        %v1560 = vadd.f32 %v1535, %v1552
        %v1561 = vadd.f32 %v1536, %v1554
        %v1562 = vadd.f32 %v1537, %v1553
        %s1563 = sld [smem:[#allocation3 + $0x1b]]
        %v1564 = vstv %s1563
        %v1565 = vmul.f32 %v1564, %v490
        %v1566 = vmul.f32 %v1564, %v491
        %v1567 = vmul.f32 %v1564, %v492
        %v1568 = vmul.f32 %v1564, %v493
        %v1573 = vrot.slane %v1565, 1
        %v1574 = vrot.slane %v1566, 1
        %v1575 = vsel %vm556, %v1573, %v1574
        %v1576 = vrot.slane %v1567, 1
        %v1577 = vsel %vm556, %v1574, %v1576
        %v1578 = vrot.slane %v1568, 1
        %v1579 = vsel %vm556, %v1576, %v1578
        %1580 = vrot.lane.b32.xlu0 %v1575, 127
        %v1581 = vpop.permute.xlu0 %1580
        %1582 = vrot.lane.b32.xlu0 %v1577, 127
        %v1583 = vpop.permute.xlu0 %1582
        %1584 = vrot.lane.b32.xlu0 %v1579, 127
        %v1585 = vpop.permute.xlu0 %1584
        %1586 = vrot.lane.b32.xlu0 %v1578, 127
        %v1587 = vpop.permute.xlu0 %1586
        %v1592 = vadd.f32 %v1559, %v1581
        %v1593 = vadd.f32 %v1560, %v1583
        %v1594 = vadd.f32 %v1561, %v1585
        %v1595 = vadd.f32 %v1562, %v1587
        %s1596 = sld [smem:[#allocation3 + $0x1c]]
        %v1597 = vstv %s1596
        %v1598 = vmul.f32 %v1597, %v495
        %v1599 = vmul.f32 %v1597, %v496
        %v1600 = vmul.f32 %v1597, %v497
        %v1601 = vmul.f32 %v1597, %v498
        %v1602 = vadd.f32 %v1592, %v1598
        %v1603 = vadd.f32 %v1593, %v1599
        %v1604 = vadd.f32 %v1594, %v1600
        %v1605 = vadd.f32 %v1595, %v1601
        %s1606 = sld [smem:[#allocation3 + $0x1d]]
        %v1607 = vstv %s1606
        %v1608 = vmul.f32 %v1607, %v495
        %v1609 = vmul.f32 %v1607, %v496
        %v1610 = vmul.f32 %v1607, %v497
        %v1611 = vmul.f32 %v1607, %v498
        %1616 = vrot.lane.b32.xlu0 %v1608, 127
        %v1617 = vpop.permute.xlu0 %1616
        %1618 = vrot.lane.b32.xlu0 %v1609, 127
        %v1619 = vpop.permute.xlu0 %1618
        %1620 = vrot.lane.b32.xlu0 %v1610, 127
        %v1621 = vpop.permute.xlu0 %1620
        %1622 = vrot.lane.b32.xlu0 %v1611, 127
        %v1623 = vpop.permute.xlu0 %1622
        %v1628 = vadd.f32 %v1602, %v1617
        %v1629 = vadd.f32 %v1603, %v1619
        %v1630 = vadd.f32 %v1604, %v1621
        %v1631 = vadd.f32 %v1605, %v1623
        %s1632 = sld [smem:[#allocation3 + $0x1e]]
        %v1633 = vstv %s1632
        %v1634 = vmul.f32 %v1633, %v495
        %v1635 = vmul.f32 %v1633, %v496
        %v1636 = vmul.f32 %v1633, %v497
        %v1637 = vmul.f32 %v1633, %v498
        %v1642 = vrot.slane %v1634, 1
        %v1643 = vrot.slane %v1635, 1
        %v1644 = vsel %vm556, %v1642, %v1643
        %v1645 = vrot.slane %v1636, 1
        %v1646 = vsel %vm556, %v1643, %v1645
        %v1647 = vrot.slane %v1637, 1
        %v1648 = vsel %vm556, %v1645, %v1647
        %v1653 = vadd.f32 %v1628, %v1644
        %v1654 = vadd.f32 %v1629, %v1646
        %v1655 = vadd.f32 %v1630, %v1648
        %v1656 = vadd.f32 %v1631, %v1647
        %s1657 = sld [smem:[#allocation3 + $0x1f]]
        %v1658 = vstv %s1657
        %v1659 = vmul.f32 %v1658, %v495
        %v1660 = vmul.f32 %v1658, %v496
        %v1661 = vmul.f32 %v1658, %v497
        %v1662 = vmul.f32 %v1658, %v498
        %v1667 = vrot.slane %v1659, 1
        %v1668 = vrot.slane %v1660, 1
        %v1669 = vsel %vm556, %v1667, %v1668
        %v1670 = vrot.slane %v1661, 1
        %v1671 = vsel %vm556, %v1668, %v1670
        %v1672 = vrot.slane %v1662, 1
        %v1673 = vsel %vm556, %v1670, %v1672
        %1674 = vrot.lane.b32.xlu0 %v1669, 127
        %v1675 = vpop.permute.xlu0 %1674
        %1676 = vrot.lane.b32.xlu0 %v1671, 127
        %v1677 = vpop.permute.xlu0 %1676
        %1678 = vrot.lane.b32.xlu0 %v1673, 127
        %v1679 = vpop.permute.xlu0 %1678
        %1680 = vrot.lane.b32.xlu0 %v1672, 127
        %v1681 = vpop.permute.xlu0 %1680
        %v1686 = vadd.f32 %v1653, %v1675
        %v1687 = vadd.f32 %v1654, %v1677
        %v1688 = vadd.f32 %v1655, %v1679
        %v1689 = vadd.f32 %v1656, %v1681
        %s1690 = sld [smem:[#allocation3 + $0x20]]
        %v1691 = vstv %s1690
        %v1692 = vmul.f32 %v1691, %v500
        %v1693 = vmul.f32 %v1691, %v501
        %v1694 = vmul.f32 %v1691, %v502
        %v1695 = vmul.f32 %v1691, %v503
        %v1696 = vadd.f32 %v1686, %v1692
        %v1697 = vadd.f32 %v1687, %v1693
        %v1698 = vadd.f32 %v1688, %v1694
        %v1699 = vadd.f32 %v1689, %v1695
        %s1700 = sld [smem:[#allocation3 + $0x21]]
        %v1701 = vstv %s1700
        %v1702 = vmul.f32 %v1701, %v500
        %v1703 = vmul.f32 %v1701, %v501
        %v1704 = vmul.f32 %v1701, %v502
        %v1705 = vmul.f32 %v1701, %v503
        %1710 = vrot.lane.b32.xlu0 %v1702, 127
        %v1711 = vpop.permute.xlu0 %1710
        %1712 = vrot.lane.b32.xlu0 %v1703, 127
        %v1713 = vpop.permute.xlu0 %1712
        %1714 = vrot.lane.b32.xlu0 %v1704, 127
        %v1715 = vpop.permute.xlu0 %1714
        %1716 = vrot.lane.b32.xlu0 %v1705, 127
        %v1717 = vpop.permute.xlu0 %1716
        %v1722 = vadd.f32 %v1696, %v1711
        %v1723 = vadd.f32 %v1697, %v1713
        %v1724 = vadd.f32 %v1698, %v1715
        %v1725 = vadd.f32 %v1699, %v1717
        %s1726 = sld [smem:[#allocation3 + $0x22]]
        %v1727 = vstv %s1726
        %v1728 = vmul.f32 %v1727, %v500
        %v1729 = vmul.f32 %v1727, %v501
        %v1730 = vmul.f32 %v1727, %v502
        %v1731 = vmul.f32 %v1727, %v503
        %v1736 = vrot.slane %v1728, 1
        %v1737 = vrot.slane %v1729, 1
        %v1738 = vsel %vm556, %v1736, %v1737
        %v1739 = vrot.slane %v1730, 1
        %v1740 = vsel %vm556, %v1737, %v1739
        %v1741 = vrot.slane %v1731, 1
        %v1742 = vsel %vm556, %v1739, %v1741
        %v1747 = vadd.f32 %v1722, %v1738
        %v1748 = vadd.f32 %v1723, %v1740
        %v1749 = vadd.f32 %v1724, %v1742
        %v1750 = vadd.f32 %v1725, %v1741
        %s1751 = sld [smem:[#allocation3 + $0x23]]
        %v1752 = vstv %s1751
        %v1753 = vmul.f32 %v1752, %v500
        %v1754 = vmul.f32 %v1752, %v501
        %v1755 = vmul.f32 %v1752, %v502
        %v1756 = vmul.f32 %v1752, %v503
        %v1761 = vrot.slane %v1753, 1
        %v1762 = vrot.slane %v1754, 1
        %v1763 = vsel %vm556, %v1761, %v1762
        %v1764 = vrot.slane %v1755, 1
        %v1765 = vsel %vm556, %v1762, %v1764
        %v1766 = vrot.slane %v1756, 1
        %v1767 = vsel %vm556, %v1764, %v1766
        %1768 = vrot.lane.b32.xlu0 %v1763, 127
        %v1769 = vpop.permute.xlu0 %1768
        %1770 = vrot.lane.b32.xlu0 %v1765, 127
        %v1771 = vpop.permute.xlu0 %1770
        %1772 = vrot.lane.b32.xlu0 %v1767, 127
        %v1773 = vpop.permute.xlu0 %1772
        %1774 = vrot.lane.b32.xlu0 %v1766, 127
        %v1775 = vpop.permute.xlu0 %1774
        %v1780 = vadd.f32 %v1747, %v1769
        %v1781 = vadd.f32 %v1748, %v1771
        %v1782 = vadd.f32 %v1749, %v1773
        %v1783 = vadd.f32 %v1750, %v1775
        %s1784 = sld [smem:[#allocation5 + $0x2]]
        %v1785 = vstv %s1784
        %v1786 = vadd.f32 %v1780, %v1785
        %v1787 = vadd.f32 %v1781, %v1785
        %v1788 = vadd.f32 %v1782, %v1785
        %v1789 = vadd.f32 %v1783, %v1785
        %v1790 = vmax.f32 %v1786, 0.0
        %v1791 = vmax.f32 %v1787, 0.0
        %v1792 = vmax.f32 %v1788, 0.0
        %v1793 = vmax.f32 %v1789, 0.0
        %1798 = vrot.lane.b32.xlu0 %v1790, 127
        %v1799 = vpop.permute.xlu0 %1798
        %1800 = vrot.lane.b32.xlu0 %v1791, 127
        %v1801 = vpop.permute.xlu0 %1800
        %1802 = vrot.lane.b32.xlu0 %v1792, 127
        %v1803 = vpop.permute.xlu0 %1802
        %1804 = vrot.lane.b32.xlu0 %v1793, 127
        %v1805 = vpop.permute.xlu0 %1804
        %v1810 = vmax.f32 %v1790, %v1799
        %v1811 = vmax.f32 %v1791, %v1801
        %v1812 = vmax.f32 %v1792, %v1803
        %v1813 = vmax.f32 %v1793, %v1805
        %v1818 = vrot.slane %v1810, 1
        %v1819 = vrot.slane %v1811, 1
        %v1820 = vsel %vm556, %v1818, %v1819
        %v1821 = vrot.slane %v1812, 1
        %v1822 = vsel %vm556, %v1819, %v1821
        %v1823 = vrot.slane %v1813, 1
        %v1824 = vsel %vm556, %v1821, %v1823
        %v1829 = vmax.f32 %v1810, %v1820
        %v1830 = vmax.f32 %v1811, %v1822
        %v1831 = vmax.f32 %v1812, %v1824
        %v1832 = vmax.f32 %v1813, %v1823
        %v1834 = vsel %vm849, %v1832, 0
        %1836 = vmatprep.subr.mxu0 0.0
        %1837 = vmatpush1.msra.mxu0 0.0
        %1838 = vmatprep.subr.mxu0 0.0
        %1839 = vmatpush1.msra.mxu0 0.0
        %1840 = vmatprep.subr.mxu0 0.0
        %1841 = vmatpush1.msra.mxu0 0.0
        %1842 = vmatprep.subr.mxu0 0.0
        %1843 = vmatpush1.msra.mxu0 0.0
        %1844 = vmatprep.subr.mxu0 0.0
        %1845 = vmatpush1.msra.mxu0 0.0
        %1846 = vmatprep.subr.mxu0 0.0
        %1847 = vmatpush1.msra.mxu0 0.0
        %1848 = vmatprep.subr.mxu0 0.0
        %1849 = vmatpush1.msra.mxu0 0.0
        %1850 = vmatprep.subr.mxu0 0.0
        %1851 = vmatpush1.msra.mxu0 0.0
        %1852 = vmatprep.subr.mxu0 0.0
        %1853 = vmatpush1.msra.mxu0 0.0
        %1854 = vmatprep.subr.mxu0 0.0
        %1855 = vmatpush1.msra.mxu0 0.0
        %1856 = vmatprep.subr.mxu0 0.0
        %1857 = vmatpush1.msra.mxu0 0.0
        %1858 = vmatprep.subr.mxu0 0.0
        %1859 = vmatpush1.msra.mxu0 0.0
        %1860 = vmatprep.subr.mxu0 0.0
        %1861 = vmatpush1.msra.mxu0 %v1834
        %1862 = vmatprep.subr.mxu0 0.0
        %1863 = vmatpush1.msra.mxu0 %v1831
        %1864 = vmatprep.subr.mxu0 0.0
        %1865 = vmatpush1.msra.mxu0 %v1830
        %1866 = vmatprep.subr.mxu0 0.0
        %1867 = vmatpush1.msra.mxu0 %v1829
        %1868 = vmatprep.subr.mxu0 0.0
        %1869 = vmatpush2.msra.mxu0 0.0
        %1870 = vmatprep.subr.mxu0 0.0
        %1871 = vmatpush2.msra.mxu0 0.0
        %1872 = vmatprep.subr.mxu0 0.0
        %1873 = vmatpush2.msra.mxu0 0.0
        %1874 = vmatprep.subr.mxu0 0.0
        %1875 = vmatpush2.msra.mxu0 0.0
        %1876 = vmatprep.subr.mxu0 0.0
        %1877 = vmatpush2.msra.mxu0 0.0
        %1878 = vmatprep.subr.mxu0 0.0
        %1879 = vmatpush2.msra.mxu0 0.0
        %1880 = vmatprep.subr.mxu0 0.0
        %1881 = vmatpush2.msra.mxu0 0.0
        %1882 = vmatprep.subr.mxu0 0.0
        %1883 = vmatpush2.msra.mxu0 0.0
        %1884 = vmatprep.subr.mxu0 0.0
        %1885 = vmatpush2.msra.mxu0 0.0
        %1886 = vmatprep.subr.mxu0 0.0
        %1887 = vmatpush2.msra.mxu0 0.0
        %1888 = vmatprep.subr.mxu0 0.0
        %1889 = vmatpush2.msra.mxu0 0.0
        %1890 = vmatprep.subr.mxu0 0.0
        %1891 = vmatpush2.msra.mxu0 0.0
        %1892 = vmatprep.subr.mxu0 0.0
        %1893 = vmatpush2.msra.mxu0 0.0
        %1894 = vmatprep.subr.mxu0 0.0
        %1895 = vmatpush2.msra.mxu0 0.0
        %1896 = vmatprep.subr.mxu0 0.0
        %1897 = vmatpush2.msra.mxu0 0.0
        %1898 = vmatprep.subr.mxu0 0.0
        %1899 = vmatpush2.msra.mxu0 0.0
        %1900 = vmatprep.mubr.f32.mxu0 0.0
        %1901 = vmatmul.mubr.f32.gmra.mxu0 %v844
        %v1902 = vpop.f32.mrf.mxu0
        %v1903 = vadd.f32 0.0, %v1902
        %v1904 = vpop.f32.mrf.mxu0
        %1905 = vmatprep.mubr.f32.mxu0 0.0
        %1906 = vmatmul.mubr.f32.gmra.mxu0 %v847
        %v1907 = vpop.f32.mrf.mxu0
        %v1908 = vadd.f32 0.0, %v1907
        %v1909 = vpop.f32.mrf.mxu0
        %1910 = vdwg.mxu0
        %v1912 = vsel %vm842, %v1903, 0
        %v1915 = vsel %vm842, %v1908, 0
        %1917 = vmatprep.subr.mxu0 0.0
        %1918 = vmatpush1.msra.mxu0 0.0
        %1919 = vmatprep.subr.mxu0 0.0
        %1920 = vmatpush1.msra.mxu0 0.0
        %1921 = vmatprep.subr.mxu0 0.0
        %1922 = vmatpush1.msra.mxu0 0.0
        %1923 = vmatprep.subr.mxu0 0.0
        %1924 = vmatpush1.msra.mxu0 0.0
        %1925 = vmatprep.subr.mxu0 0.0
        %1926 = vmatpush1.msra.mxu0 0.0
        %1927 = vmatprep.subr.mxu0 0.0
        %1928 = vmatpush1.msra.mxu0 0.0
        %1929 = vmatprep.subr.mxu0 0.0
        %1930 = vmatpush1.msra.mxu0 0.0
        %1931 = vmatprep.subr.mxu0 0.0
        %1932 = vmatpush1.msra.mxu0 0.0
        %1933 = vmatprep.subr.mxu0 0.0
        %1934 = vmatpush1.msra.mxu0 0.0
        %1935 = vmatprep.subr.mxu0 0.0
        %1936 = vmatpush1.msra.mxu0 0.0
        %1937 = vmatprep.subr.mxu0 0.0
        %1938 = vmatpush1.msra.mxu0 0.0
        %1939 = vmatprep.subr.mxu0 0.0
        %1940 = vmatpush1.msra.mxu0 0.0
        %1941 = vmatprep.subr.mxu0 0.0
        %1942 = vmatpush1.msra.mxu0 %v935
        %1943 = vmatprep.subr.mxu0 0.0
        %1944 = vmatpush1.msra.mxu0 %v508
        %1945 = vmatprep.subr.mxu0 0.0
        %1946 = vmatpush1.msra.mxu0 %v507
        %1947 = vmatprep.subr.mxu0 0.0
        %1948 = vmatpush1.msra.mxu0 %v506
        %1949 = vmatprep.subr.mxu0 0.0
        %1950 = vmatpush2.msra.mxu0 0.0
        %1951 = vmatprep.subr.mxu0 0.0
        %1952 = vmatpush2.msra.mxu0 0.0
        %1953 = vmatprep.subr.mxu0 0.0
        %1954 = vmatpush2.msra.mxu0 0.0
        %1955 = vmatprep.subr.mxu0 0.0
        %1956 = vmatpush2.msra.mxu0 0.0
        %1957 = vmatprep.subr.mxu0 0.0
        %1958 = vmatpush2.msra.mxu0 0.0
        %1959 = vmatprep.subr.mxu0 0.0
        %1960 = vmatpush2.msra.mxu0 0.0
        %1961 = vmatprep.subr.mxu0 0.0
        %1962 = vmatpush2.msra.mxu0 0.0
        %1963 = vmatprep.subr.mxu0 0.0
        %1964 = vmatpush2.msra.mxu0 0.0
        %1965 = vmatprep.subr.mxu0 0.0
        %1966 = vmatpush2.msra.mxu0 0.0
        %1967 = vmatprep.subr.mxu0 0.0
        %1968 = vmatpush2.msra.mxu0 0.0
        %1969 = vmatprep.subr.mxu0 0.0
        %1970 = vmatpush2.msra.mxu0 0.0
        %1971 = vmatprep.subr.mxu0 0.0
        %1972 = vmatpush2.msra.mxu0 0.0
        %1973 = vmatprep.subr.mxu0 0.0
        %1974 = vmatpush2.msra.mxu0 0.0
        %1975 = vmatprep.subr.mxu0 0.0
        %1976 = vmatpush2.msra.mxu0 0.0
        %1977 = vmatprep.subr.mxu0 0.0
        %1978 = vmatpush2.msra.mxu0 0.0
        %1979 = vmatprep.subr.mxu0 0.0
        %1980 = vmatpush2.msra.mxu0 0.0
        %1981 = vmatprep.mubr.f32.mxu0 0.0
        %1982 = vmatmul.mubr.f32.gmra.mxu0 %v1912
        %v1983 = vpop.f32.mrf.mxu0
        %v1984 = vadd.f32 0.0, %v1983
        %v1985 = vpop.f32.mrf.mxu0
        %1986 = vmatprep.mubr.f32.mxu0 0.0
        %1987 = vmatmul.mubr.f32.gmra.mxu0 %v1915
        %v1988 = vpop.f32.mrf.mxu0
        %v1989 = vadd.f32 0.0, %v1988
        %v1990 = vpop.f32.mrf.mxu0
        %1991 = vdwg.mxu0
        %s1992 = sld [smem:[#allocation3 + $0x24]]
        %v1993 = vstv %s1992
        %v1994 = vmul.f32 %v1993, %v490
        %v1995 = vmul.f32 %v1993, %v491
        %v1996 = vmul.f32 %v1993, %v492
        %v1997 = vmul.f32 %v1993, %v493
        %v1998 = vadd.f32 %v1994, 0.0
        %v1999 = vadd.f32 %v1995, 0.0
        %v2000 = vadd.f32 %v1996, 0.0
        %v2001 = vadd.f32 %v1997, 0.0
        %s2002 = sld [smem:[#allocation3 + $0x25]]
        %v2003 = vstv %s2002
        %v2004 = vmul.f32 %v2003, %v490
        %v2005 = vmul.f32 %v2003, %v491
        %v2006 = vmul.f32 %v2003, %v492
        %v2007 = vmul.f32 %v2003, %v493
        %2012 = vrot.lane.b32.xlu0 %v2004, 127
        %v2013 = vpop.permute.xlu0 %2012
        %2014 = vrot.lane.b32.xlu0 %v2005, 127
        %v2015 = vpop.permute.xlu0 %2014
        %2016 = vrot.lane.b32.xlu0 %v2006, 127
        %v2017 = vpop.permute.xlu0 %2016
        %2018 = vrot.lane.b32.xlu0 %v2007, 127
        %v2019 = vpop.permute.xlu0 %2018
        %v2024 = vadd.f32 %v1998, %v2013
        %v2025 = vadd.f32 %v1999, %v2015
        %v2026 = vadd.f32 %v2000, %v2017
        %v2027 = vadd.f32 %v2001, %v2019
        %s2028 = sld [smem:[#allocation3 + $0x26]]
        %v2029 = vstv %s2028
        %v2030 = vmul.f32 %v2029, %v490
        %v2031 = vmul.f32 %v2029, %v491
        %v2032 = vmul.f32 %v2029, %v492
        %v2033 = vmul.f32 %v2029, %v493
        %v2038 = vrot.slane %v2030, 1
        %v2039 = vrot.slane %v2031, 1
        %v2040 = vsel %vm556, %v2038, %v2039
        %v2041 = vrot.slane %v2032, 1
        %v2042 = vsel %vm556, %v2039, %v2041
        %v2043 = vrot.slane %v2033, 1
        %v2044 = vsel %vm556, %v2041, %v2043
        %v2049 = vadd.f32 %v2024, %v2040
        %v2050 = vadd.f32 %v2025, %v2042
        %v2051 = vadd.f32 %v2026, %v2044
        %v2052 = vadd.f32 %v2027, %v2043
        %s2053 = sld [smem:[#allocation3 + $0x27]]
        %v2054 = vstv %s2053
        %v2055 = vmul.f32 %v2054, %v490
        %v2056 = vmul.f32 %v2054, %v491
        %v2057 = vmul.f32 %v2054, %v492
        %v2058 = vmul.f32 %v2054, %v493
        %v2063 = vrot.slane %v2055, 1
        %v2064 = vrot.slane %v2056, 1
        %v2065 = vsel %vm556, %v2063, %v2064
        %v2066 = vrot.slane %v2057, 1
        %v2067 = vsel %vm556, %v2064, %v2066
        %v2068 = vrot.slane %v2058, 1
        %v2069 = vsel %vm556, %v2066, %v2068
        %2070 = vrot.lane.b32.xlu0 %v2065, 127
        %v2071 = vpop.permute.xlu0 %2070
        %2072 = vrot.lane.b32.xlu0 %v2067, 127
        %v2073 = vpop.permute.xlu0 %2072
        %2074 = vrot.lane.b32.xlu0 %v2069, 127
        %v2075 = vpop.permute.xlu0 %2074
        %2076 = vrot.lane.b32.xlu0 %v2068, 127
        %v2077 = vpop.permute.xlu0 %2076
        %v2082 = vadd.f32 %v2049, %v2071
        %v2083 = vadd.f32 %v2050, %v2073
        %v2084 = vadd.f32 %v2051, %v2075
        %v2085 = vadd.f32 %v2052, %v2077
        %s2086 = sld [smem:[#allocation3 + $0x28]]
        %v2087 = vstv %s2086
        %v2088 = vmul.f32 %v2087, %v495
        %v2089 = vmul.f32 %v2087, %v496
        %v2090 = vmul.f32 %v2087, %v497
        %v2091 = vmul.f32 %v2087, %v498
        %v2092 = vadd.f32 %v2082, %v2088
        %v2093 = vadd.f32 %v2083, %v2089
        %v2094 = vadd.f32 %v2084, %v2090
        %v2095 = vadd.f32 %v2085, %v2091
        %s2096 = sld [smem:[#allocation3 + $0x29]]
        %v2097 = vstv %s2096
        %v2098 = vmul.f32 %v2097, %v495
        %v2099 = vmul.f32 %v2097, %v496
        %v2100 = vmul.f32 %v2097, %v497
        %v2101 = vmul.f32 %v2097, %v498
        %2106 = vrot.lane.b32.xlu0 %v2098, 127
        %v2107 = vpop.permute.xlu0 %2106
        %2108 = vrot.lane.b32.xlu0 %v2099, 127
        %v2109 = vpop.permute.xlu0 %2108
        %2110 = vrot.lane.b32.xlu0 %v2100, 127
        %v2111 = vpop.permute.xlu0 %2110
        %2112 = vrot.lane.b32.xlu0 %v2101, 127
        %v2113 = vpop.permute.xlu0 %2112
        %v2118 = vadd.f32 %v2092, %v2107
        %v2119 = vadd.f32 %v2093, %v2109
        %v2120 = vadd.f32 %v2094, %v2111
        %v2121 = vadd.f32 %v2095, %v2113
        %s2122 = sld [smem:[#allocation3 + $0x2a]]
        %v2123 = vstv %s2122
        %v2124 = vmul.f32 %v2123, %v495
        %v2125 = vmul.f32 %v2123, %v496
        %v2126 = vmul.f32 %v2123, %v497
        %v2127 = vmul.f32 %v2123, %v498
        %v2132 = vrot.slane %v2124, 1
        %v2133 = vrot.slane %v2125, 1
        %v2134 = vsel %vm556, %v2132, %v2133
        %v2135 = vrot.slane %v2126, 1
        %v2136 = vsel %vm556, %v2133, %v2135
        %v2137 = vrot.slane %v2127, 1
        %v2138 = vsel %vm556, %v2135, %v2137
        %v2143 = vadd.f32 %v2118, %v2134
        %v2144 = vadd.f32 %v2119, %v2136
        %v2145 = vadd.f32 %v2120, %v2138
        %v2146 = vadd.f32 %v2121, %v2137
        %s2147 = sld [smem:[#allocation3 + $0x2b]]
        %v2148 = vstv %s2147
        %v2149 = vmul.f32 %v2148, %v495
        %v2150 = vmul.f32 %v2148, %v496
        %v2151 = vmul.f32 %v2148, %v497
        %v2152 = vmul.f32 %v2148, %v498
        %v2157 = vrot.slane %v2149, 1
        %v2158 = vrot.slane %v2150, 1
        %v2159 = vsel %vm556, %v2157, %v2158
        %v2160 = vrot.slane %v2151, 1
        %v2161 = vsel %vm556, %v2158, %v2160
        %v2162 = vrot.slane %v2152, 1
        %v2163 = vsel %vm556, %v2160, %v2162
        %2164 = vrot.lane.b32.xlu0 %v2159, 127
        %v2165 = vpop.permute.xlu0 %2164
        %2166 = vrot.lane.b32.xlu0 %v2161, 127
        %v2167 = vpop.permute.xlu0 %2166
        %2168 = vrot.lane.b32.xlu0 %v2163, 127
        %v2169 = vpop.permute.xlu0 %2168
        %2170 = vrot.lane.b32.xlu0 %v2162, 127
        %v2171 = vpop.permute.xlu0 %2170
        %v2176 = vadd.f32 %v2143, %v2165
        %v2177 = vadd.f32 %v2144, %v2167
        %v2178 = vadd.f32 %v2145, %v2169
        %v2179 = vadd.f32 %v2146, %v2171
        %s2180 = sld [smem:[#allocation3 + $0x2c]]
        %v2181 = vstv %s2180
        %v2182 = vmul.f32 %v2181, %v500
        %v2183 = vmul.f32 %v2181, %v501
        %v2184 = vmul.f32 %v2181, %v502
        %v2185 = vmul.f32 %v2181, %v503
        %v2186 = vadd.f32 %v2176, %v2182
        %v2187 = vadd.f32 %v2177, %v2183
        %v2188 = vadd.f32 %v2178, %v2184
        %v2189 = vadd.f32 %v2179, %v2185
        %s2190 = sld [smem:[#allocation3 + $0x2d]]
        %v2191 = vstv %s2190
        %v2192 = vmul.f32 %v2191, %v500
        %v2193 = vmul.f32 %v2191, %v501
        %v2194 = vmul.f32 %v2191, %v502
        %v2195 = vmul.f32 %v2191, %v503
        %2200 = vrot.lane.b32.xlu0 %v2192, 127
        %v2201 = vpop.permute.xlu0 %2200
        %2202 = vrot.lane.b32.xlu0 %v2193, 127
        %v2203 = vpop.permute.xlu0 %2202
        %2204 = vrot.lane.b32.xlu0 %v2194, 127
        %v2205 = vpop.permute.xlu0 %2204
        %2206 = vrot.lane.b32.xlu0 %v2195, 127
        %v2207 = vpop.permute.xlu0 %2206
        %v2212 = vadd.f32 %v2186, %v2201
        %v2213 = vadd.f32 %v2187, %v2203
        %v2214 = vadd.f32 %v2188, %v2205
        %v2215 = vadd.f32 %v2189, %v2207
        %s2216 = sld [smem:[#allocation3 + $0x2e]]
        %v2217 = vstv %s2216
        %v2218 = vmul.f32 %v2217, %v500
        %v2219 = vmul.f32 %v2217, %v501
        %v2220 = vmul.f32 %v2217, %v502
        %v2221 = vmul.f32 %v2217, %v503
        %v2226 = vrot.slane %v2218, 1
        %v2227 = vrot.slane %v2219, 1
        %v2228 = vsel %vm556, %v2226, %v2227
        %v2229 = vrot.slane %v2220, 1
        %v2230 = vsel %vm556, %v2227, %v2229
        %v2231 = vrot.slane %v2221, 1
        %v2232 = vsel %vm556, %v2229, %v2231
        %v2237 = vadd.f32 %v2212, %v2228
        %v2238 = vadd.f32 %v2213, %v2230
        %v2239 = vadd.f32 %v2214, %v2232
        %v2240 = vadd.f32 %v2215, %v2231
        %s2241 = sld [smem:[#allocation3 + $0x2f]]
        %v2242 = vstv %s2241
        %v2243 = vmul.f32 %v2242, %v500
        %v2244 = vmul.f32 %v2242, %v501
        %v2245 = vmul.f32 %v2242, %v502
        %v2246 = vmul.f32 %v2242, %v503
        %v2251 = vrot.slane %v2243, 1
        %v2252 = vrot.slane %v2244, 1
        %v2253 = vsel %vm556, %v2251, %v2252
        %v2254 = vrot.slane %v2245, 1
        %v2255 = vsel %vm556, %v2252, %v2254
        %v2256 = vrot.slane %v2246, 1
        %v2257 = vsel %vm556, %v2254, %v2256
        %2258 = vrot.lane.b32.xlu0 %v2253, 127
        %v2259 = vpop.permute.xlu0 %2258
        %2260 = vrot.lane.b32.xlu0 %v2255, 127
        %v2261 = vpop.permute.xlu0 %2260
        %2262 = vrot.lane.b32.xlu0 %v2257, 127
        %v2263 = vpop.permute.xlu0 %2262
        %2264 = vrot.lane.b32.xlu0 %v2256, 127
        %v2265 = vpop.permute.xlu0 %2264
        %v2270 = vadd.f32 %v2237, %v2259
        %v2271 = vadd.f32 %v2238, %v2261
        %v2272 = vadd.f32 %v2239, %v2263
        %v2273 = vadd.f32 %v2240, %v2265
        %s2274 = sld [smem:[#allocation5 + $0x3]]
        %v2275 = vstv %s2274
        %v2276 = vadd.f32 %v2270, %v2275
        %v2277 = vadd.f32 %v2271, %v2275
        %v2278 = vadd.f32 %v2272, %v2275
        %v2279 = vadd.f32 %v2273, %v2275
        %v2280 = vmax.f32 %v2276, 0.0
        %v2281 = vmax.f32 %v2277, 0.0
        %v2282 = vmax.f32 %v2278, 0.0
        %v2283 = vmax.f32 %v2279, 0.0
        %2288 = vrot.lane.b32.xlu0 %v2280, 127
        %v2289 = vpop.permute.xlu0 %2288
        %2290 = vrot.lane.b32.xlu0 %v2281, 127
        %v2291 = vpop.permute.xlu0 %2290
        %2292 = vrot.lane.b32.xlu0 %v2282, 127
        %v2293 = vpop.permute.xlu0 %2292
        %2294 = vrot.lane.b32.xlu0 %v2283, 127
        %v2295 = vpop.permute.xlu0 %2294
        %v2300 = vmax.f32 %v2280, %v2289
        %v2301 = vmax.f32 %v2281, %v2291
        %v2302 = vmax.f32 %v2282, %v2293
        %v2303 = vmax.f32 %v2283, %v2295
        %v2308 = vrot.slane %v2300, 1
        %v2309 = vrot.slane %v2301, 1
        %v2310 = vsel %vm556, %v2308, %v2309
        %v2311 = vrot.slane %v2302, 1
        %v2312 = vsel %vm556, %v2309, %v2311
        %v2313 = vrot.slane %v2303, 1
        %v2314 = vsel %vm556, %v2311, %v2313
        %v2319 = vmax.f32 %v2300, %v2310
        %v2320 = vmax.f32 %v2301, %v2312
        %v2321 = vmax.f32 %v2302, %v2314
        %v2322 = vmax.f32 %v2303, %v2313
        %v2324 = vsel %vm849, %v2322, 0
        %2326 = vmatprep.subr.mxu0 0.0
        %2327 = vmatpush1.msra.mxu0 0.0
        %2328 = vmatprep.subr.mxu0 0.0
        %2329 = vmatpush1.msra.mxu0 0.0
        %2330 = vmatprep.subr.mxu0 0.0
        %2331 = vmatpush1.msra.mxu0 0.0
        %2332 = vmatprep.subr.mxu0 0.0
        %2333 = vmatpush1.msra.mxu0 0.0
        %2334 = vmatprep.subr.mxu0 0.0
        %2335 = vmatpush1.msra.mxu0 0.0
        %2336 = vmatprep.subr.mxu0 0.0
        %2337 = vmatpush1.msra.mxu0 0.0
        %2338 = vmatprep.subr.mxu0 0.0
        %2339 = vmatpush1.msra.mxu0 0.0
        %2340 = vmatprep.subr.mxu0 0.0
        %2341 = vmatpush1.msra.mxu0 0.0
        %2342 = vmatprep.subr.mxu0 0.0
        %2343 = vmatpush1.msra.mxu0 0.0
        %2344 = vmatprep.subr.mxu0 0.0
        %2345 = vmatpush1.msra.mxu0 0.0
        %2346 = vmatprep.subr.mxu0 0.0
        %2347 = vmatpush1.msra.mxu0 0.0
        %2348 = vmatprep.subr.mxu0 0.0
        %2349 = vmatpush1.msra.mxu0 0.0
        %2350 = vmatprep.subr.mxu0 0.0
        %2351 = vmatpush1.msra.mxu0 %v2324
        %2352 = vmatprep.subr.mxu0 0.0
        %2353 = vmatpush1.msra.mxu0 %v2321
        %2354 = vmatprep.subr.mxu0 0.0
        %2355 = vmatpush1.msra.mxu0 %v2320
        %2356 = vmatprep.subr.mxu0 0.0
        %2357 = vmatpush1.msra.mxu0 %v2319
        %2358 = vmatprep.subr.mxu0 0.0
        %2359 = vmatpush2.msra.mxu0 0.0
        %2360 = vmatprep.subr.mxu0 0.0
        %2361 = vmatpush2.msra.mxu0 0.0
        %2362 = vmatprep.subr.mxu0 0.0
        %2363 = vmatpush2.msra.mxu0 0.0
        %2364 = vmatprep.subr.mxu0 0.0
        %2365 = vmatpush2.msra.mxu0 0.0
        %2366 = vmatprep.subr.mxu0 0.0
        %2367 = vmatpush2.msra.mxu0 0.0
        %2368 = vmatprep.subr.mxu0 0.0
        %2369 = vmatpush2.msra.mxu0 0.0
        %2370 = vmatprep.subr.mxu0 0.0
        %2371 = vmatpush2.msra.mxu0 0.0
        %2372 = vmatprep.subr.mxu0 0.0
        %2373 = vmatpush2.msra.mxu0 0.0
        %2374 = vmatprep.subr.mxu0 0.0
        %2375 = vmatpush2.msra.mxu0 0.0
        %2376 = vmatprep.subr.mxu0 0.0
        %2377 = vmatpush2.msra.mxu0 0.0
        %2378 = vmatprep.subr.mxu0 0.0
        %2379 = vmatpush2.msra.mxu0 0.0
        %2380 = vmatprep.subr.mxu0 0.0
        %2381 = vmatpush2.msra.mxu0 0.0
        %2382 = vmatprep.subr.mxu0 0.0
        %2383 = vmatpush2.msra.mxu0 0.0
        %2384 = vmatprep.subr.mxu0 0.0
        %2385 = vmatpush2.msra.mxu0 0.0
        %2386 = vmatprep.subr.mxu0 0.0
        %2387 = vmatpush2.msra.mxu0 0.0
        %2388 = vmatprep.subr.mxu0 0.0
        %2389 = vmatpush2.msra.mxu0 0.0
        %2390 = vmatprep.mubr.f32.mxu0 0.0
        %2391 = vmatmul.mubr.f32.gmra.mxu0 %v844
        %v2392 = vpop.f32.mrf.mxu0
        %v2393 = vadd.f32 0.0, %v2392
        %v2394 = vpop.f32.mrf.mxu0
        %2395 = vmatprep.mubr.f32.mxu0 0.0
        %2396 = vmatmul.mubr.f32.gmra.mxu0 %v847
        %v2397 = vpop.f32.mrf.mxu0
        %v2398 = vadd.f32 0.0, %v2397
        %v2399 = vpop.f32.mrf.mxu0
        %2400 = vdwg.mxu0
        %v2402 = vsel %vm842, %v2393, 0
        %v2405 = vsel %vm842, %v2398, 0
        %2407 = vmatprep.subr.mxu0 0.0
        %2408 = vmatpush1.msra.mxu0 0.0
        %2409 = vmatprep.subr.mxu0 0.0
        %2410 = vmatpush1.msra.mxu0 0.0
        %2411 = vmatprep.subr.mxu0 0.0
        %2412 = vmatpush1.msra.mxu0 0.0
        %2413 = vmatprep.subr.mxu0 0.0
        %2414 = vmatpush1.msra.mxu0 0.0
        %2415 = vmatprep.subr.mxu0 0.0
        %2416 = vmatpush1.msra.mxu0 0.0
        %2417 = vmatprep.subr.mxu0 0.0
        %2418 = vmatpush1.msra.mxu0 0.0
        %2419 = vmatprep.subr.mxu0 0.0
        %2420 = vmatpush1.msra.mxu0 0.0
        %2421 = vmatprep.subr.mxu0 0.0
        %2422 = vmatpush1.msra.mxu0 0.0
        %2423 = vmatprep.subr.mxu0 0.0
        %2424 = vmatpush1.msra.mxu0 0.0
        %2425 = vmatprep.subr.mxu0 0.0
        %2426 = vmatpush1.msra.mxu0 0.0
        %2427 = vmatprep.subr.mxu0 0.0
        %2428 = vmatpush1.msra.mxu0 0.0
        %2429 = vmatprep.subr.mxu0 0.0
        %2430 = vmatpush1.msra.mxu0 0.0
        %2431 = vmatprep.subr.mxu0 0.0
        %2432 = vmatpush1.msra.mxu0 %v935
        %2433 = vmatprep.subr.mxu0 0.0
        %2434 = vmatpush1.msra.mxu0 %v508
        %2435 = vmatprep.subr.mxu0 0.0
        %2436 = vmatpush1.msra.mxu0 %v507
        %2437 = vmatprep.subr.mxu0 0.0
        %2438 = vmatpush1.msra.mxu0 %v506
        %2439 = vmatprep.subr.mxu0 0.0
        %2440 = vmatpush2.msra.mxu0 0.0
        %2441 = vmatprep.subr.mxu0 0.0
        %2442 = vmatpush2.msra.mxu0 0.0
        %2443 = vmatprep.subr.mxu0 0.0
        %2444 = vmatpush2.msra.mxu0 0.0
        %2445 = vmatprep.subr.mxu0 0.0
        %2446 = vmatpush2.msra.mxu0 0.0
        %2447 = vmatprep.subr.mxu0 0.0
        %2448 = vmatpush2.msra.mxu0 0.0
        %2449 = vmatprep.subr.mxu0 0.0
        %2450 = vmatpush2.msra.mxu0 0.0
        %2451 = vmatprep.subr.mxu0 0.0
        %2452 = vmatpush2.msra.mxu0 0.0
        %2453 = vmatprep.subr.mxu0 0.0
        %2454 = vmatpush2.msra.mxu0 0.0
        %2455 = vmatprep.subr.mxu0 0.0
        %2456 = vmatpush2.msra.mxu0 0.0
        %2457 = vmatprep.subr.mxu0 0.0
        %2458 = vmatpush2.msra.mxu0 0.0
        %2459 = vmatprep.subr.mxu0 0.0
        %2460 = vmatpush2.msra.mxu0 0.0
        %2461 = vmatprep.subr.mxu0 0.0
        %2462 = vmatpush2.msra.mxu0 0.0
        %2463 = vmatprep.subr.mxu0 0.0
        %2464 = vmatpush2.msra.mxu0 0.0
        %2465 = vmatprep.subr.mxu0 0.0
        %2466 = vmatpush2.msra.mxu0 0.0
        %2467 = vmatprep.subr.mxu0 0.0
        %2468 = vmatpush2.msra.mxu0 0.0
        %2469 = vmatprep.subr.mxu0 0.0
        %2470 = vmatpush2.msra.mxu0 0.0
        %2471 = vmatprep.mubr.f32.mxu0 0.0
        %2472 = vmatmul.mubr.f32.gmra.mxu0 %v2402
        %v2473 = vpop.f32.mrf.mxu0
        %v2474 = vadd.f32 0.0, %v2473
        %v2475 = vpop.f32.mrf.mxu0
        %2476 = vmatprep.mubr.f32.mxu0 0.0
        %2477 = vmatmul.mubr.f32.gmra.mxu0 %v2405
        %v2478 = vpop.f32.mrf.mxu0
        %v2479 = vadd.f32 0.0, %v2478
        %v2480 = vpop.f32.mrf.mxu0
        %2481 = vdwg.mxu0
        %s2482 = sld [smem:[#allocation3 + $0x30]]
        %v2483 = vstv %s2482
        %v2484 = vmul.f32 %v2483, %v490
        %v2485 = vmul.f32 %v2483, %v491
        %v2486 = vmul.f32 %v2483, %v492
        %v2487 = vmul.f32 %v2483, %v493
        %v2488 = vadd.f32 %v2484, 0.0
        %v2489 = vadd.f32 %v2485, 0.0
        %v2490 = vadd.f32 %v2486, 0.0
        %v2491 = vadd.f32 %v2487, 0.0
        %s2492 = sld [smem:[#allocation3 + $0x31]]
        %v2493 = vstv %s2492
        %v2494 = vmul.f32 %v2493, %v490
        %v2495 = vmul.f32 %v2493, %v491
        %v2496 = vmul.f32 %v2493, %v492
        %v2497 = vmul.f32 %v2493, %v493
        %2502 = vrot.lane.b32.xlu0 %v2494, 127
        %v2503 = vpop.permute.xlu0 %2502
        %2504 = vrot.lane.b32.xlu0 %v2495, 127
        %v2505 = vpop.permute.xlu0 %2504
        %2506 = vrot.lane.b32.xlu0 %v2496, 127
        %v2507 = vpop.permute.xlu0 %2506
        %2508 = vrot.lane.b32.xlu0 %v2497, 127
        %v2509 = vpop.permute.xlu0 %2508
        %v2514 = vadd.f32 %v2488, %v2503
        %v2515 = vadd.f32 %v2489, %v2505
        %v2516 = vadd.f32 %v2490, %v2507
        %v2517 = vadd.f32 %v2491, %v2509
        %s2518 = sld [smem:[#allocation3 + $0x32]]
        %v2519 = vstv %s2518
        %v2520 = vmul.f32 %v2519, %v490
        %v2521 = vmul.f32 %v2519, %v491
        %v2522 = vmul.f32 %v2519, %v492
        %v2523 = vmul.f32 %v2519, %v493
        %v2528 = vrot.slane %v2520, 1
        %v2529 = vrot.slane %v2521, 1
        %v2530 = vsel %vm556, %v2528, %v2529
        %v2531 = vrot.slane %v2522, 1
        %v2532 = vsel %vm556, %v2529, %v2531
        %v2533 = vrot.slane %v2523, 1
        %v2534 = vsel %vm556, %v2531, %v2533
        %v2539 = vadd.f32 %v2514, %v2530
        %v2540 = vadd.f32 %v2515, %v2532
        %v2541 = vadd.f32 %v2516, %v2534
        %v2542 = vadd.f32 %v2517, %v2533
        %s2543 = sld [smem:[#allocation3 + $0x33]]
        %v2544 = vstv %s2543
        %v2545 = vmul.f32 %v2544, %v490
        %v2546 = vmul.f32 %v2544, %v491
        %v2547 = vmul.f32 %v2544, %v492
        %v2548 = vmul.f32 %v2544, %v493
        %v2553 = vrot.slane %v2545, 1
        %v2554 = vrot.slane %v2546, 1
        %v2555 = vsel %vm556, %v2553, %v2554
        %v2556 = vrot.slane %v2547, 1
        %v2557 = vsel %vm556, %v2554, %v2556
        %v2558 = vrot.slane %v2548, 1
        %v2559 = vsel %vm556, %v2556, %v2558
        %2560 = vrot.lane.b32.xlu0 %v2555, 127
        %v2561 = vpop.permute.xlu0 %2560
        %2562 = vrot.lane.b32.xlu0 %v2557, 127
        %v2563 = vpop.permute.xlu0 %2562
        %2564 = vrot.lane.b32.xlu0 %v2559, 127
        %v2565 = vpop.permute.xlu0 %2564
        %2566 = vrot.lane.b32.xlu0 %v2558, 127
        %v2567 = vpop.permute.xlu0 %2566
        %v2572 = vadd.f32 %v2539, %v2561
        %v2573 = vadd.f32 %v2540, %v2563
        %v2574 = vadd.f32 %v2541, %v2565
        %v2575 = vadd.f32 %v2542, %v2567
        %s2576 = sld [smem:[#allocation3 + $0x34]]
        %v2577 = vstv %s2576
        %v2578 = vmul.f32 %v2577, %v495
        %v2579 = vmul.f32 %v2577, %v496
        %v2580 = vmul.f32 %v2577, %v497
        %v2581 = vmul.f32 %v2577, %v498
        %v2582 = vadd.f32 %v2572, %v2578
        %v2583 = vadd.f32 %v2573, %v2579
        %v2584 = vadd.f32 %v2574, %v2580
        %v2585 = vadd.f32 %v2575, %v2581
        %s2586 = sld [smem:[#allocation3 + $0x35]]
        %v2587 = vstv %s2586
        %v2588 = vmul.f32 %v2587, %v495
        %v2589 = vmul.f32 %v2587, %v496
        %v2590 = vmul.f32 %v2587, %v497
        %v2591 = vmul.f32 %v2587, %v498
        %2596 = vrot.lane.b32.xlu0 %v2588, 127
        %v2597 = vpop.permute.xlu0 %2596
        %2598 = vrot.lane.b32.xlu0 %v2589, 127
        %v2599 = vpop.permute.xlu0 %2598
        %2600 = vrot.lane.b32.xlu0 %v2590, 127
        %v2601 = vpop.permute.xlu0 %2600
        %2602 = vrot.lane.b32.xlu0 %v2591, 127
        %v2603 = vpop.permute.xlu0 %2602
        %v2608 = vadd.f32 %v2582, %v2597
        %v2609 = vadd.f32 %v2583, %v2599
        %v2610 = vadd.f32 %v2584, %v2601
        %v2611 = vadd.f32 %v2585, %v2603
        %s2612 = sld [smem:[#allocation3 + $0x36]]
        %v2613 = vstv %s2612
        %v2614 = vmul.f32 %v2613, %v495
        %v2615 = vmul.f32 %v2613, %v496
        %v2616 = vmul.f32 %v2613, %v497
        %v2617 = vmul.f32 %v2613, %v498
        %v2622 = vrot.slane %v2614, 1
        %v2623 = vrot.slane %v2615, 1
        %v2624 = vsel %vm556, %v2622, %v2623
        %v2625 = vrot.slane %v2616, 1
        %v2626 = vsel %vm556, %v2623, %v2625
        %v2627 = vrot.slane %v2617, 1
        %v2628 = vsel %vm556, %v2625, %v2627
        %v2633 = vadd.f32 %v2608, %v2624
        %v2634 = vadd.f32 %v2609, %v2626
        %v2635 = vadd.f32 %v2610, %v2628
        %v2636 = vadd.f32 %v2611, %v2627
        %s2637 = sld [smem:[#allocation3 + $0x37]]
        %v2638 = vstv %s2637
        %v2639 = vmul.f32 %v2638, %v495
        %v2640 = vmul.f32 %v2638, %v496
        %v2641 = vmul.f32 %v2638, %v497
        %v2642 = vmul.f32 %v2638, %v498
        %v2647 = vrot.slane %v2639, 1
        %v2648 = vrot.slane %v2640, 1
        %v2649 = vsel %vm556, %v2647, %v2648
        %v2650 = vrot.slane %v2641, 1
        %v2651 = vsel %vm556, %v2648, %v2650
        %v2652 = vrot.slane %v2642, 1
        %v2653 = vsel %vm556, %v2650, %v2652
        %2654 = vrot.lane.b32.xlu0 %v2649, 127
        %v2655 = vpop.permute.xlu0 %2654
        %2656 = vrot.lane.b32.xlu0 %v2651, 127
        %v2657 = vpop.permute.xlu0 %2656
        %2658 = vrot.lane.b32.xlu0 %v2653, 127
        %v2659 = vpop.permute.xlu0 %2658
        %2660 = vrot.lane.b32.xlu0 %v2652, 127
        %v2661 = vpop.permute.xlu0 %2660
        %v2666 = vadd.f32 %v2633, %v2655
        %v2667 = vadd.f32 %v2634, %v2657
        %v2668 = vadd.f32 %v2635, %v2659
        %v2669 = vadd.f32 %v2636, %v2661
        %s2670 = sld [smem:[#allocation3 + $0x38]]
        %v2671 = vstv %s2670
        %v2672 = vmul.f32 %v2671, %v500
        %v2673 = vmul.f32 %v2671, %v501
        %v2674 = vmul.f32 %v2671, %v502
        %v2675 = vmul.f32 %v2671, %v503
        %v2676 = vadd.f32 %v2666, %v2672
        %v2677 = vadd.f32 %v2667, %v2673
        %v2678 = vadd.f32 %v2668, %v2674
        %v2679 = vadd.f32 %v2669, %v2675
        %s2680 = sld [smem:[#allocation3 + $0x39]]
        %v2681 = vstv %s2680
        %v2682 = vmul.f32 %v2681, %v500
        %v2683 = vmul.f32 %v2681, %v501
        %v2684 = vmul.f32 %v2681, %v502
        %v2685 = vmul.f32 %v2681, %v503
        %2690 = vrot.lane.b32.xlu0 %v2682, 127
        %v2691 = vpop.permute.xlu0 %2690
        %2692 = vrot.lane.b32.xlu0 %v2683, 127
        %v2693 = vpop.permute.xlu0 %2692
        %2694 = vrot.lane.b32.xlu0 %v2684, 127
        %v2695 = vpop.permute.xlu0 %2694
        %2696 = vrot.lane.b32.xlu0 %v2685, 127
        %v2697 = vpop.permute.xlu0 %2696
        %v2702 = vadd.f32 %v2676, %v2691
        %v2703 = vadd.f32 %v2677, %v2693
        %v2704 = vadd.f32 %v2678, %v2695
        %v2705 = vadd.f32 %v2679, %v2697
        %s2706 = sld [smem:[#allocation3 + $0x3a]]
        %v2707 = vstv %s2706
        %v2708 = vmul.f32 %v2707, %v500
        %v2709 = vmul.f32 %v2707, %v501
        %v2710 = vmul.f32 %v2707, %v502
        %v2711 = vmul.f32 %v2707, %v503
        %v2716 = vrot.slane %v2708, 1
        %v2717 = vrot.slane %v2709, 1
        %v2718 = vsel %vm556, %v2716, %v2717
        %v2719 = vrot.slane %v2710, 1
        %v2720 = vsel %vm556, %v2717, %v2719
        %v2721 = vrot.slane %v2711, 1
        %v2722 = vsel %vm556, %v2719, %v2721
        %v2727 = vadd.f32 %v2702, %v2718
        %v2728 = vadd.f32 %v2703, %v2720
        %v2729 = vadd.f32 %v2704, %v2722
        %v2730 = vadd.f32 %v2705, %v2721
        %s2731 = sld [smem:[#allocation3 + $0x3b]]
        %v2732 = vstv %s2731
        %v2733 = vmul.f32 %v2732, %v500
        %v2734 = vmul.f32 %v2732, %v501
        %v2735 = vmul.f32 %v2732, %v502
        %v2736 = vmul.f32 %v2732, %v503
        %v2741 = vrot.slane %v2733, 1
        %v2742 = vrot.slane %v2734, 1
        %v2743 = vsel %vm556, %v2741, %v2742
        %v2744 = vrot.slane %v2735, 1
        %v2745 = vsel %vm556, %v2742, %v2744
        %v2746 = vrot.slane %v2736, 1
        %v2747 = vsel %vm556, %v2744, %v2746
        %2748 = vrot.lane.b32.xlu0 %v2743, 127
        %v2749 = vpop.permute.xlu0 %2748
        %2750 = vrot.lane.b32.xlu0 %v2745, 127
        %v2751 = vpop.permute.xlu0 %2750
        %2752 = vrot.lane.b32.xlu0 %v2747, 127
        %v2753 = vpop.permute.xlu0 %2752
        %2754 = vrot.lane.b32.xlu0 %v2746, 127
        %v2755 = vpop.permute.xlu0 %2754
        %v2760 = vadd.f32 %v2727, %v2749
        %v2761 = vadd.f32 %v2728, %v2751
        %v2762 = vadd.f32 %v2729, %v2753
        %v2763 = vadd.f32 %v2730, %v2755
        %s2764 = sld [smem:[#allocation5 + $0x4]]
        %v2765 = vstv %s2764
        %v2766 = vadd.f32 %v2760, %v2765
        %v2767 = vadd.f32 %v2761, %v2765
        %v2768 = vadd.f32 %v2762, %v2765
        %v2769 = vadd.f32 %v2763, %v2765
        %v2770 = vmax.f32 %v2766, 0.0
        %v2771 = vmax.f32 %v2767, 0.0
        %v2772 = vmax.f32 %v2768, 0.0
        %v2773 = vmax.f32 %v2769, 0.0
        %2778 = vrot.lane.b32.xlu0 %v2770, 127
        %v2779 = vpop.permute.xlu0 %2778
        %2780 = vrot.lane.b32.xlu0 %v2771, 127
        %v2781 = vpop.permute.xlu0 %2780
        %2782 = vrot.lane.b32.xlu0 %v2772, 127
        %v2783 = vpop.permute.xlu0 %2782
        %2784 = vrot.lane.b32.xlu0 %v2773, 127
        %v2785 = vpop.permute.xlu0 %2784
        %v2790 = vmax.f32 %v2770, %v2779
        %v2791 = vmax.f32 %v2771, %v2781
        %v2792 = vmax.f32 %v2772, %v2783
        %v2793 = vmax.f32 %v2773, %v2785
        %v2798 = vrot.slane %v2790, 1
        %v2799 = vrot.slane %v2791, 1
        %v2800 = vsel %vm556, %v2798, %v2799
        %v2801 = vrot.slane %v2792, 1
        %v2802 = vsel %vm556, %v2799, %v2801
        %v2803 = vrot.slane %v2793, 1
        %v2804 = vsel %vm556, %v2801, %v2803
        %v2809 = vmax.f32 %v2790, %v2800
        %v2810 = vmax.f32 %v2791, %v2802
        %v2811 = vmax.f32 %v2792, %v2804
        %v2812 = vmax.f32 %v2793, %v2803
        %v2814 = vsel %vm849, %v2812, 0
        %2816 = vmatprep.subr.mxu0 0.0
        %2817 = vmatpush1.msra.mxu0 0.0
        %2818 = vmatprep.subr.mxu0 0.0
        %2819 = vmatpush1.msra.mxu0 0.0
        %2820 = vmatprep.subr.mxu0 0.0
        %2821 = vmatpush1.msra.mxu0 0.0
        %2822 = vmatprep.subr.mxu0 0.0
        %2823 = vmatpush1.msra.mxu0 0.0
        %2824 = vmatprep.subr.mxu0 0.0
        %2825 = vmatpush1.msra.mxu0 0.0
        %2826 = vmatprep.subr.mxu0 0.0
        %2827 = vmatpush1.msra.mxu0 0.0
        %2828 = vmatprep.subr.mxu0 0.0
        %2829 = vmatpush1.msra.mxu0 0.0
        %2830 = vmatprep.subr.mxu0 0.0
        %2831 = vmatpush1.msra.mxu0 0.0
        %2832 = vmatprep.subr.mxu0 0.0
        %2833 = vmatpush1.msra.mxu0 0.0
        %2834 = vmatprep.subr.mxu0 0.0
        %2835 = vmatpush1.msra.mxu0 0.0
        %2836 = vmatprep.subr.mxu0 0.0
        %2837 = vmatpush1.msra.mxu0 0.0
        %2838 = vmatprep.subr.mxu0 0.0
        %2839 = vmatpush1.msra.mxu0 0.0
        %2840 = vmatprep.subr.mxu0 0.0
        %2841 = vmatpush1.msra.mxu0 %v2814
        %2842 = vmatprep.subr.mxu0 0.0
        %2843 = vmatpush1.msra.mxu0 %v2811
        %2844 = vmatprep.subr.mxu0 0.0
        %2845 = vmatpush1.msra.mxu0 %v2810
        %2846 = vmatprep.subr.mxu0 0.0
        %2847 = vmatpush1.msra.mxu0 %v2809
        %2848 = vmatprep.subr.mxu0 0.0
        %2849 = vmatpush2.msra.mxu0 0.0
        %2850 = vmatprep.subr.mxu0 0.0
        %2851 = vmatpush2.msra.mxu0 0.0
        %2852 = vmatprep.subr.mxu0 0.0
        %2853 = vmatpush2.msra.mxu0 0.0
        %2854 = vmatprep.subr.mxu0 0.0
        %2855 = vmatpush2.msra.mxu0 0.0
        %2856 = vmatprep.subr.mxu0 0.0
        %2857 = vmatpush2.msra.mxu0 0.0
        %2858 = vmatprep.subr.mxu0 0.0
        %2859 = vmatpush2.msra.mxu0 0.0
        %2860 = vmatprep.subr.mxu0 0.0
        %2861 = vmatpush2.msra.mxu0 0.0
        %2862 = vmatprep.subr.mxu0 0.0
        %2863 = vmatpush2.msra.mxu0 0.0
        %2864 = vmatprep.subr.mxu0 0.0
        %2865 = vmatpush2.msra.mxu0 0.0
        %2866 = vmatprep.subr.mxu0 0.0
        %2867 = vmatpush2.msra.mxu0 0.0
        %2868 = vmatprep.subr.mxu0 0.0
        %2869 = vmatpush2.msra.mxu0 0.0
        %2870 = vmatprep.subr.mxu0 0.0
        %2871 = vmatpush2.msra.mxu0 0.0
        %2872 = vmatprep.subr.mxu0 0.0
        %2873 = vmatpush2.msra.mxu0 0.0
        %2874 = vmatprep.subr.mxu0 0.0
        %2875 = vmatpush2.msra.mxu0 0.0
        %2876 = vmatprep.subr.mxu0 0.0
        %2877 = vmatpush2.msra.mxu0 0.0
        %2878 = vmatprep.subr.mxu0 0.0
        %2879 = vmatpush2.msra.mxu0 0.0
        %2880 = vmatprep.mubr.f32.mxu0 0.0
        %2881 = vmatmul.mubr.f32.gmra.mxu0 %v844
        %v2882 = vpop.f32.mrf.mxu0
        %v2883 = vadd.f32 0.0, %v2882
        %v2884 = vpop.f32.mrf.mxu0
        %2885 = vmatprep.mubr.f32.mxu0 0.0
        %2886 = vmatmul.mubr.f32.gmra.mxu0 %v847
        %v2887 = vpop.f32.mrf.mxu0
        %v2888 = vadd.f32 0.0, %v2887
        %v2889 = vpop.f32.mrf.mxu0
        %2890 = vdwg.mxu0
        %v2892 = vsel %vm842, %v2883, 0
        %v2895 = vsel %vm842, %v2888, 0
        %2897 = vmatprep.subr.mxu0 0.0
        %2898 = vmatpush1.msra.mxu0 0.0
        %2899 = vmatprep.subr.mxu0 0.0
        %2900 = vmatpush1.msra.mxu0 0.0
        %2901 = vmatprep.subr.mxu0 0.0
        %2902 = vmatpush1.msra.mxu0 0.0
        %2903 = vmatprep.subr.mxu0 0.0
        %2904 = vmatpush1.msra.mxu0 0.0
        %2905 = vmatprep.subr.mxu0 0.0
        %2906 = vmatpush1.msra.mxu0 0.0
        %2907 = vmatprep.subr.mxu0 0.0
        %2908 = vmatpush1.msra.mxu0 0.0
        %2909 = vmatprep.subr.mxu0 0.0
        %2910 = vmatpush1.msra.mxu0 0.0
        %2911 = vmatprep.subr.mxu0 0.0
        %2912 = vmatpush1.msra.mxu0 0.0
        %2913 = vmatprep.subr.mxu0 0.0
        %2914 = vmatpush1.msra.mxu0 0.0
        %2915 = vmatprep.subr.mxu0 0.0
        %2916 = vmatpush1.msra.mxu0 0.0
        %2917 = vmatprep.subr.mxu0 0.0
        %2918 = vmatpush1.msra.mxu0 0.0
        %2919 = vmatprep.subr.mxu0 0.0
        %2920 = vmatpush1.msra.mxu0 0.0
        %2921 = vmatprep.subr.mxu0 0.0
        %2922 = vmatpush1.msra.mxu0 %v935
        %2923 = vmatprep.subr.mxu0 0.0
        %2924 = vmatpush1.msra.mxu0 %v508
        %2925 = vmatprep.subr.mxu0 0.0
        %2926 = vmatpush1.msra.mxu0 %v507
        %2927 = vmatprep.subr.mxu0 0.0
        %2928 = vmatpush1.msra.mxu0 %v506
        %2929 = vmatprep.subr.mxu0 0.0
        %2930 = vmatpush2.msra.mxu0 0.0
        %2931 = vmatprep.subr.mxu0 0.0
        %2932 = vmatpush2.msra.mxu0 0.0
        %2933 = vmatprep.subr.mxu0 0.0
        %2934 = vmatpush2.msra.mxu0 0.0
        %2935 = vmatprep.subr.mxu0 0.0
        %2936 = vmatpush2.msra.mxu0 0.0
        %2937 = vmatprep.subr.mxu0 0.0
        %2938 = vmatpush2.msra.mxu0 0.0
        %2939 = vmatprep.subr.mxu0 0.0
        %2940 = vmatpush2.msra.mxu0 0.0
        %2941 = vmatprep.subr.mxu0 0.0
        %2942 = vmatpush2.msra.mxu0 0.0
        %2943 = vmatprep.subr.mxu0 0.0
        %2944 = vmatpush2.msra.mxu0 0.0
        %2945 = vmatprep.subr.mxu0 0.0
        %2946 = vmatpush2.msra.mxu0 0.0
        %2947 = vmatprep.subr.mxu0 0.0
        %2948 = vmatpush2.msra.mxu0 0.0
        %2949 = vmatprep.subr.mxu0 0.0
        %2950 = vmatpush2.msra.mxu0 0.0
        %2951 = vmatprep.subr.mxu0 0.0
        %2952 = vmatpush2.msra.mxu0 0.0
        %2953 = vmatprep.subr.mxu0 0.0
        %2954 = vmatpush2.msra.mxu0 0.0
        %2955 = vmatprep.subr.mxu0 0.0
        %2956 = vmatpush2.msra.mxu0 0.0
        %2957 = vmatprep.subr.mxu0 0.0
        %2958 = vmatpush2.msra.mxu0 0.0
        %2959 = vmatprep.subr.mxu0 0.0
        %2960 = vmatpush2.msra.mxu0 0.0
        %2961 = vmatprep.mubr.f32.mxu0 0.0
        %2962 = vmatmul.mubr.f32.gmra.mxu0 %v2892
        %v2963 = vpop.f32.mrf.mxu0
        %v2964 = vadd.f32 0.0, %v2963
        %v2965 = vpop.f32.mrf.mxu0
        %2966 = vmatprep.mubr.f32.mxu0 0.0
        %2967 = vmatmul.mubr.f32.gmra.mxu0 %v2895
        %v2968 = vpop.f32.mrf.mxu0
        %v2969 = vadd.f32 0.0, %v2968
        %v2970 = vpop.f32.mrf.mxu0
        %2971 = vdwg.mxu0
        %v2972 = vld [vmem:[%s8] sm:$0xff]
        %v2973 = vld [vmem:[%s8 + $0x8] sm:$0x7]
        %s2974 = sld [smem:[#allocation7]]
        %v2975 = vstv %s2974
        %v2976 = vmul.f32 %v2975, %v1004
        %v2977 = vmul.f32 %v2975, %v1009
        %v2978 = vadd.f32 %v2976, 0.0
        %v2979 = vadd.f32 %v2977, 0.0
        %s2980 = sld [smem:[#allocation7 + $0x1]]
        %v2981 = vstv %s2980
        %v2982 = vmul.f32 %v2981, %v1004
        %v2983 = vmul.f32 %v2981, %v1009
        %2986 = vrot.lane.b32.xlu0 %v2982, 127
        %v2987 = vpop.permute.xlu0 %2986
        %2988 = vrot.lane.b32.xlu0 %v2983, 127
        %v2989 = vpop.permute.xlu0 %2988
        %v2992 = vadd.f32 %v2978, %v2987
        %v2993 = vadd.f32 %v2979, %v2989
        %s2994 = sld [smem:[#allocation7 + $0x2]]
        %v2995 = vstv %s2994
        %v2996 = vmul.f32 %v2995, %v1004
        %v2997 = vmul.f32 %v2995, %v1009
        %v3000 = vrot.slane %v2996, 1
        %v3001 = vrot.slane %v2997, 1
        %v3002 = vsel %vm556, %v3000, %v3001
        %v3005 = vadd.f32 %v2992, %v3002
        %v3006 = vadd.f32 %v2993, %v3001
        %s3007 = sld [smem:[#allocation7 + $0x3]]
        %v3008 = vstv %s3007
        %v3009 = vmul.f32 %v3008, %v1004
        %v3010 = vmul.f32 %v3008, %v1009
        %v3013 = vrot.slane %v3009, 1
        %v3014 = vrot.slane %v3010, 1
        %v3015 = vsel %vm556, %v3013, %v3014
        %3016 = vrot.lane.b32.xlu0 %v3015, 127
        %v3017 = vpop.permute.xlu0 %3016
        %3018 = vrot.lane.b32.xlu0 %v3014, 127
        %v3019 = vpop.permute.xlu0 %3018
        %v3022 = vadd.f32 %v3005, %v3017
        %v3023 = vadd.f32 %v3006, %v3019
        %s3024 = sld [smem:[#allocation7 + $0x4]]
        %v3025 = vstv %s3024
        %v3026 = vmul.f32 %v3025, %v1494
        %v3027 = vmul.f32 %v3025, %v1499
        %v3028 = vadd.f32 %v3022, %v3026
        %v3029 = vadd.f32 %v3023, %v3027
        %s3030 = sld [smem:[#allocation7 + $0x5]]
        %v3031 = vstv %s3030
        %v3032 = vmul.f32 %v3031, %v1494
        %v3033 = vmul.f32 %v3031, %v1499
        %3036 = vrot.lane.b32.xlu0 %v3032, 127
        %v3037 = vpop.permute.xlu0 %3036
        %3038 = vrot.lane.b32.xlu0 %v3033, 127
        %v3039 = vpop.permute.xlu0 %3038
        %v3042 = vadd.f32 %v3028, %v3037
        %v3043 = vadd.f32 %v3029, %v3039
        %s3044 = sld [smem:[#allocation7 + $0x6]]
        %v3045 = vstv %s3044
        %v3046 = vmul.f32 %v3045, %v1494
        %v3047 = vmul.f32 %v3045, %v1499
        %v3050 = vrot.slane %v3046, 1
        %v3051 = vrot.slane %v3047, 1
        %v3052 = vsel %vm556, %v3050, %v3051
        %v3055 = vadd.f32 %v3042, %v3052
        %v3056 = vadd.f32 %v3043, %v3051
        %s3057 = sld [smem:[#allocation7 + $0x7]]
        %v3058 = vstv %s3057
        %v3059 = vmul.f32 %v3058, %v1494
        %v3060 = vmul.f32 %v3058, %v1499
        %v3063 = vrot.slane %v3059, 1
        %v3064 = vrot.slane %v3060, 1
        %v3065 = vsel %vm556, %v3063, %v3064
        %3066 = vrot.lane.b32.xlu0 %v3065, 127
        %v3067 = vpop.permute.xlu0 %3066
        %3068 = vrot.lane.b32.xlu0 %v3064, 127
        %v3069 = vpop.permute.xlu0 %3068
        %v3072 = vadd.f32 %v3055, %v3067
        %v3073 = vadd.f32 %v3056, %v3069
        %s3074 = sld [smem:[#allocation7 + $0x8]]
        %v3075 = vstv %s3074
        %v3076 = vmul.f32 %v3075, %v1984
        %v3077 = vmul.f32 %v3075, %v1989
        %v3078 = vadd.f32 %v3072, %v3076
        %v3079 = vadd.f32 %v3073, %v3077
        %s3080 = sld [smem:[#allocation7 + $0x9]]
        %v3081 = vstv %s3080
        %v3082 = vmul.f32 %v3081, %v1984
        %v3083 = vmul.f32 %v3081, %v1989
        %3086 = vrot.lane.b32.xlu0 %v3082, 127
        %v3087 = vpop.permute.xlu0 %3086
        %3088 = vrot.lane.b32.xlu0 %v3083, 127
        %v3089 = vpop.permute.xlu0 %3088
        %v3092 = vadd.f32 %v3078, %v3087
        %v3093 = vadd.f32 %v3079, %v3089
        %s3094 = sld [smem:[#allocation7 + $0xa]]
        %v3095 = vstv %s3094
        %v3096 = vmul.f32 %v3095, %v1984
        %v3097 = vmul.f32 %v3095, %v1989
        %v3100 = vrot.slane %v3096, 1
        %v3101 = vrot.slane %v3097, 1
        %v3102 = vsel %vm556, %v3100, %v3101
        %v3105 = vadd.f32 %v3092, %v3102
        %v3106 = vadd.f32 %v3093, %v3101
        %s3107 = sld [smem:[#allocation7 + $0xb]]
        %v3108 = vstv %s3107
        %v3109 = vmul.f32 %v3108, %v1984
        %v3110 = vmul.f32 %v3108, %v1989
        %v3113 = vrot.slane %v3109, 1
        %v3114 = vrot.slane %v3110, 1
        %v3115 = vsel %vm556, %v3113, %v3114
        %3116 = vrot.lane.b32.xlu0 %v3115, 127
        %v3117 = vpop.permute.xlu0 %3116
        %3118 = vrot.lane.b32.xlu0 %v3114, 127
        %v3119 = vpop.permute.xlu0 %3118
        %v3122 = vadd.f32 %v3105, %v3117
        %v3123 = vadd.f32 %v3106, %v3119
        %s3124 = sld [smem:[#allocation7 + $0xc]]
        %v3125 = vstv %s3124
        %v3126 = vmul.f32 %v3125, %v2474
        %v3127 = vmul.f32 %v3125, %v2479
        %v3128 = vadd.f32 %v3122, %v3126
        %v3129 = vadd.f32 %v3123, %v3127
        %s3130 = sld [smem:[#allocation7 + $0xd]]
        %v3131 = vstv %s3130
        %v3132 = vmul.f32 %v3131, %v2474
        %v3133 = vmul.f32 %v3131, %v2479
        %3136 = vrot.lane.b32.xlu0 %v3132, 127
        %v3137 = vpop.permute.xlu0 %3136
        %3138 = vrot.lane.b32.xlu0 %v3133, 127
        %v3139 = vpop.permute.xlu0 %3138
        %v3142 = vadd.f32 %v3128, %v3137
        %v3143 = vadd.f32 %v3129, %v3139
        %s3144 = sld [smem:[#allocation7 + $0xe]]
        %v3145 = vstv %s3144
        %v3146 = vmul.f32 %v3145, %v2474
        %v3147 = vmul.f32 %v3145, %v2479
        %v3150 = vrot.slane %v3146, 1
        %v3151 = vrot.slane %v3147, 1
        %v3152 = vsel %vm556, %v3150, %v3151
        %v3155 = vadd.f32 %v3142, %v3152
        %v3156 = vadd.f32 %v3143, %v3151
        %s3157 = sld [smem:[#allocation7 + $0xf]]
        %v3158 = vstv %s3157
        %v3159 = vmul.f32 %v3158, %v2474
        %v3160 = vmul.f32 %v3158, %v2479
        %v3163 = vrot.slane %v3159, 1
        %v3164 = vrot.slane %v3160, 1
        %v3165 = vsel %vm556, %v3163, %v3164
        %3166 = vrot.lane.b32.xlu0 %v3165, 127
        %v3167 = vpop.permute.xlu0 %3166
        %3168 = vrot.lane.b32.xlu0 %v3164, 127
        %v3169 = vpop.permute.xlu0 %3168
        %v3172 = vadd.f32 %v3155, %v3167
        %v3173 = vadd.f32 %v3156, %v3169
        %s3174 = sld [smem:[#allocation7 + $0x10]]
        %v3175 = vstv %s3174
        %v3176 = vmul.f32 %v3175, %v2964
        %v3177 = vmul.f32 %v3175, %v2969
        %v3178 = vadd.f32 %v3172, %v3176
        %v3179 = vadd.f32 %v3173, %v3177
        %s3180 = sld [smem:[#allocation7 + $0x11]]
        %v3181 = vstv %s3180
        %v3182 = vmul.f32 %v3181, %v2964
        %v3183 = vmul.f32 %v3181, %v2969
        %3186 = vrot.lane.b32.xlu0 %v3182, 127
        %v3187 = vpop.permute.xlu0 %3186
        %3188 = vrot.lane.b32.xlu0 %v3183, 127
        %v3189 = vpop.permute.xlu0 %3188
        %v3192 = vadd.f32 %v3178, %v3187
        %v3193 = vadd.f32 %v3179, %v3189
        %s3194 = sld [smem:[#allocation7 + $0x12]]
        %v3195 = vstv %s3194
        %v3196 = vmul.f32 %v3195, %v2964
        %v3197 = vmul.f32 %v3195, %v2969
        %v3200 = vrot.slane %v3196, 1
        %v3201 = vrot.slane %v3197, 1
        %v3202 = vsel %vm556, %v3200, %v3201
        %v3205 = vadd.f32 %v3192, %v3202
        %v3206 = vadd.f32 %v3193, %v3201
        %s3207 = sld [smem:[#allocation7 + $0x13]]
        %v3208 = vstv %s3207
        %v3209 = vmul.f32 %v3208, %v2964
        %v3210 = vmul.f32 %v3208, %v2969
        %v3213 = vrot.slane %v3209, 1
        %v3214 = vrot.slane %v3210, 1
        %v3215 = vsel %vm556, %v3213, %v3214
        %3216 = vrot.lane.b32.xlu0 %v3215, 127
        %v3217 = vpop.permute.xlu0 %3216
        %3218 = vrot.lane.b32.xlu0 %v3214, 127
        %v3219 = vpop.permute.xlu0 %3218
        %v3222 = vadd.f32 %v3205, %v3217
        %v3223 = vadd.f32 %v3206, %v3219
        %s3224 = sld [smem:[#allocation8]]
        %v3225 = vstv %s3224
        %v3226 = vadd.f32 %v3222, %v3225
        %v3227 = vadd.f32 %v3223, %v3225
        %v3228 = vmax.f32 %v3226, 0.0
        %v3229 = vmax.f32 %v3227, 0.0
        %3232 = vrot.lane.b32.xlu0 %v3228, 127
        %v3233 = vpop.permute.xlu0 %3232
        %3234 = vrot.lane.b32.xlu0 %v3229, 127
        %v3235 = vpop.permute.xlu0 %3234
        %v3238 = vmax.f32 %v3228, %v3233
        %v3239 = vmax.f32 %v3229, %v3235
        %v3242 = vrot.slane %v3238, 1
        %v3243 = vrot.slane %v3239, 1
        %v3244 = vsel %vm556, %v3242, %v3243
        %v3247 = vmax.f32 %v3238, %v3244
        %v3248 = vmax.f32 %v3239, %v3243
        %v3249 = vld [vmem:[%s7] sm:$0xff]
        %v3250 = vld [vmem:[%s7 + $0x8] sm:$0xff]
        %v3251 = vld [vmem:[%s7 + $0x10] sm:$0xff]
        %v3252 = vld [vmem:[%s7 + $0x18] sm:$0xff]
        %v3253 = vld [vmem:[%s7 + $0x20] sm:$0xff]
        %v3254 = vld [vmem:[%s7 + $0x28] sm:$0xff]
        %v3255 = vld [vmem:[%s7 + $0x30] sm:$0xff]
        %v3256 = vld [vmem:[%s7 + $0x38] sm:$0xf]
        %vm3257 = vcmask 89088
        %v3259 = vsel %vm3257, %v3249, 0
        %v3262 = vsel %vm3257, %v3250, 0
        %v3265 = vsel %vm3257, %v3251, 0
        %v3268 = vsel %vm3257, %v3252, 0
        %v3271 = vsel %vm3257, %v3253, 0
        %v3274 = vsel %vm3257, %v3254, 0
        %v3277 = vsel %vm3257, %v3255, 0
        %v3280 = vsel %vm3257, %v3256, 0
        %vm3282 = vcmask 1042432
        %v3284 = vsel %vm3282, %v3248, 0
        %3286 = vmatprep.subr.mxu0 0.0
        %3287 = vmatpush1.msra.mxu0 0.0
        %3288 = vmatprep.subr.mxu0 0.0
        %3289 = vmatpush1.msra.mxu0 0.0
        %3290 = vmatprep.subr.mxu0 0.0
        %3291 = vmatpush1.msra.mxu0 0.0
        %3292 = vmatprep.subr.mxu0 0.0
        %3293 = vmatpush1.msra.mxu0 0.0
        %3294 = vmatprep.subr.mxu0 0.0
        %3295 = vmatpush1.msra.mxu0 0.0
        %3296 = vmatprep.subr.mxu0 0.0
        %3297 = vmatpush1.msra.mxu0 0.0
        %3298 = vmatprep.subr.mxu0 0.0
        %3299 = vmatpush1.msra.mxu0 0.0
        %3300 = vmatprep.subr.mxu0 0.0
        %3301 = vmatpush1.msra.mxu0 0.0
        %3302 = vmatprep.subr.mxu0 0.0
        %3303 = vmatpush1.msra.mxu0 0.0
        %3304 = vmatprep.subr.mxu0 0.0
        %3305 = vmatpush1.msra.mxu0 0.0
        %3306 = vmatprep.subr.mxu0 0.0
        %3307 = vmatpush1.msra.mxu0 0.0
        %3308 = vmatprep.subr.mxu0 0.0
        %3309 = vmatpush1.msra.mxu0 0.0
        %3310 = vmatprep.subr.mxu0 0.0
        %3311 = vmatpush1.msra.mxu0 0.0
        %3312 = vmatprep.subr.mxu0 0.0
        %3313 = vmatpush1.msra.mxu0 0.0
        %3314 = vmatprep.subr.mxu0 0.0
        %3315 = vmatpush1.msra.mxu0 %v3284
        %3316 = vmatprep.subr.mxu0 0.0
        %3317 = vmatpush1.msra.mxu0 %v3247
        %3318 = vmatprep.subr.mxu0 0.0
        %3319 = vmatpush2.msra.mxu0 0.0
        %3320 = vmatprep.subr.mxu0 0.0
        %3321 = vmatpush2.msra.mxu0 0.0
        %3322 = vmatprep.subr.mxu0 0.0
        %3323 = vmatpush2.msra.mxu0 0.0
        %3324 = vmatprep.subr.mxu0 0.0
        %3325 = vmatpush2.msra.mxu0 0.0
        %3326 = vmatprep.subr.mxu0 0.0
        %3327 = vmatpush2.msra.mxu0 0.0
        %3328 = vmatprep.subr.mxu0 0.0
        %3329 = vmatpush2.msra.mxu0 0.0
        %3330 = vmatprep.subr.mxu0 0.0
        %3331 = vmatpush2.msra.mxu0 0.0
        %3332 = vmatprep.subr.mxu0 0.0
        %3333 = vmatpush2.msra.mxu0 0.0
        %3334 = vmatprep.subr.mxu0 0.0
        %3335 = vmatpush2.msra.mxu0 0.0
        %3336 = vmatprep.subr.mxu0 0.0
        %3337 = vmatpush2.msra.mxu0 0.0
        %3338 = vmatprep.subr.mxu0 0.0
        %3339 = vmatpush2.msra.mxu0 0.0
        %3340 = vmatprep.subr.mxu0 0.0
        %3341 = vmatpush2.msra.mxu0 0.0
        %3342 = vmatprep.subr.mxu0 0.0
        %3343 = vmatpush2.msra.mxu0 0.0
        %3344 = vmatprep.subr.mxu0 0.0
        %3345 = vmatpush2.msra.mxu0 0.0
        %3346 = vmatprep.subr.mxu0 0.0
        %3347 = vmatpush2.msra.mxu0 0.0
        %3348 = vmatprep.subr.mxu0 0.0
        %3349 = vmatpush2.msra.mxu0 0.0
        %3350 = vmatprep.mubr.f32.mxu0 0.0
        %3351 = vmatmul.mubr.f32.gmra.mxu0 %v3259
        %v3352 = vpop.f32.mrf.mxu0
        %v3353 = vadd.f32 0.0, %v3352
        %v3354 = vpop.f32.mrf.mxu0
        %3355 = vmatprep.mubr.f32.mxu0 0.0
        %3356 = vmatmul.mubr.f32.gmra.mxu0 %v3262
        %v3357 = vpop.f32.mrf.mxu0
        %v3358 = vadd.f32 0.0, %v3357
        %v3359 = vpop.f32.mrf.mxu0
        %3360 = vmatprep.mubr.f32.mxu0 0.0
        %3361 = vmatmul.mubr.f32.gmra.mxu0 %v3265
        %v3362 = vpop.f32.mrf.mxu0
        %v3363 = vadd.f32 0.0, %v3362
        %v3364 = vpop.f32.mrf.mxu0
        %3365 = vmatprep.mubr.f32.mxu0 0.0
        %3366 = vmatmul.mubr.f32.gmra.mxu0 %v3268
        %v3367 = vpop.f32.mrf.mxu0
        %v3368 = vadd.f32 0.0, %v3367
        %v3369 = vpop.f32.mrf.mxu0
        %3370 = vmatprep.mubr.f32.mxu0 0.0
        %3371 = vmatmul.mubr.f32.gmra.mxu0 %v3271
        %v3372 = vpop.f32.mrf.mxu0
        %v3373 = vadd.f32 0.0, %v3372
        %v3374 = vpop.f32.mrf.mxu0
        %3375 = vmatprep.mubr.f32.mxu0 0.0
        %3376 = vmatmul.mubr.f32.gmra.mxu0 %v3274
        %v3377 = vpop.f32.mrf.mxu0
        %v3378 = vadd.f32 0.0, %v3377
        %v3379 = vpop.f32.mrf.mxu0
        %3380 = vmatprep.mubr.f32.mxu0 0.0
        %3381 = vmatmul.mubr.f32.gmra.mxu0 %v3277
        %v3382 = vpop.f32.mrf.mxu0
        %v3383 = vadd.f32 0.0, %v3382
        %v3384 = vpop.f32.mrf.mxu0
        %3385 = vmatprep.mubr.f32.mxu0 0.0
        %3386 = vmatmul.mubr.f32.gmra.mxu0 %v3280
        %v3387 = vpop.f32.mrf.mxu0
        %v3388 = vadd.f32 0.0, %v3387
        %v3389 = vpop.f32.mrf.mxu0
        %3390 = vdwg.mxu0
        %s3391 = sld [smem:[#allocation7 + $0x14]]
        %v3392 = vstv %s3391
        %v3393 = vmul.f32 %v3392, %v1004
        %v3394 = vmul.f32 %v3392, %v1009
        %v3395 = vadd.f32 %v3393, 0.0
        %v3396 = vadd.f32 %v3394, 0.0
        %s3397 = sld [smem:[#allocation7 + $0x15]]
        %v3398 = vstv %s3397
        %v3399 = vmul.f32 %v3398, %v1004
        %v3400 = vmul.f32 %v3398, %v1009
        %3403 = vrot.lane.b32.xlu0 %v3399, 127
        %v3404 = vpop.permute.xlu0 %3403
        %3405 = vrot.lane.b32.xlu0 %v3400, 127
        %v3406 = vpop.permute.xlu0 %3405
        %v3409 = vadd.f32 %v3395, %v3404
        %v3410 = vadd.f32 %v3396, %v3406
        %s3411 = sld [smem:[#allocation7 + $0x16]]
        %v3412 = vstv %s3411
        %v3413 = vmul.f32 %v3412, %v1004
        %v3414 = vmul.f32 %v3412, %v1009
        %v3417 = vrot.slane %v3413, 1
        %v3418 = vrot.slane %v3414, 1
        %v3419 = vsel %vm556, %v3417, %v3418
        %v3422 = vadd.f32 %v3409, %v3419
        %v3423 = vadd.f32 %v3410, %v3418
        %s3424 = sld [smem:[#allocation7 + $0x17]]
        %v3425 = vstv %s3424
        %v3426 = vmul.f32 %v3425, %v1004
        %v3427 = vmul.f32 %v3425, %v1009
        %v3430 = vrot.slane %v3426, 1
        %v3431 = vrot.slane %v3427, 1
        %v3432 = vsel %vm556, %v3430, %v3431
        %3433 = vrot.lane.b32.xlu0 %v3432, 127
        %v3434 = vpop.permute.xlu0 %3433
        %3435 = vrot.lane.b32.xlu0 %v3431, 127
        %v3436 = vpop.permute.xlu0 %3435
        %v3439 = vadd.f32 %v3422, %v3434
        %v3440 = vadd.f32 %v3423, %v3436
        %s3441 = sld [smem:[#allocation7 + $0x18]]
        %v3442 = vstv %s3441
        %v3443 = vmul.f32 %v3442, %v1494
        %v3444 = vmul.f32 %v3442, %v1499
        %v3445 = vadd.f32 %v3439, %v3443
        %v3446 = vadd.f32 %v3440, %v3444
        %s3447 = sld [smem:[#allocation7 + $0x19]]
        %v3448 = vstv %s3447
        %v3449 = vmul.f32 %v3448, %v1494
        %v3450 = vmul.f32 %v3448, %v1499
        %3453 = vrot.lane.b32.xlu0 %v3449, 127
        %v3454 = vpop.permute.xlu0 %3453
        %3455 = vrot.lane.b32.xlu0 %v3450, 127
        %v3456 = vpop.permute.xlu0 %3455
        %v3459 = vadd.f32 %v3445, %v3454
        %v3460 = vadd.f32 %v3446, %v3456
        %s3461 = sld [smem:[#allocation7 + $0x1a]]
        %v3462 = vstv %s3461
        %v3463 = vmul.f32 %v3462, %v1494
        %v3464 = vmul.f32 %v3462, %v1499
        %v3467 = vrot.slane %v3463, 1
        %v3468 = vrot.slane %v3464, 1
        %v3469 = vsel %vm556, %v3467, %v3468
        %v3472 = vadd.f32 %v3459, %v3469
        %v3473 = vadd.f32 %v3460, %v3468
        %s3474 = sld [smem:[#allocation7 + $0x1b]]
        %v3475 = vstv %s3474
        %v3476 = vmul.f32 %v3475, %v1494
        %v3477 = vmul.f32 %v3475, %v1499
        %v3480 = vrot.slane %v3476, 1
        %v3481 = vrot.slane %v3477, 1
        %v3482 = vsel %vm556, %v3480, %v3481
        %3483 = vrot.lane.b32.xlu0 %v3482, 127
        %v3484 = vpop.permute.xlu0 %3483
        %3485 = vrot.lane.b32.xlu0 %v3481, 127
        %v3486 = vpop.permute.xlu0 %3485
        %v3489 = vadd.f32 %v3472, %v3484
        %v3490 = vadd.f32 %v3473, %v3486
        %s3491 = sld [smem:[#allocation7 + $0x1c]]
        %v3492 = vstv %s3491
        %v3493 = vmul.f32 %v3492, %v1984
        %v3494 = vmul.f32 %v3492, %v1989
        %v3495 = vadd.f32 %v3489, %v3493
        %v3496 = vadd.f32 %v3490, %v3494
        %s3497 = sld [smem:[#allocation7 + $0x1d]]
        %v3498 = vstv %s3497
        %v3499 = vmul.f32 %v3498, %v1984
        %v3500 = vmul.f32 %v3498, %v1989
        %3503 = vrot.lane.b32.xlu0 %v3499, 127
        %v3504 = vpop.permute.xlu0 %3503
        %3505 = vrot.lane.b32.xlu0 %v3500, 127
        %v3506 = vpop.permute.xlu0 %3505
        %v3509 = vadd.f32 %v3495, %v3504
        %v3510 = vadd.f32 %v3496, %v3506
        %s3511 = sld [smem:[#allocation7 + $0x1e]]
        %v3512 = vstv %s3511
        %v3513 = vmul.f32 %v3512, %v1984
        %v3514 = vmul.f32 %v3512, %v1989
        %v3517 = vrot.slane %v3513, 1
        %v3518 = vrot.slane %v3514, 1
        %v3519 = vsel %vm556, %v3517, %v3518
        %v3522 = vadd.f32 %v3509, %v3519
        %v3523 = vadd.f32 %v3510, %v3518
        %s3524 = sld [smem:[#allocation7 + $0x1f]]
        %v3525 = vstv %s3524
        %v3526 = vmul.f32 %v3525, %v1984
        %v3527 = vmul.f32 %v3525, %v1989
        %v3530 = vrot.slane %v3526, 1
        %v3531 = vrot.slane %v3527, 1
        %v3532 = vsel %vm556, %v3530, %v3531
        %3533 = vrot.lane.b32.xlu0 %v3532, 127
        %v3534 = vpop.permute.xlu0 %3533
        %3535 = vrot.lane.b32.xlu0 %v3531, 127
        %v3536 = vpop.permute.xlu0 %3535
        %v3539 = vadd.f32 %v3522, %v3534
        %v3540 = vadd.f32 %v3523, %v3536
        %s3541 = sld [smem:[#allocation7 + $0x20]]
        %v3542 = vstv %s3541
        %v3543 = vmul.f32 %v3542, %v2474
        %v3544 = vmul.f32 %v3542, %v2479
        %v3545 = vadd.f32 %v3539, %v3543
        %v3546 = vadd.f32 %v3540, %v3544
        %s3547 = sld [smem:[#allocation7 + $0x21]]
        %v3548 = vstv %s3547
        %v3549 = vmul.f32 %v3548, %v2474
        %v3550 = vmul.f32 %v3548, %v2479
        %3553 = vrot.lane.b32.xlu0 %v3549, 127
        %v3554 = vpop.permute.xlu0 %3553
        %3555 = vrot.lane.b32.xlu0 %v3550, 127
        %v3556 = vpop.permute.xlu0 %3555
        %v3559 = vadd.f32 %v3545, %v3554
        %v3560 = vadd.f32 %v3546, %v3556
        %s3561 = sld [smem:[#allocation7 + $0x22]]
        %v3562 = vstv %s3561
        %v3563 = vmul.f32 %v3562, %v2474
        %v3564 = vmul.f32 %v3562, %v2479
        %v3567 = vrot.slane %v3563, 1
        %v3568 = vrot.slane %v3564, 1
        %v3569 = vsel %vm556, %v3567, %v3568
        %v3572 = vadd.f32 %v3559, %v3569
        %v3573 = vadd.f32 %v3560, %v3568
        %s3574 = sld [smem:[#allocation7 + $0x23]]
        %v3575 = vstv %s3574
        %v3576 = vmul.f32 %v3575, %v2474
        %v3577 = vmul.f32 %v3575, %v2479
        %v3580 = vrot.slane %v3576, 1
        %v3581 = vrot.slane %v3577, 1
        %v3582 = vsel %vm556, %v3580, %v3581
        %3583 = vrot.lane.b32.xlu0 %v3582, 127
        %v3584 = vpop.permute.xlu0 %3583
        %3585 = vrot.lane.b32.xlu0 %v3581, 127
        %v3586 = vpop.permute.xlu0 %3585
        %v3589 = vadd.f32 %v3572, %v3584
        %v3590 = vadd.f32 %v3573, %v3586
        %s3591 = sld [smem:[#allocation7 + $0x24]]
        %v3592 = vstv %s3591
        %v3593 = vmul.f32 %v3592, %v2964
        %v3594 = vmul.f32 %v3592, %v2969
        %v3595 = vadd.f32 %v3589, %v3593
        %v3596 = vadd.f32 %v3590, %v3594
        %s3597 = sld [smem:[#allocation7 + $0x25]]
        %v3598 = vstv %s3597
        %v3599 = vmul.f32 %v3598, %v2964
        %v3600 = vmul.f32 %v3598, %v2969
        %3603 = vrot.lane.b32.xlu0 %v3599, 127
        %v3604 = vpop.permute.xlu0 %3603
        %3605 = vrot.lane.b32.xlu0 %v3600, 127
        %v3606 = vpop.permute.xlu0 %3605
        %v3609 = vadd.f32 %v3595, %v3604
        %v3610 = vadd.f32 %v3596, %v3606
        %s3611 = sld [smem:[#allocation7 + $0x26]]
        %v3612 = vstv %s3611
        %v3613 = vmul.f32 %v3612, %v2964
        %v3614 = vmul.f32 %v3612, %v2969
        %v3617 = vrot.slane %v3613, 1
        %v3618 = vrot.slane %v3614, 1
        %v3619 = vsel %vm556, %v3617, %v3618
        %v3622 = vadd.f32 %v3609, %v3619
        %v3623 = vadd.f32 %v3610, %v3618
        %s3624 = sld [smem:[#allocation7 + $0x27]]
        %v3625 = vstv %s3624
        %v3626 = vmul.f32 %v3625, %v2964
        %v3627 = vmul.f32 %v3625, %v2969
        %v3630 = vrot.slane %v3626, 1
        %v3631 = vrot.slane %v3627, 1
        %v3632 = vsel %vm556, %v3630, %v3631
        %3633 = vrot.lane.b32.xlu0 %v3632, 127
        %v3634 = vpop.permute.xlu0 %3633
        %3635 = vrot.lane.b32.xlu0 %v3631, 127
        %v3636 = vpop.permute.xlu0 %3635
        %v3639 = vadd.f32 %v3622, %v3634
        %v3640 = vadd.f32 %v3623, %v3636
        %s3641 = sld [smem:[#allocation8 + $0x1]]
        %v3642 = vstv %s3641
        %v3643 = vadd.f32 %v3639, %v3642
        %v3644 = vadd.f32 %v3640, %v3642
        %v3645 = vmax.f32 %v3643, 0.0
        %v3646 = vmax.f32 %v3644, 0.0
        %3649 = vrot.lane.b32.xlu0 %v3645, 127
        %v3650 = vpop.permute.xlu0 %3649
        %3651 = vrot.lane.b32.xlu0 %v3646, 127
        %v3652 = vpop.permute.xlu0 %3651
        %v3655 = vmax.f32 %v3645, %v3650
        %v3656 = vmax.f32 %v3646, %v3652
        %v3659 = vrot.slane %v3655, 1
        %v3660 = vrot.slane %v3656, 1
        %v3661 = vsel %vm556, %v3659, %v3660
        %v3664 = vmax.f32 %v3655, %v3661
        %v3665 = vmax.f32 %v3656, %v3660
        %s3666 = scalar_lea.vmem %s7, 64
        %v3667 = vld [vmem:[%s3666] sm:$0xff]
        %v3668 = vld [vmem:[%s3666 + $0x8] sm:$0xff]
        %v3669 = vld [vmem:[%s3666 + $0x10] sm:$0xff]
        %v3670 = vld [vmem:[%s3666 + $0x18] sm:$0xff]
        %v3671 = vld [vmem:[%s3666 + $0x20] sm:$0xff]
        %v3672 = vld [vmem:[%s3666 + $0x28] sm:$0xff]
        %v3673 = vld [vmem:[%s3666 + $0x30] sm:$0xff]
        %v3674 = vld [vmem:[%s3666 + $0x38] sm:$0xf]
        %v3676 = vsel %vm3257, %v3667, 0
        %v3679 = vsel %vm3257, %v3668, 0
        %v3682 = vsel %vm3257, %v3669, 0
        %v3685 = vsel %vm3257, %v3670, 0
        %v3688 = vsel %vm3257, %v3671, 0
        %v3691 = vsel %vm3257, %v3672, 0
        %v3694 = vsel %vm3257, %v3673, 0
        %v3697 = vsel %vm3257, %v3674, 0
        %v3700 = vsel %vm3282, %v3665, 0
        %3702 = vmatprep.subr.mxu0 0.0
        %3703 = vmatpush1.msra.mxu0 0.0
        %3704 = vmatprep.subr.mxu0 0.0
        %3705 = vmatpush1.msra.mxu0 0.0
        %3706 = vmatprep.subr.mxu0 0.0
        %3707 = vmatpush1.msra.mxu0 0.0
        %3708 = vmatprep.subr.mxu0 0.0
        %3709 = vmatpush1.msra.mxu0 0.0
        %3710 = vmatprep.subr.mxu0 0.0
        %3711 = vmatpush1.msra.mxu0 0.0
        %3712 = vmatprep.subr.mxu0 0.0
        %3713 = vmatpush1.msra.mxu0 0.0
        %3714 = vmatprep.subr.mxu0 0.0
        %3715 = vmatpush1.msra.mxu0 0.0
        %3716 = vmatprep.subr.mxu0 0.0
        %3717 = vmatpush1.msra.mxu0 0.0
        %3718 = vmatprep.subr.mxu0 0.0
        %3719 = vmatpush1.msra.mxu0 0.0
        %3720 = vmatprep.subr.mxu0 0.0
        %3721 = vmatpush1.msra.mxu0 0.0
        %3722 = vmatprep.subr.mxu0 0.0
        %3723 = vmatpush1.msra.mxu0 0.0
        %3724 = vmatprep.subr.mxu0 0.0
        %3725 = vmatpush1.msra.mxu0 0.0
        %3726 = vmatprep.subr.mxu0 0.0
        %3727 = vmatpush1.msra.mxu0 0.0
        %3728 = vmatprep.subr.mxu0 0.0
        %3729 = vmatpush1.msra.mxu0 0.0
        %3730 = vmatprep.subr.mxu0 0.0
        %3731 = vmatpush1.msra.mxu0 %v3700
        %3732 = vmatprep.subr.mxu0 0.0
        %3733 = vmatpush1.msra.mxu0 %v3664
        %3734 = vmatprep.subr.mxu0 0.0
        %3735 = vmatpush2.msra.mxu0 0.0
        %3736 = vmatprep.subr.mxu0 0.0
        %3737 = vmatpush2.msra.mxu0 0.0
        %3738 = vmatprep.subr.mxu0 0.0
        %3739 = vmatpush2.msra.mxu0 0.0
        %3740 = vmatprep.subr.mxu0 0.0
        %3741 = vmatpush2.msra.mxu0 0.0
        %3742 = vmatprep.subr.mxu0 0.0
        %3743 = vmatpush2.msra.mxu0 0.0
        %3744 = vmatprep.subr.mxu0 0.0
        %3745 = vmatpush2.msra.mxu0 0.0
        %3746 = vmatprep.subr.mxu0 0.0
        %3747 = vmatpush2.msra.mxu0 0.0
        %3748 = vmatprep.subr.mxu0 0.0
        %3749 = vmatpush2.msra.mxu0 0.0
        %3750 = vmatprep.subr.mxu0 0.0
        %3751 = vmatpush2.msra.mxu0 0.0
        %3752 = vmatprep.subr.mxu0 0.0
        %3753 = vmatpush2.msra.mxu0 0.0
        %3754 = vmatprep.subr.mxu0 0.0
        %3755 = vmatpush2.msra.mxu0 0.0
        %3756 = vmatprep.subr.mxu0 0.0
        %3757 = vmatpush2.msra.mxu0 0.0
        %3758 = vmatprep.subr.mxu0 0.0
        %3759 = vmatpush2.msra.mxu0 0.0
        %3760 = vmatprep.subr.mxu0 0.0
        %3761 = vmatpush2.msra.mxu0 0.0
        %3762 = vmatprep.subr.mxu0 0.0
        %3763 = vmatpush2.msra.mxu0 0.0
        %3764 = vmatprep.subr.mxu0 0.0
        %3765 = vmatpush2.msra.mxu0 0.0
        %3766 = vmatprep.mubr.f32.mxu0 0.0
        %3767 = vmatmul.mubr.f32.gmra.mxu0 %v3676
        %v3768 = vpop.f32.mrf.mxu0
        %v3769 = vadd.f32 0.0, %v3768
        %v3770 = vpop.f32.mrf.mxu0
        %3771 = vmatprep.mubr.f32.mxu0 0.0
        %3772 = vmatmul.mubr.f32.gmra.mxu0 %v3679
        %v3773 = vpop.f32.mrf.mxu0
        %v3774 = vadd.f32 0.0, %v3773
        %v3775 = vpop.f32.mrf.mxu0
        %3776 = vmatprep.mubr.f32.mxu0 0.0
        %3777 = vmatmul.mubr.f32.gmra.mxu0 %v3682
        %v3778 = vpop.f32.mrf.mxu0
        %v3779 = vadd.f32 0.0, %v3778
        %v3780 = vpop.f32.mrf.mxu0
        %3781 = vmatprep.mubr.f32.mxu0 0.0
        %3782 = vmatmul.mubr.f32.gmra.mxu0 %v3685
        %v3783 = vpop.f32.mrf.mxu0
        %v3784 = vadd.f32 0.0, %v3783
        %v3785 = vpop.f32.mrf.mxu0
        %3786 = vmatprep.mubr.f32.mxu0 0.0
        %3787 = vmatmul.mubr.f32.gmra.mxu0 %v3688
        %v3788 = vpop.f32.mrf.mxu0
        %v3789 = vadd.f32 0.0, %v3788
        %v3790 = vpop.f32.mrf.mxu0
        %3791 = vmatprep.mubr.f32.mxu0 0.0
        %3792 = vmatmul.mubr.f32.gmra.mxu0 %v3691
        %v3793 = vpop.f32.mrf.mxu0
        %v3794 = vadd.f32 0.0, %v3793
        %v3795 = vpop.f32.mrf.mxu0
        %3796 = vmatprep.mubr.f32.mxu0 0.0
        %3797 = vmatmul.mubr.f32.gmra.mxu0 %v3694
        %v3798 = vpop.f32.mrf.mxu0
        %v3799 = vadd.f32 0.0, %v3798
        %v3800 = vpop.f32.mrf.mxu0
        %3801 = vmatprep.mubr.f32.mxu0 0.0
        %3802 = vmatmul.mubr.f32.gmra.mxu0 %v3697
        %v3803 = vpop.f32.mrf.mxu0
        %v3804 = vadd.f32 0.0, %v3803
        %v3805 = vpop.f32.mrf.mxu0
        %3806 = vdwg.mxu0
        %v3808 = vsel %vm3257, %v3769, 0
        %v3811 = vsel %vm3257, %v3774, 0
        %v3814 = vsel %vm3257, %v3779, 0
        %v3817 = vsel %vm3257, %v3784, 0
        %v3820 = vsel %vm3257, %v3789, 0
        %v3823 = vsel %vm3257, %v3794, 0
        %v3826 = vsel %vm3257, %v3799, 0
        %v3829 = vsel %vm3257, %v3804, 0
        %v3832 = vsel %vm3282, %v2973, 0
        %3834 = vmatprep.subr.mxu0 0.0
        %3835 = vmatpush1.msra.mxu0 0.0
        %3836 = vmatprep.subr.mxu0 0.0
        %3837 = vmatpush1.msra.mxu0 0.0
        %3838 = vmatprep.subr.mxu0 0.0
        %3839 = vmatpush1.msra.mxu0 0.0
        %3840 = vmatprep.subr.mxu0 0.0
        %3841 = vmatpush1.msra.mxu0 0.0
        %3842 = vmatprep.subr.mxu0 0.0
        %3843 = vmatpush1.msra.mxu0 0.0
        %3844 = vmatprep.subr.mxu0 0.0
        %3845 = vmatpush1.msra.mxu0 0.0
        %3846 = vmatprep.subr.mxu0 0.0
        %3847 = vmatpush1.msra.mxu0 0.0
        %3848 = vmatprep.subr.mxu0 0.0
        %3849 = vmatpush1.msra.mxu0 0.0
        %3850 = vmatprep.subr.mxu0 0.0
        %3851 = vmatpush1.msra.mxu0 0.0
        %3852 = vmatprep.subr.mxu0 0.0
        %3853 = vmatpush1.msra.mxu0 0.0
        %3854 = vmatprep.subr.mxu0 0.0
        %3855 = vmatpush1.msra.mxu0 0.0
        %3856 = vmatprep.subr.mxu0 0.0
        %3857 = vmatpush1.msra.mxu0 0.0
        %3858 = vmatprep.subr.mxu0 0.0
        %3859 = vmatpush1.msra.mxu0 0.0
        %3860 = vmatprep.subr.mxu0 0.0
        %3861 = vmatpush1.msra.mxu0 0.0
        %3862 = vmatprep.subr.mxu0 0.0
        %3863 = vmatpush1.msra.mxu0 %v3832
        %3864 = vmatprep.subr.mxu0 0.0
        %3865 = vmatpush1.msra.mxu0 %v2972
        %3866 = vmatprep.subr.mxu0 0.0
        %3867 = vmatpush2.msra.mxu0 0.0
        %3868 = vmatprep.subr.mxu0 0.0
        %3869 = vmatpush2.msra.mxu0 0.0
        %3870 = vmatprep.subr.mxu0 0.0
        %3871 = vmatpush2.msra.mxu0 0.0
        %3872 = vmatprep.subr.mxu0 0.0
        %3873 = vmatpush2.msra.mxu0 0.0
        %3874 = vmatprep.subr.mxu0 0.0
        %3875 = vmatpush2.msra.mxu0 0.0
        %3876 = vmatprep.subr.mxu0 0.0
        %3877 = vmatpush2.msra.mxu0 0.0
        %3878 = vmatprep.subr.mxu0 0.0
        %3879 = vmatpush2.msra.mxu0 0.0
        %3880 = vmatprep.subr.mxu0 0.0
        %3881 = vmatpush2.msra.mxu0 0.0
        %3882 = vmatprep.subr.mxu0 0.0
        %3883 = vmatpush2.msra.mxu0 0.0
        %3884 = vmatprep.subr.mxu0 0.0
        %3885 = vmatpush2.msra.mxu0 0.0
        %3886 = vmatprep.subr.mxu0 0.0
        %3887 = vmatpush2.msra.mxu0 0.0
        %3888 = vmatprep.subr.mxu0 0.0
        %3889 = vmatpush2.msra.mxu0 0.0
        %3890 = vmatprep.subr.mxu0 0.0
        %3891 = vmatpush2.msra.mxu0 0.0
        %3892 = vmatprep.subr.mxu0 0.0
        %3893 = vmatpush2.msra.mxu0 0.0
        %3894 = vmatprep.subr.mxu0 0.0
        %3895 = vmatpush2.msra.mxu0 0.0
        %3896 = vmatprep.subr.mxu0 0.0
        %3897 = vmatpush2.msra.mxu0 0.0
        %3898 = vmatprep.mubr.f32.mxu0 0.0
        %3899 = vmatmul.mubr.f32.gmra.mxu0 %v3808
        %v3900 = vpop.f32.mrf.mxu0
        %v3901 = vadd.f32 0.0, %v3900
        %v3902 = vpop.f32.mrf.mxu0
        %3903 = vmatprep.mubr.f32.mxu0 0.0
        %3904 = vmatmul.mubr.f32.gmra.mxu0 %v3811
        %v3905 = vpop.f32.mrf.mxu0
        %v3906 = vadd.f32 0.0, %v3905
        %v3907 = vpop.f32.mrf.mxu0
        %3908 = vmatprep.mubr.f32.mxu0 0.0
        %3909 = vmatmul.mubr.f32.gmra.mxu0 %v3814
        %v3910 = vpop.f32.mrf.mxu0
        %v3911 = vadd.f32 0.0, %v3910
        %v3912 = vpop.f32.mrf.mxu0
        %3913 = vmatprep.mubr.f32.mxu0 0.0
        %3914 = vmatmul.mubr.f32.gmra.mxu0 %v3817
        %v3915 = vpop.f32.mrf.mxu0
        %v3916 = vadd.f32 0.0, %v3915
        %v3917 = vpop.f32.mrf.mxu0
        %3918 = vmatprep.mubr.f32.mxu0 0.0
        %3919 = vmatmul.mubr.f32.gmra.mxu0 %v3820
        %v3920 = vpop.f32.mrf.mxu0
        %v3921 = vadd.f32 0.0, %v3920
        %v3922 = vpop.f32.mrf.mxu0
        %3923 = vmatprep.mubr.f32.mxu0 0.0
        %3924 = vmatmul.mubr.f32.gmra.mxu0 %v3823
        %v3925 = vpop.f32.mrf.mxu0
        %v3926 = vadd.f32 0.0, %v3925
        %v3927 = vpop.f32.mrf.mxu0
        %3928 = vmatprep.mubr.f32.mxu0 0.0
        %3929 = vmatmul.mubr.f32.gmra.mxu0 %v3826
        %v3930 = vpop.f32.mrf.mxu0
        %v3931 = vadd.f32 0.0, %v3930
        %v3932 = vpop.f32.mrf.mxu0
        %3933 = vmatprep.mubr.f32.mxu0 0.0
        %3934 = vmatmul.mubr.f32.gmra.mxu0 %v3829
        %v3935 = vpop.f32.mrf.mxu0
        %v3936 = vadd.f32 0.0, %v3935
        %v3937 = vpop.f32.mrf.mxu0
        %3938 = vdwg.mxu0
        %v3940 = vsel %vm3257, %v3353, 0
        %v3943 = vsel %vm3257, %v3358, 0
        %v3946 = vsel %vm3257, %v3363, 0
        %v3949 = vsel %vm3257, %v3368, 0
        %v3952 = vsel %vm3257, %v3373, 0
        %v3955 = vsel %vm3257, %v3378, 0
        %v3958 = vsel %vm3257, %v3383, 0
        %v3961 = vsel %vm3257, %v3388, 0
        %3963 = vmatprep.subr.mxu0 0.0
        %3964 = vmatpush1.msra.mxu0 0.0
        %3965 = vmatprep.subr.mxu0 0.0
        %3966 = vmatpush1.msra.mxu0 0.0
        %3967 = vmatprep.subr.mxu0 0.0
        %3968 = vmatpush1.msra.mxu0 0.0
        %3969 = vmatprep.subr.mxu0 0.0
        %3970 = vmatpush1.msra.mxu0 0.0
        %3971 = vmatprep.subr.mxu0 0.0
        %3972 = vmatpush1.msra.mxu0 0.0
        %3973 = vmatprep.subr.mxu0 0.0
        %3974 = vmatpush1.msra.mxu0 0.0
        %3975 = vmatprep.subr.mxu0 0.0
        %3976 = vmatpush1.msra.mxu0 0.0
        %3977 = vmatprep.subr.mxu0 0.0
        %3978 = vmatpush1.msra.mxu0 0.0
        %3979 = vmatprep.subr.mxu0 0.0
        %3980 = vmatpush1.msra.mxu0 0.0
        %3981 = vmatprep.subr.mxu0 0.0
        %3982 = vmatpush1.msra.mxu0 0.0
        %3983 = vmatprep.subr.mxu0 0.0
        %3984 = vmatpush1.msra.mxu0 0.0
        %3985 = vmatprep.subr.mxu0 0.0
        %3986 = vmatpush1.msra.mxu0 0.0
        %3987 = vmatprep.subr.mxu0 0.0
        %3988 = vmatpush1.msra.mxu0 0.0
        %3989 = vmatprep.subr.mxu0 0.0
        %3990 = vmatpush1.msra.mxu0 0.0
        %3991 = vmatprep.subr.mxu0 0.0
        %3992 = vmatpush1.msra.mxu0 %v3832
        %3993 = vmatprep.subr.mxu0 0.0
        %3994 = vmatpush1.msra.mxu0 %v2972
        %3995 = vmatprep.subr.mxu0 0.0
        %3996 = vmatpush2.msra.mxu0 0.0
        %3997 = vmatprep.subr.mxu0 0.0
        %3998 = vmatpush2.msra.mxu0 0.0
        %3999 = vmatprep.subr.mxu0 0.0
        %4000 = vmatpush2.msra.mxu0 0.0
        %4001 = vmatprep.subr.mxu0 0.0
        %4002 = vmatpush2.msra.mxu0 0.0
        %4003 = vmatprep.subr.mxu0 0.0
        %4004 = vmatpush2.msra.mxu0 0.0
        %4005 = vmatprep.subr.mxu0 0.0
        %4006 = vmatpush2.msra.mxu0 0.0
        %4007 = vmatprep.subr.mxu0 0.0
        %4008 = vmatpush2.msra.mxu0 0.0
        %4009 = vmatprep.subr.mxu0 0.0
        %4010 = vmatpush2.msra.mxu0 0.0
        %4011 = vmatprep.subr.mxu0 0.0
        %4012 = vmatpush2.msra.mxu0 0.0
        %4013 = vmatprep.subr.mxu0 0.0
        %4014 = vmatpush2.msra.mxu0 0.0
        %4015 = vmatprep.subr.mxu0 0.0
        %4016 = vmatpush2.msra.mxu0 0.0
        %4017 = vmatprep.subr.mxu0 0.0
        %4018 = vmatpush2.msra.mxu0 0.0
        %4019 = vmatprep.subr.mxu0 0.0
        %4020 = vmatpush2.msra.mxu0 0.0
        %4021 = vmatprep.subr.mxu0 0.0
        %4022 = vmatpush2.msra.mxu0 0.0
        %4023 = vmatprep.subr.mxu0 0.0
        %4024 = vmatpush2.msra.mxu0 0.0
        %4025 = vmatprep.subr.mxu0 0.0
        %4026 = vmatpush2.msra.mxu0 0.0
        %4027 = vmatprep.mubr.f32.mxu0 0.0
        %4028 = vmatmul.mubr.f32.gmra.mxu0 %v3940
        %v4029 = vpop.f32.mrf.mxu0
        %v4030 = vadd.f32 %v3901, %v4029
        %v4031 = vpop.f32.mrf.mxu0
        %4032 = vmatprep.mubr.f32.mxu0 0.0
        %4033 = vmatmul.mubr.f32.gmra.mxu0 %v3943
        %v4034 = vpop.f32.mrf.mxu0
        %v4035 = vadd.f32 %v3906, %v4034
        %v4036 = vpop.f32.mrf.mxu0
        %4037 = vmatprep.mubr.f32.mxu0 0.0
        %4038 = vmatmul.mubr.f32.gmra.mxu0 %v3946
        %v4039 = vpop.f32.mrf.mxu0
        %v4040 = vadd.f32 %v3911, %v4039
        %v4041 = vpop.f32.mrf.mxu0
        %4042 = vmatprep.mubr.f32.mxu0 0.0
        %4043 = vmatmul.mubr.f32.gmra.mxu0 %v3949
        %v4044 = vpop.f32.mrf.mxu0
        %v4045 = vadd.f32 %v3916, %v4044
        %v4046 = vpop.f32.mrf.mxu0
        %4047 = vmatprep.mubr.f32.mxu0 0.0
        %4048 = vmatmul.mubr.f32.gmra.mxu0 %v3952
        %v4049 = vpop.f32.mrf.mxu0
        %v4050 = vadd.f32 %v3921, %v4049
        %v4051 = vpop.f32.mrf.mxu0
        %4052 = vmatprep.mubr.f32.mxu0 0.0
        %4053 = vmatmul.mubr.f32.gmra.mxu0 %v3955
        %v4054 = vpop.f32.mrf.mxu0
        %v4055 = vadd.f32 %v3926, %v4054
        %v4056 = vpop.f32.mrf.mxu0
        %4057 = vmatprep.mubr.f32.mxu0 0.0
        %4058 = vmatmul.mubr.f32.gmra.mxu0 %v3958
        %v4059 = vpop.f32.mrf.mxu0
        %v4060 = vadd.f32 %v3931, %v4059
        %v4061 = vpop.f32.mrf.mxu0
        %4062 = vmatprep.mubr.f32.mxu0 0.0
        %4063 = vmatmul.mubr.f32.gmra.mxu0 %v3961
        %v4064 = vpop.f32.mrf.mxu0
        %v4065 = vadd.f32 %v3936, %v4064
        %v4066 = vpop.f32.mrf.mxu0
        %4067 = vdwg.mxu0
        %s4068 = sld [smem:[#allocation7 + $0x28]]
        %v4069 = vstv %s4068
        %v4070 = vmul.f32 %v4069, %v1004
        %v4071 = vmul.f32 %v4069, %v1009
        %v4072 = vadd.f32 %v4070, 0.0
        %v4073 = vadd.f32 %v4071, 0.0
        %s4074 = sld [smem:[#allocation7 + $0x29]]
        %v4075 = vstv %s4074
        %v4076 = vmul.f32 %v4075, %v1004
        %v4077 = vmul.f32 %v4075, %v1009
        %4080 = vrot.lane.b32.xlu0 %v4076, 127
        %v4081 = vpop.permute.xlu0 %4080
        %4082 = vrot.lane.b32.xlu0 %v4077, 127
        %v4083 = vpop.permute.xlu0 %4082
        %v4086 = vadd.f32 %v4072, %v4081
        %v4087 = vadd.f32 %v4073, %v4083
        %s4088 = sld [smem:[#allocation7 + $0x2a]]
        %v4089 = vstv %s4088
        %v4090 = vmul.f32 %v4089, %v1004
        %v4091 = vmul.f32 %v4089, %v1009
        %v4094 = vrot.slane %v4090, 1
        %v4095 = vrot.slane %v4091, 1
        %v4096 = vsel %vm556, %v4094, %v4095
        %v4099 = vadd.f32 %v4086, %v4096
        %v4100 = vadd.f32 %v4087, %v4095
        %s4101 = sld [smem:[#allocation7 + $0x2b]]
        %v4102 = vstv %s4101
        %v4103 = vmul.f32 %v4102, %v1004
        %v4104 = vmul.f32 %v4102, %v1009
        %v4107 = vrot.slane %v4103, 1
        %v4108 = vrot.slane %v4104, 1
        %v4109 = vsel %vm556, %v4107, %v4108
        %4110 = vrot.lane.b32.xlu0 %v4109, 127
        %v4111 = vpop.permute.xlu0 %4110
        %4112 = vrot.lane.b32.xlu0 %v4108, 127
        %v4113 = vpop.permute.xlu0 %4112
        %v4116 = vadd.f32 %v4099, %v4111
        %v4117 = vadd.f32 %v4100, %v4113
        %s4118 = sld [smem:[#allocation7 + $0x2c]]
        %v4119 = vstv %s4118
        %v4120 = vmul.f32 %v4119, %v1494
        %v4121 = vmul.f32 %v4119, %v1499
        %v4122 = vadd.f32 %v4116, %v4120
        %v4123 = vadd.f32 %v4117, %v4121
        %s4124 = sld [smem:[#allocation7 + $0x2d]]
        %v4125 = vstv %s4124
        %v4126 = vmul.f32 %v4125, %v1494
        %v4127 = vmul.f32 %v4125, %v1499
        %4130 = vrot.lane.b32.xlu0 %v4126, 127
        %v4131 = vpop.permute.xlu0 %4130
        %4132 = vrot.lane.b32.xlu0 %v4127, 127
        %v4133 = vpop.permute.xlu0 %4132
        %v4136 = vadd.f32 %v4122, %v4131
        %v4137 = vadd.f32 %v4123, %v4133
        %s4138 = sld [smem:[#allocation7 + $0x2e]]
        %v4139 = vstv %s4138
        %v4140 = vmul.f32 %v4139, %v1494
        %v4141 = vmul.f32 %v4139, %v1499
        %v4144 = vrot.slane %v4140, 1
        %v4145 = vrot.slane %v4141, 1
        %v4146 = vsel %vm556, %v4144, %v4145
        %v4149 = vadd.f32 %v4136, %v4146
        %v4150 = vadd.f32 %v4137, %v4145
        %s4151 = sld [smem:[#allocation7 + $0x2f]]
        %v4152 = vstv %s4151
        %v4153 = vmul.f32 %v4152, %v1494
        %v4154 = vmul.f32 %v4152, %v1499
        %v4157 = vrot.slane %v4153, 1
        %v4158 = vrot.slane %v4154, 1
        %v4159 = vsel %vm556, %v4157, %v4158
        %4160 = vrot.lane.b32.xlu0 %v4159, 127
        %v4161 = vpop.permute.xlu0 %4160
        %4162 = vrot.lane.b32.xlu0 %v4158, 127
        %v4163 = vpop.permute.xlu0 %4162
        %v4166 = vadd.f32 %v4149, %v4161
        %v4167 = vadd.f32 %v4150, %v4163
        %s4168 = sld [smem:[#allocation7 + $0x30]]
        %v4169 = vstv %s4168
        %v4170 = vmul.f32 %v4169, %v1984
        %v4171 = vmul.f32 %v4169, %v1989
        %v4172 = vadd.f32 %v4166, %v4170
        %v4173 = vadd.f32 %v4167, %v4171
        %s4174 = sld [smem:[#allocation7 + $0x31]]
        %v4175 = vstv %s4174
        %v4176 = vmul.f32 %v4175, %v1984
        %v4177 = vmul.f32 %v4175, %v1989
        %4180 = vrot.lane.b32.xlu0 %v4176, 127
        %v4181 = vpop.permute.xlu0 %4180
        %4182 = vrot.lane.b32.xlu0 %v4177, 127
        %v4183 = vpop.permute.xlu0 %4182
        %v4186 = vadd.f32 %v4172, %v4181
        %v4187 = vadd.f32 %v4173, %v4183
        %s4188 = sld [smem:[#allocation7 + $0x32]]
        %v4189 = vstv %s4188
        %v4190 = vmul.f32 %v4189, %v1984
        %v4191 = vmul.f32 %v4189, %v1989
        %v4194 = vrot.slane %v4190, 1
        %v4195 = vrot.slane %v4191, 1
        %v4196 = vsel %vm556, %v4194, %v4195
        %v4199 = vadd.f32 %v4186, %v4196
        %v4200 = vadd.f32 %v4187, %v4195
        %s4201 = sld [smem:[#allocation7 + $0x33]]
        %v4202 = vstv %s4201
        %v4203 = vmul.f32 %v4202, %v1984
        %v4204 = vmul.f32 %v4202, %v1989
        %v4207 = vrot.slane %v4203, 1
        %v4208 = vrot.slane %v4204, 1
        %v4209 = vsel %vm556, %v4207, %v4208
        %4210 = vrot.lane.b32.xlu0 %v4209, 127
        %v4211 = vpop.permute.xlu0 %4210
        %4212 = vrot.lane.b32.xlu0 %v4208, 127
        %v4213 = vpop.permute.xlu0 %4212
        %v4216 = vadd.f32 %v4199, %v4211
        %v4217 = vadd.f32 %v4200, %v4213
        %s4218 = sld [smem:[#allocation7 + $0x34]]
        %v4219 = vstv %s4218
        %v4220 = vmul.f32 %v4219, %v2474
        %v4221 = vmul.f32 %v4219, %v2479
        %v4222 = vadd.f32 %v4216, %v4220
        %v4223 = vadd.f32 %v4217, %v4221
        %s4224 = sld [smem:[#allocation7 + $0x35]]
        %v4225 = vstv %s4224
        %v4226 = vmul.f32 %v4225, %v2474
        %v4227 = vmul.f32 %v4225, %v2479
        %4230 = vrot.lane.b32.xlu0 %v4226, 127
        %v4231 = vpop.permute.xlu0 %4230
        %4232 = vrot.lane.b32.xlu0 %v4227, 127
        %v4233 = vpop.permute.xlu0 %4232
        %v4236 = vadd.f32 %v4222, %v4231
        %v4237 = vadd.f32 %v4223, %v4233
        %s4238 = sld [smem:[#allocation7 + $0x36]]
        %v4239 = vstv %s4238
        %v4240 = vmul.f32 %v4239, %v2474
        %v4241 = vmul.f32 %v4239, %v2479
        %v4244 = vrot.slane %v4240, 1
        %v4245 = vrot.slane %v4241, 1
        %v4246 = vsel %vm556, %v4244, %v4245
        %v4249 = vadd.f32 %v4236, %v4246
        %v4250 = vadd.f32 %v4237, %v4245
        %s4251 = sld [smem:[#allocation7 + $0x37]]
        %v4252 = vstv %s4251
        %v4253 = vmul.f32 %v4252, %v2474
        %v4254 = vmul.f32 %v4252, %v2479
        %v4257 = vrot.slane %v4253, 1
        %v4258 = vrot.slane %v4254, 1
        %v4259 = vsel %vm556, %v4257, %v4258
        %4260 = vrot.lane.b32.xlu0 %v4259, 127
        %v4261 = vpop.permute.xlu0 %4260
        %4262 = vrot.lane.b32.xlu0 %v4258, 127
        %v4263 = vpop.permute.xlu0 %4262
        %v4266 = vadd.f32 %v4249, %v4261
        %v4267 = vadd.f32 %v4250, %v4263
        %s4268 = sld [smem:[#allocation7 + $0x38]]
        %v4269 = vstv %s4268
        %v4270 = vmul.f32 %v4269, %v2964
        %v4271 = vmul.f32 %v4269, %v2969
        %v4272 = vadd.f32 %v4266, %v4270
        %v4273 = vadd.f32 %v4267, %v4271
        %s4274 = sld [smem:[#allocation7 + $0x39]]
        %v4275 = vstv %s4274
        %v4276 = vmul.f32 %v4275, %v2964
        %v4277 = vmul.f32 %v4275, %v2969
        %4280 = vrot.lane.b32.xlu0 %v4276, 127
        %v4281 = vpop.permute.xlu0 %4280
        %4282 = vrot.lane.b32.xlu0 %v4277, 127
        %v4283 = vpop.permute.xlu0 %4282
        %v4286 = vadd.f32 %v4272, %v4281
        %v4287 = vadd.f32 %v4273, %v4283
        %s4288 = sld [smem:[#allocation7 + $0x3a]]
        %v4289 = vstv %s4288
        %v4290 = vmul.f32 %v4289, %v2964
        %v4291 = vmul.f32 %v4289, %v2969
        %v4294 = vrot.slane %v4290, 1
        %v4295 = vrot.slane %v4291, 1
        %v4296 = vsel %vm556, %v4294, %v4295
        %v4299 = vadd.f32 %v4286, %v4296
        %v4300 = vadd.f32 %v4287, %v4295
        %s4301 = sld [smem:[#allocation7 + $0x3b]]
        %v4302 = vstv %s4301
        %v4303 = vmul.f32 %v4302, %v2964
        %v4304 = vmul.f32 %v4302, %v2969
        %v4307 = vrot.slane %v4303, 1
        %v4308 = vrot.slane %v4304, 1
        %v4309 = vsel %vm556, %v4307, %v4308
        %4310 = vrot.lane.b32.xlu0 %v4309, 127
        %v4311 = vpop.permute.xlu0 %4310
        %4312 = vrot.lane.b32.xlu0 %v4308, 127
        %v4313 = vpop.permute.xlu0 %4312
        %v4316 = vadd.f32 %v4299, %v4311
        %v4317 = vadd.f32 %v4300, %v4313
        %s4318 = sld [smem:[#allocation8 + $0x2]]
        %v4319 = vstv %s4318
        %v4320 = vadd.f32 %v4316, %v4319
        %v4321 = vadd.f32 %v4317, %v4319
        %v4322 = vmax.f32 %v4320, 0.0
        %v4323 = vmax.f32 %v4321, 0.0
        %4326 = vrot.lane.b32.xlu0 %v4322, 127
        %v4327 = vpop.permute.xlu0 %4326
        %4328 = vrot.lane.b32.xlu0 %v4323, 127
        %v4329 = vpop.permute.xlu0 %4328
        %v4332 = vmax.f32 %v4322, %v4327
        %v4333 = vmax.f32 %v4323, %v4329
        %v4336 = vrot.slane %v4332, 1
        %v4337 = vrot.slane %v4333, 1
        %v4338 = vsel %vm556, %v4336, %v4337
        %v4341 = vmax.f32 %v4332, %v4338
        %v4342 = vmax.f32 %v4333, %v4337
        %s4343 = scalar_lea.vmem %s7, 128
        %v4344 = vld [vmem:[%s4343] sm:$0xff]
        %v4345 = vld [vmem:[%s4343 + $0x8] sm:$0xff]
        %v4346 = vld [vmem:[%s4343 + $0x10] sm:$0xff]
        %v4347 = vld [vmem:[%s4343 + $0x18] sm:$0xff]
        %v4348 = vld [vmem:[%s4343 + $0x20] sm:$0xff]
        %v4349 = vld [vmem:[%s4343 + $0x28] sm:$0xff]
        %v4350 = vld [vmem:[%s4343 + $0x30] sm:$0xff]
        %v4351 = vld [vmem:[%s4343 + $0x38] sm:$0xf]
        %v4353 = vsel %vm3257, %v4344, 0
        %v4356 = vsel %vm3257, %v4345, 0
        %v4359 = vsel %vm3257, %v4346, 0
        %v4362 = vsel %vm3257, %v4347, 0
        %v4365 = vsel %vm3257, %v4348, 0
        %v4368 = vsel %vm3257, %v4349, 0
        %v4371 = vsel %vm3257, %v4350, 0
        %v4374 = vsel %vm3257, %v4351, 0
        %v4377 = vsel %vm3282, %v4342, 0
        %4379 = vmatprep.subr.mxu0 0.0
        %4380 = vmatpush1.msra.mxu0 0.0
        %4381 = vmatprep.subr.mxu0 0.0
        %4382 = vmatpush1.msra.mxu0 0.0
        %4383 = vmatprep.subr.mxu0 0.0
        %4384 = vmatpush1.msra.mxu0 0.0
        %4385 = vmatprep.subr.mxu0 0.0
        %4386 = vmatpush1.msra.mxu0 0.0
        %4387 = vmatprep.subr.mxu0 0.0
        %4388 = vmatpush1.msra.mxu0 0.0
        %4389 = vmatprep.subr.mxu0 0.0
        %4390 = vmatpush1.msra.mxu0 0.0
        %4391 = vmatprep.subr.mxu0 0.0
        %4392 = vmatpush1.msra.mxu0 0.0
        %4393 = vmatprep.subr.mxu0 0.0
        %4394 = vmatpush1.msra.mxu0 0.0
        %4395 = vmatprep.subr.mxu0 0.0
        %4396 = vmatpush1.msra.mxu0 0.0
        %4397 = vmatprep.subr.mxu0 0.0
        %4398 = vmatpush1.msra.mxu0 0.0
        %4399 = vmatprep.subr.mxu0 0.0
        %4400 = vmatpush1.msra.mxu0 0.0
        %4401 = vmatprep.subr.mxu0 0.0
        %4402 = vmatpush1.msra.mxu0 0.0
        %4403 = vmatprep.subr.mxu0 0.0
        %4404 = vmatpush1.msra.mxu0 0.0
        %4405 = vmatprep.subr.mxu0 0.0
        %4406 = vmatpush1.msra.mxu0 0.0
        %4407 = vmatprep.subr.mxu0 0.0
        %4408 = vmatpush1.msra.mxu0 %v4377
        %4409 = vmatprep.subr.mxu0 0.0
        %4410 = vmatpush1.msra.mxu0 %v4341
        %4411 = vmatprep.subr.mxu0 0.0
        %4412 = vmatpush2.msra.mxu0 0.0
        %4413 = vmatprep.subr.mxu0 0.0
        %4414 = vmatpush2.msra.mxu0 0.0
        %4415 = vmatprep.subr.mxu0 0.0
        %4416 = vmatpush2.msra.mxu0 0.0
        %4417 = vmatprep.subr.mxu0 0.0
        %4418 = vmatpush2.msra.mxu0 0.0
        %4419 = vmatprep.subr.mxu0 0.0
        %4420 = vmatpush2.msra.mxu0 0.0
        %4421 = vmatprep.subr.mxu0 0.0
        %4422 = vmatpush2.msra.mxu0 0.0
        %4423 = vmatprep.subr.mxu0 0.0
        %4424 = vmatpush2.msra.mxu0 0.0
        %4425 = vmatprep.subr.mxu0 0.0
        %4426 = vmatpush2.msra.mxu0 0.0
        %4427 = vmatprep.subr.mxu0 0.0
        %4428 = vmatpush2.msra.mxu0 0.0
        %4429 = vmatprep.subr.mxu0 0.0
        %4430 = vmatpush2.msra.mxu0 0.0
        %4431 = vmatprep.subr.mxu0 0.0
        %4432 = vmatpush2.msra.mxu0 0.0
        %4433 = vmatprep.subr.mxu0 0.0
        %4434 = vmatpush2.msra.mxu0 0.0
        %4435 = vmatprep.subr.mxu0 0.0
        %4436 = vmatpush2.msra.mxu0 0.0
        %4437 = vmatprep.subr.mxu0 0.0
        %4438 = vmatpush2.msra.mxu0 0.0
        %4439 = vmatprep.subr.mxu0 0.0
        %4440 = vmatpush2.msra.mxu0 0.0
        %4441 = vmatprep.subr.mxu0 0.0
        %4442 = vmatpush2.msra.mxu0 0.0
        %4443 = vmatprep.mubr.f32.mxu0 0.0
        %4444 = vmatmul.mubr.f32.gmra.mxu0 %v4353
        %v4445 = vpop.f32.mrf.mxu0
        %v4446 = vadd.f32 0.0, %v4445
        %v4447 = vpop.f32.mrf.mxu0
        %4448 = vmatprep.mubr.f32.mxu0 0.0
        %4449 = vmatmul.mubr.f32.gmra.mxu0 %v4356
        %v4450 = vpop.f32.mrf.mxu0
        %v4451 = vadd.f32 0.0, %v4450
        %v4452 = vpop.f32.mrf.mxu0
        %4453 = vmatprep.mubr.f32.mxu0 0.0
        %4454 = vmatmul.mubr.f32.gmra.mxu0 %v4359
        %v4455 = vpop.f32.mrf.mxu0
        %v4456 = vadd.f32 0.0, %v4455
        %v4457 = vpop.f32.mrf.mxu0
        %4458 = vmatprep.mubr.f32.mxu0 0.0
        %4459 = vmatmul.mubr.f32.gmra.mxu0 %v4362
        %v4460 = vpop.f32.mrf.mxu0
        %v4461 = vadd.f32 0.0, %v4460
        %v4462 = vpop.f32.mrf.mxu0
        %4463 = vmatprep.mubr.f32.mxu0 0.0
        %4464 = vmatmul.mubr.f32.gmra.mxu0 %v4365
        %v4465 = vpop.f32.mrf.mxu0
        %v4466 = vadd.f32 0.0, %v4465
        %v4467 = vpop.f32.mrf.mxu0
        %4468 = vmatprep.mubr.f32.mxu0 0.0
        %4469 = vmatmul.mubr.f32.gmra.mxu0 %v4368
        %v4470 = vpop.f32.mrf.mxu0
        %v4471 = vadd.f32 0.0, %v4470
        %v4472 = vpop.f32.mrf.mxu0
        %4473 = vmatprep.mubr.f32.mxu0 0.0
        %4474 = vmatmul.mubr.f32.gmra.mxu0 %v4371
        %v4475 = vpop.f32.mrf.mxu0
        %v4476 = vadd.f32 0.0, %v4475
        %v4477 = vpop.f32.mrf.mxu0
        %4478 = vmatprep.mubr.f32.mxu0 0.0
        %4479 = vmatmul.mubr.f32.gmra.mxu0 %v4374
        %v4480 = vpop.f32.mrf.mxu0
        %v4481 = vadd.f32 0.0, %v4480
        %v4482 = vpop.f32.mrf.mxu0
        %4483 = vdwg.mxu0
        %v4485 = vsel %vm3257, %v4446, 0
        %v4488 = vsel %vm3257, %v4451, 0
        %v4491 = vsel %vm3257, %v4456, 0
        %v4494 = vsel %vm3257, %v4461, 0
        %v4497 = vsel %vm3257, %v4466, 0
        %v4500 = vsel %vm3257, %v4471, 0
        %v4503 = vsel %vm3257, %v4476, 0
        %v4506 = vsel %vm3257, %v4481, 0
        %4508 = vmatprep.subr.mxu0 0.0
        %4509 = vmatpush1.msra.mxu0 0.0
        %4510 = vmatprep.subr.mxu0 0.0
        %4511 = vmatpush1.msra.mxu0 0.0
        %4512 = vmatprep.subr.mxu0 0.0
        %4513 = vmatpush1.msra.mxu0 0.0
        %4514 = vmatprep.subr.mxu0 0.0
        %4515 = vmatpush1.msra.mxu0 0.0
        %4516 = vmatprep.subr.mxu0 0.0
        %4517 = vmatpush1.msra.mxu0 0.0
        %4518 = vmatprep.subr.mxu0 0.0
        %4519 = vmatpush1.msra.mxu0 0.0
        %4520 = vmatprep.subr.mxu0 0.0
        %4521 = vmatpush1.msra.mxu0 0.0
        %4522 = vmatprep.subr.mxu0 0.0
        %4523 = vmatpush1.msra.mxu0 0.0
        %4524 = vmatprep.subr.mxu0 0.0
        %4525 = vmatpush1.msra.mxu0 0.0
        %4526 = vmatprep.subr.mxu0 0.0
        %4527 = vmatpush1.msra.mxu0 0.0
        %4528 = vmatprep.subr.mxu0 0.0
        %4529 = vmatpush1.msra.mxu0 0.0
        %4530 = vmatprep.subr.mxu0 0.0
        %4531 = vmatpush1.msra.mxu0 0.0
        %4532 = vmatprep.subr.mxu0 0.0
        %4533 = vmatpush1.msra.mxu0 0.0
        %4534 = vmatprep.subr.mxu0 0.0
        %4535 = vmatpush1.msra.mxu0 0.0
        %4536 = vmatprep.subr.mxu0 0.0
        %4537 = vmatpush1.msra.mxu0 %v3832
        %4538 = vmatprep.subr.mxu0 0.0
        %4539 = vmatpush1.msra.mxu0 %v2972
        %4540 = vmatprep.subr.mxu0 0.0
        %4541 = vmatpush2.msra.mxu0 0.0
        %4542 = vmatprep.subr.mxu0 0.0
        %4543 = vmatpush2.msra.mxu0 0.0
        %4544 = vmatprep.subr.mxu0 0.0
        %4545 = vmatpush2.msra.mxu0 0.0
        %4546 = vmatprep.subr.mxu0 0.0
        %4547 = vmatpush2.msra.mxu0 0.0
        %4548 = vmatprep.subr.mxu0 0.0
        %4549 = vmatpush2.msra.mxu0 0.0
        %4550 = vmatprep.subr.mxu0 0.0
        %4551 = vmatpush2.msra.mxu0 0.0
        %4552 = vmatprep.subr.mxu0 0.0
        %4553 = vmatpush2.msra.mxu0 0.0
        %4554 = vmatprep.subr.mxu0 0.0
        %4555 = vmatpush2.msra.mxu0 0.0
        %4556 = vmatprep.subr.mxu0 0.0
        %4557 = vmatpush2.msra.mxu0 0.0
        %4558 = vmatprep.subr.mxu0 0.0
        %4559 = vmatpush2.msra.mxu0 0.0
        %4560 = vmatprep.subr.mxu0 0.0
        %4561 = vmatpush2.msra.mxu0 0.0
        %4562 = vmatprep.subr.mxu0 0.0
        %4563 = vmatpush2.msra.mxu0 0.0
        %4564 = vmatprep.subr.mxu0 0.0
        %4565 = vmatpush2.msra.mxu0 0.0
        %4566 = vmatprep.subr.mxu0 0.0
        %4567 = vmatpush2.msra.mxu0 0.0
        %4568 = vmatprep.subr.mxu0 0.0
        %4569 = vmatpush2.msra.mxu0 0.0
        %4570 = vmatprep.subr.mxu0 0.0
        %4571 = vmatpush2.msra.mxu0 0.0
        %4572 = vmatprep.mubr.f32.mxu0 0.0
        %4573 = vmatmul.mubr.f32.gmra.mxu0 %v4485
        %v4574 = vpop.f32.mrf.mxu0
        %v4575 = vadd.f32 0.0, %v4574
        %v4576 = vpop.f32.mrf.mxu0
        %4577 = vmatprep.mubr.f32.mxu0 0.0
        %4578 = vmatmul.mubr.f32.gmra.mxu0 %v4488
        %v4579 = vpop.f32.mrf.mxu0
        %v4580 = vadd.f32 0.0, %v4579
        %v4581 = vpop.f32.mrf.mxu0
        %4582 = vmatprep.mubr.f32.mxu0 0.0
        %4583 = vmatmul.mubr.f32.gmra.mxu0 %v4491
        %v4584 = vpop.f32.mrf.mxu0
        %v4585 = vadd.f32 0.0, %v4584
        %v4586 = vpop.f32.mrf.mxu0
        %4587 = vmatprep.mubr.f32.mxu0 0.0
        %4588 = vmatmul.mubr.f32.gmra.mxu0 %v4494
        %v4589 = vpop.f32.mrf.mxu0
        %v4590 = vadd.f32 0.0, %v4589
        %v4591 = vpop.f32.mrf.mxu0
        %4592 = vmatprep.mubr.f32.mxu0 0.0
        %4593 = vmatmul.mubr.f32.gmra.mxu0 %v4497
        %v4594 = vpop.f32.mrf.mxu0
        %v4595 = vadd.f32 0.0, %v4594
        %v4596 = vpop.f32.mrf.mxu0
        %4597 = vmatprep.mubr.f32.mxu0 0.0
        %4598 = vmatmul.mubr.f32.gmra.mxu0 %v4500
        %v4599 = vpop.f32.mrf.mxu0
        %v4600 = vadd.f32 0.0, %v4599
        %v4601 = vpop.f32.mrf.mxu0
        %4602 = vmatprep.mubr.f32.mxu0 0.0
        %4603 = vmatmul.mubr.f32.gmra.mxu0 %v4503
        %v4604 = vpop.f32.mrf.mxu0
        %v4605 = vadd.f32 0.0, %v4604
        %v4606 = vpop.f32.mrf.mxu0
        %4607 = vmatprep.mubr.f32.mxu0 0.0
        %4608 = vmatmul.mubr.f32.gmra.mxu0 %v4506
        %v4609 = vpop.f32.mrf.mxu0
        %v4610 = vadd.f32 0.0, %v4609
        %v4611 = vpop.f32.mrf.mxu0
        %4612 = vdwg.mxu0
        %v4613 = vadd.f32 %v4030, %v4575
        %v4614 = vadd.f32 %v4035, %v4580
        %v4615 = vadd.f32 %v4040, %v4585
        %v4616 = vadd.f32 %v4045, %v4590
        %v4617 = vadd.f32 %v4050, %v4595
        %v4618 = vadd.f32 %v4055, %v4600
        %v4619 = vadd.f32 %v4060, %v4605
        %v4620 = vadd.f32 %v4065, %v4610
        %s4621 = sld [smem:[#allocation7 + $0x3c]]
        %v4622 = vstv %s4621
        %v4623 = vmul.f32 %v4622, %v1004
        %v4624 = vmul.f32 %v4622, %v1009
        %v4625 = vadd.f32 %v4623, 0.0
        %v4626 = vadd.f32 %v4624, 0.0
        %s4627 = sld [smem:[#allocation7 + $0x3d]]
        %v4628 = vstv %s4627
        %v4629 = vmul.f32 %v4628, %v1004
        %v4630 = vmul.f32 %v4628, %v1009
        %4633 = vrot.lane.b32.xlu0 %v4629, 127
        %v4634 = vpop.permute.xlu0 %4633
        %4635 = vrot.lane.b32.xlu0 %v4630, 127
        %v4636 = vpop.permute.xlu0 %4635
        %v4639 = vadd.f32 %v4625, %v4634
        %v4640 = vadd.f32 %v4626, %v4636
        %s4641 = sld [smem:[#allocation7 + $0x3e]]
        %v4642 = vstv %s4641
        %v4643 = vmul.f32 %v4642, %v1004
        %v4644 = vmul.f32 %v4642, %v1009
        %v4647 = vrot.slane %v4643, 1
        %v4648 = vrot.slane %v4644, 1
        %v4649 = vsel %vm556, %v4647, %v4648
        %v4652 = vadd.f32 %v4639, %v4649
        %v4653 = vadd.f32 %v4640, %v4648
        %s4654 = sld [smem:[#allocation7 + $0x3f]]
        %v4655 = vstv %s4654
        %v4656 = vmul.f32 %v4655, %v1004
        %v4657 = vmul.f32 %v4655, %v1009
        %v4660 = vrot.slane %v4656, 1
        %v4661 = vrot.slane %v4657, 1
        %v4662 = vsel %vm556, %v4660, %v4661
        %4663 = vrot.lane.b32.xlu0 %v4662, 127
        %v4664 = vpop.permute.xlu0 %4663
        %4665 = vrot.lane.b32.xlu0 %v4661, 127
        %v4666 = vpop.permute.xlu0 %4665
        %v4669 = vadd.f32 %v4652, %v4664
        %v4670 = vadd.f32 %v4653, %v4666
        %s4671 = sld [smem:[#allocation7 + $0x40]]
        %v4672 = vstv %s4671
        %v4673 = vmul.f32 %v4672, %v1494
        %v4674 = vmul.f32 %v4672, %v1499
        %v4675 = vadd.f32 %v4669, %v4673
        %v4676 = vadd.f32 %v4670, %v4674
        %s4677 = sld [smem:[#allocation7 + $0x41]]
        %v4678 = vstv %s4677
        %v4679 = vmul.f32 %v4678, %v1494
        %v4680 = vmul.f32 %v4678, %v1499
        %4683 = vrot.lane.b32.xlu0 %v4679, 127
        %v4684 = vpop.permute.xlu0 %4683
        %4685 = vrot.lane.b32.xlu0 %v4680, 127
        %v4686 = vpop.permute.xlu0 %4685
        %v4689 = vadd.f32 %v4675, %v4684
        %v4690 = vadd.f32 %v4676, %v4686
        %s4691 = sld [smem:[#allocation7 + $0x42]]
        %v4692 = vstv %s4691
        %v4693 = vmul.f32 %v4692, %v1494
        %v4694 = vmul.f32 %v4692, %v1499
        %v4697 = vrot.slane %v4693, 1
        %v4698 = vrot.slane %v4694, 1
        %v4699 = vsel %vm556, %v4697, %v4698
        %v4702 = vadd.f32 %v4689, %v4699
        %v4703 = vadd.f32 %v4690, %v4698
        %s4704 = sld [smem:[#allocation7 + $0x43]]
        %v4705 = vstv %s4704
        %v4706 = vmul.f32 %v4705, %v1494
        %v4707 = vmul.f32 %v4705, %v1499
        %v4710 = vrot.slane %v4706, 1
        %v4711 = vrot.slane %v4707, 1
        %v4712 = vsel %vm556, %v4710, %v4711
        %4713 = vrot.lane.b32.xlu0 %v4712, 127
        %v4714 = vpop.permute.xlu0 %4713
        %4715 = vrot.lane.b32.xlu0 %v4711, 127
        %v4716 = vpop.permute.xlu0 %4715
        %v4719 = vadd.f32 %v4702, %v4714
        %v4720 = vadd.f32 %v4703, %v4716
        %s4721 = sld [smem:[#allocation7 + $0x44]]
        %v4722 = vstv %s4721
        %v4723 = vmul.f32 %v4722, %v1984
        %v4724 = vmul.f32 %v4722, %v1989
        %v4725 = vadd.f32 %v4719, %v4723
        %v4726 = vadd.f32 %v4720, %v4724
        %s4727 = sld [smem:[#allocation7 + $0x45]]
        %v4728 = vstv %s4727
        %v4729 = vmul.f32 %v4728, %v1984
        %v4730 = vmul.f32 %v4728, %v1989
        %4733 = vrot.lane.b32.xlu0 %v4729, 127
        %v4734 = vpop.permute.xlu0 %4733
        %4735 = vrot.lane.b32.xlu0 %v4730, 127
        %v4736 = vpop.permute.xlu0 %4735
        %v4739 = vadd.f32 %v4725, %v4734
        %v4740 = vadd.f32 %v4726, %v4736
        %s4741 = sld [smem:[#allocation7 + $0x46]]
        %v4742 = vstv %s4741
        %v4743 = vmul.f32 %v4742, %v1984
        %v4744 = vmul.f32 %v4742, %v1989
        %v4747 = vrot.slane %v4743, 1
        %v4748 = vrot.slane %v4744, 1
        %v4749 = vsel %vm556, %v4747, %v4748
        %v4752 = vadd.f32 %v4739, %v4749
        %v4753 = vadd.f32 %v4740, %v4748
        %s4754 = sld [smem:[#allocation7 + $0x47]]
        %v4755 = vstv %s4754
        %v4756 = vmul.f32 %v4755, %v1984
        %v4757 = vmul.f32 %v4755, %v1989
        %v4760 = vrot.slane %v4756, 1
        %v4761 = vrot.slane %v4757, 1
        %v4762 = vsel %vm556, %v4760, %v4761
        %4763 = vrot.lane.b32.xlu0 %v4762, 127
        %v4764 = vpop.permute.xlu0 %4763
        %4765 = vrot.lane.b32.xlu0 %v4761, 127
        %v4766 = vpop.permute.xlu0 %4765
        %v4769 = vadd.f32 %v4752, %v4764
        %v4770 = vadd.f32 %v4753, %v4766
        %s4771 = sld [smem:[#allocation7 + $0x48]]
        %v4772 = vstv %s4771
        %v4773 = vmul.f32 %v4772, %v2474
        %v4774 = vmul.f32 %v4772, %v2479
        %v4775 = vadd.f32 %v4769, %v4773
        %v4776 = vadd.f32 %v4770, %v4774
        %s4777 = sld [smem:[#allocation7 + $0x49]]
        %v4778 = vstv %s4777
        %v4779 = vmul.f32 %v4778, %v2474
        %v4780 = vmul.f32 %v4778, %v2479
        %4783 = vrot.lane.b32.xlu0 %v4779, 127
        %v4784 = vpop.permute.xlu0 %4783
        %4785 = vrot.lane.b32.xlu0 %v4780, 127
        %v4786 = vpop.permute.xlu0 %4785
        %v4789 = vadd.f32 %v4775, %v4784
        %v4790 = vadd.f32 %v4776, %v4786
        %s4791 = sld [smem:[#allocation7 + $0x4a]]
        %v4792 = vstv %s4791
        %v4793 = vmul.f32 %v4792, %v2474
        %v4794 = vmul.f32 %v4792, %v2479
        %v4797 = vrot.slane %v4793, 1
        %v4798 = vrot.slane %v4794, 1
        %v4799 = vsel %vm556, %v4797, %v4798
        %v4802 = vadd.f32 %v4789, %v4799
        %v4803 = vadd.f32 %v4790, %v4798
        %s4804 = sld [smem:[#allocation7 + $0x4b]]
        %v4805 = vstv %s4804
        %v4806 = vmul.f32 %v4805, %v2474
        %v4807 = vmul.f32 %v4805, %v2479
        %v4810 = vrot.slane %v4806, 1
        %v4811 = vrot.slane %v4807, 1
        %v4812 = vsel %vm556, %v4810, %v4811
        %4813 = vrot.lane.b32.xlu0 %v4812, 127
        %v4814 = vpop.permute.xlu0 %4813
        %4815 = vrot.lane.b32.xlu0 %v4811, 127
        %v4816 = vpop.permute.xlu0 %4815
        %v4819 = vadd.f32 %v4802, %v4814
        %v4820 = vadd.f32 %v4803, %v4816
        %s4821 = sld [smem:[#allocation7 + $0x4c]]
        %v4822 = vstv %s4821
        %v4823 = vmul.f32 %v4822, %v2964
        %v4824 = vmul.f32 %v4822, %v2969
        %v4825 = vadd.f32 %v4819, %v4823
        %v4826 = vadd.f32 %v4820, %v4824
        %s4827 = sld [smem:[#allocation7 + $0x4d]]
        %v4828 = vstv %s4827
        %v4829 = vmul.f32 %v4828, %v2964
        %v4830 = vmul.f32 %v4828, %v2969
        %4833 = vrot.lane.b32.xlu0 %v4829, 127
        %v4834 = vpop.permute.xlu0 %4833
        %4835 = vrot.lane.b32.xlu0 %v4830, 127
        %v4836 = vpop.permute.xlu0 %4835
        %v4839 = vadd.f32 %v4825, %v4834
        %v4840 = vadd.f32 %v4826, %v4836
        %s4841 = sld [smem:[#allocation7 + $0x4e]]
        %v4842 = vstv %s4841
        %v4843 = vmul.f32 %v4842, %v2964
        %v4844 = vmul.f32 %v4842, %v2969
        %v4847 = vrot.slane %v4843, 1
        %v4848 = vrot.slane %v4844, 1
        %v4849 = vsel %vm556, %v4847, %v4848
        %v4852 = vadd.f32 %v4839, %v4849
        %v4853 = vadd.f32 %v4840, %v4848
        %s4854 = sld [smem:[#allocation7 + $0x4f]]
        %v4855 = vstv %s4854
        %v4856 = vmul.f32 %v4855, %v2964
        %v4857 = vmul.f32 %v4855, %v2969
        %v4860 = vrot.slane %v4856, 1
        %v4861 = vrot.slane %v4857, 1
        %v4862 = vsel %vm556, %v4860, %v4861
        %4863 = vrot.lane.b32.xlu0 %v4862, 127
        %v4864 = vpop.permute.xlu0 %4863
        %4865 = vrot.lane.b32.xlu0 %v4861, 127
        %v4866 = vpop.permute.xlu0 %4865
        %v4869 = vadd.f32 %v4852, %v4864
        %v4870 = vadd.f32 %v4853, %v4866
        %s4871 = sld [smem:[#allocation8 + $0x3]]
        %v4872 = vstv %s4871
        %v4873 = vadd.f32 %v4869, %v4872
        %v4874 = vadd.f32 %v4870, %v4872
        %v4875 = vmax.f32 %v4873, 0.0
        %v4876 = vmax.f32 %v4874, 0.0
        %4879 = vrot.lane.b32.xlu0 %v4875, 127
        %v4880 = vpop.permute.xlu0 %4879
        %4881 = vrot.lane.b32.xlu0 %v4876, 127
        %v4882 = vpop.permute.xlu0 %4881
        %v4885 = vmax.f32 %v4875, %v4880
        %v4886 = vmax.f32 %v4876, %v4882
        %v4889 = vrot.slane %v4885, 1
        %v4890 = vrot.slane %v4886, 1
        %v4891 = vsel %vm556, %v4889, %v4890
        %v4894 = vmax.f32 %v4885, %v4891
        %v4895 = vmax.f32 %v4886, %v4890
        %s4896 = scalar_lea.vmem %s7, 192
        %v4897 = vld [vmem:[%s4896] sm:$0xff]
        %v4898 = vld [vmem:[%s4896 + $0x8] sm:$0xff]
        %v4899 = vld [vmem:[%s4896 + $0x10] sm:$0xff]
        %v4900 = vld [vmem:[%s4896 + $0x18] sm:$0xff]
        %v4901 = vld [vmem:[%s4896 + $0x20] sm:$0xff]
        %v4902 = vld [vmem:[%s4896 + $0x28] sm:$0xff]
        %v4903 = vld [vmem:[%s4896 + $0x30] sm:$0xff]
        %v4904 = vld [vmem:[%s4896 + $0x38] sm:$0xf]
        %v4906 = vsel %vm3257, %v4897, 0
        %v4909 = vsel %vm3257, %v4898, 0
        %v4912 = vsel %vm3257, %v4899, 0
        %v4915 = vsel %vm3257, %v4900, 0
        %v4918 = vsel %vm3257, %v4901, 0
        %v4921 = vsel %vm3257, %v4902, 0
        %v4924 = vsel %vm3257, %v4903, 0
        %v4927 = vsel %vm3257, %v4904, 0
        %v4930 = vsel %vm3282, %v4895, 0
        %4932 = vmatprep.subr.mxu0 0.0
        %4933 = vmatpush1.msra.mxu0 0.0
        %4934 = vmatprep.subr.mxu0 0.0
        %4935 = vmatpush1.msra.mxu0 0.0
        %4936 = vmatprep.subr.mxu0 0.0
        %4937 = vmatpush1.msra.mxu0 0.0
        %4938 = vmatprep.subr.mxu0 0.0
        %4939 = vmatpush1.msra.mxu0 0.0
        %4940 = vmatprep.subr.mxu0 0.0
        %4941 = vmatpush1.msra.mxu0 0.0
        %4942 = vmatprep.subr.mxu0 0.0
        %4943 = vmatpush1.msra.mxu0 0.0
        %4944 = vmatprep.subr.mxu0 0.0
        %4945 = vmatpush1.msra.mxu0 0.0
        %4946 = vmatprep.subr.mxu0 0.0
        %4947 = vmatpush1.msra.mxu0 0.0
        %4948 = vmatprep.subr.mxu0 0.0
        %4949 = vmatpush1.msra.mxu0 0.0
        %4950 = vmatprep.subr.mxu0 0.0
        %4951 = vmatpush1.msra.mxu0 0.0
        %4952 = vmatprep.subr.mxu0 0.0
        %4953 = vmatpush1.msra.mxu0 0.0
        %4954 = vmatprep.subr.mxu0 0.0
        %4955 = vmatpush1.msra.mxu0 0.0
        %4956 = vmatprep.subr.mxu0 0.0
        %4957 = vmatpush1.msra.mxu0 0.0
        %4958 = vmatprep.subr.mxu0 0.0
        %4959 = vmatpush1.msra.mxu0 0.0
        %4960 = vmatprep.subr.mxu0 0.0
        %4961 = vmatpush1.msra.mxu0 %v4930
        %4962 = vmatprep.subr.mxu0 0.0
        %4963 = vmatpush1.msra.mxu0 %v4894
        %4964 = vmatprep.subr.mxu0 0.0
        %4965 = vmatpush2.msra.mxu0 0.0
        %4966 = vmatprep.subr.mxu0 0.0
        %4967 = vmatpush2.msra.mxu0 0.0
        %4968 = vmatprep.subr.mxu0 0.0
        %4969 = vmatpush2.msra.mxu0 0.0
        %4970 = vmatprep.subr.mxu0 0.0
        %4971 = vmatpush2.msra.mxu0 0.0
        %4972 = vmatprep.subr.mxu0 0.0
        %4973 = vmatpush2.msra.mxu0 0.0
        %4974 = vmatprep.subr.mxu0 0.0
        %4975 = vmatpush2.msra.mxu0 0.0
        %4976 = vmatprep.subr.mxu0 0.0
        %4977 = vmatpush2.msra.mxu0 0.0
        %4978 = vmatprep.subr.mxu0 0.0
        %4979 = vmatpush2.msra.mxu0 0.0
        %4980 = vmatprep.subr.mxu0 0.0
        %4981 = vmatpush2.msra.mxu0 0.0
        %4982 = vmatprep.subr.mxu0 0.0
        %4983 = vmatpush2.msra.mxu0 0.0
        %4984 = vmatprep.subr.mxu0 0.0
        %4985 = vmatpush2.msra.mxu0 0.0
        %4986 = vmatprep.subr.mxu0 0.0
        %4987 = vmatpush2.msra.mxu0 0.0
        %4988 = vmatprep.subr.mxu0 0.0
        %4989 = vmatpush2.msra.mxu0 0.0
        %4990 = vmatprep.subr.mxu0 0.0
        %4991 = vmatpush2.msra.mxu0 0.0
        %4992 = vmatprep.subr.mxu0 0.0
        %4993 = vmatpush2.msra.mxu0 0.0
        %4994 = vmatprep.subr.mxu0 0.0
        %4995 = vmatpush2.msra.mxu0 0.0
        %4996 = vmatprep.mubr.f32.mxu0 0.0
        %4997 = vmatmul.mubr.f32.gmra.mxu0 %v4906
        %v4998 = vpop.f32.mrf.mxu0
        %v4999 = vadd.f32 0.0, %v4998
        %v5000 = vpop.f32.mrf.mxu0
        %5001 = vmatprep.mubr.f32.mxu0 0.0
        %5002 = vmatmul.mubr.f32.gmra.mxu0 %v4909
        %v5003 = vpop.f32.mrf.mxu0
        %v5004 = vadd.f32 0.0, %v5003
        %v5005 = vpop.f32.mrf.mxu0
        %5006 = vmatprep.mubr.f32.mxu0 0.0
        %5007 = vmatmul.mubr.f32.gmra.mxu0 %v4912
        %v5008 = vpop.f32.mrf.mxu0
        %v5009 = vadd.f32 0.0, %v5008
        %v5010 = vpop.f32.mrf.mxu0
        %5011 = vmatprep.mubr.f32.mxu0 0.0
        %5012 = vmatmul.mubr.f32.gmra.mxu0 %v4915
        %v5013 = vpop.f32.mrf.mxu0
        %v5014 = vadd.f32 0.0, %v5013
        %v5015 = vpop.f32.mrf.mxu0
        %5016 = vmatprep.mubr.f32.mxu0 0.0
        %5017 = vmatmul.mubr.f32.gmra.mxu0 %v4918
        %v5018 = vpop.f32.mrf.mxu0
        %v5019 = vadd.f32 0.0, %v5018
        %v5020 = vpop.f32.mrf.mxu0
        %5021 = vmatprep.mubr.f32.mxu0 0.0
        %5022 = vmatmul.mubr.f32.gmra.mxu0 %v4921
        %v5023 = vpop.f32.mrf.mxu0
        %v5024 = vadd.f32 0.0, %v5023
        %v5025 = vpop.f32.mrf.mxu0
        %5026 = vmatprep.mubr.f32.mxu0 0.0
        %5027 = vmatmul.mubr.f32.gmra.mxu0 %v4924
        %v5028 = vpop.f32.mrf.mxu0
        %v5029 = vadd.f32 0.0, %v5028
        %v5030 = vpop.f32.mrf.mxu0
        %5031 = vmatprep.mubr.f32.mxu0 0.0
        %5032 = vmatmul.mubr.f32.gmra.mxu0 %v4927
        %v5033 = vpop.f32.mrf.mxu0
        %v5034 = vadd.f32 0.0, %v5033
        %v5035 = vpop.f32.mrf.mxu0
        %5036 = vdwg.mxu0
        %v5038 = vsel %vm3257, %v4999, 0
        %v5041 = vsel %vm3257, %v5004, 0
        %v5044 = vsel %vm3257, %v5009, 0
        %v5047 = vsel %vm3257, %v5014, 0
        %v5050 = vsel %vm3257, %v5019, 0
        %v5053 = vsel %vm3257, %v5024, 0
        %v5056 = vsel %vm3257, %v5029, 0
        %v5059 = vsel %vm3257, %v5034, 0
        %5061 = vmatprep.subr.mxu0 0.0
        %5062 = vmatpush1.msra.mxu0 0.0
        %5063 = vmatprep.subr.mxu0 0.0
        %5064 = vmatpush1.msra.mxu0 0.0
        %5065 = vmatprep.subr.mxu0 0.0
        %5066 = vmatpush1.msra.mxu0 0.0
        %5067 = vmatprep.subr.mxu0 0.0
        %5068 = vmatpush1.msra.mxu0 0.0
        %5069 = vmatprep.subr.mxu0 0.0
        %5070 = vmatpush1.msra.mxu0 0.0
        %5071 = vmatprep.subr.mxu0 0.0
        %5072 = vmatpush1.msra.mxu0 0.0
        %5073 = vmatprep.subr.mxu0 0.0
        %5074 = vmatpush1.msra.mxu0 0.0
        %5075 = vmatprep.subr.mxu0 0.0
        %5076 = vmatpush1.msra.mxu0 0.0
        %5077 = vmatprep.subr.mxu0 0.0
        %5078 = vmatpush1.msra.mxu0 0.0
        %5079 = vmatprep.subr.mxu0 0.0
        %5080 = vmatpush1.msra.mxu0 0.0
        %5081 = vmatprep.subr.mxu0 0.0
        %5082 = vmatpush1.msra.mxu0 0.0
        %5083 = vmatprep.subr.mxu0 0.0
        %5084 = vmatpush1.msra.mxu0 0.0
        %5085 = vmatprep.subr.mxu0 0.0
        %5086 = vmatpush1.msra.mxu0 0.0
        %5087 = vmatprep.subr.mxu0 0.0
        %5088 = vmatpush1.msra.mxu0 0.0
        %5089 = vmatprep.subr.mxu0 0.0
        %5090 = vmatpush1.msra.mxu0 %v3832
        %5091 = vmatprep.subr.mxu0 0.0
        %5092 = vmatpush1.msra.mxu0 %v2972
        %5093 = vmatprep.subr.mxu0 0.0
        %5094 = vmatpush2.msra.mxu0 0.0
        %5095 = vmatprep.subr.mxu0 0.0
        %5096 = vmatpush2.msra.mxu0 0.0
        %5097 = vmatprep.subr.mxu0 0.0
        %5098 = vmatpush2.msra.mxu0 0.0
        %5099 = vmatprep.subr.mxu0 0.0
        %5100 = vmatpush2.msra.mxu0 0.0
        %5101 = vmatprep.subr.mxu0 0.0
        %5102 = vmatpush2.msra.mxu0 0.0
        %5103 = vmatprep.subr.mxu0 0.0
        %5104 = vmatpush2.msra.mxu0 0.0
        %5105 = vmatprep.subr.mxu0 0.0
        %5106 = vmatpush2.msra.mxu0 0.0
        %5107 = vmatprep.subr.mxu0 0.0
        %5108 = vmatpush2.msra.mxu0 0.0
        %5109 = vmatprep.subr.mxu0 0.0
        %5110 = vmatpush2.msra.mxu0 0.0
        %5111 = vmatprep.subr.mxu0 0.0
        %5112 = vmatpush2.msra.mxu0 0.0
        %5113 = vmatprep.subr.mxu0 0.0
        %5114 = vmatpush2.msra.mxu0 0.0
        %5115 = vmatprep.subr.mxu0 0.0
        %5116 = vmatpush2.msra.mxu0 0.0
        %5117 = vmatprep.subr.mxu0 0.0
        %5118 = vmatpush2.msra.mxu0 0.0
        %5119 = vmatprep.subr.mxu0 0.0
        %5120 = vmatpush2.msra.mxu0 0.0
        %5121 = vmatprep.subr.mxu0 0.0
        %5122 = vmatpush2.msra.mxu0 0.0
        %5123 = vmatprep.subr.mxu0 0.0
        %5124 = vmatpush2.msra.mxu0 0.0
        %5125 = vmatprep.mubr.f32.mxu0 0.0
        %5126 = vmatmul.mubr.f32.gmra.mxu0 %v5038
        %v5127 = vpop.f32.mrf.mxu0
        %v5128 = vadd.f32 0.0, %v5127
        %v5129 = vpop.f32.mrf.mxu0
        %5130 = vmatprep.mubr.f32.mxu0 0.0
        %5131 = vmatmul.mubr.f32.gmra.mxu0 %v5041
        %v5132 = vpop.f32.mrf.mxu0
        %v5133 = vadd.f32 0.0, %v5132
        %v5134 = vpop.f32.mrf.mxu0
        %5135 = vmatprep.mubr.f32.mxu0 0.0
        %5136 = vmatmul.mubr.f32.gmra.mxu0 %v5044
        %v5137 = vpop.f32.mrf.mxu0
        %v5138 = vadd.f32 0.0, %v5137
        %v5139 = vpop.f32.mrf.mxu0
        %5140 = vmatprep.mubr.f32.mxu0 0.0
        %5141 = vmatmul.mubr.f32.gmra.mxu0 %v5047
        %v5142 = vpop.f32.mrf.mxu0
        %v5143 = vadd.f32 0.0, %v5142
        %v5144 = vpop.f32.mrf.mxu0
        %5145 = vmatprep.mubr.f32.mxu0 0.0
        %5146 = vmatmul.mubr.f32.gmra.mxu0 %v5050
        %v5147 = vpop.f32.mrf.mxu0
        %v5148 = vadd.f32 0.0, %v5147
        %v5149 = vpop.f32.mrf.mxu0
        %5150 = vmatprep.mubr.f32.mxu0 0.0
        %5151 = vmatmul.mubr.f32.gmra.mxu0 %v5053
        %v5152 = vpop.f32.mrf.mxu0
        %v5153 = vadd.f32 0.0, %v5152
        %v5154 = vpop.f32.mrf.mxu0
        %5155 = vmatprep.mubr.f32.mxu0 0.0
        %5156 = vmatmul.mubr.f32.gmra.mxu0 %v5056
        %v5157 = vpop.f32.mrf.mxu0
        %v5158 = vadd.f32 0.0, %v5157
        %v5159 = vpop.f32.mrf.mxu0
        %5160 = vmatprep.mubr.f32.mxu0 0.0
        %5161 = vmatmul.mubr.f32.gmra.mxu0 %v5059
        %v5162 = vpop.f32.mrf.mxu0
        %v5163 = vadd.f32 0.0, %v5162
        %v5164 = vpop.f32.mrf.mxu0
        %5165 = vdwg.mxu0
        %v5166 = vadd.f32 %v4613, %v5128
        %v5167 = vadd.f32 %v4614, %v5133
        %v5168 = vadd.f32 %v4615, %v5138
        %v5169 = vadd.f32 %v4616, %v5143
        %v5170 = vadd.f32 %v4617, %v5148
        %v5171 = vadd.f32 %v4618, %v5153
        %v5172 = vadd.f32 %v4619, %v5158
        %v5173 = vadd.f32 %v4620, %v5163
        %s5174 = sld [smem:[#allocation7 + $0x50]]
        %v5175 = vstv %s5174
        %v5176 = vmul.f32 %v5175, %v1004
        %v5177 = vmul.f32 %v5175, %v1009
        %v5178 = vadd.f32 %v5176, 0.0
        %v5179 = vadd.f32 %v5177, 0.0
        %s5180 = sld [smem:[#allocation7 + $0x51]]
        %v5181 = vstv %s5180
        %v5182 = vmul.f32 %v5181, %v1004
        %v5183 = vmul.f32 %v5181, %v1009
        %5186 = vrot.lane.b32.xlu0 %v5182, 127
        %v5187 = vpop.permute.xlu0 %5186
        %5188 = vrot.lane.b32.xlu0 %v5183, 127
        %v5189 = vpop.permute.xlu0 %5188
        %v5192 = vadd.f32 %v5178, %v5187
        %v5193 = vadd.f32 %v5179, %v5189
        %s5194 = sld [smem:[#allocation7 + $0x52]]
        %v5195 = vstv %s5194
        %v5196 = vmul.f32 %v5195, %v1004
        %v5197 = vmul.f32 %v5195, %v1009
        %v5200 = vrot.slane %v5196, 1
        %v5201 = vrot.slane %v5197, 1
        %v5202 = vsel %vm556, %v5200, %v5201
        %v5205 = vadd.f32 %v5192, %v5202
        %v5206 = vadd.f32 %v5193, %v5201
        %s5207 = sld [smem:[#allocation7 + $0x53]]
        %v5208 = vstv %s5207
        %v5209 = vmul.f32 %v5208, %v1004
        %v5210 = vmul.f32 %v5208, %v1009
        %v5213 = vrot.slane %v5209, 1
        %v5214 = vrot.slane %v5210, 1
        %v5215 = vsel %vm556, %v5213, %v5214
        %5216 = vrot.lane.b32.xlu0 %v5215, 127
        %v5217 = vpop.permute.xlu0 %5216
        %5218 = vrot.lane.b32.xlu0 %v5214, 127
        %v5219 = vpop.permute.xlu0 %5218
        %v5222 = vadd.f32 %v5205, %v5217
        %v5223 = vadd.f32 %v5206, %v5219
        %s5224 = sld [smem:[#allocation7 + $0x54]]
        %v5225 = vstv %s5224
        %v5226 = vmul.f32 %v5225, %v1494
        %v5227 = vmul.f32 %v5225, %v1499
        %v5228 = vadd.f32 %v5222, %v5226
        %v5229 = vadd.f32 %v5223, %v5227
        %s5230 = sld [smem:[#allocation7 + $0x55]]
        %v5231 = vstv %s5230
        %v5232 = vmul.f32 %v5231, %v1494
        %v5233 = vmul.f32 %v5231, %v1499
        %5236 = vrot.lane.b32.xlu0 %v5232, 127
        %v5237 = vpop.permute.xlu0 %5236
        %5238 = vrot.lane.b32.xlu0 %v5233, 127
        %v5239 = vpop.permute.xlu0 %5238
        %v5242 = vadd.f32 %v5228, %v5237
        %v5243 = vadd.f32 %v5229, %v5239
        %s5244 = sld [smem:[#allocation7 + $0x56]]
        %v5245 = vstv %s5244
        %v5246 = vmul.f32 %v5245, %v1494
        %v5247 = vmul.f32 %v5245, %v1499
        %v5250 = vrot.slane %v5246, 1
        %v5251 = vrot.slane %v5247, 1
        %v5252 = vsel %vm556, %v5250, %v5251
        %v5255 = vadd.f32 %v5242, %v5252
        %v5256 = vadd.f32 %v5243, %v5251
        %s5257 = sld [smem:[#allocation7 + $0x57]]
        %v5258 = vstv %s5257
        %v5259 = vmul.f32 %v5258, %v1494
        %v5260 = vmul.f32 %v5258, %v1499
        %v5263 = vrot.slane %v5259, 1
        %v5264 = vrot.slane %v5260, 1
        %v5265 = vsel %vm556, %v5263, %v5264
        %5266 = vrot.lane.b32.xlu0 %v5265, 127
        %v5267 = vpop.permute.xlu0 %5266
        %5268 = vrot.lane.b32.xlu0 %v5264, 127
        %v5269 = vpop.permute.xlu0 %5268
        %v5272 = vadd.f32 %v5255, %v5267
        %v5273 = vadd.f32 %v5256, %v5269
        %s5274 = sld [smem:[#allocation7 + $0x58]]
        %v5275 = vstv %s5274
        %v5276 = vmul.f32 %v5275, %v1984
        %v5277 = vmul.f32 %v5275, %v1989
        %v5278 = vadd.f32 %v5272, %v5276
        %v5279 = vadd.f32 %v5273, %v5277
        %s5280 = sld [smem:[#allocation7 + $0x59]]
        %v5281 = vstv %s5280
        %v5282 = vmul.f32 %v5281, %v1984
        %v5283 = vmul.f32 %v5281, %v1989
        %5286 = vrot.lane.b32.xlu0 %v5282, 127
        %v5287 = vpop.permute.xlu0 %5286
        %5288 = vrot.lane.b32.xlu0 %v5283, 127
        %v5289 = vpop.permute.xlu0 %5288
        %v5292 = vadd.f32 %v5278, %v5287
        %v5293 = vadd.f32 %v5279, %v5289
        %s5294 = sld [smem:[#allocation7 + $0x5a]]
        %v5295 = vstv %s5294
        %v5296 = vmul.f32 %v5295, %v1984
        %v5297 = vmul.f32 %v5295, %v1989
        %v5300 = vrot.slane %v5296, 1
        %v5301 = vrot.slane %v5297, 1
        %v5302 = vsel %vm556, %v5300, %v5301
        %v5305 = vadd.f32 %v5292, %v5302
        %v5306 = vadd.f32 %v5293, %v5301
        %s5307 = sld [smem:[#allocation7 + $0x5b]]
        %v5308 = vstv %s5307
        %v5309 = vmul.f32 %v5308, %v1984
        %v5310 = vmul.f32 %v5308, %v1989
        %v5313 = vrot.slane %v5309, 1
        %v5314 = vrot.slane %v5310, 1
        %v5315 = vsel %vm556, %v5313, %v5314
        %5316 = vrot.lane.b32.xlu0 %v5315, 127
        %v5317 = vpop.permute.xlu0 %5316
        %5318 = vrot.lane.b32.xlu0 %v5314, 127
        %v5319 = vpop.permute.xlu0 %5318
        %v5322 = vadd.f32 %v5305, %v5317
        %v5323 = vadd.f32 %v5306, %v5319
        %s5324 = sld [smem:[#allocation7 + $0x5c]]
        %v5325 = vstv %s5324
        %v5326 = vmul.f32 %v5325, %v2474
        %v5327 = vmul.f32 %v5325, %v2479
        %v5328 = vadd.f32 %v5322, %v5326
        %v5329 = vadd.f32 %v5323, %v5327
        %s5330 = sld [smem:[#allocation7 + $0x5d]]
        %v5331 = vstv %s5330
        %v5332 = vmul.f32 %v5331, %v2474
        %v5333 = vmul.f32 %v5331, %v2479
        %5336 = vrot.lane.b32.xlu0 %v5332, 127
        %v5337 = vpop.permute.xlu0 %5336
        %5338 = vrot.lane.b32.xlu0 %v5333, 127
        %v5339 = vpop.permute.xlu0 %5338
        %v5342 = vadd.f32 %v5328, %v5337
        %v5343 = vadd.f32 %v5329, %v5339
        %s5344 = sld [smem:[#allocation7 + $0x5e]]
        %v5345 = vstv %s5344
        %v5346 = vmul.f32 %v5345, %v2474
        %v5347 = vmul.f32 %v5345, %v2479
        %v5350 = vrot.slane %v5346, 1
        %v5351 = vrot.slane %v5347, 1
        %v5352 = vsel %vm556, %v5350, %v5351
        %v5355 = vadd.f32 %v5342, %v5352
        %v5356 = vadd.f32 %v5343, %v5351
        %s5357 = sld [smem:[#allocation7 + $0x5f]]
        %v5358 = vstv %s5357
        %v5359 = vmul.f32 %v5358, %v2474
        %v5360 = vmul.f32 %v5358, %v2479
        %v5363 = vrot.slane %v5359, 1
        %v5364 = vrot.slane %v5360, 1
        %v5365 = vsel %vm556, %v5363, %v5364
        %5366 = vrot.lane.b32.xlu0 %v5365, 127
        %v5367 = vpop.permute.xlu0 %5366
        %5368 = vrot.lane.b32.xlu0 %v5364, 127
        %v5369 = vpop.permute.xlu0 %5368
        %v5372 = vadd.f32 %v5355, %v5367
        %v5373 = vadd.f32 %v5356, %v5369
        %s5374 = sld [smem:[#allocation7 + $0x60]]
        %v5375 = vstv %s5374
        %v5376 = vmul.f32 %v5375, %v2964
        %v5377 = vmul.f32 %v5375, %v2969
        %v5378 = vadd.f32 %v5372, %v5376
        %v5379 = vadd.f32 %v5373, %v5377
        %s5380 = sld [smem:[#allocation7 + $0x61]]
        %v5381 = vstv %s5380
        %v5382 = vmul.f32 %v5381, %v2964
        %v5383 = vmul.f32 %v5381, %v2969
        %5386 = vrot.lane.b32.xlu0 %v5382, 127
        %v5387 = vpop.permute.xlu0 %5386
        %5388 = vrot.lane.b32.xlu0 %v5383, 127
        %v5389 = vpop.permute.xlu0 %5388
        %v5392 = vadd.f32 %v5378, %v5387
        %v5393 = vadd.f32 %v5379, %v5389
        %s5394 = sld [smem:[#allocation7 + $0x62]]
        %v5395 = vstv %s5394
        %v5396 = vmul.f32 %v5395, %v2964
        %v5397 = vmul.f32 %v5395, %v2969
        %v5400 = vrot.slane %v5396, 1
        %v5401 = vrot.slane %v5397, 1
        %v5402 = vsel %vm556, %v5400, %v5401
        %v5405 = vadd.f32 %v5392, %v5402
        %v5406 = vadd.f32 %v5393, %v5401
        %s5407 = sld [smem:[#allocation7 + $0x63]]
        %v5408 = vstv %s5407
        %v5409 = vmul.f32 %v5408, %v2964
        %v5410 = vmul.f32 %v5408, %v2969
        %v5413 = vrot.slane %v5409, 1
        %v5414 = vrot.slane %v5410, 1
        %v5415 = vsel %vm556, %v5413, %v5414
        %5416 = vrot.lane.b32.xlu0 %v5415, 127
        %v5417 = vpop.permute.xlu0 %5416
        %5418 = vrot.lane.b32.xlu0 %v5414, 127
        %v5419 = vpop.permute.xlu0 %5418
        %v5422 = vadd.f32 %v5405, %v5417
        %v5423 = vadd.f32 %v5406, %v5419
        %s5424 = sld [smem:[#allocation8 + $0x4]]
        %v5425 = vstv %s5424
        %v5426 = vadd.f32 %v5422, %v5425
        %v5427 = vadd.f32 %v5423, %v5425
        %v5428 = vmax.f32 %v5426, 0.0
        %v5429 = vmax.f32 %v5427, 0.0
        %5432 = vrot.lane.b32.xlu0 %v5428, 127
        %v5433 = vpop.permute.xlu0 %5432
        %5434 = vrot.lane.b32.xlu0 %v5429, 127
        %v5435 = vpop.permute.xlu0 %5434
        %v5438 = vmax.f32 %v5428, %v5433
        %v5439 = vmax.f32 %v5429, %v5435
        %v5442 = vrot.slane %v5438, 1
        %v5443 = vrot.slane %v5439, 1
        %v5444 = vsel %vm556, %v5442, %v5443
        %v5447 = vmax.f32 %v5438, %v5444
        %v5448 = vmax.f32 %v5439, %v5443
        %s5449 = scalar_lea.vmem %s7, 256
        %v5450 = vld [vmem:[%s5449] sm:$0xff]
        %v5451 = vld [vmem:[%s5449 + $0x8] sm:$0xff]
        %v5452 = vld [vmem:[%s5449 + $0x10] sm:$0xff]
        %v5453 = vld [vmem:[%s5449 + $0x18] sm:$0xff]
        %v5454 = vld [vmem:[%s5449 + $0x20] sm:$0xff]
        %v5455 = vld [vmem:[%s5449 + $0x28] sm:$0xff]
        %v5456 = vld [vmem:[%s5449 + $0x30] sm:$0xff]
        %v5457 = vld [vmem:[%s5449 + $0x38] sm:$0xf]
        %v5459 = vsel %vm3257, %v5450, 0
        %v5462 = vsel %vm3257, %v5451, 0
        %v5465 = vsel %vm3257, %v5452, 0
        %v5468 = vsel %vm3257, %v5453, 0
        %v5471 = vsel %vm3257, %v5454, 0
        %v5474 = vsel %vm3257, %v5455, 0
        %v5477 = vsel %vm3257, %v5456, 0
        %v5480 = vsel %vm3257, %v5457, 0
        %v5483 = vsel %vm3282, %v5448, 0
        %5485 = vmatprep.subr.mxu0 0.0
        %5486 = vmatpush1.msra.mxu0 0.0
        %5487 = vmatprep.subr.mxu0 0.0
        %5488 = vmatpush1.msra.mxu0 0.0
        %5489 = vmatprep.subr.mxu0 0.0
        %5490 = vmatpush1.msra.mxu0 0.0
        %5491 = vmatprep.subr.mxu0 0.0
        %5492 = vmatpush1.msra.mxu0 0.0
        %5493 = vmatprep.subr.mxu0 0.0
        %5494 = vmatpush1.msra.mxu0 0.0
        %5495 = vmatprep.subr.mxu0 0.0
        %5496 = vmatpush1.msra.mxu0 0.0
        %5497 = vmatprep.subr.mxu0 0.0
        %5498 = vmatpush1.msra.mxu0 0.0
        %5499 = vmatprep.subr.mxu0 0.0
        %5500 = vmatpush1.msra.mxu0 0.0
        %5501 = vmatprep.subr.mxu0 0.0
        %5502 = vmatpush1.msra.mxu0 0.0
        %5503 = vmatprep.subr.mxu0 0.0
        %5504 = vmatpush1.msra.mxu0 0.0
        %5505 = vmatprep.subr.mxu0 0.0
        %5506 = vmatpush1.msra.mxu0 0.0
        %5507 = vmatprep.subr.mxu0 0.0
        %5508 = vmatpush1.msra.mxu0 0.0
        %5509 = vmatprep.subr.mxu0 0.0
        %5510 = vmatpush1.msra.mxu0 0.0
        %5511 = vmatprep.subr.mxu0 0.0
        %5512 = vmatpush1.msra.mxu0 0.0
        %5513 = vmatprep.subr.mxu0 0.0
        %5514 = vmatpush1.msra.mxu0 %v5483
        %5515 = vmatprep.subr.mxu0 0.0
        %5516 = vmatpush1.msra.mxu0 %v5447
        %5517 = vmatprep.subr.mxu0 0.0
        %5518 = vmatpush2.msra.mxu0 0.0
        %5519 = vmatprep.subr.mxu0 0.0
        %5520 = vmatpush2.msra.mxu0 0.0
        %5521 = vmatprep.subr.mxu0 0.0
        %5522 = vmatpush2.msra.mxu0 0.0
        %5523 = vmatprep.subr.mxu0 0.0
        %5524 = vmatpush2.msra.mxu0 0.0
        %5525 = vmatprep.subr.mxu0 0.0
        %5526 = vmatpush2.msra.mxu0 0.0
        %5527 = vmatprep.subr.mxu0 0.0
        %5528 = vmatpush2.msra.mxu0 0.0
        %5529 = vmatprep.subr.mxu0 0.0
        %5530 = vmatpush2.msra.mxu0 0.0
        %5531 = vmatprep.subr.mxu0 0.0
        %5532 = vmatpush2.msra.mxu0 0.0
        %5533 = vmatprep.subr.mxu0 0.0
        %5534 = vmatpush2.msra.mxu0 0.0
        %5535 = vmatprep.subr.mxu0 0.0
        %5536 = vmatpush2.msra.mxu0 0.0
        %5537 = vmatprep.subr.mxu0 0.0
        %5538 = vmatpush2.msra.mxu0 0.0
        %5539 = vmatprep.subr.mxu0 0.0
        %5540 = vmatpush2.msra.mxu0 0.0
        %5541 = vmatprep.subr.mxu0 0.0
        %5542 = vmatpush2.msra.mxu0 0.0
        %5543 = vmatprep.subr.mxu0 0.0
        %5544 = vmatpush2.msra.mxu0 0.0
        %5545 = vmatprep.subr.mxu0 0.0
        %5546 = vmatpush2.msra.mxu0 0.0
        %5547 = vmatprep.subr.mxu0 0.0
        %5548 = vmatpush2.msra.mxu0 0.0
        %5549 = vmatprep.mubr.f32.mxu0 0.0
        %5550 = vmatmul.mubr.f32.gmra.mxu0 %v5459
        %v5551 = vpop.f32.mrf.mxu0
        %v5552 = vadd.f32 0.0, %v5551
        %v5553 = vpop.f32.mrf.mxu0
        %5554 = vmatprep.mubr.f32.mxu0 0.0
        %5555 = vmatmul.mubr.f32.gmra.mxu0 %v5462
        %v5556 = vpop.f32.mrf.mxu0
        %v5557 = vadd.f32 0.0, %v5556
        %v5558 = vpop.f32.mrf.mxu0
        %5559 = vmatprep.mubr.f32.mxu0 0.0
        %5560 = vmatmul.mubr.f32.gmra.mxu0 %v5465
        %v5561 = vpop.f32.mrf.mxu0
        %v5562 = vadd.f32 0.0, %v5561
        %v5563 = vpop.f32.mrf.mxu0
        %5564 = vmatprep.mubr.f32.mxu0 0.0
        %5565 = vmatmul.mubr.f32.gmra.mxu0 %v5468
        %v5566 = vpop.f32.mrf.mxu0
        %v5567 = vadd.f32 0.0, %v5566
        %v5568 = vpop.f32.mrf.mxu0
        %5569 = vmatprep.mubr.f32.mxu0 0.0
        %5570 = vmatmul.mubr.f32.gmra.mxu0 %v5471
        %v5571 = vpop.f32.mrf.mxu0
        %v5572 = vadd.f32 0.0, %v5571
        %v5573 = vpop.f32.mrf.mxu0
        %5574 = vmatprep.mubr.f32.mxu0 0.0
        %5575 = vmatmul.mubr.f32.gmra.mxu0 %v5474
        %v5576 = vpop.f32.mrf.mxu0
        %v5577 = vadd.f32 0.0, %v5576
        %v5578 = vpop.f32.mrf.mxu0
        %5579 = vmatprep.mubr.f32.mxu0 0.0
        %5580 = vmatmul.mubr.f32.gmra.mxu0 %v5477
        %v5581 = vpop.f32.mrf.mxu0
        %v5582 = vadd.f32 0.0, %v5581
        %v5583 = vpop.f32.mrf.mxu0
        %5584 = vmatprep.mubr.f32.mxu0 0.0
        %5585 = vmatmul.mubr.f32.gmra.mxu0 %v5480
        %v5586 = vpop.f32.mrf.mxu0
        %v5587 = vadd.f32 0.0, %v5586
        %v5588 = vpop.f32.mrf.mxu0
        %5589 = vdwg.mxu0
        %v5591 = vsel %vm3257, %v5552, 0
        %v5594 = vsel %vm3257, %v5557, 0
        %v5597 = vsel %vm3257, %v5562, 0
        %v5600 = vsel %vm3257, %v5567, 0
        %v5603 = vsel %vm3257, %v5572, 0
        %v5606 = vsel %vm3257, %v5577, 0
        %v5609 = vsel %vm3257, %v5582, 0
        %v5612 = vsel %vm3257, %v5587, 0
        %5614 = vmatprep.subr.mxu0 0.0
        %5615 = vmatpush1.msra.mxu0 0.0
        %5616 = vmatprep.subr.mxu0 0.0
        %5617 = vmatpush1.msra.mxu0 0.0
        %5618 = vmatprep.subr.mxu0 0.0
        %5619 = vmatpush1.msra.mxu0 0.0
        %5620 = vmatprep.subr.mxu0 0.0
        %5621 = vmatpush1.msra.mxu0 0.0
        %5622 = vmatprep.subr.mxu0 0.0
        %5623 = vmatpush1.msra.mxu0 0.0
        %5624 = vmatprep.subr.mxu0 0.0
        %5625 = vmatpush1.msra.mxu0 0.0
        %5626 = vmatprep.subr.mxu0 0.0
        %5627 = vmatpush1.msra.mxu0 0.0
        %5628 = vmatprep.subr.mxu0 0.0
        %5629 = vmatpush1.msra.mxu0 0.0
        %5630 = vmatprep.subr.mxu0 0.0
        %5631 = vmatpush1.msra.mxu0 0.0
        %5632 = vmatprep.subr.mxu0 0.0
        %5633 = vmatpush1.msra.mxu0 0.0
        %5634 = vmatprep.subr.mxu0 0.0
        %5635 = vmatpush1.msra.mxu0 0.0
        %5636 = vmatprep.subr.mxu0 0.0
        %5637 = vmatpush1.msra.mxu0 0.0
        %5638 = vmatprep.subr.mxu0 0.0
        %5639 = vmatpush1.msra.mxu0 0.0
        %5640 = vmatprep.subr.mxu0 0.0
        %5641 = vmatpush1.msra.mxu0 0.0
        %5642 = vmatprep.subr.mxu0 0.0
        %5643 = vmatpush1.msra.mxu0 %v3832
        %5644 = vmatprep.subr.mxu0 0.0
        %5645 = vmatpush1.msra.mxu0 %v2972
        %5646 = vmatprep.subr.mxu0 0.0
        %5647 = vmatpush2.msra.mxu0 0.0
        %5648 = vmatprep.subr.mxu0 0.0
        %5649 = vmatpush2.msra.mxu0 0.0
        %5650 = vmatprep.subr.mxu0 0.0
        %5651 = vmatpush2.msra.mxu0 0.0
        %5652 = vmatprep.subr.mxu0 0.0
        %5653 = vmatpush2.msra.mxu0 0.0
        %5654 = vmatprep.subr.mxu0 0.0
        %5655 = vmatpush2.msra.mxu0 0.0
        %5656 = vmatprep.subr.mxu0 0.0
        %5657 = vmatpush2.msra.mxu0 0.0
        %5658 = vmatprep.subr.mxu0 0.0
        %5659 = vmatpush2.msra.mxu0 0.0
        %5660 = vmatprep.subr.mxu0 0.0
        %5661 = vmatpush2.msra.mxu0 0.0
        %5662 = vmatprep.subr.mxu0 0.0
        %5663 = vmatpush2.msra.mxu0 0.0
        %5664 = vmatprep.subr.mxu0 0.0
        %5665 = vmatpush2.msra.mxu0 0.0
        %5666 = vmatprep.subr.mxu0 0.0
        %5667 = vmatpush2.msra.mxu0 0.0
        %5668 = vmatprep.subr.mxu0 0.0
        %5669 = vmatpush2.msra.mxu0 0.0
        %5670 = vmatprep.subr.mxu0 0.0
        %5671 = vmatpush2.msra.mxu0 0.0
        %5672 = vmatprep.subr.mxu0 0.0
        %5673 = vmatpush2.msra.mxu0 0.0
        %5674 = vmatprep.subr.mxu0 0.0
        %5675 = vmatpush2.msra.mxu0 0.0
        %5676 = vmatprep.subr.mxu0 0.0
        %5677 = vmatpush2.msra.mxu0 0.0
        %5678 = vmatprep.mubr.f32.mxu0 0.0
        %5679 = vmatmul.mubr.f32.gmra.mxu0 %v5591
        %v5680 = vpop.f32.mrf.mxu0
        %v5681 = vadd.f32 0.0, %v5680
        %v5682 = vpop.f32.mrf.mxu0
        %5683 = vmatprep.mubr.f32.mxu0 0.0
        %5684 = vmatmul.mubr.f32.gmra.mxu0 %v5594
        %v5685 = vpop.f32.mrf.mxu0
        %v5686 = vadd.f32 0.0, %v5685
        %v5687 = vpop.f32.mrf.mxu0
        %5688 = vmatprep.mubr.f32.mxu0 0.0
        %5689 = vmatmul.mubr.f32.gmra.mxu0 %v5597
        %v5690 = vpop.f32.mrf.mxu0
        %v5691 = vadd.f32 0.0, %v5690
        %v5692 = vpop.f32.mrf.mxu0
        %5693 = vmatprep.mubr.f32.mxu0 0.0
        %5694 = vmatmul.mubr.f32.gmra.mxu0 %v5600
        %v5695 = vpop.f32.mrf.mxu0
        %v5696 = vadd.f32 0.0, %v5695
        %v5697 = vpop.f32.mrf.mxu0
        %5698 = vmatprep.mubr.f32.mxu0 0.0
        %5699 = vmatmul.mubr.f32.gmra.mxu0 %v5603
        %v5700 = vpop.f32.mrf.mxu0
        %v5701 = vadd.f32 0.0, %v5700
        %v5702 = vpop.f32.mrf.mxu0
        %5703 = vmatprep.mubr.f32.mxu0 0.0
        %5704 = vmatmul.mubr.f32.gmra.mxu0 %v5606
        %v5705 = vpop.f32.mrf.mxu0
        %v5706 = vadd.f32 0.0, %v5705
        %v5707 = vpop.f32.mrf.mxu0
        %5708 = vmatprep.mubr.f32.mxu0 0.0
        %5709 = vmatmul.mubr.f32.gmra.mxu0 %v5609
        %v5710 = vpop.f32.mrf.mxu0
        %v5711 = vadd.f32 0.0, %v5710
        %v5712 = vpop.f32.mrf.mxu0
        %5713 = vmatprep.mubr.f32.mxu0 0.0
        %5714 = vmatmul.mubr.f32.gmra.mxu0 %v5612
        %v5715 = vpop.f32.mrf.mxu0
        %v5716 = vadd.f32 0.0, %v5715
        %v5717 = vpop.f32.mrf.mxu0
        %5718 = vdwg.mxu0
        %v5719 = vadd.f32 %v5166, %v5681
        %v5720 = vadd.f32 %v5167, %v5686
        %v5721 = vadd.f32 %v5168, %v5691
        %v5722 = vadd.f32 %v5169, %v5696
        %v5723 = vadd.f32 %v5170, %v5701
        %v5724 = vadd.f32 %v5171, %v5706
        %v5725 = vadd.f32 %v5172, %v5711
        %v5726 = vadd.f32 %v5173, %v5716
        %s5727 = sld [smem:[#allocation7 + $0x64]]
        %v5728 = vstv %s5727
        %v5729 = vmul.f32 %v5728, %v1004
        %v5730 = vmul.f32 %v5728, %v1009
        %v5731 = vadd.f32 %v5729, 0.0
        %v5732 = vadd.f32 %v5730, 0.0
        %s5733 = sld [smem:[#allocation7 + $0x65]]
        %v5734 = vstv %s5733
        %v5735 = vmul.f32 %v5734, %v1004
        %v5736 = vmul.f32 %v5734, %v1009
        %5739 = vrot.lane.b32.xlu0 %v5735, 127
        %v5740 = vpop.permute.xlu0 %5739
        %5741 = vrot.lane.b32.xlu0 %v5736, 127
        %v5742 = vpop.permute.xlu0 %5741
        %v5745 = vadd.f32 %v5731, %v5740
        %v5746 = vadd.f32 %v5732, %v5742
        %s5747 = sld [smem:[#allocation7 + $0x66]]
        %v5748 = vstv %s5747
        %v5749 = vmul.f32 %v5748, %v1004
        %v5750 = vmul.f32 %v5748, %v1009
        %v5753 = vrot.slane %v5749, 1
        %v5754 = vrot.slane %v5750, 1
        %v5755 = vsel %vm556, %v5753, %v5754
        %v5758 = vadd.f32 %v5745, %v5755
        %v5759 = vadd.f32 %v5746, %v5754
        %s5760 = sld [smem:[#allocation7 + $0x67]]
        %v5761 = vstv %s5760
        %v5762 = vmul.f32 %v5761, %v1004
        %v5763 = vmul.f32 %v5761, %v1009
        %v5766 = vrot.slane %v5762, 1
        %v5767 = vrot.slane %v5763, 1
        %v5768 = vsel %vm556, %v5766, %v5767
        %5769 = vrot.lane.b32.xlu0 %v5768, 127
        %v5770 = vpop.permute.xlu0 %5769
        %5771 = vrot.lane.b32.xlu0 %v5767, 127
        %v5772 = vpop.permute.xlu0 %5771
        %v5775 = vadd.f32 %v5758, %v5770
        %v5776 = vadd.f32 %v5759, %v5772
        %s5777 = sld [smem:[#allocation7 + $0x68]]
        %v5778 = vstv %s5777
        %v5779 = vmul.f32 %v5778, %v1494
        %v5780 = vmul.f32 %v5778, %v1499
        %v5781 = vadd.f32 %v5775, %v5779
        %v5782 = vadd.f32 %v5776, %v5780
        %s5783 = sld [smem:[#allocation7 + $0x69]]
        %v5784 = vstv %s5783
        %v5785 = vmul.f32 %v5784, %v1494
        %v5786 = vmul.f32 %v5784, %v1499
        %5789 = vrot.lane.b32.xlu0 %v5785, 127
        %v5790 = vpop.permute.xlu0 %5789
        %5791 = vrot.lane.b32.xlu0 %v5786, 127
        %v5792 = vpop.permute.xlu0 %5791
        %v5795 = vadd.f32 %v5781, %v5790
        %v5796 = vadd.f32 %v5782, %v5792
        %s5797 = sld [smem:[#allocation7 + $0x6a]]
        %v5798 = vstv %s5797
        %v5799 = vmul.f32 %v5798, %v1494
        %v5800 = vmul.f32 %v5798, %v1499
        %v5803 = vrot.slane %v5799, 1
        %v5804 = vrot.slane %v5800, 1
        %v5805 = vsel %vm556, %v5803, %v5804
        %v5808 = vadd.f32 %v5795, %v5805
        %v5809 = vadd.f32 %v5796, %v5804
        %s5810 = sld [smem:[#allocation7 + $0x6b]]
        %v5811 = vstv %s5810
        %v5812 = vmul.f32 %v5811, %v1494
        %v5813 = vmul.f32 %v5811, %v1499
        %v5816 = vrot.slane %v5812, 1
        %v5817 = vrot.slane %v5813, 1
        %v5818 = vsel %vm556, %v5816, %v5817
        %5819 = vrot.lane.b32.xlu0 %v5818, 127
        %v5820 = vpop.permute.xlu0 %5819
        %5821 = vrot.lane.b32.xlu0 %v5817, 127
        %v5822 = vpop.permute.xlu0 %5821
        %v5825 = vadd.f32 %v5808, %v5820
        %v5826 = vadd.f32 %v5809, %v5822
        %s5827 = sld [smem:[#allocation7 + $0x6c]]
        %v5828 = vstv %s5827
        %v5829 = vmul.f32 %v5828, %v1984
        %v5830 = vmul.f32 %v5828, %v1989
        %v5831 = vadd.f32 %v5825, %v5829
        %v5832 = vadd.f32 %v5826, %v5830
        %s5833 = sld [smem:[#allocation7 + $0x6d]]
        %v5834 = vstv %s5833
        %v5835 = vmul.f32 %v5834, %v1984
        %v5836 = vmul.f32 %v5834, %v1989
        %5839 = vrot.lane.b32.xlu0 %v5835, 127
        %v5840 = vpop.permute.xlu0 %5839
        %5841 = vrot.lane.b32.xlu0 %v5836, 127
        %v5842 = vpop.permute.xlu0 %5841
        %v5845 = vadd.f32 %v5831, %v5840
        %v5846 = vadd.f32 %v5832, %v5842
        %s5847 = sld [smem:[#allocation7 + $0x6e]]
        %v5848 = vstv %s5847
        %v5849 = vmul.f32 %v5848, %v1984
        %v5850 = vmul.f32 %v5848, %v1989
        %v5853 = vrot.slane %v5849, 1
        %v5854 = vrot.slane %v5850, 1
        %v5855 = vsel %vm556, %v5853, %v5854
        %v5858 = vadd.f32 %v5845, %v5855
        %v5859 = vadd.f32 %v5846, %v5854
        %s5860 = sld [smem:[#allocation7 + $0x6f]]
        %v5861 = vstv %s5860
        %v5862 = vmul.f32 %v5861, %v1984
        %v5863 = vmul.f32 %v5861, %v1989
        %v5866 = vrot.slane %v5862, 1
        %v5867 = vrot.slane %v5863, 1
        %v5868 = vsel %vm556, %v5866, %v5867
        %5869 = vrot.lane.b32.xlu0 %v5868, 127
        %v5870 = vpop.permute.xlu0 %5869
        %5871 = vrot.lane.b32.xlu0 %v5867, 127
        %v5872 = vpop.permute.xlu0 %5871
        %v5875 = vadd.f32 %v5858, %v5870
        %v5876 = vadd.f32 %v5859, %v5872
        %s5877 = sld [smem:[#allocation7 + $0x70]]
        %v5878 = vstv %s5877
        %v5879 = vmul.f32 %v5878, %v2474
        %v5880 = vmul.f32 %v5878, %v2479
        %v5881 = vadd.f32 %v5875, %v5879
        %v5882 = vadd.f32 %v5876, %v5880
        %s5883 = sld [smem:[#allocation7 + $0x71]]
        %v5884 = vstv %s5883
        %v5885 = vmul.f32 %v5884, %v2474
        %v5886 = vmul.f32 %v5884, %v2479
        %5889 = vrot.lane.b32.xlu0 %v5885, 127
        %v5890 = vpop.permute.xlu0 %5889
        %5891 = vrot.lane.b32.xlu0 %v5886, 127
        %v5892 = vpop.permute.xlu0 %5891
        %v5895 = vadd.f32 %v5881, %v5890
        %v5896 = vadd.f32 %v5882, %v5892
        %s5897 = sld [smem:[#allocation7 + $0x72]]
        %v5898 = vstv %s5897
        %v5899 = vmul.f32 %v5898, %v2474
        %v5900 = vmul.f32 %v5898, %v2479
        %v5903 = vrot.slane %v5899, 1
        %v5904 = vrot.slane %v5900, 1
        %v5905 = vsel %vm556, %v5903, %v5904
        %v5908 = vadd.f32 %v5895, %v5905
        %v5909 = vadd.f32 %v5896, %v5904
        %s5910 = sld [smem:[#allocation7 + $0x73]]
        %v5911 = vstv %s5910
        %v5912 = vmul.f32 %v5911, %v2474
        %v5913 = vmul.f32 %v5911, %v2479
        %v5916 = vrot.slane %v5912, 1
        %v5917 = vrot.slane %v5913, 1
        %v5918 = vsel %vm556, %v5916, %v5917
        %5919 = vrot.lane.b32.xlu0 %v5918, 127
        %v5920 = vpop.permute.xlu0 %5919
        %5921 = vrot.lane.b32.xlu0 %v5917, 127
        %v5922 = vpop.permute.xlu0 %5921
        %v5925 = vadd.f32 %v5908, %v5920
        %v5926 = vadd.f32 %v5909, %v5922
        %s5927 = sld [smem:[#allocation7 + $0x74]]
        %v5928 = vstv %s5927
        %v5929 = vmul.f32 %v5928, %v2964
        %v5930 = vmul.f32 %v5928, %v2969
        %v5931 = vadd.f32 %v5925, %v5929
        %v5932 = vadd.f32 %v5926, %v5930
        %s5933 = sld [smem:[#allocation7 + $0x75]]
        %v5934 = vstv %s5933
        %v5935 = vmul.f32 %v5934, %v2964
        %v5936 = vmul.f32 %v5934, %v2969
        %5939 = vrot.lane.b32.xlu0 %v5935, 127
        %v5940 = vpop.permute.xlu0 %5939
        %5941 = vrot.lane.b32.xlu0 %v5936, 127
        %v5942 = vpop.permute.xlu0 %5941
        %v5945 = vadd.f32 %v5931, %v5940
        %v5946 = vadd.f32 %v5932, %v5942
        %s5947 = sld [smem:[#allocation7 + $0x76]]
        %v5948 = vstv %s5947
        %v5949 = vmul.f32 %v5948, %v2964
        %v5950 = vmul.f32 %v5948, %v2969
        %v5953 = vrot.slane %v5949, 1
        %v5954 = vrot.slane %v5950, 1
        %v5955 = vsel %vm556, %v5953, %v5954
        %v5958 = vadd.f32 %v5945, %v5955
        %v5959 = vadd.f32 %v5946, %v5954
        %s5960 = sld [smem:[#allocation7 + $0x77]]
        %v5961 = vstv %s5960
        %v5962 = vmul.f32 %v5961, %v2964
        %v5963 = vmul.f32 %v5961, %v2969
        %v5966 = vrot.slane %v5962, 1
        %v5967 = vrot.slane %v5963, 1
        %v5968 = vsel %vm556, %v5966, %v5967
        %5969 = vrot.lane.b32.xlu0 %v5968, 127
        %v5970 = vpop.permute.xlu0 %5969
        %5971 = vrot.lane.b32.xlu0 %v5967, 127
        %v5972 = vpop.permute.xlu0 %5971
        %v5975 = vadd.f32 %v5958, %v5970
        %v5976 = vadd.f32 %v5959, %v5972
        %s5977 = sld [smem:[#allocation8 + $0x5]]
        %v5978 = vstv %s5977
        %v5979 = vadd.f32 %v5975, %v5978
        %v5980 = vadd.f32 %v5976, %v5978
        %v5981 = vmax.f32 %v5979, 0.0
        %v5982 = vmax.f32 %v5980, 0.0
        %5985 = vrot.lane.b32.xlu0 %v5981, 127
        %v5986 = vpop.permute.xlu0 %5985
        %5987 = vrot.lane.b32.xlu0 %v5982, 127
        %v5988 = vpop.permute.xlu0 %5987
        %v5991 = vmax.f32 %v5981, %v5986
        %v5992 = vmax.f32 %v5982, %v5988
        %v5995 = vrot.slane %v5991, 1
        %v5996 = vrot.slane %v5992, 1
        %v5997 = vsel %vm556, %v5995, %v5996
        %v6000 = vmax.f32 %v5991, %v5997
        %v6001 = vmax.f32 %v5992, %v5996
        %s6002 = scalar_lea.vmem %s7, 320
        %v6003 = vld [vmem:[%s6002] sm:$0xff]
        %v6004 = vld [vmem:[%s6002 + $0x8] sm:$0xff]
        %v6005 = vld [vmem:[%s6002 + $0x10] sm:$0xff]
        %v6006 = vld [vmem:[%s6002 + $0x18] sm:$0xff]
        %v6007 = vld [vmem:[%s6002 + $0x20] sm:$0xff]
        %v6008 = vld [vmem:[%s6002 + $0x28] sm:$0xff]
        %v6009 = vld [vmem:[%s6002 + $0x30] sm:$0xff]
        %v6010 = vld [vmem:[%s6002 + $0x38] sm:$0xf]
        %v6012 = vsel %vm3257, %v6003, 0
        %v6015 = vsel %vm3257, %v6004, 0
        %v6018 = vsel %vm3257, %v6005, 0
        %v6021 = vsel %vm3257, %v6006, 0
        %v6024 = vsel %vm3257, %v6007, 0
        %v6027 = vsel %vm3257, %v6008, 0
        %v6030 = vsel %vm3257, %v6009, 0
        %v6033 = vsel %vm3257, %v6010, 0
        %v6036 = vsel %vm3282, %v6001, 0
        %6038 = vmatprep.subr.mxu0 0.0
        %6039 = vmatpush1.msra.mxu0 0.0
        %6040 = vmatprep.subr.mxu0 0.0
        %6041 = vmatpush1.msra.mxu0 0.0
        %6042 = vmatprep.subr.mxu0 0.0
        %6043 = vmatpush1.msra.mxu0 0.0
        %6044 = vmatprep.subr.mxu0 0.0
        %6045 = vmatpush1.msra.mxu0 0.0
        %6046 = vmatprep.subr.mxu0 0.0
        %6047 = vmatpush1.msra.mxu0 0.0
        %6048 = vmatprep.subr.mxu0 0.0
        %6049 = vmatpush1.msra.mxu0 0.0
        %6050 = vmatprep.subr.mxu0 0.0
        %6051 = vmatpush1.msra.mxu0 0.0
        %6052 = vmatprep.subr.mxu0 0.0
        %6053 = vmatpush1.msra.mxu0 0.0
        %6054 = vmatprep.subr.mxu0 0.0
        %6055 = vmatpush1.msra.mxu0 0.0
        %6056 = vmatprep.subr.mxu0 0.0
        %6057 = vmatpush1.msra.mxu0 0.0
        %6058 = vmatprep.subr.mxu0 0.0
        %6059 = vmatpush1.msra.mxu0 0.0
        %6060 = vmatprep.subr.mxu0 0.0
        %6061 = vmatpush1.msra.mxu0 0.0
        %6062 = vmatprep.subr.mxu0 0.0
        %6063 = vmatpush1.msra.mxu0 0.0
        %6064 = vmatprep.subr.mxu0 0.0
        %6065 = vmatpush1.msra.mxu0 0.0
        %6066 = vmatprep.subr.mxu0 0.0
        %6067 = vmatpush1.msra.mxu0 %v6036
        %6068 = vmatprep.subr.mxu0 0.0
        %6069 = vmatpush1.msra.mxu0 %v6000
        %6070 = vmatprep.subr.mxu0 0.0
        %6071 = vmatpush2.msra.mxu0 0.0
        %6072 = vmatprep.subr.mxu0 0.0
        %6073 = vmatpush2.msra.mxu0 0.0
        %6074 = vmatprep.subr.mxu0 0.0
        %6075 = vmatpush2.msra.mxu0 0.0
        %6076 = vmatprep.subr.mxu0 0.0
        %6077 = vmatpush2.msra.mxu0 0.0
        %6078 = vmatprep.subr.mxu0 0.0
        %6079 = vmatpush2.msra.mxu0 0.0
        %6080 = vmatprep.subr.mxu0 0.0
        %6081 = vmatpush2.msra.mxu0 0.0
        %6082 = vmatprep.subr.mxu0 0.0
        %6083 = vmatpush2.msra.mxu0 0.0
        %6084 = vmatprep.subr.mxu0 0.0
        %6085 = vmatpush2.msra.mxu0 0.0
        %6086 = vmatprep.subr.mxu0 0.0
        %6087 = vmatpush2.msra.mxu0 0.0
        %6088 = vmatprep.subr.mxu0 0.0
        %6089 = vmatpush2.msra.mxu0 0.0
        %6090 = vmatprep.subr.mxu0 0.0
        %6091 = vmatpush2.msra.mxu0 0.0
        %6092 = vmatprep.subr.mxu0 0.0
        %6093 = vmatpush2.msra.mxu0 0.0
        %6094 = vmatprep.subr.mxu0 0.0
        %6095 = vmatpush2.msra.mxu0 0.0
        %6096 = vmatprep.subr.mxu0 0.0
        %6097 = vmatpush2.msra.mxu0 0.0
        %6098 = vmatprep.subr.mxu0 0.0
        %6099 = vmatpush2.msra.mxu0 0.0
        %6100 = vmatprep.subr.mxu0 0.0
        %6101 = vmatpush2.msra.mxu0 0.0
        %6102 = vmatprep.mubr.f32.mxu0 0.0
        %6103 = vmatmul.mubr.f32.gmra.mxu0 %v6012
        %v6104 = vpop.f32.mrf.mxu0
        %v6105 = vadd.f32 0.0, %v6104
        %v6106 = vpop.f32.mrf.mxu0
        %6107 = vmatprep.mubr.f32.mxu0 0.0
        %6108 = vmatmul.mubr.f32.gmra.mxu0 %v6015
        %v6109 = vpop.f32.mrf.mxu0
        %v6110 = vadd.f32 0.0, %v6109
        %v6111 = vpop.f32.mrf.mxu0
        %6112 = vmatprep.mubr.f32.mxu0 0.0
        %6113 = vmatmul.mubr.f32.gmra.mxu0 %v6018
        %v6114 = vpop.f32.mrf.mxu0
        %v6115 = vadd.f32 0.0, %v6114
        %v6116 = vpop.f32.mrf.mxu0
        %6117 = vmatprep.mubr.f32.mxu0 0.0
        %6118 = vmatmul.mubr.f32.gmra.mxu0 %v6021
        %v6119 = vpop.f32.mrf.mxu0
        %v6120 = vadd.f32 0.0, %v6119
        %v6121 = vpop.f32.mrf.mxu0
        %6122 = vmatprep.mubr.f32.mxu0 0.0
        %6123 = vmatmul.mubr.f32.gmra.mxu0 %v6024
        %v6124 = vpop.f32.mrf.mxu0
        %v6125 = vadd.f32 0.0, %v6124
        %v6126 = vpop.f32.mrf.mxu0
        %6127 = vmatprep.mubr.f32.mxu0 0.0
        %6128 = vmatmul.mubr.f32.gmra.mxu0 %v6027
        %v6129 = vpop.f32.mrf.mxu0
        %v6130 = vadd.f32 0.0, %v6129
        %v6131 = vpop.f32.mrf.mxu0
        %6132 = vmatprep.mubr.f32.mxu0 0.0
        %6133 = vmatmul.mubr.f32.gmra.mxu0 %v6030
        %v6134 = vpop.f32.mrf.mxu0
        %v6135 = vadd.f32 0.0, %v6134
        %v6136 = vpop.f32.mrf.mxu0
        %6137 = vmatprep.mubr.f32.mxu0 0.0
        %6138 = vmatmul.mubr.f32.gmra.mxu0 %v6033
        %v6139 = vpop.f32.mrf.mxu0
        %v6140 = vadd.f32 0.0, %v6139
        %v6141 = vpop.f32.mrf.mxu0
        %6142 = vdwg.mxu0
        %v6144 = vsel %vm3257, %v6105, 0
        %v6147 = vsel %vm3257, %v6110, 0
        %v6150 = vsel %vm3257, %v6115, 0
        %v6153 = vsel %vm3257, %v6120, 0
        %v6156 = vsel %vm3257, %v6125, 0
        %v6159 = vsel %vm3257, %v6130, 0
        %v6162 = vsel %vm3257, %v6135, 0
        %v6165 = vsel %vm3257, %v6140, 0
        %6167 = vmatprep.subr.mxu0 0.0
        %6168 = vmatpush1.msra.mxu0 0.0
        %6169 = vmatprep.subr.mxu0 0.0
        %6170 = vmatpush1.msra.mxu0 0.0
        %6171 = vmatprep.subr.mxu0 0.0
        %6172 = vmatpush1.msra.mxu0 0.0
        %6173 = vmatprep.subr.mxu0 0.0
        %6174 = vmatpush1.msra.mxu0 0.0
        %6175 = vmatprep.subr.mxu0 0.0
        %6176 = vmatpush1.msra.mxu0 0.0
        %6177 = vmatprep.subr.mxu0 0.0
        %6178 = vmatpush1.msra.mxu0 0.0
        %6179 = vmatprep.subr.mxu0 0.0
        %6180 = vmatpush1.msra.mxu0 0.0
        %6181 = vmatprep.subr.mxu0 0.0
        %6182 = vmatpush1.msra.mxu0 0.0
        %6183 = vmatprep.subr.mxu0 0.0
        %6184 = vmatpush1.msra.mxu0 0.0
        %6185 = vmatprep.subr.mxu0 0.0
        %6186 = vmatpush1.msra.mxu0 0.0
        %6187 = vmatprep.subr.mxu0 0.0
        %6188 = vmatpush1.msra.mxu0 0.0
        %6189 = vmatprep.subr.mxu0 0.0
        %6190 = vmatpush1.msra.mxu0 0.0
        %6191 = vmatprep.subr.mxu0 0.0
        %6192 = vmatpush1.msra.mxu0 0.0
        %6193 = vmatprep.subr.mxu0 0.0
        %6194 = vmatpush1.msra.mxu0 0.0
        %6195 = vmatprep.subr.mxu0 0.0
        %6196 = vmatpush1.msra.mxu0 %v3832
        %6197 = vmatprep.subr.mxu0 0.0
        %6198 = vmatpush1.msra.mxu0 %v2972
        %6199 = vmatprep.subr.mxu0 0.0
        %6200 = vmatpush2.msra.mxu0 0.0
        %6201 = vmatprep.subr.mxu0 0.0
        %6202 = vmatpush2.msra.mxu0 0.0
        %6203 = vmatprep.subr.mxu0 0.0
        %6204 = vmatpush2.msra.mxu0 0.0
        %6205 = vmatprep.subr.mxu0 0.0
        %6206 = vmatpush2.msra.mxu0 0.0
        %6207 = vmatprep.subr.mxu0 0.0
        %6208 = vmatpush2.msra.mxu0 0.0
        %6209 = vmatprep.subr.mxu0 0.0
        %6210 = vmatpush2.msra.mxu0 0.0
        %6211 = vmatprep.subr.mxu0 0.0
        %6212 = vmatpush2.msra.mxu0 0.0
        %6213 = vmatprep.subr.mxu0 0.0
        %6214 = vmatpush2.msra.mxu0 0.0
        %6215 = vmatprep.subr.mxu0 0.0
        %6216 = vmatpush2.msra.mxu0 0.0
        %6217 = vmatprep.subr.mxu0 0.0
        %6218 = vmatpush2.msra.mxu0 0.0
        %6219 = vmatprep.subr.mxu0 0.0
        %6220 = vmatpush2.msra.mxu0 0.0
        %6221 = vmatprep.subr.mxu0 0.0
        %6222 = vmatpush2.msra.mxu0 0.0
        %6223 = vmatprep.subr.mxu0 0.0
        %6224 = vmatpush2.msra.mxu0 0.0
        %6225 = vmatprep.subr.mxu0 0.0
        %6226 = vmatpush2.msra.mxu0 0.0
        %6227 = vmatprep.subr.mxu0 0.0
        %6228 = vmatpush2.msra.mxu0 0.0
        %6229 = vmatprep.subr.mxu0 0.0
        %6230 = vmatpush2.msra.mxu0 0.0
        %6231 = vmatprep.mubr.f32.mxu0 0.0
        %6232 = vmatmul.mubr.f32.gmra.mxu0 %v6144
        %v6233 = vpop.f32.mrf.mxu0
        %v6234 = vadd.f32 0.0, %v6233
        %v6235 = vpop.f32.mrf.mxu0
        %6236 = vmatprep.mubr.f32.mxu0 0.0
        %6237 = vmatmul.mubr.f32.gmra.mxu0 %v6147
        %v6238 = vpop.f32.mrf.mxu0
        %v6239 = vadd.f32 0.0, %v6238
        %v6240 = vpop.f32.mrf.mxu0
        %6241 = vmatprep.mubr.f32.mxu0 0.0
        %6242 = vmatmul.mubr.f32.gmra.mxu0 %v6150
        %v6243 = vpop.f32.mrf.mxu0
        %v6244 = vadd.f32 0.0, %v6243
        %v6245 = vpop.f32.mrf.mxu0
        %6246 = vmatprep.mubr.f32.mxu0 0.0
        %6247 = vmatmul.mubr.f32.gmra.mxu0 %v6153
        %v6248 = vpop.f32.mrf.mxu0
        %v6249 = vadd.f32 0.0, %v6248
        %v6250 = vpop.f32.mrf.mxu0
        %6251 = vmatprep.mubr.f32.mxu0 0.0
        %6252 = vmatmul.mubr.f32.gmra.mxu0 %v6156
        %v6253 = vpop.f32.mrf.mxu0
        %v6254 = vadd.f32 0.0, %v6253
        %v6255 = vpop.f32.mrf.mxu0
        %6256 = vmatprep.mubr.f32.mxu0 0.0
        %6257 = vmatmul.mubr.f32.gmra.mxu0 %v6159
        %v6258 = vpop.f32.mrf.mxu0
        %v6259 = vadd.f32 0.0, %v6258
        %v6260 = vpop.f32.mrf.mxu0
        %6261 = vmatprep.mubr.f32.mxu0 0.0
        %6262 = vmatmul.mubr.f32.gmra.mxu0 %v6162
        %v6263 = vpop.f32.mrf.mxu0
        %v6264 = vadd.f32 0.0, %v6263
        %v6265 = vpop.f32.mrf.mxu0
        %6266 = vmatprep.mubr.f32.mxu0 0.0
        %6267 = vmatmul.mubr.f32.gmra.mxu0 %v6165
        %v6268 = vpop.f32.mrf.mxu0
        %v6269 = vadd.f32 0.0, %v6268
        %v6270 = vpop.f32.mrf.mxu0
        %6271 = vdwg.mxu0
        %v6272 = vadd.f32 %v5719, %v6234
        %v6273 = vadd.f32 %v5720, %v6239
        %v6274 = vadd.f32 %v5721, %v6244
        %v6275 = vadd.f32 %v5722, %v6249
        %v6276 = vadd.f32 %v5723, %v6254
        %v6277 = vadd.f32 %v5724, %v6259
        %v6278 = vadd.f32 %v5725, %v6264
        %v6279 = vadd.f32 %v5726, %v6269
        %s6280 = sld [smem:[#allocation7 + $0x78]]
        %v6281 = vstv %s6280
        %v6282 = vmul.f32 %v6281, %v1004
        %v6283 = vmul.f32 %v6281, %v1009
        %v6284 = vadd.f32 %v6282, 0.0
        %v6285 = vadd.f32 %v6283, 0.0
        %s6286 = sld [smem:[#allocation7 + $0x79]]
        %v6287 = vstv %s6286
        %v6288 = vmul.f32 %v6287, %v1004
        %v6289 = vmul.f32 %v6287, %v1009
        %6292 = vrot.lane.b32.xlu0 %v6288, 127
        %v6293 = vpop.permute.xlu0 %6292
        %6294 = vrot.lane.b32.xlu0 %v6289, 127
        %v6295 = vpop.permute.xlu0 %6294
        %v6298 = vadd.f32 %v6284, %v6293
        %v6299 = vadd.f32 %v6285, %v6295
        %s6300 = sld [smem:[#allocation7 + $0x7a]]
        %v6301 = vstv %s6300
        %v6302 = vmul.f32 %v6301, %v1004
        %v6303 = vmul.f32 %v6301, %v1009
        %v6306 = vrot.slane %v6302, 1
        %v6307 = vrot.slane %v6303, 1
        %v6308 = vsel %vm556, %v6306, %v6307
        %v6311 = vadd.f32 %v6298, %v6308
        %v6312 = vadd.f32 %v6299, %v6307
        %s6313 = sld [smem:[#allocation7 + $0x7b]]
        %v6314 = vstv %s6313
        %v6315 = vmul.f32 %v6314, %v1004
        %v6316 = vmul.f32 %v6314, %v1009
        %v6319 = vrot.slane %v6315, 1
        %v6320 = vrot.slane %v6316, 1
        %v6321 = vsel %vm556, %v6319, %v6320
        %6322 = vrot.lane.b32.xlu0 %v6321, 127
        %v6323 = vpop.permute.xlu0 %6322
        %6324 = vrot.lane.b32.xlu0 %v6320, 127
        %v6325 = vpop.permute.xlu0 %6324
        %v6328 = vadd.f32 %v6311, %v6323
        %v6329 = vadd.f32 %v6312, %v6325
        %s6330 = sld [smem:[#allocation7 + $0x7c]]
        %v6331 = vstv %s6330
        %v6332 = vmul.f32 %v6331, %v1494
        %v6333 = vmul.f32 %v6331, %v1499
        %v6334 = vadd.f32 %v6328, %v6332
        %v6335 = vadd.f32 %v6329, %v6333
        %s6336 = sld [smem:[#allocation7 + $0x7d]]
        %v6337 = vstv %s6336
        %v6338 = vmul.f32 %v6337, %v1494
        %v6339 = vmul.f32 %v6337, %v1499
        %6342 = vrot.lane.b32.xlu0 %v6338, 127
        %v6343 = vpop.permute.xlu0 %6342
        %6344 = vrot.lane.b32.xlu0 %v6339, 127
        %v6345 = vpop.permute.xlu0 %6344
        %v6348 = vadd.f32 %v6334, %v6343
        %v6349 = vadd.f32 %v6335, %v6345
        %s6350 = sld [smem:[#allocation7 + $0x7e]]
        %v6351 = vstv %s6350
        %v6352 = vmul.f32 %v6351, %v1494
        %v6353 = vmul.f32 %v6351, %v1499
        %v6356 = vrot.slane %v6352, 1
        %v6357 = vrot.slane %v6353, 1
        %v6358 = vsel %vm556, %v6356, %v6357
        %v6361 = vadd.f32 %v6348, %v6358
        %v6362 = vadd.f32 %v6349, %v6357
        %s6363 = sld [smem:[#allocation7 + $0x7f]]
        %v6364 = vstv %s6363
        %v6365 = vmul.f32 %v6364, %v1494
        %v6366 = vmul.f32 %v6364, %v1499
        %v6369 = vrot.slane %v6365, 1
        %v6370 = vrot.slane %v6366, 1
        %v6371 = vsel %vm556, %v6369, %v6370
        %6372 = vrot.lane.b32.xlu0 %v6371, 127
        %v6373 = vpop.permute.xlu0 %6372
        %6374 = vrot.lane.b32.xlu0 %v6370, 127
        %v6375 = vpop.permute.xlu0 %6374
        %v6378 = vadd.f32 %v6361, %v6373
        %v6379 = vadd.f32 %v6362, %v6375
        %s6380 = sld [smem:[#allocation7 + $0x80]]
        %v6381 = vstv %s6380
        %v6382 = vmul.f32 %v6381, %v1984
        %v6383 = vmul.f32 %v6381, %v1989
        %v6384 = vadd.f32 %v6378, %v6382
        %v6385 = vadd.f32 %v6379, %v6383
        %s6386 = sld [smem:[#allocation7 + $0x81]]
        %v6387 = vstv %s6386
        %v6388 = vmul.f32 %v6387, %v1984
        %v6389 = vmul.f32 %v6387, %v1989
        %6392 = vrot.lane.b32.xlu0 %v6388, 127
        %v6393 = vpop.permute.xlu0 %6392
        %6394 = vrot.lane.b32.xlu0 %v6389, 127
        %v6395 = vpop.permute.xlu0 %6394
        %v6398 = vadd.f32 %v6384, %v6393
        %v6399 = vadd.f32 %v6385, %v6395
        %s6400 = sld [smem:[#allocation7 + $0x82]]
        %v6401 = vstv %s6400
        %v6402 = vmul.f32 %v6401, %v1984
        %v6403 = vmul.f32 %v6401, %v1989
        %v6406 = vrot.slane %v6402, 1
        %v6407 = vrot.slane %v6403, 1
        %v6408 = vsel %vm556, %v6406, %v6407
        %v6411 = vadd.f32 %v6398, %v6408
        %v6412 = vadd.f32 %v6399, %v6407
        %s6413 = sld [smem:[#allocation7 + $0x83]]
        %v6414 = vstv %s6413
        %v6415 = vmul.f32 %v6414, %v1984
        %v6416 = vmul.f32 %v6414, %v1989
        %v6419 = vrot.slane %v6415, 1
        %v6420 = vrot.slane %v6416, 1
        %v6421 = vsel %vm556, %v6419, %v6420
        %6422 = vrot.lane.b32.xlu0 %v6421, 127
        %v6423 = vpop.permute.xlu0 %6422
        %6424 = vrot.lane.b32.xlu0 %v6420, 127
        %v6425 = vpop.permute.xlu0 %6424
        %v6428 = vadd.f32 %v6411, %v6423
        %v6429 = vadd.f32 %v6412, %v6425
        %s6430 = sld [smem:[#allocation7 + $0x84]]
        %v6431 = vstv %s6430
        %v6432 = vmul.f32 %v6431, %v2474
        %v6433 = vmul.f32 %v6431, %v2479
        %v6434 = vadd.f32 %v6428, %v6432
        %v6435 = vadd.f32 %v6429, %v6433
        %s6436 = sld [smem:[#allocation7 + $0x85]]
        %v6437 = vstv %s6436
        %v6438 = vmul.f32 %v6437, %v2474
        %v6439 = vmul.f32 %v6437, %v2479
        %6442 = vrot.lane.b32.xlu0 %v6438, 127
        %v6443 = vpop.permute.xlu0 %6442
        %6444 = vrot.lane.b32.xlu0 %v6439, 127
        %v6445 = vpop.permute.xlu0 %6444
        %v6448 = vadd.f32 %v6434, %v6443
        %v6449 = vadd.f32 %v6435, %v6445
        %s6450 = sld [smem:[#allocation7 + $0x86]]
        %v6451 = vstv %s6450
        %v6452 = vmul.f32 %v6451, %v2474
        %v6453 = vmul.f32 %v6451, %v2479
        %v6456 = vrot.slane %v6452, 1
        %v6457 = vrot.slane %v6453, 1
        %v6458 = vsel %vm556, %v6456, %v6457
        %v6461 = vadd.f32 %v6448, %v6458
        %v6462 = vadd.f32 %v6449, %v6457
        %s6463 = sld [smem:[#allocation7 + $0x87]]
        %v6464 = vstv %s6463
        %v6465 = vmul.f32 %v6464, %v2474
        %v6466 = vmul.f32 %v6464, %v2479
        %v6469 = vrot.slane %v6465, 1
        %v6470 = vrot.slane %v6466, 1
        %v6471 = vsel %vm556, %v6469, %v6470
        %6472 = vrot.lane.b32.xlu0 %v6471, 127
        %v6473 = vpop.permute.xlu0 %6472
        %6474 = vrot.lane.b32.xlu0 %v6470, 127
        %v6475 = vpop.permute.xlu0 %6474
        %v6478 = vadd.f32 %v6461, %v6473
        %v6479 = vadd.f32 %v6462, %v6475
        %s6480 = sld [smem:[#allocation7 + $0x88]]
        %v6481 = vstv %s6480
        %v6482 = vmul.f32 %v6481, %v2964
        %v6483 = vmul.f32 %v6481, %v2969
        %v6484 = vadd.f32 %v6478, %v6482
        %v6485 = vadd.f32 %v6479, %v6483
        %s6486 = sld [smem:[#allocation7 + $0x89]]
        %v6487 = vstv %s6486
        %v6488 = vmul.f32 %v6487, %v2964
        %v6489 = vmul.f32 %v6487, %v2969
        %6492 = vrot.lane.b32.xlu0 %v6488, 127
        %v6493 = vpop.permute.xlu0 %6492
        %6494 = vrot.lane.b32.xlu0 %v6489, 127
        %v6495 = vpop.permute.xlu0 %6494
        %v6498 = vadd.f32 %v6484, %v6493
        %v6499 = vadd.f32 %v6485, %v6495
        %s6500 = sld [smem:[#allocation7 + $0x8a]]
        %v6501 = vstv %s6500
        %v6502 = vmul.f32 %v6501, %v2964
        %v6503 = vmul.f32 %v6501, %v2969
        %v6506 = vrot.slane %v6502, 1
        %v6507 = vrot.slane %v6503, 1
        %v6508 = vsel %vm556, %v6506, %v6507
        %v6511 = vadd.f32 %v6498, %v6508
        %v6512 = vadd.f32 %v6499, %v6507
        %s6513 = sld [smem:[#allocation7 + $0x8b]]
        %v6514 = vstv %s6513
        %v6515 = vmul.f32 %v6514, %v2964
        %v6516 = vmul.f32 %v6514, %v2969
        %v6519 = vrot.slane %v6515, 1
        %v6520 = vrot.slane %v6516, 1
        %v6521 = vsel %vm556, %v6519, %v6520
        %6522 = vrot.lane.b32.xlu0 %v6521, 127
        %v6523 = vpop.permute.xlu0 %6522
        %6524 = vrot.lane.b32.xlu0 %v6520, 127
        %v6525 = vpop.permute.xlu0 %6524
        %v6528 = vadd.f32 %v6511, %v6523
        %v6529 = vadd.f32 %v6512, %v6525
        %s6530 = sld [smem:[#allocation8 + $0x6]]
        %v6531 = vstv %s6530
        %v6532 = vadd.f32 %v6528, %v6531
        %v6533 = vadd.f32 %v6529, %v6531
        %v6534 = vmax.f32 %v6532, 0.0
        %v6535 = vmax.f32 %v6533, 0.0
        %6538 = vrot.lane.b32.xlu0 %v6534, 127
        %v6539 = vpop.permute.xlu0 %6538
        %6540 = vrot.lane.b32.xlu0 %v6535, 127
        %v6541 = vpop.permute.xlu0 %6540
        %v6544 = vmax.f32 %v6534, %v6539
        %v6545 = vmax.f32 %v6535, %v6541
        %v6548 = vrot.slane %v6544, 1
        %v6549 = vrot.slane %v6545, 1
        %v6550 = vsel %vm556, %v6548, %v6549
        %v6553 = vmax.f32 %v6544, %v6550
        %v6554 = vmax.f32 %v6545, %v6549
        %s6555 = scalar_lea.vmem %s7, 384
        %v6556 = vld [vmem:[%s6555] sm:$0xff]
        %v6557 = vld [vmem:[%s6555 + $0x8] sm:$0xff]
        %v6558 = vld [vmem:[%s6555 + $0x10] sm:$0xff]
        %v6559 = vld [vmem:[%s6555 + $0x18] sm:$0xff]
        %v6560 = vld [vmem:[%s6555 + $0x20] sm:$0xff]
        %v6561 = vld [vmem:[%s6555 + $0x28] sm:$0xff]
        %v6562 = vld [vmem:[%s6555 + $0x30] sm:$0xff]
        %v6563 = vld [vmem:[%s6555 + $0x38] sm:$0xf]
        %v6565 = vsel %vm3257, %v6556, 0
        %v6568 = vsel %vm3257, %v6557, 0
        %v6571 = vsel %vm3257, %v6558, 0
        %v6574 = vsel %vm3257, %v6559, 0
        %v6577 = vsel %vm3257, %v6560, 0
        %v6580 = vsel %vm3257, %v6561, 0
        %v6583 = vsel %vm3257, %v6562, 0
        %v6586 = vsel %vm3257, %v6563, 0
        %v6589 = vsel %vm3282, %v6554, 0
        %6591 = vmatprep.subr.mxu0 0.0
        %6592 = vmatpush1.msra.mxu0 0.0
        %6593 = vmatprep.subr.mxu0 0.0
        %6594 = vmatpush1.msra.mxu0 0.0
        %6595 = vmatprep.subr.mxu0 0.0
        %6596 = vmatpush1.msra.mxu0 0.0
        %6597 = vmatprep.subr.mxu0 0.0
        %6598 = vmatpush1.msra.mxu0 0.0
        %6599 = vmatprep.subr.mxu0 0.0
        %6600 = vmatpush1.msra.mxu0 0.0
        %6601 = vmatprep.subr.mxu0 0.0
        %6602 = vmatpush1.msra.mxu0 0.0
        %6603 = vmatprep.subr.mxu0 0.0
        %6604 = vmatpush1.msra.mxu0 0.0
        %6605 = vmatprep.subr.mxu0 0.0
        %6606 = vmatpush1.msra.mxu0 0.0
        %6607 = vmatprep.subr.mxu0 0.0
        %6608 = vmatpush1.msra.mxu0 0.0
        %6609 = vmatprep.subr.mxu0 0.0
        %6610 = vmatpush1.msra.mxu0 0.0
        %6611 = vmatprep.subr.mxu0 0.0
        %6612 = vmatpush1.msra.mxu0 0.0
        %6613 = vmatprep.subr.mxu0 0.0
        %6614 = vmatpush1.msra.mxu0 0.0
        %6615 = vmatprep.subr.mxu0 0.0
        %6616 = vmatpush1.msra.mxu0 0.0
        %6617 = vmatprep.subr.mxu0 0.0
        %6618 = vmatpush1.msra.mxu0 0.0
        %6619 = vmatprep.subr.mxu0 0.0
        %6620 = vmatpush1.msra.mxu0 %v6589
        %6621 = vmatprep.subr.mxu0 0.0
        %6622 = vmatpush1.msra.mxu0 %v6553
        %6623 = vmatprep.subr.mxu0 0.0
        %6624 = vmatpush2.msra.mxu0 0.0
        %6625 = vmatprep.subr.mxu0 0.0
        %6626 = vmatpush2.msra.mxu0 0.0
        %6627 = vmatprep.subr.mxu0 0.0
        %6628 = vmatpush2.msra.mxu0 0.0
        %6629 = vmatprep.subr.mxu0 0.0
        %6630 = vmatpush2.msra.mxu0 0.0
        %6631 = vmatprep.subr.mxu0 0.0
        %6632 = vmatpush2.msra.mxu0 0.0
        %6633 = vmatprep.subr.mxu0 0.0
        %6634 = vmatpush2.msra.mxu0 0.0
        %6635 = vmatprep.subr.mxu0 0.0
        %6636 = vmatpush2.msra.mxu0 0.0
        %6637 = vmatprep.subr.mxu0 0.0
        %6638 = vmatpush2.msra.mxu0 0.0
        %6639 = vmatprep.subr.mxu0 0.0
        %6640 = vmatpush2.msra.mxu0 0.0
        %6641 = vmatprep.subr.mxu0 0.0
        %6642 = vmatpush2.msra.mxu0 0.0
        %6643 = vmatprep.subr.mxu0 0.0
        %6644 = vmatpush2.msra.mxu0 0.0
        %6645 = vmatprep.subr.mxu0 0.0
        %6646 = vmatpush2.msra.mxu0 0.0
        %6647 = vmatprep.subr.mxu0 0.0
        %6648 = vmatpush2.msra.mxu0 0.0
        %6649 = vmatprep.subr.mxu0 0.0
        %6650 = vmatpush2.msra.mxu0 0.0
        %6651 = vmatprep.subr.mxu0 0.0
        %6652 = vmatpush2.msra.mxu0 0.0
        %6653 = vmatprep.subr.mxu0 0.0
        %6654 = vmatpush2.msra.mxu0 0.0
        %6655 = vmatprep.mubr.f32.mxu0 0.0
        %6656 = vmatmul.mubr.f32.gmra.mxu0 %v6565
        %v6657 = vpop.f32.mrf.mxu0
        %v6658 = vadd.f32 0.0, %v6657
        %v6659 = vpop.f32.mrf.mxu0
        %6660 = vmatprep.mubr.f32.mxu0 0.0
        %6661 = vmatmul.mubr.f32.gmra.mxu0 %v6568
        %v6662 = vpop.f32.mrf.mxu0
        %v6663 = vadd.f32 0.0, %v6662
        %v6664 = vpop.f32.mrf.mxu0
        %6665 = vmatprep.mubr.f32.mxu0 0.0
        %6666 = vmatmul.mubr.f32.gmra.mxu0 %v6571
        %v6667 = vpop.f32.mrf.mxu0
        %v6668 = vadd.f32 0.0, %v6667
        %v6669 = vpop.f32.mrf.mxu0
        %6670 = vmatprep.mubr.f32.mxu0 0.0
        %6671 = vmatmul.mubr.f32.gmra.mxu0 %v6574
        %v6672 = vpop.f32.mrf.mxu0
        %v6673 = vadd.f32 0.0, %v6672
        %v6674 = vpop.f32.mrf.mxu0
        %6675 = vmatprep.mubr.f32.mxu0 0.0
        %6676 = vmatmul.mubr.f32.gmra.mxu0 %v6577
        %v6677 = vpop.f32.mrf.mxu0
        %v6678 = vadd.f32 0.0, %v6677
        %v6679 = vpop.f32.mrf.mxu0
        %6680 = vmatprep.mubr.f32.mxu0 0.0
        %6681 = vmatmul.mubr.f32.gmra.mxu0 %v6580
        %v6682 = vpop.f32.mrf.mxu0
        %v6683 = vadd.f32 0.0, %v6682
        %v6684 = vpop.f32.mrf.mxu0
        %6685 = vmatprep.mubr.f32.mxu0 0.0
        %6686 = vmatmul.mubr.f32.gmra.mxu0 %v6583
        %v6687 = vpop.f32.mrf.mxu0
        %v6688 = vadd.f32 0.0, %v6687
        %v6689 = vpop.f32.mrf.mxu0
        %6690 = vmatprep.mubr.f32.mxu0 0.0
        %6691 = vmatmul.mubr.f32.gmra.mxu0 %v6586
        %v6692 = vpop.f32.mrf.mxu0
        %v6693 = vadd.f32 0.0, %v6692
        %v6694 = vpop.f32.mrf.mxu0
        %6695 = vdwg.mxu0
        %v6697 = vsel %vm3257, %v6658, 0
        %v6700 = vsel %vm3257, %v6663, 0
        %v6703 = vsel %vm3257, %v6668, 0
        %v6706 = vsel %vm3257, %v6673, 0
        %v6709 = vsel %vm3257, %v6678, 0
        %v6712 = vsel %vm3257, %v6683, 0
        %v6715 = vsel %vm3257, %v6688, 0
        %v6718 = vsel %vm3257, %v6693, 0
        %6720 = vmatprep.subr.mxu0 0.0
        %6721 = vmatpush1.msra.mxu0 0.0
        %6722 = vmatprep.subr.mxu0 0.0
        %6723 = vmatpush1.msra.mxu0 0.0
        %6724 = vmatprep.subr.mxu0 0.0
        %6725 = vmatpush1.msra.mxu0 0.0
        %6726 = vmatprep.subr.mxu0 0.0
        %6727 = vmatpush1.msra.mxu0 0.0
        %6728 = vmatprep.subr.mxu0 0.0
        %6729 = vmatpush1.msra.mxu0 0.0
        %6730 = vmatprep.subr.mxu0 0.0
        %6731 = vmatpush1.msra.mxu0 0.0
        %6732 = vmatprep.subr.mxu0 0.0
        %6733 = vmatpush1.msra.mxu0 0.0
        %6734 = vmatprep.subr.mxu0 0.0
        %6735 = vmatpush1.msra.mxu0 0.0
        %6736 = vmatprep.subr.mxu0 0.0
        %6737 = vmatpush1.msra.mxu0 0.0
        %6738 = vmatprep.subr.mxu0 0.0
        %6739 = vmatpush1.msra.mxu0 0.0
        %6740 = vmatprep.subr.mxu0 0.0
        %6741 = vmatpush1.msra.mxu0 0.0
        %6742 = vmatprep.subr.mxu0 0.0
        %6743 = vmatpush1.msra.mxu0 0.0
        %6744 = vmatprep.subr.mxu0 0.0
        %6745 = vmatpush1.msra.mxu0 0.0
        %6746 = vmatprep.subr.mxu0 0.0
        %6747 = vmatpush1.msra.mxu0 0.0
        %6748 = vmatprep.subr.mxu0 0.0
        %6749 = vmatpush1.msra.mxu0 %v3832
        %6750 = vmatprep.subr.mxu0 0.0
        %6751 = vmatpush1.msra.mxu0 %v2972
        %6752 = vmatprep.subr.mxu0 0.0
        %6753 = vmatpush2.msra.mxu0 0.0
        %6754 = vmatprep.subr.mxu0 0.0
        %6755 = vmatpush2.msra.mxu0 0.0
        %6756 = vmatprep.subr.mxu0 0.0
        %6757 = vmatpush2.msra.mxu0 0.0
        %6758 = vmatprep.subr.mxu0 0.0
        %6759 = vmatpush2.msra.mxu0 0.0
        %6760 = vmatprep.subr.mxu0 0.0
        %6761 = vmatpush2.msra.mxu0 0.0
        %6762 = vmatprep.subr.mxu0 0.0
        %6763 = vmatpush2.msra.mxu0 0.0
        %6764 = vmatprep.subr.mxu0 0.0
        %6765 = vmatpush2.msra.mxu0 0.0
        %6766 = vmatprep.subr.mxu0 0.0
        %6767 = vmatpush2.msra.mxu0 0.0
        %6768 = vmatprep.subr.mxu0 0.0
        %6769 = vmatpush2.msra.mxu0 0.0
        %6770 = vmatprep.subr.mxu0 0.0
        %6771 = vmatpush2.msra.mxu0 0.0
        %6772 = vmatprep.subr.mxu0 0.0
        %6773 = vmatpush2.msra.mxu0 0.0
        %6774 = vmatprep.subr.mxu0 0.0
        %6775 = vmatpush2.msra.mxu0 0.0
        %6776 = vmatprep.subr.mxu0 0.0
        %6777 = vmatpush2.msra.mxu0 0.0
        %6778 = vmatprep.subr.mxu0 0.0
        %6779 = vmatpush2.msra.mxu0 0.0
        %6780 = vmatprep.subr.mxu0 0.0
        %6781 = vmatpush2.msra.mxu0 0.0
        %6782 = vmatprep.subr.mxu0 0.0
        %6783 = vmatpush2.msra.mxu0 0.0
        %6784 = vmatprep.mubr.f32.mxu0 0.0
        %6785 = vmatmul.mubr.f32.gmra.mxu0 %v6697
        %v6786 = vpop.f32.mrf.mxu0
        %v6787 = vadd.f32 0.0, %v6786
        %v6788 = vpop.f32.mrf.mxu0
        %6789 = vmatprep.mubr.f32.mxu0 0.0
        %6790 = vmatmul.mubr.f32.gmra.mxu0 %v6700
        %v6791 = vpop.f32.mrf.mxu0
        %v6792 = vadd.f32 0.0, %v6791
        %v6793 = vpop.f32.mrf.mxu0
        %6794 = vmatprep.mubr.f32.mxu0 0.0
        %6795 = vmatmul.mubr.f32.gmra.mxu0 %v6703
        %v6796 = vpop.f32.mrf.mxu0
        %v6797 = vadd.f32 0.0, %v6796
        %v6798 = vpop.f32.mrf.mxu0
        %6799 = vmatprep.mubr.f32.mxu0 0.0
        %6800 = vmatmul.mubr.f32.gmra.mxu0 %v6706
        %v6801 = vpop.f32.mrf.mxu0
        %v6802 = vadd.f32 0.0, %v6801
        %v6803 = vpop.f32.mrf.mxu0
        %6804 = vmatprep.mubr.f32.mxu0 0.0
        %6805 = vmatmul.mubr.f32.gmra.mxu0 %v6709
        %v6806 = vpop.f32.mrf.mxu0
        %v6807 = vadd.f32 0.0, %v6806
        %v6808 = vpop.f32.mrf.mxu0
        %6809 = vmatprep.mubr.f32.mxu0 0.0
        %6810 = vmatmul.mubr.f32.gmra.mxu0 %v6712
        %v6811 = vpop.f32.mrf.mxu0
        %v6812 = vadd.f32 0.0, %v6811
        %v6813 = vpop.f32.mrf.mxu0
        %6814 = vmatprep.mubr.f32.mxu0 0.0
        %6815 = vmatmul.mubr.f32.gmra.mxu0 %v6715
        %v6816 = vpop.f32.mrf.mxu0
        %v6817 = vadd.f32 0.0, %v6816
        %v6818 = vpop.f32.mrf.mxu0
        %6819 = vmatprep.mubr.f32.mxu0 0.0
        %6820 = vmatmul.mubr.f32.gmra.mxu0 %v6718
        %v6821 = vpop.f32.mrf.mxu0
        %v6822 = vadd.f32 0.0, %v6821
        %v6823 = vpop.f32.mrf.mxu0
        %6824 = vdwg.mxu0
        %v6825 = vadd.f32 %v6272, %v6787
        %v6826 = vadd.f32 %v6273, %v6792
        %v6827 = vadd.f32 %v6274, %v6797
        %v6828 = vadd.f32 %v6275, %v6802
        %v6829 = vadd.f32 %v6276, %v6807
        %v6830 = vadd.f32 %v6277, %v6812
        %v6831 = vadd.f32 %v6278, %v6817
        %v6832 = vadd.f32 %v6279, %v6822
        %s6833 = sld [smem:[#allocation7 + $0x8c]]
        %v6834 = vstv %s6833
        %v6835 = vmul.f32 %v6834, %v1004
        %v6836 = vmul.f32 %v6834, %v1009
        %v6837 = vadd.f32 %v6835, 0.0
        %v6838 = vadd.f32 %v6836, 0.0
        %s6839 = sld [smem:[#allocation7 + $0x8d]]
        %v6840 = vstv %s6839
        %v6841 = vmul.f32 %v6840, %v1004
        %v6842 = vmul.f32 %v6840, %v1009
        %6845 = vrot.lane.b32.xlu0 %v6841, 127
        %v6846 = vpop.permute.xlu0 %6845
        %6847 = vrot.lane.b32.xlu0 %v6842, 127
        %v6848 = vpop.permute.xlu0 %6847
        %v6851 = vadd.f32 %v6837, %v6846
        %v6852 = vadd.f32 %v6838, %v6848
        %s6853 = sld [smem:[#allocation7 + $0x8e]]
        %v6854 = vstv %s6853
        %v6855 = vmul.f32 %v6854, %v1004
        %v6856 = vmul.f32 %v6854, %v1009
        %v6859 = vrot.slane %v6855, 1
        %v6860 = vrot.slane %v6856, 1
        %v6861 = vsel %vm556, %v6859, %v6860
        %v6864 = vadd.f32 %v6851, %v6861
        %v6865 = vadd.f32 %v6852, %v6860
        %s6866 = sld [smem:[#allocation7 + $0x8f]]
        %v6867 = vstv %s6866
        %v6868 = vmul.f32 %v6867, %v1004
        %v6869 = vmul.f32 %v6867, %v1009
        %v6872 = vrot.slane %v6868, 1
        %v6873 = vrot.slane %v6869, 1
        %v6874 = vsel %vm556, %v6872, %v6873
        %6875 = vrot.lane.b32.xlu0 %v6874, 127
        %v6876 = vpop.permute.xlu0 %6875
        %6877 = vrot.lane.b32.xlu0 %v6873, 127
        %v6878 = vpop.permute.xlu0 %6877
        %v6881 = vadd.f32 %v6864, %v6876
        %v6882 = vadd.f32 %v6865, %v6878
        %s6883 = sld [smem:[#allocation7 + $0x90]]
        %v6884 = vstv %s6883
        %v6885 = vmul.f32 %v6884, %v1494
        %v6886 = vmul.f32 %v6884, %v1499
        %v6887 = vadd.f32 %v6881, %v6885
        %v6888 = vadd.f32 %v6882, %v6886
        %s6889 = sld [smem:[#allocation7 + $0x91]]
        %v6890 = vstv %s6889
        %v6891 = vmul.f32 %v6890, %v1494
        %v6892 = vmul.f32 %v6890, %v1499
        %6895 = vrot.lane.b32.xlu0 %v6891, 127
        %v6896 = vpop.permute.xlu0 %6895
        %6897 = vrot.lane.b32.xlu0 %v6892, 127
        %v6898 = vpop.permute.xlu0 %6897
        %v6901 = vadd.f32 %v6887, %v6896
        %v6902 = vadd.f32 %v6888, %v6898
        %s6903 = sld [smem:[#allocation7 + $0x92]]
        %v6904 = vstv %s6903
        %v6905 = vmul.f32 %v6904, %v1494
        %v6906 = vmul.f32 %v6904, %v1499
        %v6909 = vrot.slane %v6905, 1
        %v6910 = vrot.slane %v6906, 1
        %v6911 = vsel %vm556, %v6909, %v6910
        %v6914 = vadd.f32 %v6901, %v6911
        %v6915 = vadd.f32 %v6902, %v6910
        %s6916 = sld [smem:[#allocation7 + $0x93]]
        %v6917 = vstv %s6916
        %v6918 = vmul.f32 %v6917, %v1494
        %v6919 = vmul.f32 %v6917, %v1499
        %v6922 = vrot.slane %v6918, 1
        %v6923 = vrot.slane %v6919, 1
        %v6924 = vsel %vm556, %v6922, %v6923
        %6925 = vrot.lane.b32.xlu0 %v6924, 127
        %v6926 = vpop.permute.xlu0 %6925
        %6927 = vrot.lane.b32.xlu0 %v6923, 127
        %v6928 = vpop.permute.xlu0 %6927
        %v6931 = vadd.f32 %v6914, %v6926
        %v6932 = vadd.f32 %v6915, %v6928
        %s6933 = sld [smem:[#allocation7 + $0x94]]
        %v6934 = vstv %s6933
        %v6935 = vmul.f32 %v6934, %v1984
        %v6936 = vmul.f32 %v6934, %v1989
        %v6937 = vadd.f32 %v6931, %v6935
        %v6938 = vadd.f32 %v6932, %v6936
        %s6939 = sld [smem:[#allocation7 + $0x95]]
        %v6940 = vstv %s6939
        %v6941 = vmul.f32 %v6940, %v1984
        %v6942 = vmul.f32 %v6940, %v1989
        %6945 = vrot.lane.b32.xlu0 %v6941, 127
        %v6946 = vpop.permute.xlu0 %6945
        %6947 = vrot.lane.b32.xlu0 %v6942, 127
        %v6948 = vpop.permute.xlu0 %6947
        %v6951 = vadd.f32 %v6937, %v6946
        %v6952 = vadd.f32 %v6938, %v6948
        %s6953 = sld [smem:[#allocation7 + $0x96]]
        %v6954 = vstv %s6953
        %v6955 = vmul.f32 %v6954, %v1984
        %v6956 = vmul.f32 %v6954, %v1989
        %v6959 = vrot.slane %v6955, 1
        %v6960 = vrot.slane %v6956, 1
        %v6961 = vsel %vm556, %v6959, %v6960
        %v6964 = vadd.f32 %v6951, %v6961
        %v6965 = vadd.f32 %v6952, %v6960
        %s6966 = sld [smem:[#allocation7 + $0x97]]
        %v6967 = vstv %s6966
        %v6968 = vmul.f32 %v6967, %v1984
        %v6969 = vmul.f32 %v6967, %v1989
        %v6972 = vrot.slane %v6968, 1
        %v6973 = vrot.slane %v6969, 1
        %v6974 = vsel %vm556, %v6972, %v6973
        %6975 = vrot.lane.b32.xlu0 %v6974, 127
        %v6976 = vpop.permute.xlu0 %6975
        %6977 = vrot.lane.b32.xlu0 %v6973, 127
        %v6978 = vpop.permute.xlu0 %6977
        %v6981 = vadd.f32 %v6964, %v6976
        %v6982 = vadd.f32 %v6965, %v6978
        %s6983 = sld [smem:[#allocation7 + $0x98]]
        %v6984 = vstv %s6983
        %v6985 = vmul.f32 %v6984, %v2474
        %v6986 = vmul.f32 %v6984, %v2479
        %v6987 = vadd.f32 %v6981, %v6985
        %v6988 = vadd.f32 %v6982, %v6986
        %s6989 = sld [smem:[#allocation7 + $0x99]]
        %v6990 = vstv %s6989
        %v6991 = vmul.f32 %v6990, %v2474
        %v6992 = vmul.f32 %v6990, %v2479
        %6995 = vrot.lane.b32.xlu0 %v6991, 127
        %v6996 = vpop.permute.xlu0 %6995
        %6997 = vrot.lane.b32.xlu0 %v6992, 127
        %v6998 = vpop.permute.xlu0 %6997
        %v7001 = vadd.f32 %v6987, %v6996
        %v7002 = vadd.f32 %v6988, %v6998
        %s7003 = sld [smem:[#allocation7 + $0x9a]]
        %v7004 = vstv %s7003
        %v7005 = vmul.f32 %v7004, %v2474
        %v7006 = vmul.f32 %v7004, %v2479
        %v7009 = vrot.slane %v7005, 1
        %v7010 = vrot.slane %v7006, 1
        %v7011 = vsel %vm556, %v7009, %v7010
        %v7014 = vadd.f32 %v7001, %v7011
        %v7015 = vadd.f32 %v7002, %v7010
        %s7016 = sld [smem:[#allocation7 + $0x9b]]
        %v7017 = vstv %s7016
        %v7018 = vmul.f32 %v7017, %v2474
        %v7019 = vmul.f32 %v7017, %v2479
        %v7022 = vrot.slane %v7018, 1
        %v7023 = vrot.slane %v7019, 1
        %v7024 = vsel %vm556, %v7022, %v7023
        %7025 = vrot.lane.b32.xlu0 %v7024, 127
        %v7026 = vpop.permute.xlu0 %7025
        %7027 = vrot.lane.b32.xlu0 %v7023, 127
        %v7028 = vpop.permute.xlu0 %7027
        %v7031 = vadd.f32 %v7014, %v7026
        %v7032 = vadd.f32 %v7015, %v7028
        %s7033 = sld [smem:[#allocation7 + $0x9c]]
        %v7034 = vstv %s7033
        %v7035 = vmul.f32 %v7034, %v2964
        %v7036 = vmul.f32 %v7034, %v2969
        %v7037 = vadd.f32 %v7031, %v7035
        %v7038 = vadd.f32 %v7032, %v7036
        %s7039 = sld [smem:[#allocation7 + $0x9d]]
        %v7040 = vstv %s7039
        %v7041 = vmul.f32 %v7040, %v2964
        %v7042 = vmul.f32 %v7040, %v2969
        %7045 = vrot.lane.b32.xlu0 %v7041, 127
        %v7046 = vpop.permute.xlu0 %7045
        %7047 = vrot.lane.b32.xlu0 %v7042, 127
        %v7048 = vpop.permute.xlu0 %7047
        %v7051 = vadd.f32 %v7037, %v7046
        %v7052 = vadd.f32 %v7038, %v7048
        %s7053 = sld [smem:[#allocation7 + $0x9e]]
        %v7054 = vstv %s7053
        %v7055 = vmul.f32 %v7054, %v2964
        %v7056 = vmul.f32 %v7054, %v2969
        %v7059 = vrot.slane %v7055, 1
        %v7060 = vrot.slane %v7056, 1
        %v7061 = vsel %vm556, %v7059, %v7060
        %v7064 = vadd.f32 %v7051, %v7061
        %v7065 = vadd.f32 %v7052, %v7060
        %s7066 = sld [smem:[#allocation7 + $0x9f]]
        %v7067 = vstv %s7066
        %v7068 = vmul.f32 %v7067, %v2964
        %v7069 = vmul.f32 %v7067, %v2969
        %v7072 = vrot.slane %v7068, 1
        %v7073 = vrot.slane %v7069, 1
        %v7074 = vsel %vm556, %v7072, %v7073
        %7075 = vrot.lane.b32.xlu0 %v7074, 127
        %v7076 = vpop.permute.xlu0 %7075
        %7077 = vrot.lane.b32.xlu0 %v7073, 127
        %v7078 = vpop.permute.xlu0 %7077
        %v7081 = vadd.f32 %v7064, %v7076
        %v7082 = vadd.f32 %v7065, %v7078
        %s7083 = sld [smem:[#allocation8 + $0x7]]
        %v7084 = vstv %s7083
        %v7085 = vadd.f32 %v7081, %v7084
        %v7086 = vadd.f32 %v7082, %v7084
        %v7087 = vmax.f32 %v7085, 0.0
        %v7088 = vmax.f32 %v7086, 0.0
        %7091 = vrot.lane.b32.xlu0 %v7087, 127
        %v7092 = vpop.permute.xlu0 %7091
        %7093 = vrot.lane.b32.xlu0 %v7088, 127
        %v7094 = vpop.permute.xlu0 %7093
        %v7097 = vmax.f32 %v7087, %v7092
        %v7098 = vmax.f32 %v7088, %v7094
        %v7101 = vrot.slane %v7097, 1
        %v7102 = vrot.slane %v7098, 1
        %v7103 = vsel %vm556, %v7101, %v7102
        %v7106 = vmax.f32 %v7097, %v7103
        %v7107 = vmax.f32 %v7098, %v7102
        %s7108 = scalar_lea.vmem %s7, 448
        %v7109 = vld [vmem:[%s7108] sm:$0xff]
        %v7110 = vld [vmem:[%s7108 + $0x8] sm:$0xff]
        %v7111 = vld [vmem:[%s7108 + $0x10] sm:$0xff]
        %v7112 = vld [vmem:[%s7108 + $0x18] sm:$0xff]
        %v7113 = vld [vmem:[%s7108 + $0x20] sm:$0xff]
        %v7114 = vld [vmem:[%s7108 + $0x28] sm:$0xff]
        %v7115 = vld [vmem:[%s7108 + $0x30] sm:$0xff]
        %v7116 = vld [vmem:[%s7108 + $0x38] sm:$0xf]
        %v7118 = vsel %vm3257, %v7109, 0
        %v7121 = vsel %vm3257, %v7110, 0
        %v7124 = vsel %vm3257, %v7111, 0
        %v7127 = vsel %vm3257, %v7112, 0
        %v7130 = vsel %vm3257, %v7113, 0
        %v7133 = vsel %vm3257, %v7114, 0
        %v7136 = vsel %vm3257, %v7115, 0
        %v7139 = vsel %vm3257, %v7116, 0
        %v7142 = vsel %vm3282, %v7107, 0
        %7144 = vmatprep.subr.mxu0 0.0
        %7145 = vmatpush1.msra.mxu0 0.0
        %7146 = vmatprep.subr.mxu0 0.0
        %7147 = vmatpush1.msra.mxu0 0.0
        %7148 = vmatprep.subr.mxu0 0.0
        %7149 = vmatpush1.msra.mxu0 0.0
        %7150 = vmatprep.subr.mxu0 0.0
        %7151 = vmatpush1.msra.mxu0 0.0
        %7152 = vmatprep.subr.mxu0 0.0
        %7153 = vmatpush1.msra.mxu0 0.0
        %7154 = vmatprep.subr.mxu0 0.0
        %7155 = vmatpush1.msra.mxu0 0.0
        %7156 = vmatprep.subr.mxu0 0.0
        %7157 = vmatpush1.msra.mxu0 0.0
        %7158 = vmatprep.subr.mxu0 0.0
        %7159 = vmatpush1.msra.mxu0 0.0
        %7160 = vmatprep.subr.mxu0 0.0
        %7161 = vmatpush1.msra.mxu0 0.0
        %7162 = vmatprep.subr.mxu0 0.0
        %7163 = vmatpush1.msra.mxu0 0.0
        %7164 = vmatprep.subr.mxu0 0.0
        %7165 = vmatpush1.msra.mxu0 0.0
        %7166 = vmatprep.subr.mxu0 0.0
        %7167 = vmatpush1.msra.mxu0 0.0
        %7168 = vmatprep.subr.mxu0 0.0
        %7169 = vmatpush1.msra.mxu0 0.0
        %7170 = vmatprep.subr.mxu0 0.0
        %7171 = vmatpush1.msra.mxu0 0.0
        %7172 = vmatprep.subr.mxu0 0.0
        %7173 = vmatpush1.msra.mxu0 %v7142
        %7174 = vmatprep.subr.mxu0 0.0
        %7175 = vmatpush1.msra.mxu0 %v7106
        %7176 = vmatprep.subr.mxu0 0.0
        %7177 = vmatpush2.msra.mxu0 0.0
        %7178 = vmatprep.subr.mxu0 0.0
        %7179 = vmatpush2.msra.mxu0 0.0
        %7180 = vmatprep.subr.mxu0 0.0
        %7181 = vmatpush2.msra.mxu0 0.0
        %7182 = vmatprep.subr.mxu0 0.0
        %7183 = vmatpush2.msra.mxu0 0.0
        %7184 = vmatprep.subr.mxu0 0.0
        %7185 = vmatpush2.msra.mxu0 0.0
        %7186 = vmatprep.subr.mxu0 0.0
        %7187 = vmatpush2.msra.mxu0 0.0
        %7188 = vmatprep.subr.mxu0 0.0
        %7189 = vmatpush2.msra.mxu0 0.0
        %7190 = vmatprep.subr.mxu0 0.0
        %7191 = vmatpush2.msra.mxu0 0.0
        %7192 = vmatprep.subr.mxu0 0.0
        %7193 = vmatpush2.msra.mxu0 0.0
        %7194 = vmatprep.subr.mxu0 0.0
        %7195 = vmatpush2.msra.mxu0 0.0
        %7196 = vmatprep.subr.mxu0 0.0
        %7197 = vmatpush2.msra.mxu0 0.0
        %7198 = vmatprep.subr.mxu0 0.0
        %7199 = vmatpush2.msra.mxu0 0.0
        %7200 = vmatprep.subr.mxu0 0.0
        %7201 = vmatpush2.msra.mxu0 0.0
        %7202 = vmatprep.subr.mxu0 0.0
        %7203 = vmatpush2.msra.mxu0 0.0
        %7204 = vmatprep.subr.mxu0 0.0
        %7205 = vmatpush2.msra.mxu0 0.0
        %7206 = vmatprep.subr.mxu0 0.0
        %7207 = vmatpush2.msra.mxu0 0.0
        %7208 = vmatprep.mubr.f32.mxu0 0.0
        %7209 = vmatmul.mubr.f32.gmra.mxu0 %v7118
        %v7210 = vpop.f32.mrf.mxu0
        %v7211 = vadd.f32 0.0, %v7210
        %v7212 = vpop.f32.mrf.mxu0
        %7213 = vmatprep.mubr.f32.mxu0 0.0
        %7214 = vmatmul.mubr.f32.gmra.mxu0 %v7121
        %v7215 = vpop.f32.mrf.mxu0
        %v7216 = vadd.f32 0.0, %v7215
        %v7217 = vpop.f32.mrf.mxu0
        %7218 = vmatprep.mubr.f32.mxu0 0.0
        %7219 = vmatmul.mubr.f32.gmra.mxu0 %v7124
        %v7220 = vpop.f32.mrf.mxu0
        %v7221 = vadd.f32 0.0, %v7220
        %v7222 = vpop.f32.mrf.mxu0
        %7223 = vmatprep.mubr.f32.mxu0 0.0
        %7224 = vmatmul.mubr.f32.gmra.mxu0 %v7127
        %v7225 = vpop.f32.mrf.mxu0
        %v7226 = vadd.f32 0.0, %v7225
        %v7227 = vpop.f32.mrf.mxu0
        %7228 = vmatprep.mubr.f32.mxu0 0.0
        %7229 = vmatmul.mubr.f32.gmra.mxu0 %v7130
        %v7230 = vpop.f32.mrf.mxu0
        %v7231 = vadd.f32 0.0, %v7230
        %v7232 = vpop.f32.mrf.mxu0
        %7233 = vmatprep.mubr.f32.mxu0 0.0
        %7234 = vmatmul.mubr.f32.gmra.mxu0 %v7133
        %v7235 = vpop.f32.mrf.mxu0
        %v7236 = vadd.f32 0.0, %v7235
        %v7237 = vpop.f32.mrf.mxu0
        %7238 = vmatprep.mubr.f32.mxu0 0.0
        %7239 = vmatmul.mubr.f32.gmra.mxu0 %v7136
        %v7240 = vpop.f32.mrf.mxu0
        %v7241 = vadd.f32 0.0, %v7240
        %v7242 = vpop.f32.mrf.mxu0
        %7243 = vmatprep.mubr.f32.mxu0 0.0
        %7244 = vmatmul.mubr.f32.gmra.mxu0 %v7139
        %v7245 = vpop.f32.mrf.mxu0
        %v7246 = vadd.f32 0.0, %v7245
        %v7247 = vpop.f32.mrf.mxu0
        %7248 = vdwg.mxu0
        %v7250 = vsel %vm3257, %v7211, 0
        %v7253 = vsel %vm3257, %v7216, 0
        %v7256 = vsel %vm3257, %v7221, 0
        %v7259 = vsel %vm3257, %v7226, 0
        %v7262 = vsel %vm3257, %v7231, 0
        %v7265 = vsel %vm3257, %v7236, 0
        %v7268 = vsel %vm3257, %v7241, 0
        %v7271 = vsel %vm3257, %v7246, 0
        %7273 = vmatprep.subr.mxu0 0.0
        %7274 = vmatpush1.msra.mxu0 0.0
        %7275 = vmatprep.subr.mxu0 0.0
        %7276 = vmatpush1.msra.mxu0 0.0
        %7277 = vmatprep.subr.mxu0 0.0
        %7278 = vmatpush1.msra.mxu0 0.0
        %7279 = vmatprep.subr.mxu0 0.0
        %7280 = vmatpush1.msra.mxu0 0.0
        %7281 = vmatprep.subr.mxu0 0.0
        %7282 = vmatpush1.msra.mxu0 0.0
        %7283 = vmatprep.subr.mxu0 0.0
        %7284 = vmatpush1.msra.mxu0 0.0
        %7285 = vmatprep.subr.mxu0 0.0
        %7286 = vmatpush1.msra.mxu0 0.0
        %7287 = vmatprep.subr.mxu0 0.0
        %7288 = vmatpush1.msra.mxu0 0.0
        %7289 = vmatprep.subr.mxu0 0.0
        %7290 = vmatpush1.msra.mxu0 0.0
        %7291 = vmatprep.subr.mxu0 0.0
        %7292 = vmatpush1.msra.mxu0 0.0
        %7293 = vmatprep.subr.mxu0 0.0
        %7294 = vmatpush1.msra.mxu0 0.0
        %7295 = vmatprep.subr.mxu0 0.0
        %7296 = vmatpush1.msra.mxu0 0.0
        %7297 = vmatprep.subr.mxu0 0.0
        %7298 = vmatpush1.msra.mxu0 0.0
        %7299 = vmatprep.subr.mxu0 0.0
        %7300 = vmatpush1.msra.mxu0 0.0
        %7301 = vmatprep.subr.mxu0 0.0
        %7302 = vmatpush1.msra.mxu0 %v3832
        %7303 = vmatprep.subr.mxu0 0.0
        %7304 = vmatpush1.msra.mxu0 %v2972
        %7305 = vmatprep.subr.mxu0 0.0
        %7306 = vmatpush2.msra.mxu0 0.0
        %7307 = vmatprep.subr.mxu0 0.0
        %7308 = vmatpush2.msra.mxu0 0.0
        %7309 = vmatprep.subr.mxu0 0.0
        %7310 = vmatpush2.msra.mxu0 0.0
        %7311 = vmatprep.subr.mxu0 0.0
        %7312 = vmatpush2.msra.mxu0 0.0
        %7313 = vmatprep.subr.mxu0 0.0
        %7314 = vmatpush2.msra.mxu0 0.0
        %7315 = vmatprep.subr.mxu0 0.0
        %7316 = vmatpush2.msra.mxu0 0.0
        %7317 = vmatprep.subr.mxu0 0.0
        %7318 = vmatpush2.msra.mxu0 0.0
        %7319 = vmatprep.subr.mxu0 0.0
        %7320 = vmatpush2.msra.mxu0 0.0
        %7321 = vmatprep.subr.mxu0 0.0
        %7322 = vmatpush2.msra.mxu0 0.0
        %7323 = vmatprep.subr.mxu0 0.0
        %7324 = vmatpush2.msra.mxu0 0.0
        %7325 = vmatprep.subr.mxu0 0.0
        %7326 = vmatpush2.msra.mxu0 0.0
        %7327 = vmatprep.subr.mxu0 0.0
        %7328 = vmatpush2.msra.mxu0 0.0
        %7329 = vmatprep.subr.mxu0 0.0
        %7330 = vmatpush2.msra.mxu0 0.0
        %7331 = vmatprep.subr.mxu0 0.0
        %7332 = vmatpush2.msra.mxu0 0.0
        %7333 = vmatprep.subr.mxu0 0.0
        %7334 = vmatpush2.msra.mxu0 0.0
        %7335 = vmatprep.subr.mxu0 0.0
        %7336 = vmatpush2.msra.mxu0 0.0
        %7337 = vmatprep.mubr.f32.mxu0 0.0
        %7338 = vmatmul.mubr.f32.gmra.mxu0 %v7250
        %v7339 = vpop.f32.mrf.mxu0
        %v7340 = vadd.f32 0.0, %v7339
        %v7341 = vpop.f32.mrf.mxu0
        %7342 = vmatprep.mubr.f32.mxu0 0.0
        %7343 = vmatmul.mubr.f32.gmra.mxu0 %v7253
        %v7344 = vpop.f32.mrf.mxu0
        %v7345 = vadd.f32 0.0, %v7344
        %v7346 = vpop.f32.mrf.mxu0
        %7347 = vmatprep.mubr.f32.mxu0 0.0
        %7348 = vmatmul.mubr.f32.gmra.mxu0 %v7256
        %v7349 = vpop.f32.mrf.mxu0
        %v7350 = vadd.f32 0.0, %v7349
        %v7351 = vpop.f32.mrf.mxu0
        %7352 = vmatprep.mubr.f32.mxu0 0.0
        %7353 = vmatmul.mubr.f32.gmra.mxu0 %v7259
        %v7354 = vpop.f32.mrf.mxu0
        %v7355 = vadd.f32 0.0, %v7354
        %v7356 = vpop.f32.mrf.mxu0
        %7357 = vmatprep.mubr.f32.mxu0 0.0
        %7358 = vmatmul.mubr.f32.gmra.mxu0 %v7262
        %v7359 = vpop.f32.mrf.mxu0
        %v7360 = vadd.f32 0.0, %v7359
        %v7361 = vpop.f32.mrf.mxu0
        %7362 = vmatprep.mubr.f32.mxu0 0.0
        %7363 = vmatmul.mubr.f32.gmra.mxu0 %v7265
        %v7364 = vpop.f32.mrf.mxu0
        %v7365 = vadd.f32 0.0, %v7364
        %v7366 = vpop.f32.mrf.mxu0
        %7367 = vmatprep.mubr.f32.mxu0 0.0
        %7368 = vmatmul.mubr.f32.gmra.mxu0 %v7268
        %v7369 = vpop.f32.mrf.mxu0
        %v7370 = vadd.f32 0.0, %v7369
        %v7371 = vpop.f32.mrf.mxu0
        %7372 = vmatprep.mubr.f32.mxu0 0.0
        %7373 = vmatmul.mubr.f32.gmra.mxu0 %v7271
        %v7374 = vpop.f32.mrf.mxu0
        %v7375 = vadd.f32 0.0, %v7374
        %v7376 = vpop.f32.mrf.mxu0
        %7377 = vdwg.mxu0
        %v7378 = vadd.f32 %v6825, %v7340
        %v7379 = vadd.f32 %v6826, %v7345
        %v7380 = vadd.f32 %v6827, %v7350
        %v7381 = vadd.f32 %v6828, %v7355
        %v7382 = vadd.f32 %v6829, %v7360
        %v7383 = vadd.f32 %v6830, %v7365
        %v7384 = vadd.f32 %v6831, %v7370
        %v7385 = vadd.f32 %v6832, %v7375
        %s7386 = sld [smem:[#allocation7 + $0xa0]]
        %v7387 = vstv %s7386
        %v7388 = vmul.f32 %v7387, %v1004
        %v7389 = vmul.f32 %v7387, %v1009
        %v7390 = vadd.f32 %v7388, 0.0
        %v7391 = vadd.f32 %v7389, 0.0
        %s7392 = sld [smem:[#allocation7 + $0xa1]]
        %v7393 = vstv %s7392
        %v7394 = vmul.f32 %v7393, %v1004
        %v7395 = vmul.f32 %v7393, %v1009
        %7398 = vrot.lane.b32.xlu0 %v7394, 127
        %v7399 = vpop.permute.xlu0 %7398
        %7400 = vrot.lane.b32.xlu0 %v7395, 127
        %v7401 = vpop.permute.xlu0 %7400
        %v7404 = vadd.f32 %v7390, %v7399
        %v7405 = vadd.f32 %v7391, %v7401
        %s7406 = sld [smem:[#allocation7 + $0xa2]]
        %v7407 = vstv %s7406
        %v7408 = vmul.f32 %v7407, %v1004
        %v7409 = vmul.f32 %v7407, %v1009
        %v7412 = vrot.slane %v7408, 1
        %v7413 = vrot.slane %v7409, 1
        %v7414 = vsel %vm556, %v7412, %v7413
        %v7417 = vadd.f32 %v7404, %v7414
        %v7418 = vadd.f32 %v7405, %v7413
        %s7419 = sld [smem:[#allocation7 + $0xa3]]
        %v7420 = vstv %s7419
        %v7421 = vmul.f32 %v7420, %v1004
        %v7422 = vmul.f32 %v7420, %v1009
        %v7425 = vrot.slane %v7421, 1
        %v7426 = vrot.slane %v7422, 1
        %v7427 = vsel %vm556, %v7425, %v7426
        %7428 = vrot.lane.b32.xlu0 %v7427, 127
        %v7429 = vpop.permute.xlu0 %7428
        %7430 = vrot.lane.b32.xlu0 %v7426, 127
        %v7431 = vpop.permute.xlu0 %7430
        %v7434 = vadd.f32 %v7417, %v7429
        %v7435 = vadd.f32 %v7418, %v7431
        %s7436 = sld [smem:[#allocation7 + $0xa4]]
        %v7437 = vstv %s7436
        %v7438 = vmul.f32 %v7437, %v1494
        %v7439 = vmul.f32 %v7437, %v1499
        %v7440 = vadd.f32 %v7434, %v7438
        %v7441 = vadd.f32 %v7435, %v7439
        %s7442 = sld [smem:[#allocation7 + $0xa5]]
        %v7443 = vstv %s7442
        %v7444 = vmul.f32 %v7443, %v1494
        %v7445 = vmul.f32 %v7443, %v1499
        %7448 = vrot.lane.b32.xlu0 %v7444, 127
        %v7449 = vpop.permute.xlu0 %7448
        %7450 = vrot.lane.b32.xlu0 %v7445, 127
        %v7451 = vpop.permute.xlu0 %7450
        %v7454 = vadd.f32 %v7440, %v7449
        %v7455 = vadd.f32 %v7441, %v7451
        %s7456 = sld [smem:[#allocation7 + $0xa6]]
        %v7457 = vstv %s7456
        %v7458 = vmul.f32 %v7457, %v1494
        %v7459 = vmul.f32 %v7457, %v1499
        %v7462 = vrot.slane %v7458, 1
        %v7463 = vrot.slane %v7459, 1
        %v7464 = vsel %vm556, %v7462, %v7463
        %v7467 = vadd.f32 %v7454, %v7464
        %v7468 = vadd.f32 %v7455, %v7463
        %s7469 = sld [smem:[#allocation7 + $0xa7]]
        %v7470 = vstv %s7469
        %v7471 = vmul.f32 %v7470, %v1494
        %v7472 = vmul.f32 %v7470, %v1499
        %v7475 = vrot.slane %v7471, 1
        %v7476 = vrot.slane %v7472, 1
        %v7477 = vsel %vm556, %v7475, %v7476
        %7478 = vrot.lane.b32.xlu0 %v7477, 127
        %v7479 = vpop.permute.xlu0 %7478
        %7480 = vrot.lane.b32.xlu0 %v7476, 127
        %v7481 = vpop.permute.xlu0 %7480
        %v7484 = vadd.f32 %v7467, %v7479
        %v7485 = vadd.f32 %v7468, %v7481
        %s7486 = sld [smem:[#allocation7 + $0xa8]]
        %v7487 = vstv %s7486
        %v7488 = vmul.f32 %v7487, %v1984
        %v7489 = vmul.f32 %v7487, %v1989
        %v7490 = vadd.f32 %v7484, %v7488
        %v7491 = vadd.f32 %v7485, %v7489
        %s7492 = sld [smem:[#allocation7 + $0xa9]]
        %v7493 = vstv %s7492
        %v7494 = vmul.f32 %v7493, %v1984
        %v7495 = vmul.f32 %v7493, %v1989
        %7498 = vrot.lane.b32.xlu0 %v7494, 127
        %v7499 = vpop.permute.xlu0 %7498
        %7500 = vrot.lane.b32.xlu0 %v7495, 127
        %v7501 = vpop.permute.xlu0 %7500
        %v7504 = vadd.f32 %v7490, %v7499
        %v7505 = vadd.f32 %v7491, %v7501
        %s7506 = sld [smem:[#allocation7 + $0xaa]]
        %v7507 = vstv %s7506
        %v7508 = vmul.f32 %v7507, %v1984
        %v7509 = vmul.f32 %v7507, %v1989
        %v7512 = vrot.slane %v7508, 1
        %v7513 = vrot.slane %v7509, 1
        %v7514 = vsel %vm556, %v7512, %v7513
        %v7517 = vadd.f32 %v7504, %v7514
        %v7518 = vadd.f32 %v7505, %v7513
        %s7519 = sld [smem:[#allocation7 + $0xab]]
        %v7520 = vstv %s7519
        %v7521 = vmul.f32 %v7520, %v1984
        %v7522 = vmul.f32 %v7520, %v1989
        %v7525 = vrot.slane %v7521, 1
        %v7526 = vrot.slane %v7522, 1
        %v7527 = vsel %vm556, %v7525, %v7526
        %7528 = vrot.lane.b32.xlu0 %v7527, 127
        %v7529 = vpop.permute.xlu0 %7528
        %7530 = vrot.lane.b32.xlu0 %v7526, 127
        %v7531 = vpop.permute.xlu0 %7530
        %v7534 = vadd.f32 %v7517, %v7529
        %v7535 = vadd.f32 %v7518, %v7531
        %s7536 = sld [smem:[#allocation7 + $0xac]]
        %v7537 = vstv %s7536
        %v7538 = vmul.f32 %v7537, %v2474
        %v7539 = vmul.f32 %v7537, %v2479
        %v7540 = vadd.f32 %v7534, %v7538
        %v7541 = vadd.f32 %v7535, %v7539
        %s7542 = sld [smem:[#allocation7 + $0xad]]
        %v7543 = vstv %s7542
        %v7544 = vmul.f32 %v7543, %v2474
        %v7545 = vmul.f32 %v7543, %v2479
        %7548 = vrot.lane.b32.xlu0 %v7544, 127
        %v7549 = vpop.permute.xlu0 %7548
        %7550 = vrot.lane.b32.xlu0 %v7545, 127
        %v7551 = vpop.permute.xlu0 %7550
        %v7554 = vadd.f32 %v7540, %v7549
        %v7555 = vadd.f32 %v7541, %v7551
        %s7556 = sld [smem:[#allocation7 + $0xae]]
        %v7557 = vstv %s7556
        %v7558 = vmul.f32 %v7557, %v2474
        %v7559 = vmul.f32 %v7557, %v2479
        %v7562 = vrot.slane %v7558, 1
        %v7563 = vrot.slane %v7559, 1
        %v7564 = vsel %vm556, %v7562, %v7563
        %v7567 = vadd.f32 %v7554, %v7564
        %v7568 = vadd.f32 %v7555, %v7563
        %s7569 = sld [smem:[#allocation7 + $0xaf]]
        %v7570 = vstv %s7569
        %v7571 = vmul.f32 %v7570, %v2474
        %v7572 = vmul.f32 %v7570, %v2479
        %v7575 = vrot.slane %v7571, 1
        %v7576 = vrot.slane %v7572, 1
        %v7577 = vsel %vm556, %v7575, %v7576
        %7578 = vrot.lane.b32.xlu0 %v7577, 127
        %v7579 = vpop.permute.xlu0 %7578
        %7580 = vrot.lane.b32.xlu0 %v7576, 127
        %v7581 = vpop.permute.xlu0 %7580
        %v7584 = vadd.f32 %v7567, %v7579
        %v7585 = vadd.f32 %v7568, %v7581
        %s7586 = sld [smem:[#allocation7 + $0xb0]]
        %v7587 = vstv %s7586
        %v7588 = vmul.f32 %v7587, %v2964
        %v7589 = vmul.f32 %v7587, %v2969
        %v7590 = vadd.f32 %v7584, %v7588
        %v7591 = vadd.f32 %v7585, %v7589
        %s7592 = sld [smem:[#allocation7 + $0xb1]]
        %v7593 = vstv %s7592
        %v7594 = vmul.f32 %v7593, %v2964
        %v7595 = vmul.f32 %v7593, %v2969
        %7598 = vrot.lane.b32.xlu0 %v7594, 127
        %v7599 = vpop.permute.xlu0 %7598
        %7600 = vrot.lane.b32.xlu0 %v7595, 127
        %v7601 = vpop.permute.xlu0 %7600
        %v7604 = vadd.f32 %v7590, %v7599
        %v7605 = vadd.f32 %v7591, %v7601
        %s7606 = sld [smem:[#allocation7 + $0xb2]]
        %v7607 = vstv %s7606
        %v7608 = vmul.f32 %v7607, %v2964
        %v7609 = vmul.f32 %v7607, %v2969
        %v7612 = vrot.slane %v7608, 1
        %v7613 = vrot.slane %v7609, 1
        %v7614 = vsel %vm556, %v7612, %v7613
        %v7617 = vadd.f32 %v7604, %v7614
        %v7618 = vadd.f32 %v7605, %v7613
        %s7619 = sld [smem:[#allocation7 + $0xb3]]
        %v7620 = vstv %s7619
        %v7621 = vmul.f32 %v7620, %v2964
        %v7622 = vmul.f32 %v7620, %v2969
        %v7625 = vrot.slane %v7621, 1
        %v7626 = vrot.slane %v7622, 1
        %v7627 = vsel %vm556, %v7625, %v7626
        %7628 = vrot.lane.b32.xlu0 %v7627, 127
        %v7629 = vpop.permute.xlu0 %7628
        %7630 = vrot.lane.b32.xlu0 %v7626, 127
        %v7631 = vpop.permute.xlu0 %7630
        %v7634 = vadd.f32 %v7617, %v7629
        %v7635 = vadd.f32 %v7618, %v7631
        %s7636 = sld [smem:[#allocation8 + $0x8]]
        %v7637 = vstv %s7636
        %v7638 = vadd.f32 %v7634, %v7637
        %v7639 = vadd.f32 %v7635, %v7637
        %v7640 = vmax.f32 %v7638, 0.0
        %v7641 = vmax.f32 %v7639, 0.0
        %7644 = vrot.lane.b32.xlu0 %v7640, 127
        %v7645 = vpop.permute.xlu0 %7644
        %7646 = vrot.lane.b32.xlu0 %v7641, 127
        %v7647 = vpop.permute.xlu0 %7646
        %v7650 = vmax.f32 %v7640, %v7645
        %v7651 = vmax.f32 %v7641, %v7647
        %v7654 = vrot.slane %v7650, 1
        %v7655 = vrot.slane %v7651, 1
        %v7656 = vsel %vm556, %v7654, %v7655
        %v7659 = vmax.f32 %v7650, %v7656
        %v7660 = vmax.f32 %v7651, %v7655
        %s7661 = scalar_lea.vmem %s7, 512
        %v7662 = vld [vmem:[%s7661] sm:$0xff]
        %v7663 = vld [vmem:[%s7661 + $0x8] sm:$0xff]
        %v7664 = vld [vmem:[%s7661 + $0x10] sm:$0xff]
        %v7665 = vld [vmem:[%s7661 + $0x18] sm:$0xff]
        %v7666 = vld [vmem:[%s7661 + $0x20] sm:$0xff]
        %v7667 = vld [vmem:[%s7661 + $0x28] sm:$0xff]
        %v7668 = vld [vmem:[%s7661 + $0x30] sm:$0xff]
        %v7669 = vld [vmem:[%s7661 + $0x38] sm:$0xf]
        %v7671 = vsel %vm3257, %v7662, 0
        %v7674 = vsel %vm3257, %v7663, 0
        %v7677 = vsel %vm3257, %v7664, 0
        %v7680 = vsel %vm3257, %v7665, 0
        %v7683 = vsel %vm3257, %v7666, 0
        %v7686 = vsel %vm3257, %v7667, 0
        %v7689 = vsel %vm3257, %v7668, 0
        %v7692 = vsel %vm3257, %v7669, 0
        %v7695 = vsel %vm3282, %v7660, 0
        %7697 = vmatprep.subr.mxu0 0.0
        %7698 = vmatpush1.msra.mxu0 0.0
        %7699 = vmatprep.subr.mxu0 0.0
        %7700 = vmatpush1.msra.mxu0 0.0
        %7701 = vmatprep.subr.mxu0 0.0
        %7702 = vmatpush1.msra.mxu0 0.0
        %7703 = vmatprep.subr.mxu0 0.0
        %7704 = vmatpush1.msra.mxu0 0.0
        %7705 = vmatprep.subr.mxu0 0.0
        %7706 = vmatpush1.msra.mxu0 0.0
        %7707 = vmatprep.subr.mxu0 0.0
        %7708 = vmatpush1.msra.mxu0 0.0
        %7709 = vmatprep.subr.mxu0 0.0
        %7710 = vmatpush1.msra.mxu0 0.0
        %7711 = vmatprep.subr.mxu0 0.0
        %7712 = vmatpush1.msra.mxu0 0.0
        %7713 = vmatprep.subr.mxu0 0.0
        %7714 = vmatpush1.msra.mxu0 0.0
        %7715 = vmatprep.subr.mxu0 0.0
        %7716 = vmatpush1.msra.mxu0 0.0
        %7717 = vmatprep.subr.mxu0 0.0
        %7718 = vmatpush1.msra.mxu0 0.0
        %7719 = vmatprep.subr.mxu0 0.0
        %7720 = vmatpush1.msra.mxu0 0.0
        %7721 = vmatprep.subr.mxu0 0.0
        %7722 = vmatpush1.msra.mxu0 0.0
        %7723 = vmatprep.subr.mxu0 0.0
        %7724 = vmatpush1.msra.mxu0 0.0
        %7725 = vmatprep.subr.mxu0 0.0
        %7726 = vmatpush1.msra.mxu0 %v7695
        %7727 = vmatprep.subr.mxu0 0.0
        %7728 = vmatpush1.msra.mxu0 %v7659
        %7729 = vmatprep.subr.mxu0 0.0
        %7730 = vmatpush2.msra.mxu0 0.0
        %7731 = vmatprep.subr.mxu0 0.0
        %7732 = vmatpush2.msra.mxu0 0.0
        %7733 = vmatprep.subr.mxu0 0.0
        %7734 = vmatpush2.msra.mxu0 0.0
        %7735 = vmatprep.subr.mxu0 0.0
        %7736 = vmatpush2.msra.mxu0 0.0
        %7737 = vmatprep.subr.mxu0 0.0
        %7738 = vmatpush2.msra.mxu0 0.0
        %7739 = vmatprep.subr.mxu0 0.0
        %7740 = vmatpush2.msra.mxu0 0.0
        %7741 = vmatprep.subr.mxu0 0.0
        %7742 = vmatpush2.msra.mxu0 0.0
        %7743 = vmatprep.subr.mxu0 0.0
        %7744 = vmatpush2.msra.mxu0 0.0
        %7745 = vmatprep.subr.mxu0 0.0
        %7746 = vmatpush2.msra.mxu0 0.0
        %7747 = vmatprep.subr.mxu0 0.0
        %7748 = vmatpush2.msra.mxu0 0.0
        %7749 = vmatprep.subr.mxu0 0.0
        %7750 = vmatpush2.msra.mxu0 0.0
        %7751 = vmatprep.subr.mxu0 0.0
        %7752 = vmatpush2.msra.mxu0 0.0
        %7753 = vmatprep.subr.mxu0 0.0
        %7754 = vmatpush2.msra.mxu0 0.0
        %7755 = vmatprep.subr.mxu0 0.0
        %7756 = vmatpush2.msra.mxu0 0.0
        %7757 = vmatprep.subr.mxu0 0.0
        %7758 = vmatpush2.msra.mxu0 0.0
        %7759 = vmatprep.subr.mxu0 0.0
        %7760 = vmatpush2.msra.mxu0 0.0
        %7761 = vmatprep.mubr.f32.mxu0 0.0
        %7762 = vmatmul.mubr.f32.gmra.mxu0 %v7671
        %v7763 = vpop.f32.mrf.mxu0
        %v7764 = vadd.f32 0.0, %v7763
        %v7765 = vpop.f32.mrf.mxu0
        %7766 = vmatprep.mubr.f32.mxu0 0.0
        %7767 = vmatmul.mubr.f32.gmra.mxu0 %v7674
        %v7768 = vpop.f32.mrf.mxu0
        %v7769 = vadd.f32 0.0, %v7768
        %v7770 = vpop.f32.mrf.mxu0
        %7771 = vmatprep.mubr.f32.mxu0 0.0
        %7772 = vmatmul.mubr.f32.gmra.mxu0 %v7677
        %v7773 = vpop.f32.mrf.mxu0
        %v7774 = vadd.f32 0.0, %v7773
        %v7775 = vpop.f32.mrf.mxu0
        %7776 = vmatprep.mubr.f32.mxu0 0.0
        %7777 = vmatmul.mubr.f32.gmra.mxu0 %v7680
        %v7778 = vpop.f32.mrf.mxu0
        %v7779 = vadd.f32 0.0, %v7778
        %v7780 = vpop.f32.mrf.mxu0
        %7781 = vmatprep.mubr.f32.mxu0 0.0
        %7782 = vmatmul.mubr.f32.gmra.mxu0 %v7683
        %v7783 = vpop.f32.mrf.mxu0
        %v7784 = vadd.f32 0.0, %v7783
        %v7785 = vpop.f32.mrf.mxu0
        %7786 = vmatprep.mubr.f32.mxu0 0.0
        %7787 = vmatmul.mubr.f32.gmra.mxu0 %v7686
        %v7788 = vpop.f32.mrf.mxu0
        %v7789 = vadd.f32 0.0, %v7788
        %v7790 = vpop.f32.mrf.mxu0
        %7791 = vmatprep.mubr.f32.mxu0 0.0
        %7792 = vmatmul.mubr.f32.gmra.mxu0 %v7689
        %v7793 = vpop.f32.mrf.mxu0
        %v7794 = vadd.f32 0.0, %v7793
        %v7795 = vpop.f32.mrf.mxu0
        %7796 = vmatprep.mubr.f32.mxu0 0.0
        %7797 = vmatmul.mubr.f32.gmra.mxu0 %v7692
        %v7798 = vpop.f32.mrf.mxu0
        %v7799 = vadd.f32 0.0, %v7798
        %v7800 = vpop.f32.mrf.mxu0
        %7801 = vdwg.mxu0
        %v7803 = vsel %vm3257, %v7764, 0
        %v7806 = vsel %vm3257, %v7769, 0
        %v7809 = vsel %vm3257, %v7774, 0
        %v7812 = vsel %vm3257, %v7779, 0
        %v7815 = vsel %vm3257, %v7784, 0
        %v7818 = vsel %vm3257, %v7789, 0
        %v7821 = vsel %vm3257, %v7794, 0
        %v7824 = vsel %vm3257, %v7799, 0
        %7826 = vmatprep.subr.mxu0 0.0
        %7827 = vmatpush1.msra.mxu0 0.0
        %7828 = vmatprep.subr.mxu0 0.0
        %7829 = vmatpush1.msra.mxu0 0.0
        %7830 = vmatprep.subr.mxu0 0.0
        %7831 = vmatpush1.msra.mxu0 0.0
        %7832 = vmatprep.subr.mxu0 0.0
        %7833 = vmatpush1.msra.mxu0 0.0
        %7834 = vmatprep.subr.mxu0 0.0
        %7835 = vmatpush1.msra.mxu0 0.0
        %7836 = vmatprep.subr.mxu0 0.0
        %7837 = vmatpush1.msra.mxu0 0.0
        %7838 = vmatprep.subr.mxu0 0.0
        %7839 = vmatpush1.msra.mxu0 0.0
        %7840 = vmatprep.subr.mxu0 0.0
        %7841 = vmatpush1.msra.mxu0 0.0
        %7842 = vmatprep.subr.mxu0 0.0
        %7843 = vmatpush1.msra.mxu0 0.0
        %7844 = vmatprep.subr.mxu0 0.0
        %7845 = vmatpush1.msra.mxu0 0.0
        %7846 = vmatprep.subr.mxu0 0.0
        %7847 = vmatpush1.msra.mxu0 0.0
        %7848 = vmatprep.subr.mxu0 0.0
        %7849 = vmatpush1.msra.mxu0 0.0
        %7850 = vmatprep.subr.mxu0 0.0
        %7851 = vmatpush1.msra.mxu0 0.0
        %7852 = vmatprep.subr.mxu0 0.0
        %7853 = vmatpush1.msra.mxu0 0.0
        %7854 = vmatprep.subr.mxu0 0.0
        %7855 = vmatpush1.msra.mxu0 %v3832
        %7856 = vmatprep.subr.mxu0 0.0
        %7857 = vmatpush1.msra.mxu0 %v2972
        %7858 = vmatprep.subr.mxu0 0.0
        %7859 = vmatpush2.msra.mxu0 0.0
        %7860 = vmatprep.subr.mxu0 0.0
        %7861 = vmatpush2.msra.mxu0 0.0
        %7862 = vmatprep.subr.mxu0 0.0
        %7863 = vmatpush2.msra.mxu0 0.0
        %7864 = vmatprep.subr.mxu0 0.0
        %7865 = vmatpush2.msra.mxu0 0.0
        %7866 = vmatprep.subr.mxu0 0.0
        %7867 = vmatpush2.msra.mxu0 0.0
        %7868 = vmatprep.subr.mxu0 0.0
        %7869 = vmatpush2.msra.mxu0 0.0
        %7870 = vmatprep.subr.mxu0 0.0
        %7871 = vmatpush2.msra.mxu0 0.0
        %7872 = vmatprep.subr.mxu0 0.0
        %7873 = vmatpush2.msra.mxu0 0.0
        %7874 = vmatprep.subr.mxu0 0.0
        %7875 = vmatpush2.msra.mxu0 0.0
        %7876 = vmatprep.subr.mxu0 0.0
        %7877 = vmatpush2.msra.mxu0 0.0
        %7878 = vmatprep.subr.mxu0 0.0
        %7879 = vmatpush2.msra.mxu0 0.0
        %7880 = vmatprep.subr.mxu0 0.0
        %7881 = vmatpush2.msra.mxu0 0.0
        %7882 = vmatprep.subr.mxu0 0.0
        %7883 = vmatpush2.msra.mxu0 0.0
        %7884 = vmatprep.subr.mxu0 0.0
        %7885 = vmatpush2.msra.mxu0 0.0
        %7886 = vmatprep.subr.mxu0 0.0
        %7887 = vmatpush2.msra.mxu0 0.0
        %7888 = vmatprep.subr.mxu0 0.0
        %7889 = vmatpush2.msra.mxu0 0.0
        %7890 = vmatprep.mubr.f32.mxu0 0.0
        %7891 = vmatmul.mubr.f32.gmra.mxu0 %v7803
        %v7892 = vpop.f32.mrf.mxu0
        %v7893 = vadd.f32 0.0, %v7892
        %v7894 = vpop.f32.mrf.mxu0
        %7895 = vmatprep.mubr.f32.mxu0 0.0
        %7896 = vmatmul.mubr.f32.gmra.mxu0 %v7806
        %v7897 = vpop.f32.mrf.mxu0
        %v7898 = vadd.f32 0.0, %v7897
        %v7899 = vpop.f32.mrf.mxu0
        %7900 = vmatprep.mubr.f32.mxu0 0.0
        %7901 = vmatmul.mubr.f32.gmra.mxu0 %v7809
        %v7902 = vpop.f32.mrf.mxu0
        %v7903 = vadd.f32 0.0, %v7902
        %v7904 = vpop.f32.mrf.mxu0
        %7905 = vmatprep.mubr.f32.mxu0 0.0
        %7906 = vmatmul.mubr.f32.gmra.mxu0 %v7812
        %v7907 = vpop.f32.mrf.mxu0
        %v7908 = vadd.f32 0.0, %v7907
        %v7909 = vpop.f32.mrf.mxu0
        %7910 = vmatprep.mubr.f32.mxu0 0.0
        %7911 = vmatmul.mubr.f32.gmra.mxu0 %v7815
        %v7912 = vpop.f32.mrf.mxu0
        %v7913 = vadd.f32 0.0, %v7912
        %v7914 = vpop.f32.mrf.mxu0
        %7915 = vmatprep.mubr.f32.mxu0 0.0
        %7916 = vmatmul.mubr.f32.gmra.mxu0 %v7818
        %v7917 = vpop.f32.mrf.mxu0
        %v7918 = vadd.f32 0.0, %v7917
        %v7919 = vpop.f32.mrf.mxu0
        %7920 = vmatprep.mubr.f32.mxu0 0.0
        %7921 = vmatmul.mubr.f32.gmra.mxu0 %v7821
        %v7922 = vpop.f32.mrf.mxu0
        %v7923 = vadd.f32 0.0, %v7922
        %v7924 = vpop.f32.mrf.mxu0
        %7925 = vmatprep.mubr.f32.mxu0 0.0
        %7926 = vmatmul.mubr.f32.gmra.mxu0 %v7824
        %v7927 = vpop.f32.mrf.mxu0
        %v7928 = vadd.f32 0.0, %v7927
        %v7929 = vpop.f32.mrf.mxu0
        %7930 = vdwg.mxu0
        %v7931 = vadd.f32 %v7378, %v7893
        %v7932 = vadd.f32 %v7379, %v7898
        %v7933 = vadd.f32 %v7380, %v7903
        %v7934 = vadd.f32 %v7381, %v7908
        %v7935 = vadd.f32 %v7382, %v7913
        %v7936 = vadd.f32 %v7383, %v7918
        %v7937 = vadd.f32 %v7384, %v7923
        %v7938 = vadd.f32 %v7385, %v7928
        %s7939 = sld [smem:[#allocation7 + $0xb4]]
        %v7940 = vstv %s7939
        %v7941 = vmul.f32 %v7940, %v1004
        %v7942 = vmul.f32 %v7940, %v1009
        %v7943 = vadd.f32 %v7941, 0.0
        %v7944 = vadd.f32 %v7942, 0.0
        %s7945 = sld [smem:[#allocation7 + $0xb5]]
        %v7946 = vstv %s7945
        %v7947 = vmul.f32 %v7946, %v1004
        %v7948 = vmul.f32 %v7946, %v1009
        %7951 = vrot.lane.b32.xlu0 %v7947, 127
        %v7952 = vpop.permute.xlu0 %7951
        %7953 = vrot.lane.b32.xlu0 %v7948, 127
        %v7954 = vpop.permute.xlu0 %7953
        %v7957 = vadd.f32 %v7943, %v7952
        %v7958 = vadd.f32 %v7944, %v7954
        %s7959 = sld [smem:[#allocation7 + $0xb6]]
        %v7960 = vstv %s7959
        %v7961 = vmul.f32 %v7960, %v1004
        %v7962 = vmul.f32 %v7960, %v1009
        %v7965 = vrot.slane %v7961, 1
        %v7966 = vrot.slane %v7962, 1
        %v7967 = vsel %vm556, %v7965, %v7966
        %v7970 = vadd.f32 %v7957, %v7967
        %v7971 = vadd.f32 %v7958, %v7966
        %s7972 = sld [smem:[#allocation7 + $0xb7]]
        %v7973 = vstv %s7972
        %v7974 = vmul.f32 %v7973, %v1004
        %v7975 = vmul.f32 %v7973, %v1009
        %v7978 = vrot.slane %v7974, 1
        %v7979 = vrot.slane %v7975, 1
        %v7980 = vsel %vm556, %v7978, %v7979
        %7981 = vrot.lane.b32.xlu0 %v7980, 127
        %v7982 = vpop.permute.xlu0 %7981
        %7983 = vrot.lane.b32.xlu0 %v7979, 127
        %v7984 = vpop.permute.xlu0 %7983
        %v7987 = vadd.f32 %v7970, %v7982
        %v7988 = vadd.f32 %v7971, %v7984
        %s7989 = sld [smem:[#allocation7 + $0xb8]]
        %v7990 = vstv %s7989
        %v7991 = vmul.f32 %v7990, %v1494
        %v7992 = vmul.f32 %v7990, %v1499
        %v7993 = vadd.f32 %v7987, %v7991
        %v7994 = vadd.f32 %v7988, %v7992
        %s7995 = sld [smem:[#allocation7 + $0xb9]]
        %v7996 = vstv %s7995
        %v7997 = vmul.f32 %v7996, %v1494
        %v7998 = vmul.f32 %v7996, %v1499
        %8001 = vrot.lane.b32.xlu0 %v7997, 127
        %v8002 = vpop.permute.xlu0 %8001
        %8003 = vrot.lane.b32.xlu0 %v7998, 127
        %v8004 = vpop.permute.xlu0 %8003
        %v8007 = vadd.f32 %v7993, %v8002
        %v8008 = vadd.f32 %v7994, %v8004
        %s8009 = sld [smem:[#allocation7 + $0xba]]
        %v8010 = vstv %s8009
        %v8011 = vmul.f32 %v8010, %v1494
        %v8012 = vmul.f32 %v8010, %v1499
        %v8015 = vrot.slane %v8011, 1
        %v8016 = vrot.slane %v8012, 1
        %v8017 = vsel %vm556, %v8015, %v8016
        %v8020 = vadd.f32 %v8007, %v8017
        %v8021 = vadd.f32 %v8008, %v8016
        %s8022 = sld [smem:[#allocation7 + $0xbb]]
        %v8023 = vstv %s8022
        %v8024 = vmul.f32 %v8023, %v1494
        %v8025 = vmul.f32 %v8023, %v1499
        %v8028 = vrot.slane %v8024, 1
        %v8029 = vrot.slane %v8025, 1
        %v8030 = vsel %vm556, %v8028, %v8029
        %8031 = vrot.lane.b32.xlu0 %v8030, 127
        %v8032 = vpop.permute.xlu0 %8031
        %8033 = vrot.lane.b32.xlu0 %v8029, 127
        %v8034 = vpop.permute.xlu0 %8033
        %v8037 = vadd.f32 %v8020, %v8032
        %v8038 = vadd.f32 %v8021, %v8034
        %s8039 = sld [smem:[#allocation7 + $0xbc]]
        %v8040 = vstv %s8039
        %v8041 = vmul.f32 %v8040, %v1984
        %v8042 = vmul.f32 %v8040, %v1989
        %v8043 = vadd.f32 %v8037, %v8041
        %v8044 = vadd.f32 %v8038, %v8042
        %s8045 = sld [smem:[#allocation7 + $0xbd]]
        %v8046 = vstv %s8045
        %v8047 = vmul.f32 %v8046, %v1984
        %v8048 = vmul.f32 %v8046, %v1989
        %8051 = vrot.lane.b32.xlu0 %v8047, 127
        %v8052 = vpop.permute.xlu0 %8051
        %8053 = vrot.lane.b32.xlu0 %v8048, 127
        %v8054 = vpop.permute.xlu0 %8053
        %v8057 = vadd.f32 %v8043, %v8052
        %v8058 = vadd.f32 %v8044, %v8054
        %s8059 = sld [smem:[#allocation7 + $0xbe]]
        %v8060 = vstv %s8059
        %v8061 = vmul.f32 %v8060, %v1984
        %v8062 = vmul.f32 %v8060, %v1989
        %v8065 = vrot.slane %v8061, 1
        %v8066 = vrot.slane %v8062, 1
        %v8067 = vsel %vm556, %v8065, %v8066
        %v8070 = vadd.f32 %v8057, %v8067
        %v8071 = vadd.f32 %v8058, %v8066
        %s8072 = sld [smem:[#allocation7 + $0xbf]]
        %v8073 = vstv %s8072
        %v8074 = vmul.f32 %v8073, %v1984
        %v8075 = vmul.f32 %v8073, %v1989
        %v8078 = vrot.slane %v8074, 1
        %v8079 = vrot.slane %v8075, 1
        %v8080 = vsel %vm556, %v8078, %v8079
        %8081 = vrot.lane.b32.xlu0 %v8080, 127
        %v8082 = vpop.permute.xlu0 %8081
        %8083 = vrot.lane.b32.xlu0 %v8079, 127
        %v8084 = vpop.permute.xlu0 %8083
        %v8087 = vadd.f32 %v8070, %v8082
        %v8088 = vadd.f32 %v8071, %v8084
        %s8089 = sld [smem:[#allocation7 + $0xc0]]
        %v8090 = vstv %s8089
        %v8091 = vmul.f32 %v8090, %v2474
        %v8092 = vmul.f32 %v8090, %v2479
        %v8093 = vadd.f32 %v8087, %v8091
        %v8094 = vadd.f32 %v8088, %v8092
        %s8095 = sld [smem:[#allocation7 + $0xc1]]
        %v8096 = vstv %s8095
        %v8097 = vmul.f32 %v8096, %v2474
        %v8098 = vmul.f32 %v8096, %v2479
        %8101 = vrot.lane.b32.xlu0 %v8097, 127
        %v8102 = vpop.permute.xlu0 %8101
        %8103 = vrot.lane.b32.xlu0 %v8098, 127
        %v8104 = vpop.permute.xlu0 %8103
        %v8107 = vadd.f32 %v8093, %v8102
        %v8108 = vadd.f32 %v8094, %v8104
        %s8109 = sld [smem:[#allocation7 + $0xc2]]
        %v8110 = vstv %s8109
        %v8111 = vmul.f32 %v8110, %v2474
        %v8112 = vmul.f32 %v8110, %v2479
        %v8115 = vrot.slane %v8111, 1
        %v8116 = vrot.slane %v8112, 1
        %v8117 = vsel %vm556, %v8115, %v8116
        %v8120 = vadd.f32 %v8107, %v8117
        %v8121 = vadd.f32 %v8108, %v8116
        %s8122 = sld [smem:[#allocation7 + $0xc3]]
        %v8123 = vstv %s8122
        %v8124 = vmul.f32 %v8123, %v2474
        %v8125 = vmul.f32 %v8123, %v2479
        %v8128 = vrot.slane %v8124, 1
        %v8129 = vrot.slane %v8125, 1
        %v8130 = vsel %vm556, %v8128, %v8129
        %8131 = vrot.lane.b32.xlu0 %v8130, 127
        %v8132 = vpop.permute.xlu0 %8131
        %8133 = vrot.lane.b32.xlu0 %v8129, 127
        %v8134 = vpop.permute.xlu0 %8133
        %v8137 = vadd.f32 %v8120, %v8132
        %v8138 = vadd.f32 %v8121, %v8134
        %s8139 = sld [smem:[#allocation7 + $0xc4]]
        %v8140 = vstv %s8139
        %v8141 = vmul.f32 %v8140, %v2964
        %v8142 = vmul.f32 %v8140, %v2969
        %v8143 = vadd.f32 %v8137, %v8141
        %v8144 = vadd.f32 %v8138, %v8142
        %s8145 = sld [smem:[#allocation7 + $0xc5]]
        %v8146 = vstv %s8145
        %v8147 = vmul.f32 %v8146, %v2964
        %v8148 = vmul.f32 %v8146, %v2969
        %8151 = vrot.lane.b32.xlu0 %v8147, 127
        %v8152 = vpop.permute.xlu0 %8151
        %8153 = vrot.lane.b32.xlu0 %v8148, 127
        %v8154 = vpop.permute.xlu0 %8153
        %v8157 = vadd.f32 %v8143, %v8152
        %v8158 = vadd.f32 %v8144, %v8154
        %s8159 = sld [smem:[#allocation7 + $0xc6]]
        %v8160 = vstv %s8159
        %v8161 = vmul.f32 %v8160, %v2964
        %v8162 = vmul.f32 %v8160, %v2969
        %v8165 = vrot.slane %v8161, 1
        %v8166 = vrot.slane %v8162, 1
        %v8167 = vsel %vm556, %v8165, %v8166
        %v8170 = vadd.f32 %v8157, %v8167
        %v8171 = vadd.f32 %v8158, %v8166
        %s8172 = sld [smem:[#allocation7 + $0xc7]]
        %v8173 = vstv %s8172
        %v8174 = vmul.f32 %v8173, %v2964
        %v8175 = vmul.f32 %v8173, %v2969
        %v8178 = vrot.slane %v8174, 1
        %v8179 = vrot.slane %v8175, 1
        %v8180 = vsel %vm556, %v8178, %v8179
        %8181 = vrot.lane.b32.xlu0 %v8180, 127
        %v8182 = vpop.permute.xlu0 %8181
        %8183 = vrot.lane.b32.xlu0 %v8179, 127
        %v8184 = vpop.permute.xlu0 %8183
        %v8187 = vadd.f32 %v8170, %v8182
        %v8188 = vadd.f32 %v8171, %v8184
        %s8189 = sld [smem:[#allocation8 + $0x9]]
        %v8190 = vstv %s8189
        %v8191 = vadd.f32 %v8187, %v8190
        %v8192 = vadd.f32 %v8188, %v8190
        %v8193 = vmax.f32 %v8191, 0.0
        %v8194 = vmax.f32 %v8192, 0.0
        %8197 = vrot.lane.b32.xlu0 %v8193, 127
        %v8198 = vpop.permute.xlu0 %8197
        %8199 = vrot.lane.b32.xlu0 %v8194, 127
        %v8200 = vpop.permute.xlu0 %8199
        %v8203 = vmax.f32 %v8193, %v8198
        %v8204 = vmax.f32 %v8194, %v8200
        %v8207 = vrot.slane %v8203, 1
        %v8208 = vrot.slane %v8204, 1
        %v8209 = vsel %vm556, %v8207, %v8208
        %v8212 = vmax.f32 %v8203, %v8209
        %v8213 = vmax.f32 %v8204, %v8208
        %s8214 = scalar_lea.vmem %s7, 576
        %v8215 = vld [vmem:[%s8214] sm:$0xff]
        %v8216 = vld [vmem:[%s8214 + $0x8] sm:$0xff]
        %v8217 = vld [vmem:[%s8214 + $0x10] sm:$0xff]
        %v8218 = vld [vmem:[%s8214 + $0x18] sm:$0xff]
        %v8219 = vld [vmem:[%s8214 + $0x20] sm:$0xff]
        %v8220 = vld [vmem:[%s8214 + $0x28] sm:$0xff]
        %v8221 = vld [vmem:[%s8214 + $0x30] sm:$0xff]
        %v8222 = vld [vmem:[%s8214 + $0x38] sm:$0xf]
        %v8224 = vsel %vm3257, %v8215, 0
        %v8227 = vsel %vm3257, %v8216, 0
        %v8230 = vsel %vm3257, %v8217, 0
        %v8233 = vsel %vm3257, %v8218, 0
        %v8236 = vsel %vm3257, %v8219, 0
        %v8239 = vsel %vm3257, %v8220, 0
        %v8242 = vsel %vm3257, %v8221, 0
        %v8245 = vsel %vm3257, %v8222, 0
        %v8248 = vsel %vm3282, %v8213, 0
        %8250 = vmatprep.subr.mxu0 0.0
        %8251 = vmatpush1.msra.mxu0 0.0
        %8252 = vmatprep.subr.mxu0 0.0
        %8253 = vmatpush1.msra.mxu0 0.0
        %8254 = vmatprep.subr.mxu0 0.0
        %8255 = vmatpush1.msra.mxu0 0.0
        %8256 = vmatprep.subr.mxu0 0.0
        %8257 = vmatpush1.msra.mxu0 0.0
        %8258 = vmatprep.subr.mxu0 0.0
        %8259 = vmatpush1.msra.mxu0 0.0
        %8260 = vmatprep.subr.mxu0 0.0
        %8261 = vmatpush1.msra.mxu0 0.0
        %8262 = vmatprep.subr.mxu0 0.0
        %8263 = vmatpush1.msra.mxu0 0.0
        %8264 = vmatprep.subr.mxu0 0.0
        %8265 = vmatpush1.msra.mxu0 0.0
        %8266 = vmatprep.subr.mxu0 0.0
        %8267 = vmatpush1.msra.mxu0 0.0
        %8268 = vmatprep.subr.mxu0 0.0
        %8269 = vmatpush1.msra.mxu0 0.0
        %8270 = vmatprep.subr.mxu0 0.0
        %8271 = vmatpush1.msra.mxu0 0.0
        %8272 = vmatprep.subr.mxu0 0.0
        %8273 = vmatpush1.msra.mxu0 0.0
        %8274 = vmatprep.subr.mxu0 0.0
        %8275 = vmatpush1.msra.mxu0 0.0
        %8276 = vmatprep.subr.mxu0 0.0
        %8277 = vmatpush1.msra.mxu0 0.0
        %8278 = vmatprep.subr.mxu0 0.0
        %8279 = vmatpush1.msra.mxu0 %v8248
        %8280 = vmatprep.subr.mxu0 0.0
        %8281 = vmatpush1.msra.mxu0 %v8212
        %8282 = vmatprep.subr.mxu0 0.0
        %8283 = vmatpush2.msra.mxu0 0.0
        %8284 = vmatprep.subr.mxu0 0.0
        %8285 = vmatpush2.msra.mxu0 0.0
        %8286 = vmatprep.subr.mxu0 0.0
        %8287 = vmatpush2.msra.mxu0 0.0
        %8288 = vmatprep.subr.mxu0 0.0
        %8289 = vmatpush2.msra.mxu0 0.0
        %8290 = vmatprep.subr.mxu0 0.0
        %8291 = vmatpush2.msra.mxu0 0.0
        %8292 = vmatprep.subr.mxu0 0.0
        %8293 = vmatpush2.msra.mxu0 0.0
        %8294 = vmatprep.subr.mxu0 0.0
        %8295 = vmatpush2.msra.mxu0 0.0
        %8296 = vmatprep.subr.mxu0 0.0
        %8297 = vmatpush2.msra.mxu0 0.0
        %8298 = vmatprep.subr.mxu0 0.0
        %8299 = vmatpush2.msra.mxu0 0.0
        %8300 = vmatprep.subr.mxu0 0.0
        %8301 = vmatpush2.msra.mxu0 0.0
        %8302 = vmatprep.subr.mxu0 0.0
        %8303 = vmatpush2.msra.mxu0 0.0
        %8304 = vmatprep.subr.mxu0 0.0
        %8305 = vmatpush2.msra.mxu0 0.0
        %8306 = vmatprep.subr.mxu0 0.0
        %8307 = vmatpush2.msra.mxu0 0.0
        %8308 = vmatprep.subr.mxu0 0.0
        %8309 = vmatpush2.msra.mxu0 0.0
        %8310 = vmatprep.subr.mxu0 0.0
        %8311 = vmatpush2.msra.mxu0 0.0
        %8312 = vmatprep.subr.mxu0 0.0
        %8313 = vmatpush2.msra.mxu0 0.0
        %8314 = vmatprep.mubr.f32.mxu0 0.0
        %8315 = vmatmul.mubr.f32.gmra.mxu0 %v8224
        %v8316 = vpop.f32.mrf.mxu0
        %v8317 = vadd.f32 0.0, %v8316
        %v8318 = vpop.f32.mrf.mxu0
        %8319 = vmatprep.mubr.f32.mxu0 0.0
        %8320 = vmatmul.mubr.f32.gmra.mxu0 %v8227
        %v8321 = vpop.f32.mrf.mxu0
        %v8322 = vadd.f32 0.0, %v8321
        %v8323 = vpop.f32.mrf.mxu0
        %8324 = vmatprep.mubr.f32.mxu0 0.0
        %8325 = vmatmul.mubr.f32.gmra.mxu0 %v8230
        %v8326 = vpop.f32.mrf.mxu0
        %v8327 = vadd.f32 0.0, %v8326
        %v8328 = vpop.f32.mrf.mxu0
        %8329 = vmatprep.mubr.f32.mxu0 0.0
        %8330 = vmatmul.mubr.f32.gmra.mxu0 %v8233
        %v8331 = vpop.f32.mrf.mxu0
        %v8332 = vadd.f32 0.0, %v8331
        %v8333 = vpop.f32.mrf.mxu0
        %8334 = vmatprep.mubr.f32.mxu0 0.0
        %8335 = vmatmul.mubr.f32.gmra.mxu0 %v8236
        %v8336 = vpop.f32.mrf.mxu0
        %v8337 = vadd.f32 0.0, %v8336
        %v8338 = vpop.f32.mrf.mxu0
        %8339 = vmatprep.mubr.f32.mxu0 0.0
        %8340 = vmatmul.mubr.f32.gmra.mxu0 %v8239
        %v8341 = vpop.f32.mrf.mxu0
        %v8342 = vadd.f32 0.0, %v8341
        %v8343 = vpop.f32.mrf.mxu0
        %8344 = vmatprep.mubr.f32.mxu0 0.0
        %8345 = vmatmul.mubr.f32.gmra.mxu0 %v8242
        %v8346 = vpop.f32.mrf.mxu0
        %v8347 = vadd.f32 0.0, %v8346
        %v8348 = vpop.f32.mrf.mxu0
        %8349 = vmatprep.mubr.f32.mxu0 0.0
        %8350 = vmatmul.mubr.f32.gmra.mxu0 %v8245
        %v8351 = vpop.f32.mrf.mxu0
        %v8352 = vadd.f32 0.0, %v8351
        %v8353 = vpop.f32.mrf.mxu0
        %8354 = vdwg.mxu0
        %v8356 = vsel %vm3257, %v8317, 0
        %v8359 = vsel %vm3257, %v8322, 0
        %v8362 = vsel %vm3257, %v8327, 0
        %v8365 = vsel %vm3257, %v8332, 0
        %v8368 = vsel %vm3257, %v8337, 0
        %v8371 = vsel %vm3257, %v8342, 0
        %v8374 = vsel %vm3257, %v8347, 0
        %v8377 = vsel %vm3257, %v8352, 0
        %8379 = vmatprep.subr.mxu0 0.0
        %8380 = vmatpush1.msra.mxu0 0.0
        %8381 = vmatprep.subr.mxu0 0.0
        %8382 = vmatpush1.msra.mxu0 0.0
        %8383 = vmatprep.subr.mxu0 0.0
        %8384 = vmatpush1.msra.mxu0 0.0
        %8385 = vmatprep.subr.mxu0 0.0
        %8386 = vmatpush1.msra.mxu0 0.0
        %8387 = vmatprep.subr.mxu0 0.0
        %8388 = vmatpush1.msra.mxu0 0.0
        %8389 = vmatprep.subr.mxu0 0.0
        %8390 = vmatpush1.msra.mxu0 0.0
        %8391 = vmatprep.subr.mxu0 0.0
        %8392 = vmatpush1.msra.mxu0 0.0
        %8393 = vmatprep.subr.mxu0 0.0
        %8394 = vmatpush1.msra.mxu0 0.0
        %8395 = vmatprep.subr.mxu0 0.0
        %8396 = vmatpush1.msra.mxu0 0.0
        %8397 = vmatprep.subr.mxu0 0.0
        %8398 = vmatpush1.msra.mxu0 0.0
        %8399 = vmatprep.subr.mxu0 0.0
        %8400 = vmatpush1.msra.mxu0 0.0
        %8401 = vmatprep.subr.mxu0 0.0
        %8402 = vmatpush1.msra.mxu0 0.0
        %8403 = vmatprep.subr.mxu0 0.0
        %8404 = vmatpush1.msra.mxu0 0.0
        %8405 = vmatprep.subr.mxu0 0.0
        %8406 = vmatpush1.msra.mxu0 0.0
        %8407 = vmatprep.subr.mxu0 0.0
        %8408 = vmatpush1.msra.mxu0 %v3832
        %8409 = vmatprep.subr.mxu0 0.0
        %8410 = vmatpush1.msra.mxu0 %v2972
        %8411 = vmatprep.subr.mxu0 0.0
        %8412 = vmatpush2.msra.mxu0 0.0
        %8413 = vmatprep.subr.mxu0 0.0
        %8414 = vmatpush2.msra.mxu0 0.0
        %8415 = vmatprep.subr.mxu0 0.0
        %8416 = vmatpush2.msra.mxu0 0.0
        %8417 = vmatprep.subr.mxu0 0.0
        %8418 = vmatpush2.msra.mxu0 0.0
        %8419 = vmatprep.subr.mxu0 0.0
        %8420 = vmatpush2.msra.mxu0 0.0
        %8421 = vmatprep.subr.mxu0 0.0
        %8422 = vmatpush2.msra.mxu0 0.0
        %8423 = vmatprep.subr.mxu0 0.0
        %8424 = vmatpush2.msra.mxu0 0.0
        %8425 = vmatprep.subr.mxu0 0.0
        %8426 = vmatpush2.msra.mxu0 0.0
        %8427 = vmatprep.subr.mxu0 0.0
        %8428 = vmatpush2.msra.mxu0 0.0
        %8429 = vmatprep.subr.mxu0 0.0
        %8430 = vmatpush2.msra.mxu0 0.0
        %8431 = vmatprep.subr.mxu0 0.0
        %8432 = vmatpush2.msra.mxu0 0.0
        %8433 = vmatprep.subr.mxu0 0.0
        %8434 = vmatpush2.msra.mxu0 0.0
        %8435 = vmatprep.subr.mxu0 0.0
        %8436 = vmatpush2.msra.mxu0 0.0
        %8437 = vmatprep.subr.mxu0 0.0
        %8438 = vmatpush2.msra.mxu0 0.0
        %8439 = vmatprep.subr.mxu0 0.0
        %8440 = vmatpush2.msra.mxu0 0.0
        %8441 = vmatprep.subr.mxu0 0.0
        %8442 = vmatpush2.msra.mxu0 0.0
        %8443 = vmatprep.mubr.f32.mxu0 0.0
        %8444 = vmatmul.mubr.f32.gmra.mxu0 %v8356
        %v8445 = vpop.f32.mrf.mxu0
        %v8446 = vadd.f32 0.0, %v8445
        %v8447 = vpop.f32.mrf.mxu0
        %8448 = vmatprep.mubr.f32.mxu0 0.0
        %8449 = vmatmul.mubr.f32.gmra.mxu0 %v8359
        %v8450 = vpop.f32.mrf.mxu0
        %v8451 = vadd.f32 0.0, %v8450
        %v8452 = vpop.f32.mrf.mxu0
        %8453 = vmatprep.mubr.f32.mxu0 0.0
        %8454 = vmatmul.mubr.f32.gmra.mxu0 %v8362
        %v8455 = vpop.f32.mrf.mxu0
        %v8456 = vadd.f32 0.0, %v8455
        %v8457 = vpop.f32.mrf.mxu0
        %8458 = vmatprep.mubr.f32.mxu0 0.0
        %8459 = vmatmul.mubr.f32.gmra.mxu0 %v8365
        %v8460 = vpop.f32.mrf.mxu0
        %v8461 = vadd.f32 0.0, %v8460
        %v8462 = vpop.f32.mrf.mxu0
        %8463 = vmatprep.mubr.f32.mxu0 0.0
        %8464 = vmatmul.mubr.f32.gmra.mxu0 %v8368
        %v8465 = vpop.f32.mrf.mxu0
        %v8466 = vadd.f32 0.0, %v8465
        %v8467 = vpop.f32.mrf.mxu0
        %8468 = vmatprep.mubr.f32.mxu0 0.0
        %8469 = vmatmul.mubr.f32.gmra.mxu0 %v8371
        %v8470 = vpop.f32.mrf.mxu0
        %v8471 = vadd.f32 0.0, %v8470
        %v8472 = vpop.f32.mrf.mxu0
        %8473 = vmatprep.mubr.f32.mxu0 0.0
        %8474 = vmatmul.mubr.f32.gmra.mxu0 %v8374
        %v8475 = vpop.f32.mrf.mxu0
        %v8476 = vadd.f32 0.0, %v8475
        %v8477 = vpop.f32.mrf.mxu0
        %8478 = vmatprep.mubr.f32.mxu0 0.0
        %8479 = vmatmul.mubr.f32.gmra.mxu0 %v8377
        %v8480 = vpop.f32.mrf.mxu0
        %v8481 = vadd.f32 0.0, %v8480
        %v8482 = vpop.f32.mrf.mxu0
        %8483 = vdwg.mxu0
        %v8484 = vadd.f32 %v7931, %v8446
        %v8485 = vadd.f32 %v7932, %v8451
        %v8486 = vadd.f32 %v7933, %v8456
        %v8487 = vadd.f32 %v7934, %v8461
        %v8488 = vadd.f32 %v7935, %v8466
        %v8489 = vadd.f32 %v7936, %v8471
        %v8490 = vadd.f32 %v7937, %v8476
        %v8491 = vadd.f32 %v7938, %v8481
        %v8492 = vld [vmem:[%s10] sm:$0xff]
        %v8493 = vld [vmem:[%s10 + $0x8] sm:$0xff]
        %v8494 = vld [vmem:[%s10 + $0x10] sm:$0xff]
        %v8495 = vld [vmem:[%s10 + $0x18] sm:$0xff]
        %v8496 = vld [vmem:[%s9] sm:$0xff]
        %v8497 = vld [vmem:[%s9 + $0x8] sm:$0xff]
        %v8498 = vld [vmem:[%s9 + $0x10] sm:$0xff]
        %v8499 = vld [vmem:[%s9 + $0x18] sm:$0xff]
        %vm8500 = vcmask 490496
        %v8502 = vsel %vm8500, %v8496, 0
        %v8505 = vsel %vm8500, %v8497, 0
        %v8508 = vsel %vm8500, %v8498, 0
        %v8511 = vsel %vm8500, %v8499, 0
        %vm8513 = vcmask 1043456
        %v8515 = vsel %vm8513, %v8491, 0
        %8517 = vmatprep.subr.mxu0 0.0
        %8518 = vmatpush1.msra.mxu0 0.0
        %8519 = vmatprep.subr.mxu0 0.0
        %8520 = vmatpush1.msra.mxu0 0.0
        %8521 = vmatprep.subr.mxu0 0.0
        %8522 = vmatpush1.msra.mxu0 0.0
        %8523 = vmatprep.subr.mxu0 0.0
        %8524 = vmatpush1.msra.mxu0 0.0
        %8525 = vmatprep.subr.mxu0 0.0
        %8526 = vmatpush1.msra.mxu0 0.0
        %8527 = vmatprep.subr.mxu0 0.0
        %8528 = vmatpush1.msra.mxu0 0.0
        %8529 = vmatprep.subr.mxu0 0.0
        %8530 = vmatpush1.msra.mxu0 0.0
        %8531 = vmatprep.subr.mxu0 0.0
        %8532 = vmatpush1.msra.mxu0 0.0
        %8533 = vmatprep.subr.mxu0 0.0
        %8534 = vmatpush1.msra.mxu0 %v8515
        %8535 = vmatprep.subr.mxu0 0.0
        %8536 = vmatpush1.msra.mxu0 %v8490
        %8537 = vmatprep.subr.mxu0 0.0
        %8538 = vmatpush1.msra.mxu0 %v8489
        %8539 = vmatprep.subr.mxu0 0.0
        %8540 = vmatpush1.msra.mxu0 %v8488
        %8541 = vmatprep.subr.mxu0 0.0
        %8542 = vmatpush1.msra.mxu0 %v8487
        %8543 = vmatprep.subr.mxu0 0.0
        %8544 = vmatpush1.msra.mxu0 %v8486
        %8545 = vmatprep.subr.mxu0 0.0
        %8546 = vmatpush1.msra.mxu0 %v8485
        %8547 = vmatprep.subr.mxu0 0.0
        %8548 = vmatpush1.msra.mxu0 %v8484
        %8549 = vmatprep.subr.mxu0 0.0
        %8550 = vmatpush2.msra.mxu0 0.0
        %8551 = vmatprep.subr.mxu0 0.0
        %8552 = vmatpush2.msra.mxu0 0.0
        %8553 = vmatprep.subr.mxu0 0.0
        %8554 = vmatpush2.msra.mxu0 0.0
        %8555 = vmatprep.subr.mxu0 0.0
        %8556 = vmatpush2.msra.mxu0 0.0
        %8557 = vmatprep.subr.mxu0 0.0
        %8558 = vmatpush2.msra.mxu0 0.0
        %8559 = vmatprep.subr.mxu0 0.0
        %8560 = vmatpush2.msra.mxu0 0.0
        %8561 = vmatprep.subr.mxu0 0.0
        %8562 = vmatpush2.msra.mxu0 0.0
        %8563 = vmatprep.subr.mxu0 0.0
        %8564 = vmatpush2.msra.mxu0 0.0
        %8565 = vmatprep.subr.mxu0 0.0
        %8566 = vmatpush2.msra.mxu0 0.0
        %8567 = vmatprep.subr.mxu0 0.0
        %8568 = vmatpush2.msra.mxu0 0.0
        %8569 = vmatprep.subr.mxu0 0.0
        %8570 = vmatpush2.msra.mxu0 0.0
        %8571 = vmatprep.subr.mxu0 0.0
        %8572 = vmatpush2.msra.mxu0 0.0
        %8573 = vmatprep.subr.mxu0 0.0
        %8574 = vmatpush2.msra.mxu0 0.0
        %8575 = vmatprep.subr.mxu0 0.0
        %8576 = vmatpush2.msra.mxu0 0.0
        %8577 = vmatprep.subr.mxu0 0.0
        %8578 = vmatpush2.msra.mxu0 0.0
        %8579 = vmatprep.subr.mxu0 0.0
        %8580 = vmatpush2.msra.mxu0 0.0
        %8581 = vmatprep.mubr.f32.mxu0 0.0
        %8582 = vmatmul.mubr.f32.gmra.mxu0 %v8502
        %v8583 = vpop.f32.mrf.mxu0
        %v8584 = vadd.f32 0.0, %v8583
        %v8585 = vpop.f32.mrf.mxu0
        %8586 = vmatprep.mubr.f32.mxu0 0.0
        %8587 = vmatmul.mubr.f32.gmra.mxu0 %v8505
        %v8588 = vpop.f32.mrf.mxu0
        %v8589 = vadd.f32 0.0, %v8588
        %v8590 = vpop.f32.mrf.mxu0
        %8591 = vmatprep.mubr.f32.mxu0 0.0
        %8592 = vmatmul.mubr.f32.gmra.mxu0 %v8508
        %v8593 = vpop.f32.mrf.mxu0
        %v8594 = vadd.f32 0.0, %v8593
        %v8595 = vpop.f32.mrf.mxu0
        %8596 = vmatprep.mubr.f32.mxu0 0.0
        %8597 = vmatmul.mubr.f32.gmra.mxu0 %v8511
        %v8598 = vpop.f32.mrf.mxu0
        %v8599 = vadd.f32 0.0, %v8598
        %v8600 = vpop.f32.mrf.mxu0
        %8601 = vdwg.mxu0
        %v8602 = vadd.f32 %v8492, %v8584
        %v8603 = vadd.f32 %v8493, %v8589
        %v8604 = vadd.f32 %v8494, %v8594
        %v8605 = vadd.f32 %v8495, %v8599
        %s8606 = scalar_lea.vmem %s9, 32
        %v8607 = vld [vmem:[%s8606] sm:$0xff]
        %v8608 = vld [vmem:[%s8606 + $0x8] sm:$0xff]
        %v8609 = vld [vmem:[%s8606 + $0x10] sm:$0xff]
        %v8610 = vld [vmem:[%s8606 + $0x18] sm:$0xff]
        %8618 = vrot.lane.b32.xlu0 %v8484, 127
        %v8619 = vpop.permute.xlu0 %8618
        %8620 = vrot.lane.b32.xlu0 %v8485, 127
        %v8621 = vpop.permute.xlu0 %8620
        %8622 = vrot.lane.b32.xlu0 %v8486, 127
        %v8623 = vpop.permute.xlu0 %8622
        %8624 = vrot.lane.b32.xlu0 %v8487, 127
        %v8625 = vpop.permute.xlu0 %8624
        %8626 = vrot.lane.b32.xlu0 %v8488, 127
        %v8627 = vpop.permute.xlu0 %8626
        %8628 = vrot.lane.b32.xlu0 %v8489, 127
        %v8629 = vpop.permute.xlu0 %8628
        %8630 = vrot.lane.b32.xlu0 %v8490, 127
        %v8631 = vpop.permute.xlu0 %8630
        %8632 = vrot.lane.b32.xlu0 %v8491, 127
        %v8633 = vpop.permute.xlu0 %8632
        %v8642 = vsel %vm8500, %v8607, 0
        %v8645 = vsel %vm8500, %v8608, 0
        %v8648 = vsel %vm8500, %v8609, 0
        %v8651 = vsel %vm8500, %v8610, 0
        %v8653 = vsel %vm8513, %v8633, 0
        %8655 = vmatprep.subr.mxu0 0.0
        %8656 = vmatpush1.msra.mxu0 0.0
        %8657 = vmatprep.subr.mxu0 0.0
        %8658 = vmatpush1.msra.mxu0 0.0
        %8659 = vmatprep.subr.mxu0 0.0
        %8660 = vmatpush1.msra.mxu0 0.0
        %8661 = vmatprep.subr.mxu0 0.0
        %8662 = vmatpush1.msra.mxu0 0.0
        %8663 = vmatprep.subr.mxu0 0.0
        %8664 = vmatpush1.msra.mxu0 0.0
        %8665 = vmatprep.subr.mxu0 0.0
        %8666 = vmatpush1.msra.mxu0 0.0
        %8667 = vmatprep.subr.mxu0 0.0
        %8668 = vmatpush1.msra.mxu0 0.0
        %8669 = vmatprep.subr.mxu0 0.0
        %8670 = vmatpush1.msra.mxu0 0.0
        %8671 = vmatprep.subr.mxu0 0.0
        %8672 = vmatpush1.msra.mxu0 %v8653
        %8673 = vmatprep.subr.mxu0 0.0
        %8674 = vmatpush1.msra.mxu0 %v8631
        %8675 = vmatprep.subr.mxu0 0.0
        %8676 = vmatpush1.msra.mxu0 %v8629
        %8677 = vmatprep.subr.mxu0 0.0
        %8678 = vmatpush1.msra.mxu0 %v8627
        %8679 = vmatprep.subr.mxu0 0.0
        %8680 = vmatpush1.msra.mxu0 %v8625
        %8681 = vmatprep.subr.mxu0 0.0
        %8682 = vmatpush1.msra.mxu0 %v8623
        %8683 = vmatprep.subr.mxu0 0.0
        %8684 = vmatpush1.msra.mxu0 %v8621
        %8685 = vmatprep.subr.mxu0 0.0
        %8686 = vmatpush1.msra.mxu0 %v8619
        %8687 = vmatprep.subr.mxu0 0.0
        %8688 = vmatpush2.msra.mxu0 0.0
        %8689 = vmatprep.subr.mxu0 0.0
        %8690 = vmatpush2.msra.mxu0 0.0
        %8691 = vmatprep.subr.mxu0 0.0
        %8692 = vmatpush2.msra.mxu0 0.0
        %8693 = vmatprep.subr.mxu0 0.0
        %8694 = vmatpush2.msra.mxu0 0.0
        %8695 = vmatprep.subr.mxu0 0.0
        %8696 = vmatpush2.msra.mxu0 0.0
        %8697 = vmatprep.subr.mxu0 0.0
        %8698 = vmatpush2.msra.mxu0 0.0
        %8699 = vmatprep.subr.mxu0 0.0
        %8700 = vmatpush2.msra.mxu0 0.0
        %8701 = vmatprep.subr.mxu0 0.0
        %8702 = vmatpush2.msra.mxu0 0.0
        %8703 = vmatprep.subr.mxu0 0.0
        %8704 = vmatpush2.msra.mxu0 0.0
        %8705 = vmatprep.subr.mxu0 0.0
        %8706 = vmatpush2.msra.mxu0 0.0
        %8707 = vmatprep.subr.mxu0 0.0
        %8708 = vmatpush2.msra.mxu0 0.0
        %8709 = vmatprep.subr.mxu0 0.0
        %8710 = vmatpush2.msra.mxu0 0.0
        %8711 = vmatprep.subr.mxu0 0.0
        %8712 = vmatpush2.msra.mxu0 0.0
        %8713 = vmatprep.subr.mxu0 0.0
        %8714 = vmatpush2.msra.mxu0 0.0
        %8715 = vmatprep.subr.mxu0 0.0
        %8716 = vmatpush2.msra.mxu0 0.0
        %8717 = vmatprep.subr.mxu0 0.0
        %8718 = vmatpush2.msra.mxu0 0.0
        %8719 = vmatprep.mubr.f32.mxu0 0.0
        %8720 = vmatmul.mubr.f32.gmra.mxu0 %v8642
        %v8721 = vpop.f32.mrf.mxu0
        %v8722 = vadd.f32 0.0, %v8721
        %v8723 = vpop.f32.mrf.mxu0
        %8724 = vmatprep.mubr.f32.mxu0 0.0
        %8725 = vmatmul.mubr.f32.gmra.mxu0 %v8645
        %v8726 = vpop.f32.mrf.mxu0
        %v8727 = vadd.f32 0.0, %v8726
        %v8728 = vpop.f32.mrf.mxu0
        %8729 = vmatprep.mubr.f32.mxu0 0.0
        %8730 = vmatmul.mubr.f32.gmra.mxu0 %v8648
        %v8731 = vpop.f32.mrf.mxu0
        %v8732 = vadd.f32 0.0, %v8731
        %v8733 = vpop.f32.mrf.mxu0
        %8734 = vmatprep.mubr.f32.mxu0 0.0
        %8735 = vmatmul.mubr.f32.gmra.mxu0 %v8651
        %v8736 = vpop.f32.mrf.mxu0
        %v8737 = vadd.f32 0.0, %v8736
        %v8738 = vpop.f32.mrf.mxu0
        %8739 = vdwg.mxu0
        %v8740 = vadd.f32 %v8602, %v8722
        %v8741 = vadd.f32 %v8603, %v8727
        %v8742 = vadd.f32 %v8604, %v8732
        %v8743 = vadd.f32 %v8605, %v8737
        %s8744 = scalar_lea.vmem %s9, 64
        %v8745 = vld [vmem:[%s8744] sm:$0xff]
        %v8746 = vld [vmem:[%s8744 + $0x8] sm:$0xff]
        %v8747 = vld [vmem:[%s8744 + $0x10] sm:$0xff]
        %v8748 = vld [vmem:[%s8744 + $0x18] sm:$0xff]
        %8749 = vrot.lane.b32.xlu0 %v8484, 126
        %v8750 = vpop.permute.xlu0 %8749
        %8751 = vrot.lane.b32.xlu0 %v8485, 126
        %v8752 = vpop.permute.xlu0 %8751
        %8753 = vrot.lane.b32.xlu0 %v8486, 126
        %v8754 = vpop.permute.xlu0 %8753
        %8755 = vrot.lane.b32.xlu0 %v8487, 126
        %v8756 = vpop.permute.xlu0 %8755
        %8757 = vrot.lane.b32.xlu0 %v8488, 126
        %v8758 = vpop.permute.xlu0 %8757
        %8759 = vrot.lane.b32.xlu0 %v8489, 126
        %v8760 = vpop.permute.xlu0 %8759
        %8761 = vrot.lane.b32.xlu0 %v8490, 126
        %v8762 = vpop.permute.xlu0 %8761
        %8763 = vrot.lane.b32.xlu0 %v8491, 126
        %v8764 = vpop.permute.xlu0 %8763
        %v8773 = vsel %vm8500, %v8745, 0
        %v8776 = vsel %vm8500, %v8746, 0
        %v8779 = vsel %vm8500, %v8747, 0
        %v8782 = vsel %vm8500, %v8748, 0
        %v8784 = vsel %vm8513, %v8764, 0
        %8786 = vmatprep.subr.mxu0 0.0
        %8787 = vmatpush1.msra.mxu0 0.0
        %8788 = vmatprep.subr.mxu0 0.0
        %8789 = vmatpush1.msra.mxu0 0.0
        %8790 = vmatprep.subr.mxu0 0.0
        %8791 = vmatpush1.msra.mxu0 0.0
        %8792 = vmatprep.subr.mxu0 0.0
        %8793 = vmatpush1.msra.mxu0 0.0
        %8794 = vmatprep.subr.mxu0 0.0
        %8795 = vmatpush1.msra.mxu0 0.0
        %8796 = vmatprep.subr.mxu0 0.0
        %8797 = vmatpush1.msra.mxu0 0.0
        %8798 = vmatprep.subr.mxu0 0.0
        %8799 = vmatpush1.msra.mxu0 0.0
        %8800 = vmatprep.subr.mxu0 0.0
        %8801 = vmatpush1.msra.mxu0 0.0
        %8802 = vmatprep.subr.mxu0 0.0
        %8803 = vmatpush1.msra.mxu0 %v8784
        %8804 = vmatprep.subr.mxu0 0.0
        %8805 = vmatpush1.msra.mxu0 %v8762
        %8806 = vmatprep.subr.mxu0 0.0
        %8807 = vmatpush1.msra.mxu0 %v8760
        %8808 = vmatprep.subr.mxu0 0.0
        %8809 = vmatpush1.msra.mxu0 %v8758
        %8810 = vmatprep.subr.mxu0 0.0
        %8811 = vmatpush1.msra.mxu0 %v8756
        %8812 = vmatprep.subr.mxu0 0.0
        %8813 = vmatpush1.msra.mxu0 %v8754
        %8814 = vmatprep.subr.mxu0 0.0
        %8815 = vmatpush1.msra.mxu0 %v8752
        %8816 = vmatprep.subr.mxu0 0.0
        %8817 = vmatpush1.msra.mxu0 %v8750
        %8818 = vmatprep.subr.mxu0 0.0
        %8819 = vmatpush2.msra.mxu0 0.0
        %8820 = vmatprep.subr.mxu0 0.0
        %8821 = vmatpush2.msra.mxu0 0.0
        %8822 = vmatprep.subr.mxu0 0.0
        %8823 = vmatpush2.msra.mxu0 0.0
        %8824 = vmatprep.subr.mxu0 0.0
        %8825 = vmatpush2.msra.mxu0 0.0
        %8826 = vmatprep.subr.mxu0 0.0
        %8827 = vmatpush2.msra.mxu0 0.0
        %8828 = vmatprep.subr.mxu0 0.0
        %8829 = vmatpush2.msra.mxu0 0.0
        %8830 = vmatprep.subr.mxu0 0.0
        %8831 = vmatpush2.msra.mxu0 0.0
        %8832 = vmatprep.subr.mxu0 0.0
        %8833 = vmatpush2.msra.mxu0 0.0
        %8834 = vmatprep.subr.mxu0 0.0
        %8835 = vmatpush2.msra.mxu0 0.0
        %8836 = vmatprep.subr.mxu0 0.0
        %8837 = vmatpush2.msra.mxu0 0.0
        %8838 = vmatprep.subr.mxu0 0.0
        %8839 = vmatpush2.msra.mxu0 0.0
        %8840 = vmatprep.subr.mxu0 0.0
        %8841 = vmatpush2.msra.mxu0 0.0
        %8842 = vmatprep.subr.mxu0 0.0
        %8843 = vmatpush2.msra.mxu0 0.0
        %8844 = vmatprep.subr.mxu0 0.0
        %8845 = vmatpush2.msra.mxu0 0.0
        %8846 = vmatprep.subr.mxu0 0.0
        %8847 = vmatpush2.msra.mxu0 0.0
        %8848 = vmatprep.subr.mxu0 0.0
        %8849 = vmatpush2.msra.mxu0 0.0
        %8850 = vmatprep.mubr.f32.mxu0 0.0
        %8851 = vmatmul.mubr.f32.gmra.mxu0 %v8773
        %v8852 = vpop.f32.mrf.mxu0
        %v8853 = vadd.f32 0.0, %v8852
        %v8854 = vpop.f32.mrf.mxu0
        %8855 = vmatprep.mubr.f32.mxu0 0.0
        %8856 = vmatmul.mubr.f32.gmra.mxu0 %v8776
        %v8857 = vpop.f32.mrf.mxu0
        %v8858 = vadd.f32 0.0, %v8857
        %v8859 = vpop.f32.mrf.mxu0
        %8860 = vmatprep.mubr.f32.mxu0 0.0
        %8861 = vmatmul.mubr.f32.gmra.mxu0 %v8779
        %v8862 = vpop.f32.mrf.mxu0
        %v8863 = vadd.f32 0.0, %v8862
        %v8864 = vpop.f32.mrf.mxu0
        %8865 = vmatprep.mubr.f32.mxu0 0.0
        %8866 = vmatmul.mubr.f32.gmra.mxu0 %v8782
        %v8867 = vpop.f32.mrf.mxu0
        %v8868 = vadd.f32 0.0, %v8867
        %v8869 = vpop.f32.mrf.mxu0
        %8870 = vdwg.mxu0
        %v8871 = vadd.f32 %v8740, %v8853
        %v8872 = vadd.f32 %v8741, %v8858
        %v8873 = vadd.f32 %v8742, %v8863
        %v8874 = vadd.f32 %v8743, %v8868
        %s8875 = scalar_lea.vmem %s9, 96
        %v8876 = vld [vmem:[%s8875] sm:$0xff]
        %v8877 = vld [vmem:[%s8875 + $0x8] sm:$0xff]
        %v8878 = vld [vmem:[%s8875 + $0x10] sm:$0xff]
        %v8879 = vld [vmem:[%s8875 + $0x18] sm:$0xff]
        %8880 = vrot.lane.b32.xlu0 %v8484, 125
        %v8881 = vpop.permute.xlu0 %8880
        %8882 = vrot.lane.b32.xlu0 %v8485, 125
        %v8883 = vpop.permute.xlu0 %8882
        %8884 = vrot.lane.b32.xlu0 %v8486, 125
        %v8885 = vpop.permute.xlu0 %8884
        %8886 = vrot.lane.b32.xlu0 %v8487, 125
        %v8887 = vpop.permute.xlu0 %8886
        %8888 = vrot.lane.b32.xlu0 %v8488, 125
        %v8889 = vpop.permute.xlu0 %8888
        %8890 = vrot.lane.b32.xlu0 %v8489, 125
        %v8891 = vpop.permute.xlu0 %8890
        %8892 = vrot.lane.b32.xlu0 %v8490, 125
        %v8893 = vpop.permute.xlu0 %8892
        %8894 = vrot.lane.b32.xlu0 %v8491, 125
        %v8895 = vpop.permute.xlu0 %8894
        %v8904 = vsel %vm8500, %v8876, 0
        %v8907 = vsel %vm8500, %v8877, 0
        %v8910 = vsel %vm8500, %v8878, 0
        %v8913 = vsel %vm8500, %v8879, 0
        %v8915 = vsel %vm8513, %v8895, 0
        %8917 = vmatprep.subr.mxu0 0.0
        %8918 = vmatpush1.msra.mxu0 0.0
        %8919 = vmatprep.subr.mxu0 0.0
        %8920 = vmatpush1.msra.mxu0 0.0
        %8921 = vmatprep.subr.mxu0 0.0
        %8922 = vmatpush1.msra.mxu0 0.0
        %8923 = vmatprep.subr.mxu0 0.0
        %8924 = vmatpush1.msra.mxu0 0.0
        %8925 = vmatprep.subr.mxu0 0.0
        %8926 = vmatpush1.msra.mxu0 0.0
        %8927 = vmatprep.subr.mxu0 0.0
        %8928 = vmatpush1.msra.mxu0 0.0
        %8929 = vmatprep.subr.mxu0 0.0
        %8930 = vmatpush1.msra.mxu0 0.0
        %8931 = vmatprep.subr.mxu0 0.0
        %8932 = vmatpush1.msra.mxu0 0.0
        %8933 = vmatprep.subr.mxu0 0.0
        %8934 = vmatpush1.msra.mxu0 %v8915
        %8935 = vmatprep.subr.mxu0 0.0
        %8936 = vmatpush1.msra.mxu0 %v8893
        %8937 = vmatprep.subr.mxu0 0.0
        %8938 = vmatpush1.msra.mxu0 %v8891
        %8939 = vmatprep.subr.mxu0 0.0
        %8940 = vmatpush1.msra.mxu0 %v8889
        %8941 = vmatprep.subr.mxu0 0.0
        %8942 = vmatpush1.msra.mxu0 %v8887
        %8943 = vmatprep.subr.mxu0 0.0
        %8944 = vmatpush1.msra.mxu0 %v8885
        %8945 = vmatprep.subr.mxu0 0.0
        %8946 = vmatpush1.msra.mxu0 %v8883
        %8947 = vmatprep.subr.mxu0 0.0
        %8948 = vmatpush1.msra.mxu0 %v8881
        %8949 = vmatprep.subr.mxu0 0.0
        %8950 = vmatpush2.msra.mxu0 0.0
        %8951 = vmatprep.subr.mxu0 0.0
        %8952 = vmatpush2.msra.mxu0 0.0
        %8953 = vmatprep.subr.mxu0 0.0
        %8954 = vmatpush2.msra.mxu0 0.0
        %8955 = vmatprep.subr.mxu0 0.0
        %8956 = vmatpush2.msra.mxu0 0.0
        %8957 = vmatprep.subr.mxu0 0.0
        %8958 = vmatpush2.msra.mxu0 0.0
        %8959 = vmatprep.subr.mxu0 0.0
        %8960 = vmatpush2.msra.mxu0 0.0
        %8961 = vmatprep.subr.mxu0 0.0
        %8962 = vmatpush2.msra.mxu0 0.0
        %8963 = vmatprep.subr.mxu0 0.0
        %8964 = vmatpush2.msra.mxu0 0.0
        %8965 = vmatprep.subr.mxu0 0.0
        %8966 = vmatpush2.msra.mxu0 0.0
        %8967 = vmatprep.subr.mxu0 0.0
        %8968 = vmatpush2.msra.mxu0 0.0
        %8969 = vmatprep.subr.mxu0 0.0
        %8970 = vmatpush2.msra.mxu0 0.0
        %8971 = vmatprep.subr.mxu0 0.0
        %8972 = vmatpush2.msra.mxu0 0.0
        %8973 = vmatprep.subr.mxu0 0.0
        %8974 = vmatpush2.msra.mxu0 0.0
        %8975 = vmatprep.subr.mxu0 0.0
        %8976 = vmatpush2.msra.mxu0 0.0
        %8977 = vmatprep.subr.mxu0 0.0
        %8978 = vmatpush2.msra.mxu0 0.0
        %8979 = vmatprep.subr.mxu0 0.0
        %8980 = vmatpush2.msra.mxu0 0.0
        %8981 = vmatprep.mubr.f32.mxu0 0.0
        %8982 = vmatmul.mubr.f32.gmra.mxu0 %v8904
        %v8983 = vpop.f32.mrf.mxu0
        %v8984 = vadd.f32 0.0, %v8983
        %v8985 = vpop.f32.mrf.mxu0
        %8986 = vmatprep.mubr.f32.mxu0 0.0
        %8987 = vmatmul.mubr.f32.gmra.mxu0 %v8907
        %v8988 = vpop.f32.mrf.mxu0
        %v8989 = vadd.f32 0.0, %v8988
        %v8990 = vpop.f32.mrf.mxu0
        %8991 = vmatprep.mubr.f32.mxu0 0.0
        %8992 = vmatmul.mubr.f32.gmra.mxu0 %v8910
        %v8993 = vpop.f32.mrf.mxu0
        %v8994 = vadd.f32 0.0, %v8993
        %v8995 = vpop.f32.mrf.mxu0
        %8996 = vmatprep.mubr.f32.mxu0 0.0
        %8997 = vmatmul.mubr.f32.gmra.mxu0 %v8913
        %v8998 = vpop.f32.mrf.mxu0
        %v8999 = vadd.f32 0.0, %v8998
        %v9000 = vpop.f32.mrf.mxu0
        %9001 = vdwg.mxu0
        %v9002 = vadd.f32 %v8871, %v8984
        %v9003 = vadd.f32 %v8872, %v8989
        %v9004 = vadd.f32 %v8873, %v8994
        %v9005 = vadd.f32 %v8874, %v8999
        %s9006 = scalar_lea.vmem %s9, 128
        %v9007 = vld [vmem:[%s9006] sm:$0xff]
        %v9008 = vld [vmem:[%s9006 + $0x8] sm:$0xff]
        %v9009 = vld [vmem:[%s9006 + $0x10] sm:$0xff]
        %v9010 = vld [vmem:[%s9006 + $0x18] sm:$0xff]
        %9011 = vrot.lane.b32.xlu0 %v8484, 124
        %v9012 = vpop.permute.xlu0 %9011
        %9013 = vrot.lane.b32.xlu0 %v8485, 124
        %v9014 = vpop.permute.xlu0 %9013
        %9015 = vrot.lane.b32.xlu0 %v8486, 124
        %v9016 = vpop.permute.xlu0 %9015
        %9017 = vrot.lane.b32.xlu0 %v8487, 124
        %v9018 = vpop.permute.xlu0 %9017
        %9019 = vrot.lane.b32.xlu0 %v8488, 124
        %v9020 = vpop.permute.xlu0 %9019
        %9021 = vrot.lane.b32.xlu0 %v8489, 124
        %v9022 = vpop.permute.xlu0 %9021
        %9023 = vrot.lane.b32.xlu0 %v8490, 124
        %v9024 = vpop.permute.xlu0 %9023
        %9025 = vrot.lane.b32.xlu0 %v8491, 124
        %v9026 = vpop.permute.xlu0 %9025
        %v9035 = vsel %vm8500, %v9007, 0
        %v9038 = vsel %vm8500, %v9008, 0
        %v9041 = vsel %vm8500, %v9009, 0
        %v9044 = vsel %vm8500, %v9010, 0
        %v9046 = vsel %vm8513, %v9026, 0
        %9048 = vmatprep.subr.mxu0 0.0
        %9049 = vmatpush1.msra.mxu0 0.0
        %9050 = vmatprep.subr.mxu0 0.0
        %9051 = vmatpush1.msra.mxu0 0.0
        %9052 = vmatprep.subr.mxu0 0.0
        %9053 = vmatpush1.msra.mxu0 0.0
        %9054 = vmatprep.subr.mxu0 0.0
        %9055 = vmatpush1.msra.mxu0 0.0
        %9056 = vmatprep.subr.mxu0 0.0
        %9057 = vmatpush1.msra.mxu0 0.0
        %9058 = vmatprep.subr.mxu0 0.0
        %9059 = vmatpush1.msra.mxu0 0.0
        %9060 = vmatprep.subr.mxu0 0.0
        %9061 = vmatpush1.msra.mxu0 0.0
        %9062 = vmatprep.subr.mxu0 0.0
        %9063 = vmatpush1.msra.mxu0 0.0
        %9064 = vmatprep.subr.mxu0 0.0
        %9065 = vmatpush1.msra.mxu0 %v9046
        %9066 = vmatprep.subr.mxu0 0.0
        %9067 = vmatpush1.msra.mxu0 %v9024
        %9068 = vmatprep.subr.mxu0 0.0
        %9069 = vmatpush1.msra.mxu0 %v9022
        %9070 = vmatprep.subr.mxu0 0.0
        %9071 = vmatpush1.msra.mxu0 %v9020
        %9072 = vmatprep.subr.mxu0 0.0
        %9073 = vmatpush1.msra.mxu0 %v9018
        %9074 = vmatprep.subr.mxu0 0.0
        %9075 = vmatpush1.msra.mxu0 %v9016
        %9076 = vmatprep.subr.mxu0 0.0
        %9077 = vmatpush1.msra.mxu0 %v9014
        %9078 = vmatprep.subr.mxu0 0.0
        %9079 = vmatpush1.msra.mxu0 %v9012
        %9080 = vmatprep.subr.mxu0 0.0
        %9081 = vmatpush2.msra.mxu0 0.0
        %9082 = vmatprep.subr.mxu0 0.0
        %9083 = vmatpush2.msra.mxu0 0.0
        %9084 = vmatprep.subr.mxu0 0.0
        %9085 = vmatpush2.msra.mxu0 0.0
        %9086 = vmatprep.subr.mxu0 0.0
        %9087 = vmatpush2.msra.mxu0 0.0
        %9088 = vmatprep.subr.mxu0 0.0
        %9089 = vmatpush2.msra.mxu0 0.0
        %9090 = vmatprep.subr.mxu0 0.0
        %9091 = vmatpush2.msra.mxu0 0.0
        %9092 = vmatprep.subr.mxu0 0.0
        %9093 = vmatpush2.msra.mxu0 0.0
        %9094 = vmatprep.subr.mxu0 0.0
        %9095 = vmatpush2.msra.mxu0 0.0
        %9096 = vmatprep.subr.mxu0 0.0
        %9097 = vmatpush2.msra.mxu0 0.0
        %9098 = vmatprep.subr.mxu0 0.0
        %9099 = vmatpush2.msra.mxu0 0.0
        %9100 = vmatprep.subr.mxu0 0.0
        %9101 = vmatpush2.msra.mxu0 0.0
        %9102 = vmatprep.subr.mxu0 0.0
        %9103 = vmatpush2.msra.mxu0 0.0
        %9104 = vmatprep.subr.mxu0 0.0
        %9105 = vmatpush2.msra.mxu0 0.0
        %9106 = vmatprep.subr.mxu0 0.0
        %9107 = vmatpush2.msra.mxu0 0.0
        %9108 = vmatprep.subr.mxu0 0.0
        %9109 = vmatpush2.msra.mxu0 0.0
        %9110 = vmatprep.subr.mxu0 0.0
        %9111 = vmatpush2.msra.mxu0 0.0
        %9112 = vmatprep.mubr.f32.mxu0 0.0
        %9113 = vmatmul.mubr.f32.gmra.mxu0 %v9035
        %v9114 = vpop.f32.mrf.mxu0
        %v9115 = vadd.f32 0.0, %v9114
        %v9116 = vpop.f32.mrf.mxu0
        %9117 = vmatprep.mubr.f32.mxu0 0.0
        %9118 = vmatmul.mubr.f32.gmra.mxu0 %v9038
        %v9119 = vpop.f32.mrf.mxu0
        %v9120 = vadd.f32 0.0, %v9119
        %v9121 = vpop.f32.mrf.mxu0
        %9122 = vmatprep.mubr.f32.mxu0 0.0
        %9123 = vmatmul.mubr.f32.gmra.mxu0 %v9041
        %v9124 = vpop.f32.mrf.mxu0
        %v9125 = vadd.f32 0.0, %v9124
        %v9126 = vpop.f32.mrf.mxu0
        %9127 = vmatprep.mubr.f32.mxu0 0.0
        %9128 = vmatmul.mubr.f32.gmra.mxu0 %v9044
        %v9129 = vpop.f32.mrf.mxu0
        %v9130 = vadd.f32 0.0, %v9129
        %v9131 = vpop.f32.mrf.mxu0
        %9132 = vdwg.mxu0
        %v9133 = vadd.f32 %v9002, %v9115
        %v9134 = vadd.f32 %v9003, %v9120
        %v9135 = vadd.f32 %v9004, %v9125
        %v9136 = vadd.f32 %v9005, %v9130
        %s9137 = scalar_lea.vmem %s9, 160
        %v9138 = vld [vmem:[%s9137] sm:$0xff]
        %v9139 = vld [vmem:[%s9137 + $0x8] sm:$0xff]
        %v9140 = vld [vmem:[%s9137 + $0x10] sm:$0xff]
        %v9141 = vld [vmem:[%s9137 + $0x18] sm:$0xff]
        %9142 = vrot.lane.b32.xlu0 %v8484, 123
        %v9143 = vpop.permute.xlu0 %9142
        %9144 = vrot.lane.b32.xlu0 %v8485, 123
        %v9145 = vpop.permute.xlu0 %9144
        %9146 = vrot.lane.b32.xlu0 %v8486, 123
        %v9147 = vpop.permute.xlu0 %9146
        %9148 = vrot.lane.b32.xlu0 %v8487, 123
        %v9149 = vpop.permute.xlu0 %9148
        %9150 = vrot.lane.b32.xlu0 %v8488, 123
        %v9151 = vpop.permute.xlu0 %9150
        %9152 = vrot.lane.b32.xlu0 %v8489, 123
        %v9153 = vpop.permute.xlu0 %9152
        %9154 = vrot.lane.b32.xlu0 %v8490, 123
        %v9155 = vpop.permute.xlu0 %9154
        %9156 = vrot.lane.b32.xlu0 %v8491, 123
        %v9157 = vpop.permute.xlu0 %9156
        %v9166 = vsel %vm8500, %v9138, 0
        %v9169 = vsel %vm8500, %v9139, 0
        %v9172 = vsel %vm8500, %v9140, 0
        %v9175 = vsel %vm8500, %v9141, 0
        %v9177 = vsel %vm8513, %v9157, 0
        %9179 = vmatprep.subr.mxu0 0.0
        %9180 = vmatpush1.msra.mxu0 0.0
        %9181 = vmatprep.subr.mxu0 0.0
        %9182 = vmatpush1.msra.mxu0 0.0
        %9183 = vmatprep.subr.mxu0 0.0
        %9184 = vmatpush1.msra.mxu0 0.0
        %9185 = vmatprep.subr.mxu0 0.0
        %9186 = vmatpush1.msra.mxu0 0.0
        %9187 = vmatprep.subr.mxu0 0.0
        %9188 = vmatpush1.msra.mxu0 0.0
        %9189 = vmatprep.subr.mxu0 0.0
        %9190 = vmatpush1.msra.mxu0 0.0
        %9191 = vmatprep.subr.mxu0 0.0
        %9192 = vmatpush1.msra.mxu0 0.0
        %9193 = vmatprep.subr.mxu0 0.0
        %9194 = vmatpush1.msra.mxu0 0.0
        %9195 = vmatprep.subr.mxu0 0.0
        %9196 = vmatpush1.msra.mxu0 %v9177
        %9197 = vmatprep.subr.mxu0 0.0
        %9198 = vmatpush1.msra.mxu0 %v9155
        %9199 = vmatprep.subr.mxu0 0.0
        %9200 = vmatpush1.msra.mxu0 %v9153
        %9201 = vmatprep.subr.mxu0 0.0
        %9202 = vmatpush1.msra.mxu0 %v9151
        %9203 = vmatprep.subr.mxu0 0.0
        %9204 = vmatpush1.msra.mxu0 %v9149
        %9205 = vmatprep.subr.mxu0 0.0
        %9206 = vmatpush1.msra.mxu0 %v9147
        %9207 = vmatprep.subr.mxu0 0.0
        %9208 = vmatpush1.msra.mxu0 %v9145
        %9209 = vmatprep.subr.mxu0 0.0
        %9210 = vmatpush1.msra.mxu0 %v9143
        %9211 = vmatprep.subr.mxu0 0.0
        %9212 = vmatpush2.msra.mxu0 0.0
        %9213 = vmatprep.subr.mxu0 0.0
        %9214 = vmatpush2.msra.mxu0 0.0
        %9215 = vmatprep.subr.mxu0 0.0
        %9216 = vmatpush2.msra.mxu0 0.0
        %9217 = vmatprep.subr.mxu0 0.0
        %9218 = vmatpush2.msra.mxu0 0.0
        %9219 = vmatprep.subr.mxu0 0.0
        %9220 = vmatpush2.msra.mxu0 0.0
        %9221 = vmatprep.subr.mxu0 0.0
        %9222 = vmatpush2.msra.mxu0 0.0
        %9223 = vmatprep.subr.mxu0 0.0
        %9224 = vmatpush2.msra.mxu0 0.0
        %9225 = vmatprep.subr.mxu0 0.0
        %9226 = vmatpush2.msra.mxu0 0.0
        %9227 = vmatprep.subr.mxu0 0.0
        %9228 = vmatpush2.msra.mxu0 0.0
        %9229 = vmatprep.subr.mxu0 0.0
        %9230 = vmatpush2.msra.mxu0 0.0
        %9231 = vmatprep.subr.mxu0 0.0
        %9232 = vmatpush2.msra.mxu0 0.0
        %9233 = vmatprep.subr.mxu0 0.0
        %9234 = vmatpush2.msra.mxu0 0.0
        %9235 = vmatprep.subr.mxu0 0.0
        %9236 = vmatpush2.msra.mxu0 0.0
        %9237 = vmatprep.subr.mxu0 0.0
        %9238 = vmatpush2.msra.mxu0 0.0
        %9239 = vmatprep.subr.mxu0 0.0
        %9240 = vmatpush2.msra.mxu0 0.0
        %9241 = vmatprep.subr.mxu0 0.0
        %9242 = vmatpush2.msra.mxu0 0.0
        %9243 = vmatprep.mubr.f32.mxu0 0.0
        %9244 = vmatmul.mubr.f32.gmra.mxu0 %v9166
        %v9245 = vpop.f32.mrf.mxu0
        %v9246 = vadd.f32 0.0, %v9245
        %v9247 = vpop.f32.mrf.mxu0
        %9248 = vmatprep.mubr.f32.mxu0 0.0
        %9249 = vmatmul.mubr.f32.gmra.mxu0 %v9169
        %v9250 = vpop.f32.mrf.mxu0
        %v9251 = vadd.f32 0.0, %v9250
        %v9252 = vpop.f32.mrf.mxu0
        %9253 = vmatprep.mubr.f32.mxu0 0.0
        %9254 = vmatmul.mubr.f32.gmra.mxu0 %v9172
        %v9255 = vpop.f32.mrf.mxu0
        %v9256 = vadd.f32 0.0, %v9255
        %v9257 = vpop.f32.mrf.mxu0
        %9258 = vmatprep.mubr.f32.mxu0 0.0
        %9259 = vmatmul.mubr.f32.gmra.mxu0 %v9175
        %v9260 = vpop.f32.mrf.mxu0
        %v9261 = vadd.f32 0.0, %v9260
        %v9262 = vpop.f32.mrf.mxu0
        %9263 = vdwg.mxu0
        %v9264 = vadd.f32 %v9133, %v9246
        %v9265 = vadd.f32 %v9134, %v9251
        %v9266 = vadd.f32 %v9135, %v9256
        %v9267 = vadd.f32 %v9136, %v9261
        %v9268 = vmax.f32 %v9264, 0.0
        %v9269 = vmax.f32 %v9265, 0.0
        %v9270 = vmax.f32 %v9266, 0.0
        %v9271 = vmax.f32 %v9267, 0.0
        %v9272 = vld [vmem:[%s11] sm:$0x1]
        %s9273 = sld [smem:[#allocation2]]
        %v9274 = vstv %s9273
        %vm9275 = vcmask 261120
        %v9277 = vsel %vm9275, %v9272, 0
        %9279 = vmatprep.subr.mxu0 0.0
        %9280 = vmatpush1.msra.mxu0 0.0
        %9281 = vmatprep.subr.mxu0 0.0
        %9282 = vmatpush1.msra.mxu0 0.0
        %9283 = vmatprep.subr.mxu0 0.0
        %9284 = vmatpush1.msra.mxu0 0.0
        %9285 = vmatprep.subr.mxu0 0.0
        %9286 = vmatpush1.msra.mxu0 0.0
        %9287 = vmatprep.subr.mxu0 0.0
        %9288 = vmatpush1.msra.mxu0 0.0
        %9289 = vmatprep.subr.mxu0 0.0
        %9290 = vmatpush1.msra.mxu0 0.0
        %9291 = vmatprep.subr.mxu0 0.0
        %9292 = vmatpush1.msra.mxu0 0.0
        %9293 = vmatprep.subr.mxu0 0.0
        %9294 = vmatpush1.msra.mxu0 0.0
        %9295 = vmatprep.subr.mxu0 0.0
        %9296 = vmatpush1.msra.mxu0 0.0
        %9297 = vmatprep.subr.mxu0 0.0
        %9298 = vmatpush1.msra.mxu0 0.0
        %9299 = vmatprep.subr.mxu0 0.0
        %9300 = vmatpush1.msra.mxu0 0.0
        %9301 = vmatprep.subr.mxu0 0.0
        %9302 = vmatpush1.msra.mxu0 0.0
        %9303 = vmatprep.subr.mxu0 0.0
        %9304 = vmatpush1.msra.mxu0 %v9271
        %9305 = vmatprep.subr.mxu0 0.0
        %9306 = vmatpush1.msra.mxu0 %v9270
        %9307 = vmatprep.subr.mxu0 0.0
        %9308 = vmatpush1.msra.mxu0 %v9269
        %9309 = vmatprep.subr.mxu0 0.0
        %9310 = vmatpush1.msra.mxu0 %v9268
        %9311 = vmatprep.subr.mxu0 0.0
        %9312 = vmatpush2.msra.mxu0 0.0
        %9313 = vmatprep.subr.mxu0 0.0
        %9314 = vmatpush2.msra.mxu0 0.0
        %9315 = vmatprep.subr.mxu0 0.0
        %9316 = vmatpush2.msra.mxu0 0.0
        %9317 = vmatprep.subr.mxu0 0.0
        %9318 = vmatpush2.msra.mxu0 0.0
        %9319 = vmatprep.subr.mxu0 0.0
        %9320 = vmatpush2.msra.mxu0 0.0
        %9321 = vmatprep.subr.mxu0 0.0
        %9322 = vmatpush2.msra.mxu0 0.0
        %9323 = vmatprep.subr.mxu0 0.0
        %9324 = vmatpush2.msra.mxu0 0.0
        %9325 = vmatprep.subr.mxu0 0.0
        %9326 = vmatpush2.msra.mxu0 0.0
        %9327 = vmatprep.subr.mxu0 0.0
        %9328 = vmatpush2.msra.mxu0 0.0
        %9329 = vmatprep.subr.mxu0 0.0
        %9330 = vmatpush2.msra.mxu0 0.0
        %9331 = vmatprep.subr.mxu0 0.0
        %9332 = vmatpush2.msra.mxu0 0.0
        %9333 = vmatprep.subr.mxu0 0.0
        %9334 = vmatpush2.msra.mxu0 0.0
        %9335 = vmatprep.subr.mxu0 0.0
        %9336 = vmatpush2.msra.mxu0 0.0
        %9337 = vmatprep.subr.mxu0 0.0
        %9338 = vmatpush2.msra.mxu0 0.0
        %9339 = vmatprep.subr.mxu0 0.0
        %9340 = vmatpush2.msra.mxu0 0.0
        %9341 = vmatprep.subr.mxu0 0.0
        %9342 = vmatpush2.msra.mxu0 0.0
        %9343 = vmatprep.mubr.f32.mxu0 0.0
        %9344 = vmatmul.mubr.f32.gmra.mxu0 %v9277
        %v9345 = vpop.f32.mrf.mxu0
        %v9346 = vadd.f32 %v9274, %v9345
        %v9347 = vpop.f32.mrf.mxu0
        %9348 = vdwg.mxu0
        %vm9349 = vcmask 0
        %9350 = vst.msk [vmem:[%s489] sm:$0x1] %vm9349, %v9346
        %p9351 = scmp.lt.s32.totalorder %s28, 1
        %s9352 = scalar_select %p9351, %s28, 1
        %s9353 = scalar_lea.vmem %s13, %s9352
        // Predicated region
        $region89: #{traffic_light_forward.1} parent=71 // pred_check
          %p9354 = pneg %p324
        $region90: #{traffic_light_forward.1} parent=71 // pred_check_branch
          %9356 = sbr.rel (%p9354) target = $region92
        $region91: #{traffic_light_forward.1} parent=71 // pred_region
          _
        $region92: #{traffic_light_forward.1} parent=71 // pred_fallthru
          _
      $region72: #{traffic_light_forward.1} parent=5 // pred_fallthru
        _
      %p9357 = scmp.le.s32.totalorder 2, %s23
      // Predicated region
      $region93: #{traffic_light_forward.1} parent=5 // pred_check
        %p9358 = pneg %p9357
      $region94: #{traffic_light_forward.1} parent=5 // pred_check_branch
        %9360 = sbr.rel (%p9358) target = $region96
      $region95: #{traffic_light_forward.1} parent=5 // pred_region
        %s9361 = ssub.s32 %s23, 2
        // Predicated region
        $region97: #{traffic_light_forward.1} parent=95 // pred_check
          %p9362 = pneg %p330
        $region98: #{traffic_light_forward.1} parent=95 // pred_check_branch
          %9364 = sbr.rel (%p9362) target = $region100
        $region99: #{traffic_light_forward.1} parent=95 // pred_region
          %p9365 = scmp.lt.s32.totalorder %s29, 1
          %s9366 = scalar_select %p9365, %s29, 1
          %s9367 = scalar_lea.vmem %s13, %s9366
        $region100: #{traffic_light_forward.1} parent=95 // pred_fallthru
          _
      $region96: #{traffic_light_forward.1} parent=5 // pred_fallthru
        _
    $region6: #{traffic_light_forward.1} parent=1 // loop_footer
      %s27 = sadd.s32 1, %s23
    $region7: #{traffic_light_forward.1} parent=1 // loop_footer_branch
      %22 = sbr.rel target = $region3
    $region8: #{traffic_light_forward.1} parent=1 // loop_exit
      _
    %9368 = vsyncpa [#allocation4], 1
    %s9369 = scalar_lea.sflag [#allocation4], 1
    %9370 = vsyncpa %s9369, 1
    %9371 = vsyncpa [#allocation6], 1
    %9372 = vsyncpa [#allocation9], 1

</llo_original>
